<compile_context>
chip_gen: v6e
topology: v6e:2x2x1
jax: 0.10.0
libtpu: 0.0.40
codegen_flags: <defaults>
</compile_context>

<pallas_src>
import functools

import jax
import jax.numpy as jnp
from jax.experimental import pallas as pl
from jax.experimental.pallas import tpu as pltpu


def _round_up(x, m):
    return ((x + m - 1) // m) * m


def _conv3d_relu_kernel(x_ref, w_ref, o_ref, patch_ref, *,
                        K, dilation, Dout, Hout, Wout, Cin):
    # x_ref:     (1, Dp, Hp, Wp, Cin)        padded input, one batch element
    # w_ref:     (Kp, Coutp)                 weight as (K^3*Cin, Cout), 0-padded
    # o_ref:     (1, Dout*Hout*Wout, Coutp)  lane-dense output slab
    # patch_ref: (Dout*Hout*Wout, Kp)        VMEM im2col scratch
    M = Dout * Hout * Wout
    Kp = patch_ref.shape[1]
    kc = K * K * K * Cin
    pad_k = Kp - kc

    # Zero the never-written padding columns so stale-VMEM garbage (possibly
    # NaN bit patterns) times the zero weight rows cannot corrupt the matmul.
    if pad_k > 0:
        patch_ref[:, pl.ds(kc, pad_k)] = jnp.zeros((M, pad_k), patch_ref.dtype)

    # im2col: one shifted window per filter tap -> one column write each.
    for kd in range(K):
        for kh in range(K):
            for kw in range(K):
                tap = (kd * K + kh) * K + kw
                xs = x_ref[0,
                           kd * dilation: kd * dilation + Dout,
                           kh * dilation: kh * dilation + Hout,
                           kw * dilation: kw * dilation + Wout,
                           :]
                patch_ref[:, pl.ds(tap * Cin, Cin)] = (
                    xs.reshape(M, Cin).astype(patch_ref.dtype))

    # Single MXU matmul over the whole patch (contraction padded to 128,
    # output lanes padded to 128); norm='none' -> Identity; ReLU fused here.
    acc = jnp.dot(patch_ref[...], w_ref[...],
                  preferred_element_type=jnp.float32)
    o_ref[0] = jnp.maximum(acc, 0.0).astype(o_ref.dtype)


def conv_block_forward(x_ncdhw, w_dhwio, *, kernel_size=3, dilation=1):
    """ConvBlock forward: ReLU(Conv3d(x)), bias=False, stride=1, groups=1."""
    # TODO(synk): stride>1, groups>1 and the non-default norm/act branches of
    # the module are not implemented (defaults: stride=1, groups=1, Identity
    # norm, ReLU).
    N, Cin, D, H, W = x_ncdhw.shape
    K = kernel_size
    Cout = w_dhwio.shape[-1]
    pad = K // 2 + dilation - 1

    # Output spatial extents of a stride-1 dilated conv with this padding
    # (equals the input extents for the module's odd-K defaults).
    Dout = D + 2 * pad - dilation * (K - 1)
    Hout = H + 2 * pad - dilation * (K - 1)
    Wout = W + 2 * pad - dilation * (K - 1)
    M = Dout * Hout * Wout

    # NCDHW -> NDHWC, spatial pad (plain-JAX layout glue).
    x = jnp.transpose(x_ncdhw, (0, 2, 3, 4, 1))
    xp = jnp.pad(x, ((0, 0), (pad, pad), (pad, pad), (pad, pad), (0, 0)))
    Dp, Hp, Wp = D + 2 * pad, H + 2 * pad, W + 2 * pad

    # Weight DHWIO -> flat (K^3*Cin, Cout), zero-padded to MXU/lane-friendly
    # (Kp, Coutp), both multiples of 128.
    kc = K * K * K * Cin
    Kp = _round_up(kc, 128)
    Coutp = _round_up(Cout, 128)
    w2d = w_dhwio.reshape(kc, Cout).astype(jnp.float32)
    w2dp = jnp.pad(w2d, ((0, Kp - kc), (0, Coutp - Cout)))

    kernel = functools.partial(_conv3d_relu_kernel, K=K, dilation=dilation,
                               Dout=Dout, Hout=Hout, Wout=Wout, Cin=Cin)

    out_p = pl.pallas_call(
        kernel,
        out_shape=jax.ShapeDtypeStruct((N, M, Coutp), x_ncdhw.dtype),
        grid_spec=pltpu.PrefetchScalarGridSpec(
            num_scalar_prefetch=0,
            grid=(N,),
            in_specs=[
                pl.BlockSpec((1, Dp, Hp, Wp, Cin), lambda n: (n, 0, 0, 0, 0)),
                pl.BlockSpec((Kp, Coutp), lambda n: (0, 0)),
            ],
            out_specs=pl.BlockSpec((1, M, Coutp), lambda n: (n, 0, 0)),
            scratch_shapes=[pltpu.VMEM((M, Kp), jnp.float32)],
        ),
        compiler_params=pltpu.CompilerParams(
            dimension_semantics=("parallel",),
            vmem_limit_bytes=32 * 1024 * 1024),
    )(xp, w2dp)

    # Strip the Cout lane padding, back to PyTorch NCDHW layout (glue).
    out = out_p[:, :, :Cout].reshape(N, Dout, Hout, Wout, Cout)
    return jnp.transpose(out, (0, 4, 1, 2, 3))


if __name__ == "__main__":
    # Small shapes consistent with ConvBlock(in_channels=4, out_channels=8)
    # on a 5-D NCDHW input.
    N, Cin, Cout = 2, 4, 8
    D = H = W = 8
    K, dilation = 3, 1

    key = jax.random.PRNGKey(0)
    kx, kw = jax.random.split(key)
    x = jax.random.normal(kx, (N, Cin, D, H, W), dtype=jnp.float32)

    # Deterministic Conv3d weight init (kaiming-uniform-like, bias=False),
    # stored as (K, K, K, Cin, Cout) == DHWIO.
    fan_in = Cin * K * K * K
    bound = 1.0 / jnp.sqrt(jnp.float32(fan_in))
    w = jax.random.uniform(kw, (K, K, K, Cin, Cout),
                           minval=-bound, maxval=bound, dtype=jnp.float32)

    out = conv_block_forward(x, w, kernel_size=K, dilation=dilation)
    out = jax.block_until_ready(out)

    # Reference check against XLA's conv (same semantics as nn.Conv3d).
    pad = K // 2 + dilation - 1
    w_oidhw = jnp.transpose(w, (4, 3, 0, 1, 2))
    ref = jax.lax.conv_general_dilated(
        x, w_oidhw,
        window_strides=(1, 1, 1),
        padding=[(pad, pad)] * 3,
        rhs_dilation=(dilation,) * 3,
        dimension_numbers=("NCDHW", "OIDHW", "NCDHW"),
    )
    ref = jnp.maximum(ref, 0.0)

    assert out.shape == (N, Cout, D, H, W), out.shape
    assert jnp.allclose(out, ref, atol=1e-4, rtol=1e-4), float(
        jnp.max(jnp.abs(out - ref)))

    print("KERNEL_OK")
</pallas_src>

<mosaic_0001>
module attributes {stable_mosaic.version = 11 : i64} {
  func.func @_conv3d_relu_kernel(%arg0: i32, %arg1: memref<1x10x10x10x4xf32, #tpu.memory_space<vmem>>, %arg2: memref<128x128xf32, #tpu.memory_space<vmem>>, %arg3: memref<1x512x128xf32, #tpu.memory_space<vmem>>, %arg4: memref<512x128xf32, #tpu.memory_space<vmem>>) attributes {dimension_semantics = [#tpu.dimension_semantics<parallel>], iteration_bounds = array<i64: 2>, scalar_prefetch = 0 : i64, scratch_operands = 1 : i64, tpu.core_type = #tpu.core_type<tc>, window_params = [{transform_indices = @transform_0, window_bounds = array<i64: 1, 10, 10, 10, 4>}, {pipeline_mode = #tpu.pipeline_mode<synchronous>, transform_indices = @transform_1, window_bounds = array<i64: 128, 128>}, {transform_indices = @transform_2, window_bounds = array<i64: 1, 512, 128>}]} {
    %cst = arith.constant 0.000000e+00 : f32
    %0 = vector.broadcast %cst : f32 to vector<512x20xf32>
    %c0 = arith.constant 0 : index
    %c108 = arith.constant 108 : index
    %1 = vector.load %arg4[%c0, %c108] : memref<512x128xf32, #tpu.memory_space<vmem>>, vector<512x20xf32>
    tpu.vector_store %arg4[%c0, %c108], %0 {strides = array<i32>} : memref<512x128xf32, #tpu.memory_space<vmem>>, vector<512x20xf32>,
    %c0_0 = arith.constant 0 : index
    %c0_1 = arith.constant 0 : index
    %c0_2 = arith.constant 0 : index
    %c0_3 = arith.constant 0 : index
    %c0_4 = arith.constant 0 : index
    %2 = vector.load %arg1[%c0_0, %c0_1, %c0_2, %c0_3, %c0_4] : memref<1x10x10x10x4xf32, #tpu.memory_space<vmem>>, vector<1x8x8x8x4xf32>
    %3 = vector.shape_cast %2 : vector<1x8x8x8x4xf32> to vector<8x8x8x4xf32>
    %4 = vector.shape_cast %3 : vector<8x8x8x4xf32> to vector<512x4xf32>
    %c0_5 = arith.constant 0 : index
    %c0_6 = arith.constant 0 : index
    %5 = vector.load %arg4[%c0_5, %c0_6] : memref<512x128xf32, #tpu.memory_space<vmem>>, vector<512x4xf32>
    tpu.vector_store %arg4[%c0_5, %c0_6], %4 {strides = array<i32>} : memref<512x128xf32, #tpu.memory_space<vmem>>, vector<512x4xf32>,
    %c0_7 = arith.constant 0 : index
    %c0_8 = arith.constant 0 : index
    %c0_9 = arith.constant 0 : index
    %c1 = arith.constant 1 : index
    %c0_10 = arith.constant 0 : index
    %6 = vector.load %arg1[%c0_7, %c0_8, %c0_9, %c1, %c0_10] : memref<1x10x10x10x4xf32, #tpu.memory_space<vmem>>, vector<1x8x8x8x4xf32>
    %7 = vector.shape_cast %6 : vector<1x8x8x8x4xf32> to vector<8x8x8x4xf32>
    %8 = vector.shape_cast %7 : vector<8x8x8x4xf32> to vector<512x4xf32>
    %c0_11 = arith.constant 0 : index
    %c4 = arith.constant 4 : index
    %9 = vector.load %arg4[%c0_11, %c4] : memref<512x128xf32, #tpu.memory_space<vmem>>, vector<512x4xf32>
    tpu.vector_store %arg4[%c0_11, %c4], %8 {strides = array<i32>} : memref<512x128xf32, #tpu.memory_space<vmem>>, vector<512x4xf32>,
    %c0_12 = arith.constant 0 : index
    %c0_13 = arith.constant 0 : index
    %c0_14 = arith.constant 0 : index
    %c2 = arith.constant 2 : index
    %c0_15 = arith.constant 0 : index
    %10 = vector.load %arg1[%c0_12, %c0_13, %c0_14, %c2, %c0_15] : memref<1x10x10x10x4xf32, #tpu.memory_space<vmem>>, vector<1x8x8x8x4xf32>
    %11 = vector.shape_cast %10 : vector<1x8x8x8x4xf32> to vector<8x8x8x4xf32>
    %12 = vector.shape_cast %11 : vector<8x8x8x4xf32> to vector<512x4xf32>
    %c0_16 = arith.constant 0 : index
    %c8 = arith.constant 8 : index
    %13 = vector.load %arg4[%c0_16, %c8] : memref<512x128xf32, #tpu.memory_space<vmem>>, vector<512x4xf32>
    tpu.vector_store %arg4[%c0_16, %c8], %12 {strides = array<i32>} : memref<512x128xf32, #tpu.memory_space<vmem>>, vector<512x4xf32>,
    %c0_17 = arith.constant 0 : index
    %c0_18 = arith.constant 0 : index
    %c1_19 = arith.constant 1 : index
    %c0_20 = arith.constant 0 : index
    %c0_21 = arith.constant 0 : index
    %14 = vector.load %arg1[%c0_17, %c0_18, %c1_19, %c0_20, %c0_21] : memref<1x10x10x10x4xf32, #tpu.memory_space<vmem>>, vector<1x8x8x8x4xf32>
    %15 = vector.shape_cast %14 : vector<1x8x8x8x4xf32> to vector<8x8x8x4xf32>
    %16 = vector.shape_cast %15 : vector<8x8x8x4xf32> to vector<512x4xf32>
    %c0_22 = arith.constant 0 : index
    %c12 = arith.constant 12 : index
    %17 = vector.load %arg4[%c0_22, %c12] : memref<512x128xf32, #tpu.memory_space<vmem>>, vector<512x4xf32>
    tpu.vector_store %arg4[%c0_22, %c12], %16 {strides = array<i32>} : memref<512x128xf32, #tpu.memory_space<vmem>>, vector<512x4xf32>,
    %c0_23 = arith.constant 0 : index
    %c0_24 = arith.constant 0 : index
    %c1_25 = arith.constant 1 : index
    %c1_26 = arith.constant 1 : index
    %c0_27 = arith.constant 0 : index
    %18 = vector.load %arg1[%c0_23, %c0_24, %c1_25, %c1_26, %c0_27] : memref<1x10x10x10x4xf32, #tpu.memory_space<vmem>>, vector<1x8x8x8x4xf32>
    %19 = vector.shape_cast %18 : vector<1x8x8x8x4xf32> to vector<8x8x8x4xf32>
    %20 = vector.shape_cast %19 : vector<8x8x8x4xf32> to vector<512x4xf32>
    %c0_28 = arith.constant 0 : index
    %c16 = arith.constant 16 : index
    %21 = vector.load %arg4[%c0_28, %c16] : memref<512x128xf32, #tpu.memory_space<vmem>>, vector<512x4xf32>
    tpu.vector_store %arg4[%c0_28, %c16], %20 {strides = array<i32>} : memref<512x128xf32, #tpu.memory_space<vmem>>, vector<512x4xf32>,
    %c0_29 = arith.constant 0 : index
    %c0_30 = arith.constant 0 : index
    %c1_31 = arith.constant 1 : index
    %c2_32 = arith.constant 2 : index
    %c0_33 = arith.constant 0 : index
    %22 = vector.load %arg1[%c0_29, %c0_30, %c1_31, %c2_32, %c0_33] : memref<1x10x10x10x4xf32, #tpu.memory_space<vmem>>, vector<1x8x8x8x4xf32>
    %23 = vector.shape_cast %22 : vector<1x8x8x8x4xf32> to vector<8x8x8x4xf32>
    %24 = vector.shape_cast %23 : vector<8x8x8x4xf32> to vector<512x4xf32>
    %c0_34 = arith.constant 0 : index
    %c20 = arith.constant 20 : index
    %25 = vector.load %arg4[%c0_34, %c20] : memref<512x128xf32, #tpu.memory_space<vmem>>, vector<512x4xf32>
    tpu.vector_store %arg4[%c0_34, %c20], %24 {strides = array<i32>} : memref<512x128xf32, #tpu.memory_space<vmem>>, vector<512x4xf32>,
    %c0_35 = arith.constant 0 : index
    %c0_36 = arith.constant 0 : index
    %c2_37 = arith.constant 2 : index
    %c0_38 = arith.constant 0 : index
    %c0_39 = arith.constant 0 : index
    %26 = vector.load %arg1[%c0_35, %c0_36, %c2_37, %c0_38, %c0_39] : memref<1x10x10x10x4xf32, #tpu.memory_space<vmem>>, vector<1x8x8x8x4xf32>
    %27 = vector.shape_cast %26 : vector<1x8x8x8x4xf32> to vector<8x8x8x4xf32>
    %28 = vector.shape_cast %27 : vector<8x8x8x4xf32> to vector<512x4xf32>
    %c0_40 = arith.constant 0 : index
    %c24 = arith.constant 24 : index
    %29 = vector.load %arg4[%c0_40, %c24] : memref<512x128xf32, #tpu.memory_space<vmem>>, vector<512x4xf32>
    tpu.vector_store %arg4[%c0_40, %c24], %28 {strides = array<i32>} : memref<512x128xf32, #tpu.memory_space<vmem>>, vector<512x4xf32>,
    %c0_41 = arith.constant 0 : index
    %c0_42 = arith.constant 0 : index
    %c2_43 = arith.constant 2 : index
    %c1_44 = arith.constant 1 : index
    %c0_45 = arith.constant 0 : index
    %30 = vector.load %arg1[%c0_41, %c0_42, %c2_43, %c1_44, %c0_45] : memref<1x10x10x10x4xf32, #tpu.memory_space<vmem>>, vector<1x8x8x8x4xf32>
    %31 = vector.shape_cast %30 : vector<1x8x8x8x4xf32> to vector<8x8x8x4xf32>
    %32 = vector.shape_cast %31 : vector<8x8x8x4xf32> to vector<512x4xf32>
    %c0_46 = arith.constant 0 : index
    %c28 = arith.constant 28 : index
    %33 = vector.load %arg4[%c0_46, %c28] : memref<512x128xf32, #tpu.memory_space<vmem>>, vector<512x4xf32>
    tpu.vector_store %arg4[%c0_46, %c28], %32 {strides = array<i32>} : memref<512x128xf32, #tpu.memory_space<vmem>>, vector<512x4xf32>,
    %c0_47 = arith.constant 0 : index
    %c0_48 = arith.constant 0 : index
    %c2_49 = arith.constant 2 : index
    %c2_50 = arith.constant 2 : index
    %c0_51 = arith.constant 0 : index
    %34 = vector.load %arg1[%c0_47, %c0_48, %c2_49, %c2_50, %c0_51] : memref<1x10x10x10x4xf32, #tpu.memory_space<vmem>>, vector<1x8x8x8x4xf32>
    %35 = vector.shape_cast %34 : vector<1x8x8x8x4xf32> to vector<8x8x8x4xf32>
    %36 = vector.shape_cast %35 : vector<8x8x8x4xf32> to vector<512x4xf32>
    %c0_52 = arith.constant 0 : index
    %c32 = arith.constant 32 : index
    %37 = vector.load %arg4[%c0_52, %c32] : memref<512x128xf32, #tpu.memory_space<vmem>>, vector<512x4xf32>
    tpu.vector_store %arg4[%c0_52, %c32], %36 {strides = array<i32>} : memref<512x128xf32, #tpu.memory_space<vmem>>, vector<512x4xf32>,
    %c0_53 = arith.constant 0 : index
    %c1_54 = arith.constant 1 : index
    %c0_55 = arith.constant 0 : index
    %c0_56 = arith.constant 0 : index
    %c0_57 = arith.constant 0 : index
    %38 = vector.load %arg1[%c0_53, %c1_54, %c0_55, %c0_56, %c0_57] : memref<1x10x10x10x4xf32, #tpu.memory_space<vmem>>, vector<1x8x8x8x4xf32>
    %39 = vector.shape_cast %38 : vector<1x8x8x8x4xf32> to vector<8x8x8x4xf32>
    %40 = vector.shape_cast %39 : vector<8x8x8x4xf32> to vector<512x4xf32>
    %c0_58 = arith.constant 0 : index
    %c36 = arith.constant 36 : index
    %41 = vector.load %arg4[%c0_58, %c36] : memref<512x128xf32, #tpu.memory_space<vmem>>, vector<512x4xf32>
    tpu.vector_store %arg4[%c0_58, %c36], %40 {strides = array<i32>} : memref<512x128xf32, #tpu.memory_space<vmem>>, vector<512x4xf32>,
    %c0_59 = arith.constant 0 : index
    %c1_60 = arith.constant 1 : index
    %c0_61 = arith.constant 0 : index
    %c1_62 = arith.constant 1 : index
    %c0_63 = arith.constant 0 : index
    %42 = vector.load %arg1[%c0_59, %c1_60, %c0_61, %c1_62, %c0_63] : memref<1x10x10x10x4xf32, #tpu.memory_space<vmem>>, vector<1x8x8x8x4xf32>
    %43 = vector.shape_cast %42 : vector<1x8x8x8x4xf32> to vector<8x8x8x4xf32>
    %44 = vector.shape_cast %43 : vector<8x8x8x4xf32> to vector<512x4xf32>
    %c0_64 = arith.constant 0 : index
    %c40 = arith.constant 40 : index
    %45 = vector.load %arg4[%c0_64, %c40] : memref<512x128xf32, #tpu.memory_space<vmem>>, vector<512x4xf32>
    tpu.vector_store %arg4[%c0_64, %c40], %44 {strides = array<i32>} : memref<512x128xf32, #tpu.memory_space<vmem>>, vector<512x4xf32>,
    %c0_65 = arith.constant 0 : index
    %c1_66 = arith.constant 1 : index
    %c0_67 = arith.constant 0 : index
    %c2_68 = arith.constant 2 : index
    %c0_69 = arith.constant 0 : index
    %46 = vector.load %arg1[%c0_65, %c1_66, %c0_67, %c2_68, %c0_69] : memref<1x10x10x10x4xf32, #tpu.memory_space<vmem>>, vector<1x8x8x8x4xf32>
    %47 = vector.shape_cast %46 : vector<1x8x8x8x4xf32> to vector<8x8x8x4xf32>
    %48 = vector.shape_cast %47 : vector<8x8x8x4xf32> to vector<512x4xf32>
    %c0_70 = arith.constant 0 : index
    %c44 = arith.constant 44 : index
    %49 = vector.load %arg4[%c0_70, %c44] : memref<512x128xf32, #tpu.memory_space<vmem>>, vector<512x4xf32>
    tpu.vector_store %arg4[%c0_70, %c44], %48 {strides = array<i32>} : memref<512x128xf32, #tpu.memory_space<vmem>>, vector<512x4xf32>,
    %c0_71 = arith.constant 0 : index
    %c1_72 = arith.constant 1 : index
    %c1_73 = arith.constant 1 : index
    %c0_74 = arith.constant 0 : index
    %c0_75 = arith.constant 0 : index
    %50 = vector.load %arg1[%c0_71, %c1_72, %c1_73, %c0_74, %c0_75] : memref<1x10x10x10x4xf32, #tpu.memory_space<vmem>>, vector<1x8x8x8x4xf32>
    %51 = vector.shape_cast %50 : vector<1x8x8x8x4xf32> to vector<8x8x8x4xf32>
    %52 = vector.shape_cast %51 : vector<8x8x8x4xf32> to vector<512x4xf32>
    %c0_76 = arith.constant 0 : index
    %c48 = arith.constant 48 : index
    %53 = vector.load %arg4[%c0_76, %c48] : memref<512x128xf32, #tpu.memory_space<vmem>>, vector<512x4xf32>
    tpu.vector_store %arg4[%c0_76, %c48], %52 {strides = array<i32>} : memref<512x128xf32, #tpu.memory_space<vmem>>, vector<512x4xf32>,
    %c0_77 = arith.constant 0 : index
    %c1_78 = arith.constant 1 : index
    %c1_79 = arith.constant 1 : index
    %c1_80 = arith.constant 1 : index
    %c0_81 = arith.constant 0 : index
    %54 = vector.load %arg1[%c0_77, %c1_78, %c1_79, %c1_80, %c0_81] : memref<1x10x10x10x4xf32, #tpu.memory_space<vmem>>, vector<1x8x8x8x4xf32>
    %55 = vector.shape_cast %54 : vector<1x8x8x8x4xf32> to vector<8x8x8x4xf32>
    %56 = vector.shape_cast %55 : vector<8x8x8x4xf32> to vector<512x4xf32>
    %c0_82 = arith.constant 0 : index
    %c52 = arith.constant 52 : index
    %57 = vector.load %arg4[%c0_82, %c52] : memref<512x128xf32, #tpu.memory_space<vmem>>, vector<512x4xf32>
    tpu.vector_store %arg4[%c0_82, %c52], %56 {strides = array<i32>} : memref<512x128xf32, #tpu.memory_space<vmem>>, vector<512x4xf32>,
    %c0_83 = arith.constant 0 : index
    %c1_84 = arith.constant 1 : index
    %c1_85 = arith.constant 1 : index
    %c2_86 = arith.constant 2 : index
    %c0_87 = arith.constant 0 : index
    %58 = vector.load %arg1[%c0_83, %c1_84, %c1_85, %c2_86, %c0_87] : memref<1x10x10x10x4xf32, #tpu.memory_space<vmem>>, vector<1x8x8x8x4xf32>
    %59 = vector.shape_cast %58 : vector<1x8x8x8x4xf32> to vector<8x8x8x4xf32>
    %60 = vector.shape_cast %59 : vector<8x8x8x4xf32> to vector<512x4xf32>
    %c0_88 = arith.constant 0 : index
    %c56 = arith.constant 56 : index
    %61 = vector.load %arg4[%c0_88, %c56] : memref<512x128xf32, #tpu.memory_space<vmem>>, vector<512x4xf32>
    tpu.vector_store %arg4[%c0_88, %c56], %60 {strides = array<i32>} : memref<512x128xf32, #tpu.memory_space<vmem>>, vector<512x4xf32>,
    %c0_89 = arith.constant 0 : index
    %c1_90 = arith.constant 1 : index
    %c2_91 = arith.constant 2 : index
    %c0_92 = arith.constant 0 : index
    %c0_93 = arith.constant 0 : index
    %62 = vector.load %arg1[%c0_89, %c1_90, %c2_91, %c0_92, %c0_93] : memref<1x10x10x10x4xf32, #tpu.memory_space<vmem>>, vector<1x8x8x8x4xf32>
    %63 = vector.shape_cast %62 : vector<1x8x8x8x4xf32> to vector<8x8x8x4xf32>
    %64 = vector.shape_cast %63 : vector<8x8x8x4xf32> to vector<512x4xf32>
    %c0_94 = arith.constant 0 : index
    %c60 = arith.constant 60 : index
    %65 = vector.load %arg4[%c0_94, %c60] : memref<512x128xf32, #tpu.memory_space<vmem>>, vector<512x4xf32>
    tpu.vector_store %arg4[%c0_94, %c60], %64 {strides = array<i32>} : memref<512x128xf32, #tpu.memory_space<vmem>>, vector<512x4xf32>,
    %c0_95 = arith.constant 0 : index
    %c1_96 = arith.constant 1 : index
    %c2_97 = arith.constant 2 : index
    %c1_98 = arith.constant 1 : index
    %c0_99 = arith.constant 0 : index
    %66 = vector.load %arg1[%c0_95, %c1_96, %c2_97, %c1_98, %c0_99] : memref<1x10x10x10x4xf32, #tpu.memory_space<vmem>>, vector<1x8x8x8x4xf32>
    %67 = vector.shape_cast %66 : vector<1x8x8x8x4xf32> to vector<8x8x8x4xf32>
    %68 = vector.shape_cast %67 : vector<8x8x8x4xf32> to vector<512x4xf32>
    %c0_100 = arith.constant 0 : index
    %c64 = arith.constant 64 : index
    %69 = vector.load %arg4[%c0_100, %c64] : memref<512x128xf32, #tpu.memory_space<vmem>>, vector<512x4xf32>
    tpu.vector_store %arg4[%c0_100, %c64], %68 {strides = array<i32>} : memref<512x128xf32, #tpu.memory_space<vmem>>, vector<512x4xf32>,
    %c0_101 = arith.constant 0 : index
    %c1_102 = arith.constant 1 : index
    %c2_103 = arith.constant 2 : index
    %c2_104 = arith.constant 2 : index
    %c0_105 = arith.constant 0 : index
    %70 = vector.load %arg1[%c0_101, %c1_102, %c2_103, %c2_104, %c0_105] : memref<1x10x10x10x4xf32, #tpu.memory_space<vmem>>, vector<1x8x8x8x4xf32>
    %71 = vector.shape_cast %70 : vector<1x8x8x8x4xf32> to vector<8x8x8x4xf32>
    %72 = vector.shape_cast %71 : vector<8x8x8x4xf32> to vector<512x4xf32>
    %c0_106 = arith.constant 0 : index
    %c68 = arith.constant 68 : index
    %73 = vector.load %arg4[%c0_106, %c68] : memref<512x128xf32, #tpu.memory_space<vmem>>, vector<512x4xf32>
    tpu.vector_store %arg4[%c0_106, %c68], %72 {strides = array<i32>} : memref<512x128xf32, #tpu.memory_space<vmem>>, vector<512x4xf32>,
    %c0_107 = arith.constant 0 : index
    %c2_108 = arith.constant 2 : index
    %c0_109 = arith.constant 0 : index
    %c0_110 = arith.constant 0 : index
    %c0_111 = arith.constant 0 : index
    %74 = vector.load %arg1[%c0_107, %c2_108, %c0_109, %c0_110, %c0_111] : memref<1x10x10x10x4xf32, #tpu.memory_space<vmem>>, vector<1x8x8x8x4xf32>
    %75 = vector.shape_cast %74 : vector<1x8x8x8x4xf32> to vector<8x8x8x4xf32>
    %76 = vector.shape_cast %75 : vector<8x8x8x4xf32> to vector<512x4xf32>
    %c0_112 = arith.constant 0 : index
    %c72 = arith.constant 72 : index
    %77 = vector.load %arg4[%c0_112, %c72] : memref<512x128xf32, #tpu.memory_space<vmem>>, vector<512x4xf32>
    tpu.vector_store %arg4[%c0_112, %c72], %76 {strides = array<i32>} : memref<512x128xf32, #tpu.memory_space<vmem>>, vector<512x4xf32>,
    %c0_113 = arith.constant 0 : index
    %c2_114 = arith.constant 2 : index
    %c0_115 = arith.constant 0 : index
    %c1_116 = arith.constant 1 : index
    %c0_117 = arith.constant 0 : index
    %78 = vector.load %arg1[%c0_113, %c2_114, %c0_115, %c1_116, %c0_117] : memref<1x10x10x10x4xf32, #tpu.memory_space<vmem>>, vector<1x8x8x8x4xf32>
    %79 = vector.shape_cast %78 : vector<1x8x8x8x4xf32> to vector<8x8x8x4xf32>
    %80 = vector.shape_cast %79 : vector<8x8x8x4xf32> to vector<512x4xf32>
    %c0_118 = arith.constant 0 : index
    %c76 = arith.constant 76 : index
    %81 = vector.load %arg4[%c0_118, %c76] : memref<512x128xf32, #tpu.memory_space<vmem>>, vector<512x4xf32>
    tpu.vector_store %arg4[%c0_118, %c76], %80 {strides = array<i32>} : memref<512x128xf32, #tpu.memory_space<vmem>>, vector<512x4xf32>,
    %c0_119 = arith.constant 0 : index
    %c2_120 = arith.constant 2 : index
    %c0_121 = arith.constant 0 : index
    %c2_122 = arith.constant 2 : index
    %c0_123 = arith.constant 0 : index
    %82 = vector.load %arg1[%c0_119, %c2_120, %c0_121, %c2_122, %c0_123] : memref<1x10x10x10x4xf32, #tpu.memory_space<vmem>>, vector<1x8x8x8x4xf32>
    %83 = vector.shape_cast %82 : vector<1x8x8x8x4xf32> to vector<8x8x8x4xf32>
    %84 = vector.shape_cast %83 : vector<8x8x8x4xf32> to vector<512x4xf32>
    %c0_124 = arith.constant 0 : index
    %c80 = arith.constant 80 : index
    %85 = vector.load %arg4[%c0_124, %c80] : memref<512x128xf32, #tpu.memory_space<vmem>>, vector<512x4xf32>
    tpu.vector_store %arg4[%c0_124, %c80], %84 {strides = array<i32>} : memref<512x128xf32, #tpu.memory_space<vmem>>, vector<512x4xf32>,
    %c0_125 = arith.constant 0 : index
    %c2_126 = arith.constant 2 : index
    %c1_127 = arith.constant 1 : index
    %c0_128 = arith.constant 0 : index
    %c0_129 = arith.constant 0 : index
    %86 = vector.load %arg1[%c0_125, %c2_126, %c1_127, %c0_128, %c0_129] : memref<1x10x10x10x4xf32, #tpu.memory_space<vmem>>, vector<1x8x8x8x4xf32>
    %87 = vector.shape_cast %86 : vector<1x8x8x8x4xf32> to vector<8x8x8x4xf32>
    %88 = vector.shape_cast %87 : vector<8x8x8x4xf32> to vector<512x4xf32>
    %c0_130 = arith.constant 0 : index
    %c84 = arith.constant 84 : index
    %89 = vector.load %arg4[%c0_130, %c84] : memref<512x128xf32, #tpu.memory_space<vmem>>, vector<512x4xf32>
    tpu.vector_store %arg4[%c0_130, %c84], %88 {strides = array<i32>} : memref<512x128xf32, #tpu.memory_space<vmem>>, vector<512x4xf32>,
    %c0_131 = arith.constant 0 : index
    %c2_132 = arith.constant 2 : index
    %c1_133 = arith.constant 1 : index
    %c1_134 = arith.constant 1 : index
    %c0_135 = arith.constant 0 : index
    %90 = vector.load %arg1[%c0_131, %c2_132, %c1_133, %c1_134, %c0_135] : memref<1x10x10x10x4xf32, #tpu.memory_space<vmem>>, vector<1x8x8x8x4xf32>
    %91 = vector.shape_cast %90 : vector<1x8x8x8x4xf32> to vector<8x8x8x4xf32>
    %92 = vector.shape_cast %91 : vector<8x8x8x4xf32> to vector<512x4xf32>
    %c0_136 = arith.constant 0 : index
    %c88 = arith.constant 88 : index
    %93 = vector.load %arg4[%c0_136, %c88] : memref<512x128xf32, #tpu.memory_space<vmem>>, vector<512x4xf32>
    tpu.vector_store %arg4[%c0_136, %c88], %92 {strides = array<i32>} : memref<512x128xf32, #tpu.memory_space<vmem>>, vector<512x4xf32>,
    %c0_137 = arith.constant 0 : index
    %c2_138 = arith.constant 2 : index
    %c1_139 = arith.constant 1 : index
    %c2_140 = arith.constant 2 : index
    %c0_141 = arith.constant 0 : index
    %94 = vector.load %arg1[%c0_137, %c2_138, %c1_139, %c2_140, %c0_141] : memref<1x10x10x10x4xf32, #tpu.memory_space<vmem>>, vector<1x8x8x8x4xf32>
    %95 = vector.shape_cast %94 : vector<1x8x8x8x4xf32> to vector<8x8x8x4xf32>
    %96 = vector.shape_cast %95 : vector<8x8x8x4xf32> to vector<512x4xf32>
    %c0_142 = arith.constant 0 : index
    %c92 = arith.constant 92 : index
    %97 = vector.load %arg4[%c0_142, %c92] : memref<512x128xf32, #tpu.memory_space<vmem>>, vector<512x4xf32>
    tpu.vector_store %arg4[%c0_142, %c92], %96 {strides = array<i32>} : memref<512x128xf32, #tpu.memory_space<vmem>>, vector<512x4xf32>,
    %c0_143 = arith.constant 0 : index
    %c2_144 = arith.constant 2 : index
    %c2_145 = arith.constant 2 : index
    %c0_146 = arith.constant 0 : index
    %c0_147 = arith.constant 0 : index
    %98 = vector.load %arg1[%c0_143, %c2_144, %c2_145, %c0_146, %c0_147] : memref<1x10x10x10x4xf32, #tpu.memory_space<vmem>>, vector<1x8x8x8x4xf32>
    %99 = vector.shape_cast %98 : vector<1x8x8x8x4xf32> to vector<8x8x8x4xf32>
    %100 = vector.shape_cast %99 : vector<8x8x8x4xf32> to vector<512x4xf32>
    %c0_148 = arith.constant 0 : index
    %c96 = arith.constant 96 : index
    %101 = vector.load %arg4[%c0_148, %c96] : memref<512x128xf32, #tpu.memory_space<vmem>>, vector<512x4xf32>
    tpu.vector_store %arg4[%c0_148, %c96], %100 {strides = array<i32>} : memref<512x128xf32, #tpu.memory_space<vmem>>, vector<512x4xf32>,
    %c0_149 = arith.constant 0 : index
    %c2_150 = arith.constant 2 : index
    %c2_151 = arith.constant 2 : index
    %c1_152 = arith.constant 1 : index
    %c0_153 = arith.constant 0 : index
    %102 = vector.load %arg1[%c0_149, %c2_150, %c2_151, %c1_152, %c0_153] : memref<1x10x10x10x4xf32, #tpu.memory_space<vmem>>, vector<1x8x8x8x4xf32>
    %103 = vector.shape_cast %102 : vector<1x8x8x8x4xf32> to vector<8x8x8x4xf32>
    %104 = vector.shape_cast %103 : vector<8x8x8x4xf32> to vector<512x4xf32>
    %c0_154 = arith.constant 0 : index
    %c100 = arith.constant 100 : index
    %105 = vector.load %arg4[%c0_154, %c100] : memref<512x128xf32, #tpu.memory_space<vmem>>, vector<512x4xf32>
    tpu.vector_store %arg4[%c0_154, %c100], %104 {strides = array<i32>} : memref<512x128xf32, #tpu.memory_space<vmem>>, vector<512x4xf32>,
    %c0_155 = arith.constant 0 : index
    %c2_156 = arith.constant 2 : index
    %c2_157 = arith.constant 2 : index
    %c2_158 = arith.constant 2 : index
    %c0_159 = arith.constant 0 : index
    %106 = vector.load %arg1[%c0_155, %c2_156, %c2_157, %c2_158, %c0_159] : memref<1x10x10x10x4xf32, #tpu.memory_space<vmem>>, vector<1x8x8x8x4xf32>
    %107 = vector.shape_cast %106 : vector<1x8x8x8x4xf32> to vector<8x8x8x4xf32>
    %108 = vector.shape_cast %107 : vector<8x8x8x4xf32> to vector<512x4xf32>
    %c0_160 = arith.constant 0 : index
    %c104 = arith.constant 104 : index
    %109 = vector.load %arg4[%c0_160, %c104] : memref<512x128xf32, #tpu.memory_space<vmem>>, vector<512x4xf32>
    tpu.vector_store %arg4[%c0_160, %c104], %108 {strides = array<i32>} : memref<512x128xf32, #tpu.memory_space<vmem>>, vector<512x4xf32>,
    %c0_161 = arith.constant 0 : index
    %c0_162 = arith.constant 0 : index
    %110 = vector.load %arg4[%c0_161, %c0_162] : memref<512x128xf32, #tpu.memory_space<vmem>>, vector<512x128xf32>
    %c0_163 = arith.constant 0 : index
    %c0_164 = arith.constant 0 : index
    %111 = vector.load %arg2[%c0_163, %c0_164] : memref<128x128xf32, #tpu.memory_space<vmem>>, vector<128x128xf32>
    %cst_165 = arith.constant dense<0.000000e+00> : vector<512x128xf32>
    %112 = tpu.matmul %110, %111, %cst_165 {dimension_numbers = #tpu.dot_dimension_numbers<[1], [0], [0], [1], [0, 0, 1, 1], [], []>} : vector<512x128xf32>, vector<128x128xf32>, vector<512x128xf32> -> vector<512x128xf32>
    %cst_166 = arith.constant 0.000000e+00 : f32
    %113 = vector.broadcast %cst_166 : f32 to vector<512x128xf32>
    %114 = arith.maximumf %112, %113 : vector<512x128xf32>
    %c0_167 = arith.constant 0 : index
    %c0_168 = arith.constant 0 : index
    %c0_169 = arith.constant 0 : index
    %115 = vector.load %arg3[%c0_167, %c0_168, %c0_169] : memref<1x512x128xf32, #tpu.memory_space<vmem>>, vector<1x512x128xf32>
    %116 = vector.shape_cast %115 : vector<1x512x128xf32> to vector<512x128xf32>
    %117 = vector.shape_cast %114 : vector<512x128xf32> to vector<1x512x128xf32>
    tpu.vector_store %arg3[%c0_167, %c0_168, %c0_169], %117 {strides = array<i32>} : memref<1x512x128xf32, #tpu.memory_space<vmem>>, vector<1x512x128xf32>,
    return
  }
  func.func @transform_0(%arg0: i32) -> (i32, i32, i32, i32, i32) {
    %c0_i32 = arith.constant 0 : i32
    %c0_i32_0 = arith.constant 0 : i32
    %c0_i32_1 = arith.constant 0 : i32
    %c0_i32_2 = arith.constant 0 : i32
    %c0_i32_3 = arith.constant 0 : i32
    return %arg0, %c0_i32, %c0_i32_0, %c0_i32_1, %c0_i32_2 : i32, i32, i32, i32, i32
  }
  func.func @transform_1(%arg0: i32) -> (i32, i32) {
    %c0_i32 = arith.constant 0 : i32
    %c0_i32_0 = arith.constant 0 : i32
    %c0_i32_1 = arith.constant 0 : i32
    return %c0_i32, %c0_i32_0 : i32, i32
  }
  func.func @transform_2(%arg0: i32) -> (i32, i32, i32) {
    %c0_i32 = arith.constant 0 : i32
    %c0_i32_0 = arith.constant 0 : i32
    %c0_i32_1 = arith.constant 0 : i32
    return %arg0, %c0_i32, %c0_i32_0 : i32, i32, i32
  }
}

</mosaic_0001>

<llo_original>
// kernel: tpu_custom_call.1
$region0: #{tpu_custom_call.1}
  #allocation0 [shape = 'u32[]', space=smem, size = 0x4, offset = 0x4, fixed_abs, tag = 'smem constant byte address 0x4 - core index']
  #allocation1 [shape = 'u32[144,128]{1,0:T(1,128)}', space=vmem, size = 0x12000, scoped, tag = 'internal scratch']
  #allocation2 [shape = 'f32[512,128]{1,0:T(8,128)}', space=vmem, size = 0x40000, scoped, tag = 'scratch operand']
  %s0 = inlined_call_operand.vmem [shape: f32[2,10,10,10,4], index: 0, kind: input, shape index: {}]
  %s1 = inlined_call_operand.vmem [shape: f32[128,128], index: 1, kind: input, shape index: {}]
  %s2 = inlined_call_operand.hbm [shape: f32[2,512,128], index: 2, kind: output, shape index: {}]
  %s3 = sld [smem:[#allocation0]]
  $region41: #{tpu_custom_call.1} parent=0
    _
  %s5 = ssub.s32 1, %s3
  %s6 = scalar_select 0, %s5, %s3
  $region1: #{tpu_custom_call.1} parent=0
    #allocation3 [shape = 'u8[524288]{0}', space=vmem, size = 0x80000, scoped, tag = 'output window, operand 0']
    #allocation4 [shape = 's32[2]{0}', space=sflag, size = 0x8, scoped, tag = 'scoped memory for tpu_custom_call.1']
    %7 = vsyncpa [#allocation4], 0
    %s8 = scalar_lea.sflag [#allocation4], 1
    %9 = vsyncpa %s8, 0
    loop: start=0, step=1, limit=4
    $region2: #{tpu_custom_call.1} parent=1 // loop_pre_header
      _
    $region3: #{tpu_custom_call.1} parent=1 // loop_header
      %s11 = sphi 0, %s15
      %p12 = scmp.ge.s32.totalorder %s11, 4
      %s21 = sphi 0, %s23
      %s24 = sphi 0, %s21
      %s25 = sphi 0, %s24
      %s41 = sphi 0, %s25
      %s45 = sphi 0, %s45
      %s47 = sphi 0, %s45
      %s48 = sphi 0, %s47
      %s62 = sphi 0, %s48
      %s68 = sphi 0, %s70
      %s71 = sphi 0, %s68
      %s72 = sphi 0, %s71
      %s88 = sphi 0, %s72
    $region4: #{tpu_custom_call.1} parent=1 // loop_header_branch
      %14 = sbr.rel (%p12) target = $region8
    $region5: #{tpu_custom_call.1} parent=1 // loop_body
      %s16 = ssub.s32 %s11, 1
      %s17 = ssub.s32 %s11, 2
      %s18 = sadd.s32 %s11, 1
      %s19 = ssub.s32 %s11, %s18
      %p20 = scmp.eq.s32.totalorder %s19, 0
      %s22 = sadd.s32 %s21, 1
      %s23 = scalar_select %p20, %s21, %s22
      %p26 = pneg %p20
      %p27 = scmp.eq.s32.totalorder %s11, 1
      %p28 = por %p26, %p27
      %p29 = scmp.ne.s32.totalorder %s21, %s24
      %p30 = scmp.eq.s32.totalorder %s11, 0
      %p31 = por %p29, %p30
      %p32 = scmp.ne.s32.totalorder %s21, %s24
      %p33 = scmp.eq.s32.totalorder %s16, 1
      %p34 = por %p32, %p33
      %p35 = scmp.ne.s32.totalorder %s24, %s25
      %p36 = scmp.eq.s32.totalorder %s16, 0
      %p37 = por %p35, %p36
      %p38 = scmp.ne.s32.totalorder %s24, %s25
      %p39 = scmp.eq.s32.totalorder %s17, 1
      %p40 = por %p38, %p39
      %p42 = scmp.ne.s32.totalorder %s25, %s41
      %p43 = scmp.eq.s32.totalorder %s17, 0
      %p44 = por %p42, %p43
      %s46 = sadd.s32 %s45, 1
      %p49 = scmp.eq.s32.totalorder %s11, 1
      %p50 = scmp.ne.s32.totalorder %s45, %s47
      %p51 = scmp.eq.s32.totalorder %s11, 0
      %p52 = por %p50, %p51
      %p53 = scmp.ne.s32.totalorder %s45, %s47
      %p54 = scmp.eq.s32.totalorder %s16, 1
      %p55 = por %p53, %p54
      %p56 = scmp.ne.s32.totalorder %s47, %s48
      %p57 = scmp.eq.s32.totalorder %s16, 0
      %p58 = por %p56, %p57
      %p59 = scmp.ne.s32.totalorder %s47, %s48
      %p60 = scmp.eq.s32.totalorder %s17, 1
      %p61 = por %p59, %p60
      %p63 = scmp.ne.s32.totalorder %s48, %s62
      %p64 = scmp.eq.s32.totalorder %s17, 0
      %p65 = por %p63, %p64
      %s66 = ssub.s32 %s11, %s18
      %p67 = scmp.eq.s32.totalorder %s66, 0
      %s69 = sadd.s32 %s68, 1
      %s70 = scalar_select %p67, %s68, %s69
      %p73 = pneg %p67
      %p74 = scmp.eq.s32.totalorder %s11, 1
      %p75 = por %p73, %p74
      %p76 = scmp.ne.s32.totalorder %s68, %s71
      %p77 = scmp.eq.s32.totalorder %s11, 0
      %p78 = por %p76, %p77
      %p79 = scmp.ne.s32.totalorder %s68, %s71
      %p80 = scmp.eq.s32.totalorder %s16, 1
      %p81 = por %p79, %p80
      %p82 = scmp.ne.s32.totalorder %s71, %s72
      %p83 = scmp.eq.s32.totalorder %s16, 0
      %p84 = por %p82, %p83
      %p85 = scmp.ne.s32.totalorder %s71, %s72
      %p86 = scmp.eq.s32.totalorder %s17, 1
      %p87 = por %p85, %p86
      %p89 = scmp.ne.s32.totalorder %s72, %s88
      %p90 = scmp.eq.s32.totalorder %s17, 0
      %p91 = por %p89, %p90
      %p92 = scmp.le.s32.totalorder 1, %s11
      %p93 = scmp.lt.s32.totalorder %s11, 3
      %p94 = pnand %p92, %p93
      %p95 = pneg %p94
      // Predicated region
      $region9: #{tpu_custom_call.1} parent=5 // pred_check
        _
      $region10: #{tpu_custom_call.1} parent=5 // pred_check_branch
        %97 = sbr.rel (%p94) target = $region12
      $region11: #{tpu_custom_call.1} parent=5 // pred_region
        %s98 = ssub.s32 %s11, 1
        // Predicated region
        $region13: #{tpu_custom_call.1} parent=11 // pred_check
          %p99 = pneg %p58
        $region14: #{tpu_custom_call.1} parent=11 // pred_check_branch
          %101 = sbr.rel (%p99) target = $region16
        $region15: #{tpu_custom_call.1} parent=11 // pred_region
          _
        $region16: #{tpu_custom_call.1} parent=11 // pred_fallthru
          _
      $region12: #{tpu_custom_call.1} parent=5 // pred_fallthru
        _
      %p102 = scmp.lt.s32.totalorder %s11, 2
      // Predicated region
      $region17: #{tpu_custom_call.1} parent=5 // pred_check
        %p103 = pneg %p102
      $region18: #{tpu_custom_call.1} parent=5 // pred_check_branch
        %105 = sbr.rel (%p103) target = $region20
      $region19: #{tpu_custom_call.1} parent=5 // pred_region
        // Predicated region
        $region21: #{tpu_custom_call.1} parent=19 // pred_check
          %p106 = pneg %p31
        $region22: #{tpu_custom_call.1} parent=19 // pred_check_branch
          %108 = sbr.rel (%p106) target = $region24
        $region23: #{tpu_custom_call.1} parent=19 // pred_region
          %p109 = scmp.lt.s32.totalorder %s11, 1
          %s110 = scalar_select %p109, %s11, 1
          %s111 = smul.addr %s110, 200
          %s112 = smul.addr %s111, 8
          %s113 = scalar_lea.vmem %s0, %s112
        $region24: #{tpu_custom_call.1} parent=19 // pred_fallthru
          _
      $region20: #{tpu_custom_call.1} parent=5 // pred_fallthru
        _
      %p114 = scmp.le.s32.totalorder 1, %s11
      %p115 = scmp.lt.s32.totalorder %s11, 3
      %p116 = pnand %p114, %p115
      %p117 = pneg %p116
      // Predicated region
      $region25: #{tpu_custom_call.1} parent=5 // pred_check
        _
      $region26: #{tpu_custom_call.1} parent=5 // pred_check_branch
        %119 = sbr.rel (%p116) target = $region28
      $region27: #{tpu_custom_call.1} parent=5 // pred_region
        %s120 = ssub.s32 %s11, 1
        %p121 = scmp.lt.s32.totalorder %s16, 1
        %s122 = scalar_select %p121, %s16, 1
        %s123 = smul.addr %s122, 200
        %s124 = smul.addr %s123, 8
        %s125 = scalar_lea.vmem %s0, %s124
        %p126 = pneg %p37
        %p127 = pneg %p34
        %p128 = pneg %p58
        %p129 = pneg %p55
        %p130 = pneg %p84
        %p131 = pneg %p81
        %s132 = sand.u32 %s71, 1
        %s133 = scalar_lea.sflag [#allocation4], %s132
        %s134 = sand.u32 %s71, 1
        %s135 = smul.addr %s134, 512
        %s136 = scalar_lea.vmem [#allocation3], %s135
        %p137 = scmp.lt.s32.totalorder %s16, 1
        %s138 = scalar_select %p137, %s16, 1
        %s139 = smul.addr %s138, 200
        %s140 = smul.addr %s139, 8
        %s141 = scalar_lea.vmem %s0, %s140
        %vm142 = vcmask 1048416
        %143 = vst.msk [vmem:[#allocation2] sm:$0xff] %vm142, 0.0
        %144 = vst.msk [vmem:[#allocation2 + $0x8] sm:$0xff] %vm142, 0.0
        %145 = vst.msk [vmem:[#allocation2 + $0x10] sm:$0xff] %vm142, 0.0
        %146 = vst.msk [vmem:[#allocation2 + $0x18] sm:$0xff] %vm142, 0.0
        %147 = vst.msk [vmem:[#allocation2 + $0x20] sm:$0xff] %vm142, 0.0
        %148 = vst.msk [vmem:[#allocation2 + $0x28] sm:$0xff] %vm142, 0.0
        %149 = vst.msk [vmem:[#allocation2 + $0x30] sm:$0xff] %vm142, 0.0
        %150 = vst.msk [vmem:[#allocation2 + $0x38] sm:$0xff] %vm142, 0.0
        %151 = vst.msk [vmem:[#allocation2 + $0x40] sm:$0xff] %vm142, 0.0
        %152 = vst.msk [vmem:[#allocation2 + $0x48] sm:$0xff] %vm142, 0.0
        %153 = vst.msk [vmem:[#allocation2 + $0x50] sm:$0xff] %vm142, 0.0
        %154 = vst.msk [vmem:[#allocation2 + $0x58] sm:$0xff] %vm142, 0.0
        %155 = vst.msk [vmem:[#allocation2 + $0x60] sm:$0xff] %vm142, 0.0
        %156 = vst.msk [vmem:[#allocation2 + $0x68] sm:$0xff] %vm142, 0.0
        %157 = vst.msk [vmem:[#allocation2 + $0x70] sm:$0xff] %vm142, 0.0
        %158 = vst.msk [vmem:[#allocation2 + $0x78] sm:$0xff] %vm142, 0.0
        %159 = vst.msk [vmem:[#allocation2 + $0x80] sm:$0xff] %vm142, 0.0
        %160 = vst.msk [vmem:[#allocation2 + $0x88] sm:$0xff] %vm142, 0.0
        %161 = vst.msk [vmem:[#allocation2 + $0x90] sm:$0xff] %vm142, 0.0
        %162 = vst.msk [vmem:[#allocation2 + $0x98] sm:$0xff] %vm142, 0.0
        %163 = vst.msk [vmem:[#allocation2 + $0xa0] sm:$0xff] %vm142, 0.0
        %164 = vst.msk [vmem:[#allocation2 + $0xa8] sm:$0xff] %vm142, 0.0
        %165 = vst.msk [vmem:[#allocation2 + $0xb0] sm:$0xff] %vm142, 0.0
        %166 = vst.msk [vmem:[#allocation2 + $0xb8] sm:$0xff] %vm142, 0.0
        %167 = vst.msk [vmem:[#allocation2 + $0xc0] sm:$0xff] %vm142, 0.0
        %168 = vst.msk [vmem:[#allocation2 + $0xc8] sm:$0xff] %vm142, 0.0
        %169 = vst.msk [vmem:[#allocation2 + $0xd0] sm:$0xff] %vm142, 0.0
        %170 = vst.msk [vmem:[#allocation2 + $0xd8] sm:$0xff] %vm142, 0.0
        %171 = vst.msk [vmem:[#allocation2 + $0xe0] sm:$0xff] %vm142, 0.0
        %172 = vst.msk [vmem:[#allocation2 + $0xe8] sm:$0xff] %vm142, 0.0
        %173 = vst.msk [vmem:[#allocation2 + $0xf0] sm:$0xff] %vm142, 0.0
        %174 = vst.msk [vmem:[#allocation2 + $0xf8] sm:$0xff] %vm142, 0.0
        %175 = vst.msk [vmem:[#allocation2 + $0x100] sm:$0xff] %vm142, 0.0
        %176 = vst.msk [vmem:[#allocation2 + $0x108] sm:$0xff] %vm142, 0.0
        %177 = vst.msk [vmem:[#allocation2 + $0x110] sm:$0xff] %vm142, 0.0
        %178 = vst.msk [vmem:[#allocation2 + $0x118] sm:$0xff] %vm142, 0.0
        %179 = vst.msk [vmem:[#allocation2 + $0x120] sm:$0xff] %vm142, 0.0
        %180 = vst.msk [vmem:[#allocation2 + $0x128] sm:$0xff] %vm142, 0.0
        %181 = vst.msk [vmem:[#allocation2 + $0x130] sm:$0xff] %vm142, 0.0
        %182 = vst.msk [vmem:[#allocation2 + $0x138] sm:$0xff] %vm142, 0.0
        %183 = vst.msk [vmem:[#allocation2 + $0x140] sm:$0xff] %vm142, 0.0
        %184 = vst.msk [vmem:[#allocation2 + $0x148] sm:$0xff] %vm142, 0.0
        %185 = vst.msk [vmem:[#allocation2 + $0x150] sm:$0xff] %vm142, 0.0
        %186 = vst.msk [vmem:[#allocation2 + $0x158] sm:$0xff] %vm142, 0.0
        %187 = vst.msk [vmem:[#allocation2 + $0x160] sm:$0xff] %vm142, 0.0
        %188 = vst.msk [vmem:[#allocation2 + $0x168] sm:$0xff] %vm142, 0.0
        %189 = vst.msk [vmem:[#allocation2 + $0x170] sm:$0xff] %vm142, 0.0
        %190 = vst.msk [vmem:[#allocation2 + $0x178] sm:$0xff] %vm142, 0.0
        %191 = vst.msk [vmem:[#allocation2 + $0x180] sm:$0xff] %vm142, 0.0
        %192 = vst.msk [vmem:[#allocation2 + $0x188] sm:$0xff] %vm142, 0.0
        %193 = vst.msk [vmem:[#allocation2 + $0x190] sm:$0xff] %vm142, 0.0
        %194 = vst.msk [vmem:[#allocation2 + $0x198] sm:$0xff] %vm142, 0.0
        %195 = vst.msk [vmem:[#allocation2 + $0x1a0] sm:$0xff] %vm142, 0.0
        %196 = vst.msk [vmem:[#allocation2 + $0x1a8] sm:$0xff] %vm142, 0.0
        %197 = vst.msk [vmem:[#allocation2 + $0x1b0] sm:$0xff] %vm142, 0.0
        %198 = vst.msk [vmem:[#allocation2 + $0x1b8] sm:$0xff] %vm142, 0.0
        %199 = vst.msk [vmem:[#allocation2 + $0x1c0] sm:$0xff] %vm142, 0.0
        %200 = vst.msk [vmem:[#allocation2 + $0x1c8] sm:$0xff] %vm142, 0.0
        %201 = vst.msk [vmem:[#allocation2 + $0x1d0] sm:$0xff] %vm142, 0.0
        %202 = vst.msk [vmem:[#allocation2 + $0x1d8] sm:$0xff] %vm142, 0.0
        %203 = vst.msk [vmem:[#allocation2 + $0x1e0] sm:$0xff] %vm142, 0.0
        %204 = vst.msk [vmem:[#allocation2 + $0x1e8] sm:$0xff] %vm142, 0.0
        %205 = vst.msk [vmem:[#allocation2 + $0x1f0] sm:$0xff] %vm142, 0.0
        %206 = vst.msk [vmem:[#allocation2 + $0x1f8] sm:$0xff] %vm142, 0.0
        %v207 = vld [vmem:[%s141] sm:$0xff]
        %v208 = vld [vmem:[%s141 + $0x10] sm:$0xff]
        %v209 = vld [vmem:[%s141 + $0x20] sm:$0xff]
        %v210 = vld [vmem:[%s141 + $0x30] sm:$0xff]
        %v211 = vld [vmem:[%s141 + $0x40] sm:$0xff]
        %v212 = vld [vmem:[%s141 + $0x50] sm:$0xff]
        %v213 = vld [vmem:[%s141 + $0x60] sm:$0xff]
        %v214 = vld [vmem:[%s141 + $0x70] sm:$0xff]
        %v215 = vld [vmem:[%s141 + $0xa0] sm:$0xff]
        %v216 = vld [vmem:[%s141 + $0xb0] sm:$0xff]
        %v217 = vld [vmem:[%s141 + $0xc0] sm:$0xff]
        %v218 = vld [vmem:[%s141 + $0xd0] sm:$0xff]
        %v219 = vld [vmem:[%s141 + $0xe0] sm:$0xff]
        %v220 = vld [vmem:[%s141 + $0xf0] sm:$0xff]
        %v221 = vld [vmem:[%s141 + $0x100] sm:$0xff]
        %v222 = vld [vmem:[%s141 + $0x110] sm:$0xff]
        %v223 = vld [vmem:[%s141 + $0x140] sm:$0xff]
        %v224 = vld [vmem:[%s141 + $0x150] sm:$0xff]
        %v225 = vld [vmem:[%s141 + $0x160] sm:$0xff]
        %v226 = vld [vmem:[%s141 + $0x170] sm:$0xff]
        %v227 = vld [vmem:[%s141 + $0x180] sm:$0xff]
        %v228 = vld [vmem:[%s141 + $0x190] sm:$0xff]
        %v229 = vld [vmem:[%s141 + $0x1a0] sm:$0xff]
        %v230 = vld [vmem:[%s141 + $0x1b0] sm:$0xff]
        %v231 = vld [vmem:[%s141 + $0x1e0] sm:$0xff]
        %v232 = vld [vmem:[%s141 + $0x1f0] sm:$0xff]
        %v233 = vld [vmem:[%s141 + $0x200] sm:$0xff]
        %v234 = vld [vmem:[%s141 + $0x210] sm:$0xff]
        %v235 = vld [vmem:[%s141 + $0x220] sm:$0xff]
        %v236 = vld [vmem:[%s141 + $0x230] sm:$0xff]
        %v237 = vld [vmem:[%s141 + $0x240] sm:$0xff]
        %v238 = vld [vmem:[%s141 + $0x250] sm:$0xff]
        %v239 = vld [vmem:[%s141 + $0x280] sm:$0xff]
        %v240 = vld [vmem:[%s141 + $0x290] sm:$0xff]
        %v241 = vld [vmem:[%s141 + $0x2a0] sm:$0xff]
        %v242 = vld [vmem:[%s141 + $0x2b0] sm:$0xff]
        %v243 = vld [vmem:[%s141 + $0x2c0] sm:$0xff]
        %v244 = vld [vmem:[%s141 + $0x2d0] sm:$0xff]
        %v245 = vld [vmem:[%s141 + $0x2e0] sm:$0xff]
        %v246 = vld [vmem:[%s141 + $0x2f0] sm:$0xff]
        %v247 = vld [vmem:[%s141 + $0x320] sm:$0xff]
        %v248 = vld [vmem:[%s141 + $0x330] sm:$0xff]
        %v249 = vld [vmem:[%s141 + $0x340] sm:$0xff]
        %v250 = vld [vmem:[%s141 + $0x350] sm:$0xff]
        %v251 = vld [vmem:[%s141 + $0x360] sm:$0xff]
        %v252 = vld [vmem:[%s141 + $0x370] sm:$0xff]
        %v253 = vld [vmem:[%s141 + $0x380] sm:$0xff]
        %v254 = vld [vmem:[%s141 + $0x390] sm:$0xff]
        %v255 = vld [vmem:[%s141 + $0x3c0] sm:$0xff]
        %v256 = vld [vmem:[%s141 + $0x3d0] sm:$0xff]
        %v257 = vld [vmem:[%s141 + $0x3e0] sm:$0xff]
        %v258 = vld [vmem:[%s141 + $0x3f0] sm:$0xff]
        %v259 = vld [vmem:[%s141 + $0x400] sm:$0xff]
        %v260 = vld [vmem:[%s141 + $0x410] sm:$0xff]
        %v261 = vld [vmem:[%s141 + $0x420] sm:$0xff]
        %v262 = vld [vmem:[%s141 + $0x430] sm:$0xff]
        %v263 = vld [vmem:[%s141 + $0x460] sm:$0xff]
        %v264 = vld [vmem:[%s141 + $0x470] sm:$0xff]
        %v265 = vld [vmem:[%s141 + $0x480] sm:$0xff]
        %v266 = vld [vmem:[%s141 + $0x490] sm:$0xff]
        %v267 = vld [vmem:[%s141 + $0x4a0] sm:$0xff]
        %v268 = vld [vmem:[%s141 + $0x4b0] sm:$0xff]
        %v269 = vld [vmem:[%s141 + $0x4c0] sm:$0xff]
        %v270 = vld [vmem:[%s141 + $0x4d0] sm:$0xff]
        %vm271 = vcmask 31744
        %272 = vst.msk [vmem:[#allocation2] sm:$0xff] %vm271, %v207
        %273 = vst.msk [vmem:[#allocation2 + $0x8] sm:$0xff] %vm271, %v208
        %274 = vst.msk [vmem:[#allocation2 + $0x10] sm:$0xff] %vm271, %v209
        %275 = vst.msk [vmem:[#allocation2 + $0x18] sm:$0xff] %vm271, %v210
        %276 = vst.msk [vmem:[#allocation2 + $0x20] sm:$0xff] %vm271, %v211
        %277 = vst.msk [vmem:[#allocation2 + $0x28] sm:$0xff] %vm271, %v212
        %278 = vst.msk [vmem:[#allocation2 + $0x30] sm:$0xff] %vm271, %v213
        %279 = vst.msk [vmem:[#allocation2 + $0x38] sm:$0xff] %vm271, %v214
        %280 = vst.msk [vmem:[#allocation2 + $0x40] sm:$0xff] %vm271, %v215
        %281 = vst.msk [vmem:[#allocation2 + $0x48] sm:$0xff] %vm271, %v216
        %282 = vst.msk [vmem:[#allocation2 + $0x50] sm:$0xff] %vm271, %v217
        %283 = vst.msk [vmem:[#allocation2 + $0x58] sm:$0xff] %vm271, %v218
        %284 = vst.msk [vmem:[#allocation2 + $0x60] sm:$0xff] %vm271, %v219
        %285 = vst.msk [vmem:[#allocation2 + $0x68] sm:$0xff] %vm271, %v220
        %286 = vst.msk [vmem:[#allocation2 + $0x70] sm:$0xff] %vm271, %v221
        %287 = vst.msk [vmem:[#allocation2 + $0x78] sm:$0xff] %vm271, %v222
        %288 = vst.msk [vmem:[#allocation2 + $0x80] sm:$0xff] %vm271, %v223
        %289 = vst.msk [vmem:[#allocation2 + $0x88] sm:$0xff] %vm271, %v224
        %290 = vst.msk [vmem:[#allocation2 + $0x90] sm:$0xff] %vm271, %v225
        %291 = vst.msk [vmem:[#allocation2 + $0x98] sm:$0xff] %vm271, %v226
        %292 = vst.msk [vmem:[#allocation2 + $0xa0] sm:$0xff] %vm271, %v227
        %293 = vst.msk [vmem:[#allocation2 + $0xa8] sm:$0xff] %vm271, %v228
        %294 = vst.msk [vmem:[#allocation2 + $0xb0] sm:$0xff] %vm271, %v229
        %295 = vst.msk [vmem:[#allocation2 + $0xb8] sm:$0xff] %vm271, %v230
        %296 = vst.msk [vmem:[#allocation2 + $0xc0] sm:$0xff] %vm271, %v231
        %297 = vst.msk [vmem:[#allocation2 + $0xc8] sm:$0xff] %vm271, %v232
        %298 = vst.msk [vmem:[#allocation2 + $0xd0] sm:$0xff] %vm271, %v233
        %299 = vst.msk [vmem:[#allocation2 + $0xd8] sm:$0xff] %vm271, %v234
        %300 = vst.msk [vmem:[#allocation2 + $0xe0] sm:$0xff] %vm271, %v235
        %301 = vst.msk [vmem:[#allocation2 + $0xe8] sm:$0xff] %vm271, %v236
        %302 = vst.msk [vmem:[#allocation2 + $0xf0] sm:$0xff] %vm271, %v237
        %303 = vst.msk [vmem:[#allocation2 + $0xf8] sm:$0xff] %vm271, %v238
        %304 = vst.msk [vmem:[#allocation2 + $0x100] sm:$0xff] %vm271, %v239
        %305 = vst.msk [vmem:[#allocation2 + $0x108] sm:$0xff] %vm271, %v240
        %306 = vst.msk [vmem:[#allocation2 + $0x110] sm:$0xff] %vm271, %v241
        %307 = vst.msk [vmem:[#allocation2 + $0x118] sm:$0xff] %vm271, %v242
        %308 = vst.msk [vmem:[#allocation2 + $0x120] sm:$0xff] %vm271, %v243
        %309 = vst.msk [vmem:[#allocation2 + $0x128] sm:$0xff] %vm271, %v244
        %310 = vst.msk [vmem:[#allocation2 + $0x130] sm:$0xff] %vm271, %v245
        %311 = vst.msk [vmem:[#allocation2 + $0x138] sm:$0xff] %vm271, %v246
        %312 = vst.msk [vmem:[#allocation2 + $0x140] sm:$0xff] %vm271, %v247
        %313 = vst.msk [vmem:[#allocation2 + $0x148] sm:$0xff] %vm271, %v248
        %314 = vst.msk [vmem:[#allocation2 + $0x150] sm:$0xff] %vm271, %v249
        %315 = vst.msk [vmem:[#allocation2 + $0x158] sm:$0xff] %vm271, %v250
        %316 = vst.msk [vmem:[#allocation2 + $0x160] sm:$0xff] %vm271, %v251
        %317 = vst.msk [vmem:[#allocation2 + $0x168] sm:$0xff] %vm271, %v252
        %318 = vst.msk [vmem:[#allocation2 + $0x170] sm:$0xff] %vm271, %v253
        %319 = vst.msk [vmem:[#allocation2 + $0x178] sm:$0xff] %vm271, %v254
        %320 = vst.msk [vmem:[#allocation2 + $0x180] sm:$0xff] %vm271, %v255
        %321 = vst.msk [vmem:[#allocation2 + $0x188] sm:$0xff] %vm271, %v256
        %322 = vst.msk [vmem:[#allocation2 + $0x190] sm:$0xff] %vm271, %v257
        %323 = vst.msk [vmem:[#allocation2 + $0x198] sm:$0xff] %vm271, %v258
        %324 = vst.msk [vmem:[#allocation2 + $0x1a0] sm:$0xff] %vm271, %v259
        %325 = vst.msk [vmem:[#allocation2 + $0x1a8] sm:$0xff] %vm271, %v260
        %326 = vst.msk [vmem:[#allocation2 + $0x1b0] sm:$0xff] %vm271, %v261
        %327 = vst.msk [vmem:[#allocation2 + $0x1b8] sm:$0xff] %vm271, %v262
        %328 = vst.msk [vmem:[#allocation2 + $0x1c0] sm:$0xff] %vm271, %v263
        %329 = vst.msk [vmem:[#allocation2 + $0x1c8] sm:$0xff] %vm271, %v264
        %330 = vst.msk [vmem:[#allocation2 + $0x1d0] sm:$0xff] %vm271, %v265
        %331 = vst.msk [vmem:[#allocation2 + $0x1d8] sm:$0xff] %vm271, %v266
        %332 = vst.msk [vmem:[#allocation2 + $0x1e0] sm:$0xff] %vm271, %v267
        %333 = vst.msk [vmem:[#allocation2 + $0x1e8] sm:$0xff] %vm271, %v268
        %334 = vst.msk [vmem:[#allocation2 + $0x1f0] sm:$0xff] %vm271, %v269
        %335 = vst.msk [vmem:[#allocation2 + $0x1f8] sm:$0xff] %vm271, %v270
        %v336 = vld [vmem:[%s141 + $0x1] sm:$0xff]
        %v337 = vld [vmem:[%s141 + $0x11] sm:$0xff]
        %v338 = vld [vmem:[%s141 + $0x21] sm:$0xff]
        %v339 = vld [vmem:[%s141 + $0x31] sm:$0xff]
        %v340 = vld [vmem:[%s141 + $0x41] sm:$0xff]
        %v341 = vld [vmem:[%s141 + $0x51] sm:$0xff]
        %v342 = vld [vmem:[%s141 + $0x61] sm:$0xff]
        %v343 = vld [vmem:[%s141 + $0x71] sm:$0xff]
        %v344 = vld [vmem:[%s141 + $0xa1] sm:$0xff]
        %v345 = vld [vmem:[%s141 + $0xb1] sm:$0xff]
        %v346 = vld [vmem:[%s141 + $0xc1] sm:$0xff]
        %v347 = vld [vmem:[%s141 + $0xd1] sm:$0xff]
        %v348 = vld [vmem:[%s141 + $0xe1] sm:$0xff]
        %v349 = vld [vmem:[%s141 + $0xf1] sm:$0xff]
        %v350 = vld [vmem:[%s141 + $0x101] sm:$0xff]
        %v351 = vld [vmem:[%s141 + $0x111] sm:$0xff]
        %v352 = vld [vmem:[%s141 + $0x141] sm:$0xff]
        %v353 = vld [vmem:[%s141 + $0x151] sm:$0xff]
        %v354 = vld [vmem:[%s141 + $0x161] sm:$0xff]
        %v355 = vld [vmem:[%s141 + $0x171] sm:$0xff]
        %v356 = vld [vmem:[%s141 + $0x181] sm:$0xff]
        %v357 = vld [vmem:[%s141 + $0x191] sm:$0xff]
        %v358 = vld [vmem:[%s141 + $0x1a1] sm:$0xff]
        %v359 = vld [vmem:[%s141 + $0x1b1] sm:$0xff]
        %v360 = vld [vmem:[%s141 + $0x1e1] sm:$0xff]
        %v361 = vld [vmem:[%s141 + $0x1f1] sm:$0xff]
        %v362 = vld [vmem:[%s141 + $0x201] sm:$0xff]
        %v363 = vld [vmem:[%s141 + $0x211] sm:$0xff]
        %v364 = vld [vmem:[%s141 + $0x221] sm:$0xff]
        %v365 = vld [vmem:[%s141 + $0x231] sm:$0xff]
        %v366 = vld [vmem:[%s141 + $0x241] sm:$0xff]
        %v367 = vld [vmem:[%s141 + $0x251] sm:$0xff]
        %v368 = vld [vmem:[%s141 + $0x281] sm:$0xff]
        %v369 = vld [vmem:[%s141 + $0x291] sm:$0xff]
        %v370 = vld [vmem:[%s141 + $0x2a1] sm:$0xff]
        %v371 = vld [vmem:[%s141 + $0x2b1] sm:$0xff]
        %v372 = vld [vmem:[%s141 + $0x2c1] sm:$0xff]
        %v373 = vld [vmem:[%s141 + $0x2d1] sm:$0xff]
        %v374 = vld [vmem:[%s141 + $0x2e1] sm:$0xff]
        %v375 = vld [vmem:[%s141 + $0x2f1] sm:$0xff]
        %v376 = vld [vmem:[%s141 + $0x321] sm:$0xff]
        %v377 = vld [vmem:[%s141 + $0x331] sm:$0xff]
        %v378 = vld [vmem:[%s141 + $0x341] sm:$0xff]
        %v379 = vld [vmem:[%s141 + $0x351] sm:$0xff]
        %v380 = vld [vmem:[%s141 + $0x361] sm:$0xff]
        %v381 = vld [vmem:[%s141 + $0x371] sm:$0xff]
        %v382 = vld [vmem:[%s141 + $0x381] sm:$0xff]
        %v383 = vld [vmem:[%s141 + $0x391] sm:$0xff]
        %v384 = vld [vmem:[%s141 + $0x3c1] sm:$0xff]
        %v385 = vld [vmem:[%s141 + $0x3d1] sm:$0xff]
        %v386 = vld [vmem:[%s141 + $0x3e1] sm:$0xff]
        %v387 = vld [vmem:[%s141 + $0x3f1] sm:$0xff]
        %v388 = vld [vmem:[%s141 + $0x401] sm:$0xff]
        %v389 = vld [vmem:[%s141 + $0x411] sm:$0xff]
        %v390 = vld [vmem:[%s141 + $0x421] sm:$0xff]
        %v391 = vld [vmem:[%s141 + $0x431] sm:$0xff]
        %v392 = vld [vmem:[%s141 + $0x461] sm:$0xff]
        %v393 = vld [vmem:[%s141 + $0x471] sm:$0xff]
        %v394 = vld [vmem:[%s141 + $0x481] sm:$0xff]
        %v395 = vld [vmem:[%s141 + $0x491] sm:$0xff]
        %v396 = vld [vmem:[%s141 + $0x4a1] sm:$0xff]
        %v397 = vld [vmem:[%s141 + $0x4b1] sm:$0xff]
        %v398 = vld [vmem:[%s141 + $0x4c1] sm:$0xff]
        %v399 = vld [vmem:[%s141 + $0x4d1] sm:$0xff]
        %464 = vrot.lane.b32.xlu0 %v336, 4
        %v465 = vpop.permute.xlu0 %464
        %466 = vrot.lane.b32.xlu0 %v337, 4
        %v467 = vpop.permute.xlu0 %466
        %468 = vrot.lane.b32.xlu0 %v338, 4
        %v469 = vpop.permute.xlu0 %468
        %470 = vrot.lane.b32.xlu0 %v339, 4
        %v471 = vpop.permute.xlu0 %470
        %472 = vrot.lane.b32.xlu0 %v340, 4
        %v473 = vpop.permute.xlu0 %472
        %474 = vrot.lane.b32.xlu0 %v341, 4
        %v475 = vpop.permute.xlu0 %474
        %476 = vrot.lane.b32.xlu0 %v342, 4
        %v477 = vpop.permute.xlu0 %476
        %478 = vrot.lane.b32.xlu0 %v343, 4
        %v479 = vpop.permute.xlu0 %478
        %480 = vrot.lane.b32.xlu0 %v344, 4
        %v481 = vpop.permute.xlu0 %480
        %482 = vrot.lane.b32.xlu0 %v345, 4
        %v483 = vpop.permute.xlu0 %482
        %484 = vrot.lane.b32.xlu0 %v346, 4
        %v485 = vpop.permute.xlu0 %484
        %486 = vrot.lane.b32.xlu0 %v347, 4
        %v487 = vpop.permute.xlu0 %486
        %488 = vrot.lane.b32.xlu0 %v348, 4
        %v489 = vpop.permute.xlu0 %488
        %490 = vrot.lane.b32.xlu0 %v349, 4
        %v491 = vpop.permute.xlu0 %490
        %492 = vrot.lane.b32.xlu0 %v350, 4
        %v493 = vpop.permute.xlu0 %492
        %494 = vrot.lane.b32.xlu0 %v351, 4
        %v495 = vpop.permute.xlu0 %494
        %496 = vrot.lane.b32.xlu0 %v352, 4
        %v497 = vpop.permute.xlu0 %496
        %498 = vrot.lane.b32.xlu0 %v353, 4
        %v499 = vpop.permute.xlu0 %498
        %500 = vrot.lane.b32.xlu0 %v354, 4
        %v501 = vpop.permute.xlu0 %500
        %502 = vrot.lane.b32.xlu0 %v355, 4
        %v503 = vpop.permute.xlu0 %502
        %504 = vrot.lane.b32.xlu0 %v356, 4
        %v505 = vpop.permute.xlu0 %504
        %506 = vrot.lane.b32.xlu0 %v357, 4
        %v507 = vpop.permute.xlu0 %506
        %508 = vrot.lane.b32.xlu0 %v358, 4
        %v509 = vpop.permute.xlu0 %508
        %510 = vrot.lane.b32.xlu0 %v359, 4
        %v511 = vpop.permute.xlu0 %510
        %512 = vrot.lane.b32.xlu0 %v360, 4
        %v513 = vpop.permute.xlu0 %512
        %514 = vrot.lane.b32.xlu0 %v361, 4
        %v515 = vpop.permute.xlu0 %514
        %516 = vrot.lane.b32.xlu0 %v362, 4
        %v517 = vpop.permute.xlu0 %516
        %518 = vrot.lane.b32.xlu0 %v363, 4
        %v519 = vpop.permute.xlu0 %518
        %520 = vrot.lane.b32.xlu0 %v364, 4
        %v521 = vpop.permute.xlu0 %520
        %522 = vrot.lane.b32.xlu0 %v365, 4
        %v523 = vpop.permute.xlu0 %522
        %524 = vrot.lane.b32.xlu0 %v366, 4
        %v525 = vpop.permute.xlu0 %524
        %526 = vrot.lane.b32.xlu0 %v367, 4
        %v527 = vpop.permute.xlu0 %526
        %528 = vrot.lane.b32.xlu0 %v368, 4
        %v529 = vpop.permute.xlu0 %528
        %530 = vrot.lane.b32.xlu0 %v369, 4
        %v531 = vpop.permute.xlu0 %530
        %532 = vrot.lane.b32.xlu0 %v370, 4
        %v533 = vpop.permute.xlu0 %532
        %534 = vrot.lane.b32.xlu0 %v371, 4
        %v535 = vpop.permute.xlu0 %534
        %536 = vrot.lane.b32.xlu0 %v372, 4
        %v537 = vpop.permute.xlu0 %536
        %538 = vrot.lane.b32.xlu0 %v373, 4
        %v539 = vpop.permute.xlu0 %538
        %540 = vrot.lane.b32.xlu0 %v374, 4
        %v541 = vpop.permute.xlu0 %540
        %542 = vrot.lane.b32.xlu0 %v375, 4
        %v543 = vpop.permute.xlu0 %542
        %544 = vrot.lane.b32.xlu0 %v376, 4
        %v545 = vpop.permute.xlu0 %544
        %546 = vrot.lane.b32.xlu0 %v377, 4
        %v547 = vpop.permute.xlu0 %546
        %548 = vrot.lane.b32.xlu0 %v378, 4
        %v549 = vpop.permute.xlu0 %548
        %550 = vrot.lane.b32.xlu0 %v379, 4
        %v551 = vpop.permute.xlu0 %550
        %552 = vrot.lane.b32.xlu0 %v380, 4
        %v553 = vpop.permute.xlu0 %552
        %554 = vrot.lane.b32.xlu0 %v381, 4
        %v555 = vpop.permute.xlu0 %554
        %556 = vrot.lane.b32.xlu0 %v382, 4
        %v557 = vpop.permute.xlu0 %556
        %558 = vrot.lane.b32.xlu0 %v383, 4
        %v559 = vpop.permute.xlu0 %558
        %560 = vrot.lane.b32.xlu0 %v384, 4
        %v561 = vpop.permute.xlu0 %560
        %562 = vrot.lane.b32.xlu0 %v385, 4
        %v563 = vpop.permute.xlu0 %562
        %564 = vrot.lane.b32.xlu0 %v386, 4
        %v565 = vpop.permute.xlu0 %564
        %566 = vrot.lane.b32.xlu0 %v387, 4
        %v567 = vpop.permute.xlu0 %566
        %568 = vrot.lane.b32.xlu0 %v388, 4
        %v569 = vpop.permute.xlu0 %568
        %570 = vrot.lane.b32.xlu0 %v389, 4
        %v571 = vpop.permute.xlu0 %570
        %572 = vrot.lane.b32.xlu0 %v390, 4
        %v573 = vpop.permute.xlu0 %572
        %574 = vrot.lane.b32.xlu0 %v391, 4
        %v575 = vpop.permute.xlu0 %574
        %576 = vrot.lane.b32.xlu0 %v392, 4
        %v577 = vpop.permute.xlu0 %576
        %578 = vrot.lane.b32.xlu0 %v393, 4
        %v579 = vpop.permute.xlu0 %578
        %580 = vrot.lane.b32.xlu0 %v394, 4
        %v581 = vpop.permute.xlu0 %580
        %582 = vrot.lane.b32.xlu0 %v395, 4
        %v583 = vpop.permute.xlu0 %582
        %584 = vrot.lane.b32.xlu0 %v396, 4
        %v585 = vpop.permute.xlu0 %584
        %586 = vrot.lane.b32.xlu0 %v397, 4
        %v587 = vpop.permute.xlu0 %586
        %588 = vrot.lane.b32.xlu0 %v398, 4
        %v589 = vpop.permute.xlu0 %588
        %590 = vrot.lane.b32.xlu0 %v399, 4
        %v591 = vpop.permute.xlu0 %590
        %vm656 = vcmask 64544
        %657 = vst.msk [vmem:[#allocation2] sm:$0xff] %vm656, %v465
        %658 = vst.msk [vmem:[#allocation2 + $0x8] sm:$0xff] %vm656, %v467
        %659 = vst.msk [vmem:[#allocation2 + $0x10] sm:$0xff] %vm656, %v469
        %660 = vst.msk [vmem:[#allocation2 + $0x18] sm:$0xff] %vm656, %v471
        %661 = vst.msk [vmem:[#allocation2 + $0x20] sm:$0xff] %vm656, %v473
        %662 = vst.msk [vmem:[#allocation2 + $0x28] sm:$0xff] %vm656, %v475
        %663 = vst.msk [vmem:[#allocation2 + $0x30] sm:$0xff] %vm656, %v477
        %664 = vst.msk [vmem:[#allocation2 + $0x38] sm:$0xff] %vm656, %v479
        %665 = vst.msk [vmem:[#allocation2 + $0x40] sm:$0xff] %vm656, %v481
        %666 = vst.msk [vmem:[#allocation2 + $0x48] sm:$0xff] %vm656, %v483
        %667 = vst.msk [vmem:[#allocation2 + $0x50] sm:$0xff] %vm656, %v485
        %668 = vst.msk [vmem:[#allocation2 + $0x58] sm:$0xff] %vm656, %v487
        %669 = vst.msk [vmem:[#allocation2 + $0x60] sm:$0xff] %vm656, %v489
        %670 = vst.msk [vmem:[#allocation2 + $0x68] sm:$0xff] %vm656, %v491
        %671 = vst.msk [vmem:[#allocation2 + $0x70] sm:$0xff] %vm656, %v493
        %672 = vst.msk [vmem:[#allocation2 + $0x78] sm:$0xff] %vm656, %v495
        %673 = vst.msk [vmem:[#allocation2 + $0x80] sm:$0xff] %vm656, %v497
        %674 = vst.msk [vmem:[#allocation2 + $0x88] sm:$0xff] %vm656, %v499
        %675 = vst.msk [vmem:[#allocation2 + $0x90] sm:$0xff] %vm656, %v501
        %676 = vst.msk [vmem:[#allocation2 + $0x98] sm:$0xff] %vm656, %v503
        %677 = vst.msk [vmem:[#allocation2 + $0xa0] sm:$0xff] %vm656, %v505
        %678 = vst.msk [vmem:[#allocation2 + $0xa8] sm:$0xff] %vm656, %v507
        %679 = vst.msk [vmem:[#allocation2 + $0xb0] sm:$0xff] %vm656, %v509
        %680 = vst.msk [vmem:[#allocation2 + $0xb8] sm:$0xff] %vm656, %v511
        %681 = vst.msk [vmem:[#allocation2 + $0xc0] sm:$0xff] %vm656, %v513
        %682 = vst.msk [vmem:[#allocation2 + $0xc8] sm:$0xff] %vm656, %v515
        %683 = vst.msk [vmem:[#allocation2 + $0xd0] sm:$0xff] %vm656, %v517
        %684 = vst.msk [vmem:[#allocation2 + $0xd8] sm:$0xff] %vm656, %v519
        %685 = vst.msk [vmem:[#allocation2 + $0xe0] sm:$0xff] %vm656, %v521
        %686 = vst.msk [vmem:[#allocation2 + $0xe8] sm:$0xff] %vm656, %v523
        %687 = vst.msk [vmem:[#allocation2 + $0xf0] sm:$0xff] %vm656, %v525
        %688 = vst.msk [vmem:[#allocation2 + $0xf8] sm:$0xff] %vm656, %v527
        %689 = vst.msk [vmem:[#allocation2 + $0x100] sm:$0xff] %vm656, %v529
        %690 = vst.msk [vmem:[#allocation2 + $0x108] sm:$0xff] %vm656, %v531
        %691 = vst.msk [vmem:[#allocation2 + $0x110] sm:$0xff] %vm656, %v533
        %692 = vst.msk [vmem:[#allocation2 + $0x118] sm:$0xff] %vm656, %v535
        %693 = vst.msk [vmem:[#allocation2 + $0x120] sm:$0xff] %vm656, %v537
        %694 = vst.msk [vmem:[#allocation2 + $0x128] sm:$0xff] %vm656, %v539
        %695 = vst.msk [vmem:[#allocation2 + $0x130] sm:$0xff] %vm656, %v541
        %696 = vst.msk [vmem:[#allocation2 + $0x138] sm:$0xff] %vm656, %v543
        %697 = vst.msk [vmem:[#allocation2 + $0x140] sm:$0xff] %vm656, %v545
        %698 = vst.msk [vmem:[#allocation2 + $0x148] sm:$0xff] %vm656, %v547
        %699 = vst.msk [vmem:[#allocation2 + $0x150] sm:$0xff] %vm656, %v549
        %700 = vst.msk [vmem:[#allocation2 + $0x158] sm:$0xff] %vm656, %v551
        %701 = vst.msk [vmem:[#allocation2 + $0x160] sm:$0xff] %vm656, %v553
        %702 = vst.msk [vmem:[#allocation2 + $0x168] sm:$0xff] %vm656, %v555
        %703 = vst.msk [vmem:[#allocation2 + $0x170] sm:$0xff] %vm656, %v557
        %704 = vst.msk [vmem:[#allocation2 + $0x178] sm:$0xff] %vm656, %v559
        %705 = vst.msk [vmem:[#allocation2 + $0x180] sm:$0xff] %vm656, %v561
        %706 = vst.msk [vmem:[#allocation2 + $0x188] sm:$0xff] %vm656, %v563
        %707 = vst.msk [vmem:[#allocation2 + $0x190] sm:$0xff] %vm656, %v565
        %708 = vst.msk [vmem:[#allocation2 + $0x198] sm:$0xff] %vm656, %v567
        %709 = vst.msk [vmem:[#allocation2 + $0x1a0] sm:$0xff] %vm656, %v569
        %710 = vst.msk [vmem:[#allocation2 + $0x1a8] sm:$0xff] %vm656, %v571
        %711 = vst.msk [vmem:[#allocation2 + $0x1b0] sm:$0xff] %vm656, %v573
        %712 = vst.msk [vmem:[#allocation2 + $0x1b8] sm:$0xff] %vm656, %v575
        %713 = vst.msk [vmem:[#allocation2 + $0x1c0] sm:$0xff] %vm656, %v577
        %714 = vst.msk [vmem:[#allocation2 + $0x1c8] sm:$0xff] %vm656, %v579
        %715 = vst.msk [vmem:[#allocation2 + $0x1d0] sm:$0xff] %vm656, %v581
        %716 = vst.msk [vmem:[#allocation2 + $0x1d8] sm:$0xff] %vm656, %v583
        %717 = vst.msk [vmem:[#allocation2 + $0x1e0] sm:$0xff] %vm656, %v585
        %718 = vst.msk [vmem:[#allocation2 + $0x1e8] sm:$0xff] %vm656, %v587
        %719 = vst.msk [vmem:[#allocation2 + $0x1f0] sm:$0xff] %vm656, %v589
        %720 = vst.msk [vmem:[#allocation2 + $0x1f8] sm:$0xff] %vm656, %v591
        %v721 = vld [vmem:[%s141 + $0x2] sm:$0xff]
        %v722 = vld [vmem:[%s141 + $0x12] sm:$0xff]
        %v723 = vld [vmem:[%s141 + $0x22] sm:$0xff]
        %v724 = vld [vmem:[%s141 + $0x32] sm:$0xff]
        %v725 = vld [vmem:[%s141 + $0x42] sm:$0xff]
        %v726 = vld [vmem:[%s141 + $0x52] sm:$0xff]
        %v727 = vld [vmem:[%s141 + $0x62] sm:$0xff]
        %v728 = vld [vmem:[%s141 + $0x72] sm:$0xff]
        %v729 = vld [vmem:[%s141 + $0xa2] sm:$0xff]
        %v730 = vld [vmem:[%s141 + $0xb2] sm:$0xff]
        %v731 = vld [vmem:[%s141 + $0xc2] sm:$0xff]
        %v732 = vld [vmem:[%s141 + $0xd2] sm:$0xff]
        %v733 = vld [vmem:[%s141 + $0xe2] sm:$0xff]
        %v734 = vld [vmem:[%s141 + $0xf2] sm:$0xff]
        %v735 = vld [vmem:[%s141 + $0x102] sm:$0xff]
        %v736 = vld [vmem:[%s141 + $0x112] sm:$0xff]
        %v737 = vld [vmem:[%s141 + $0x142] sm:$0xff]
        %v738 = vld [vmem:[%s141 + $0x152] sm:$0xff]
        %v739 = vld [vmem:[%s141 + $0x162] sm:$0xff]
        %v740 = vld [vmem:[%s141 + $0x172] sm:$0xff]
        %v741 = vld [vmem:[%s141 + $0x182] sm:$0xff]
        %v742 = vld [vmem:[%s141 + $0x192] sm:$0xff]
        %v743 = vld [vmem:[%s141 + $0x1a2] sm:$0xff]
        %v744 = vld [vmem:[%s141 + $0x1b2] sm:$0xff]
        %v745 = vld [vmem:[%s141 + $0x1e2] sm:$0xff]
        %v746 = vld [vmem:[%s141 + $0x1f2] sm:$0xff]
        %v747 = vld [vmem:[%s141 + $0x202] sm:$0xff]
        %v748 = vld [vmem:[%s141 + $0x212] sm:$0xff]
        %v749 = vld [vmem:[%s141 + $0x222] sm:$0xff]
        %v750 = vld [vmem:[%s141 + $0x232] sm:$0xff]
        %v751 = vld [vmem:[%s141 + $0x242] sm:$0xff]
        %v752 = vld [vmem:[%s141 + $0x252] sm:$0xff]
        %v753 = vld [vmem:[%s141 + $0x282] sm:$0xff]
        %v754 = vld [vmem:[%s141 + $0x292] sm:$0xff]
        %v755 = vld [vmem:[%s141 + $0x2a2] sm:$0xff]
        %v756 = vld [vmem:[%s141 + $0x2b2] sm:$0xff]
        %v757 = vld [vmem:[%s141 + $0x2c2] sm:$0xff]
        %v758 = vld [vmem:[%s141 + $0x2d2] sm:$0xff]
        %v759 = vld [vmem:[%s141 + $0x2e2] sm:$0xff]
        %v760 = vld [vmem:[%s141 + $0x2f2] sm:$0xff]
        %v761 = vld [vmem:[%s141 + $0x322] sm:$0xff]
        %v762 = vld [vmem:[%s141 + $0x332] sm:$0xff]
        %v763 = vld [vmem:[%s141 + $0x342] sm:$0xff]
        %v764 = vld [vmem:[%s141 + $0x352] sm:$0xff]
        %v765 = vld [vmem:[%s141 + $0x362] sm:$0xff]
        %v766 = vld [vmem:[%s141 + $0x372] sm:$0xff]
        %v767 = vld [vmem:[%s141 + $0x382] sm:$0xff]
        %v768 = vld [vmem:[%s141 + $0x392] sm:$0xff]
        %v769 = vld [vmem:[%s141 + $0x3c2] sm:$0xff]
        %v770 = vld [vmem:[%s141 + $0x3d2] sm:$0xff]
        %v771 = vld [vmem:[%s141 + $0x3e2] sm:$0xff]
        %v772 = vld [vmem:[%s141 + $0x3f2] sm:$0xff]
        %v773 = vld [vmem:[%s141 + $0x402] sm:$0xff]
        %v774 = vld [vmem:[%s141 + $0x412] sm:$0xff]
        %v775 = vld [vmem:[%s141 + $0x422] sm:$0xff]
        %v776 = vld [vmem:[%s141 + $0x432] sm:$0xff]
        %v777 = vld [vmem:[%s141 + $0x462] sm:$0xff]
        %v778 = vld [vmem:[%s141 + $0x472] sm:$0xff]
        %v779 = vld [vmem:[%s141 + $0x482] sm:$0xff]
        %v780 = vld [vmem:[%s141 + $0x492] sm:$0xff]
        %v781 = vld [vmem:[%s141 + $0x4a2] sm:$0xff]
        %v782 = vld [vmem:[%s141 + $0x4b2] sm:$0xff]
        %v783 = vld [vmem:[%s141 + $0x4c2] sm:$0xff]
        %v784 = vld [vmem:[%s141 + $0x4d2] sm:$0xff]
        %849 = vrot.lane.b32.xlu0 %v721, 8
        %v850 = vpop.permute.xlu0 %849
        %851 = vrot.lane.b32.xlu0 %v722, 8
        %v852 = vpop.permute.xlu0 %851
        %853 = vrot.lane.b32.xlu0 %v723, 8
        %v854 = vpop.permute.xlu0 %853
        %855 = vrot.lane.b32.xlu0 %v724, 8
        %v856 = vpop.permute.xlu0 %855
        %857 = vrot.lane.b32.xlu0 %v725, 8
        %v858 = vpop.permute.xlu0 %857
        %859 = vrot.lane.b32.xlu0 %v726, 8
        %v860 = vpop.permute.xlu0 %859
        %861 = vrot.lane.b32.xlu0 %v727, 8
        %v862 = vpop.permute.xlu0 %861
        %863 = vrot.lane.b32.xlu0 %v728, 8
        %v864 = vpop.permute.xlu0 %863
        %865 = vrot.lane.b32.xlu0 %v729, 8
        %v866 = vpop.permute.xlu0 %865
        %867 = vrot.lane.b32.xlu0 %v730, 8
        %v868 = vpop.permute.xlu0 %867
        %869 = vrot.lane.b32.xlu0 %v731, 8
        %v870 = vpop.permute.xlu0 %869
        %871 = vrot.lane.b32.xlu0 %v732, 8
        %v872 = vpop.permute.xlu0 %871
        %873 = vrot.lane.b32.xlu0 %v733, 8
        %v874 = vpop.permute.xlu0 %873
        %875 = vrot.lane.b32.xlu0 %v734, 8
        %v876 = vpop.permute.xlu0 %875
        %877 = vrot.lane.b32.xlu0 %v735, 8
        %v878 = vpop.permute.xlu0 %877
        %879 = vrot.lane.b32.xlu0 %v736, 8
        %v880 = vpop.permute.xlu0 %879
        %881 = vrot.lane.b32.xlu0 %v737, 8
        %v882 = vpop.permute.xlu0 %881
        %883 = vrot.lane.b32.xlu0 %v738, 8
        %v884 = vpop.permute.xlu0 %883
        %885 = vrot.lane.b32.xlu0 %v739, 8
        %v886 = vpop.permute.xlu0 %885
        %887 = vrot.lane.b32.xlu0 %v740, 8
        %v888 = vpop.permute.xlu0 %887
        %889 = vrot.lane.b32.xlu0 %v741, 8
        %v890 = vpop.permute.xlu0 %889
        %891 = vrot.lane.b32.xlu0 %v742, 8
        %v892 = vpop.permute.xlu0 %891
        %893 = vrot.lane.b32.xlu0 %v743, 8
        %v894 = vpop.permute.xlu0 %893
        %895 = vrot.lane.b32.xlu0 %v744, 8
        %v896 = vpop.permute.xlu0 %895
        %897 = vrot.lane.b32.xlu0 %v745, 8
        %v898 = vpop.permute.xlu0 %897
        %899 = vrot.lane.b32.xlu0 %v746, 8
        %v900 = vpop.permute.xlu0 %899
        %901 = vrot.lane.b32.xlu0 %v747, 8
        %v902 = vpop.permute.xlu0 %901
        %903 = vrot.lane.b32.xlu0 %v748, 8
        %v904 = vpop.permute.xlu0 %903
        %905 = vrot.lane.b32.xlu0 %v749, 8
        %v906 = vpop.permute.xlu0 %905
        %907 = vrot.lane.b32.xlu0 %v750, 8
        %v908 = vpop.permute.xlu0 %907
        %909 = vrot.lane.b32.xlu0 %v751, 8
        %v910 = vpop.permute.xlu0 %909
        %911 = vrot.lane.b32.xlu0 %v752, 8
        %v912 = vpop.permute.xlu0 %911
        %913 = vrot.lane.b32.xlu0 %v753, 8
        %v914 = vpop.permute.xlu0 %913
        %915 = vrot.lane.b32.xlu0 %v754, 8
        %v916 = vpop.permute.xlu0 %915
        %917 = vrot.lane.b32.xlu0 %v755, 8
        %v918 = vpop.permute.xlu0 %917
        %919 = vrot.lane.b32.xlu0 %v756, 8
        %v920 = vpop.permute.xlu0 %919
        %921 = vrot.lane.b32.xlu0 %v757, 8
        %v922 = vpop.permute.xlu0 %921
        %923 = vrot.lane.b32.xlu0 %v758, 8
        %v924 = vpop.permute.xlu0 %923
        %925 = vrot.lane.b32.xlu0 %v759, 8
        %v926 = vpop.permute.xlu0 %925
        %927 = vrot.lane.b32.xlu0 %v760, 8
        %v928 = vpop.permute.xlu0 %927
        %929 = vrot.lane.b32.xlu0 %v761, 8
        %v930 = vpop.permute.xlu0 %929
        %931 = vrot.lane.b32.xlu0 %v762, 8
        %v932 = vpop.permute.xlu0 %931
        %933 = vrot.lane.b32.xlu0 %v763, 8
        %v934 = vpop.permute.xlu0 %933
        %935 = vrot.lane.b32.xlu0 %v764, 8
        %v936 = vpop.permute.xlu0 %935
        %937 = vrot.lane.b32.xlu0 %v765, 8
        %v938 = vpop.permute.xlu0 %937
        %939 = vrot.lane.b32.xlu0 %v766, 8
        %v940 = vpop.permute.xlu0 %939
        %941 = vrot.lane.b32.xlu0 %v767, 8
        %v942 = vpop.permute.xlu0 %941
        %943 = vrot.lane.b32.xlu0 %v768, 8
        %v944 = vpop.permute.xlu0 %943
        %945 = vrot.lane.b32.xlu0 %v769, 8
        %v946 = vpop.permute.xlu0 %945
        %947 = vrot.lane.b32.xlu0 %v770, 8
        %v948 = vpop.permute.xlu0 %947
        %949 = vrot.lane.b32.xlu0 %v771, 8
        %v950 = vpop.permute.xlu0 %949
        %951 = vrot.lane.b32.xlu0 %v772, 8
        %v952 = vpop.permute.xlu0 %951
        %953 = vrot.lane.b32.xlu0 %v773, 8
        %v954 = vpop.permute.xlu0 %953
        %955 = vrot.lane.b32.xlu0 %v774, 8
        %v956 = vpop.permute.xlu0 %955
        %957 = vrot.lane.b32.xlu0 %v775, 8
        %v958 = vpop.permute.xlu0 %957
        %959 = vrot.lane.b32.xlu0 %v776, 8
        %v960 = vpop.permute.xlu0 %959
        %961 = vrot.lane.b32.xlu0 %v777, 8
        %v962 = vpop.permute.xlu0 %961
        %963 = vrot.lane.b32.xlu0 %v778, 8
        %v964 = vpop.permute.xlu0 %963
        %965 = vrot.lane.b32.xlu0 %v779, 8
        %v966 = vpop.permute.xlu0 %965
        %967 = vrot.lane.b32.xlu0 %v780, 8
        %v968 = vpop.permute.xlu0 %967
        %969 = vrot.lane.b32.xlu0 %v781, 8
        %v970 = vpop.permute.xlu0 %969
        %971 = vrot.lane.b32.xlu0 %v782, 8
        %v972 = vpop.permute.xlu0 %971
        %973 = vrot.lane.b32.xlu0 %v783, 8
        %v974 = vpop.permute.xlu0 %973
        %975 = vrot.lane.b32.xlu0 %v784, 8
        %v976 = vpop.permute.xlu0 %975
        %vm1041 = vcmask 97344
        %1042 = vst.msk [vmem:[#allocation2] sm:$0xff] %vm1041, %v850
        %1043 = vst.msk [vmem:[#allocation2 + $0x8] sm:$0xff] %vm1041, %v852
        %1044 = vst.msk [vmem:[#allocation2 + $0x10] sm:$0xff] %vm1041, %v854
        %1045 = vst.msk [vmem:[#allocation2 + $0x18] sm:$0xff] %vm1041, %v856
        %1046 = vst.msk [vmem:[#allocation2 + $0x20] sm:$0xff] %vm1041, %v858
        %1047 = vst.msk [vmem:[#allocation2 + $0x28] sm:$0xff] %vm1041, %v860
        %1048 = vst.msk [vmem:[#allocation2 + $0x30] sm:$0xff] %vm1041, %v862
        %1049 = vst.msk [vmem:[#allocation2 + $0x38] sm:$0xff] %vm1041, %v864
        %1050 = vst.msk [vmem:[#allocation2 + $0x40] sm:$0xff] %vm1041, %v866
        %1051 = vst.msk [vmem:[#allocation2 + $0x48] sm:$0xff] %vm1041, %v868
        %1052 = vst.msk [vmem:[#allocation2 + $0x50] sm:$0xff] %vm1041, %v870
        %1053 = vst.msk [vmem:[#allocation2 + $0x58] sm:$0xff] %vm1041, %v872
        %1054 = vst.msk [vmem:[#allocation2 + $0x60] sm:$0xff] %vm1041, %v874
        %1055 = vst.msk [vmem:[#allocation2 + $0x68] sm:$0xff] %vm1041, %v876
        %1056 = vst.msk [vmem:[#allocation2 + $0x70] sm:$0xff] %vm1041, %v878
        %1057 = vst.msk [vmem:[#allocation2 + $0x78] sm:$0xff] %vm1041, %v880
        %1058 = vst.msk [vmem:[#allocation2 + $0x80] sm:$0xff] %vm1041, %v882
        %1059 = vst.msk [vmem:[#allocation2 + $0x88] sm:$0xff] %vm1041, %v884
        %1060 = vst.msk [vmem:[#allocation2 + $0x90] sm:$0xff] %vm1041, %v886
        %1061 = vst.msk [vmem:[#allocation2 + $0x98] sm:$0xff] %vm1041, %v888
        %1062 = vst.msk [vmem:[#allocation2 + $0xa0] sm:$0xff] %vm1041, %v890
        %1063 = vst.msk [vmem:[#allocation2 + $0xa8] sm:$0xff] %vm1041, %v892
        %1064 = vst.msk [vmem:[#allocation2 + $0xb0] sm:$0xff] %vm1041, %v894
        %1065 = vst.msk [vmem:[#allocation2 + $0xb8] sm:$0xff] %vm1041, %v896
        %1066 = vst.msk [vmem:[#allocation2 + $0xc0] sm:$0xff] %vm1041, %v898
        %1067 = vst.msk [vmem:[#allocation2 + $0xc8] sm:$0xff] %vm1041, %v900
        %1068 = vst.msk [vmem:[#allocation2 + $0xd0] sm:$0xff] %vm1041, %v902
        %1069 = vst.msk [vmem:[#allocation2 + $0xd8] sm:$0xff] %vm1041, %v904
        %1070 = vst.msk [vmem:[#allocation2 + $0xe0] sm:$0xff] %vm1041, %v906
        %1071 = vst.msk [vmem:[#allocation2 + $0xe8] sm:$0xff] %vm1041, %v908
        %1072 = vst.msk [vmem:[#allocation2 + $0xf0] sm:$0xff] %vm1041, %v910
        %1073 = vst.msk [vmem:[#allocation2 + $0xf8] sm:$0xff] %vm1041, %v912
        %1074 = vst.msk [vmem:[#allocation2 + $0x100] sm:$0xff] %vm1041, %v914
        %1075 = vst.msk [vmem:[#allocation2 + $0x108] sm:$0xff] %vm1041, %v916
        %1076 = vst.msk [vmem:[#allocation2 + $0x110] sm:$0xff] %vm1041, %v918
        %1077 = vst.msk [vmem:[#allocation2 + $0x118] sm:$0xff] %vm1041, %v920
        %1078 = vst.msk [vmem:[#allocation2 + $0x120] sm:$0xff] %vm1041, %v922
        %1079 = vst.msk [vmem:[#allocation2 + $0x128] sm:$0xff] %vm1041, %v924
        %1080 = vst.msk [vmem:[#allocation2 + $0x130] sm:$0xff] %vm1041, %v926
        %1081 = vst.msk [vmem:[#allocation2 + $0x138] sm:$0xff] %vm1041, %v928
        %1082 = vst.msk [vmem:[#allocation2 + $0x140] sm:$0xff] %vm1041, %v930
        %1083 = vst.msk [vmem:[#allocation2 + $0x148] sm:$0xff] %vm1041, %v932
        %1084 = vst.msk [vmem:[#allocation2 + $0x150] sm:$0xff] %vm1041, %v934
        %1085 = vst.msk [vmem:[#allocation2 + $0x158] sm:$0xff] %vm1041, %v936
        %1086 = vst.msk [vmem:[#allocation2 + $0x160] sm:$0xff] %vm1041, %v938
        %1087 = vst.msk [vmem:[#allocation2 + $0x168] sm:$0xff] %vm1041, %v940
        %1088 = vst.msk [vmem:[#allocation2 + $0x170] sm:$0xff] %vm1041, %v942
        %1089 = vst.msk [vmem:[#allocation2 + $0x178] sm:$0xff] %vm1041, %v944
        %1090 = vst.msk [vmem:[#allocation2 + $0x180] sm:$0xff] %vm1041, %v946
        %1091 = vst.msk [vmem:[#allocation2 + $0x188] sm:$0xff] %vm1041, %v948
        %1092 = vst.msk [vmem:[#allocation2 + $0x190] sm:$0xff] %vm1041, %v950
        %1093 = vst.msk [vmem:[#allocation2 + $0x198] sm:$0xff] %vm1041, %v952
        %1094 = vst.msk [vmem:[#allocation2 + $0x1a0] sm:$0xff] %vm1041, %v954
        %1095 = vst.msk [vmem:[#allocation2 + $0x1a8] sm:$0xff] %vm1041, %v956
        %1096 = vst.msk [vmem:[#allocation2 + $0x1b0] sm:$0xff] %vm1041, %v958
        %1097 = vst.msk [vmem:[#allocation2 + $0x1b8] sm:$0xff] %vm1041, %v960
        %1098 = vst.msk [vmem:[#allocation2 + $0x1c0] sm:$0xff] %vm1041, %v962
        %1099 = vst.msk [vmem:[#allocation2 + $0x1c8] sm:$0xff] %vm1041, %v964
        %1100 = vst.msk [vmem:[#allocation2 + $0x1d0] sm:$0xff] %vm1041, %v966
        %1101 = vst.msk [vmem:[#allocation2 + $0x1d8] sm:$0xff] %vm1041, %v968
        %1102 = vst.msk [vmem:[#allocation2 + $0x1e0] sm:$0xff] %vm1041, %v970
        %1103 = vst.msk [vmem:[#allocation2 + $0x1e8] sm:$0xff] %vm1041, %v972
        %1104 = vst.msk [vmem:[#allocation2 + $0x1f0] sm:$0xff] %vm1041, %v974
        %1105 = vst.msk [vmem:[#allocation2 + $0x1f8] sm:$0xff] %vm1041, %v976
        %s1106 = scalar_lea.vmem %s141, 16
        %v1107 = vld [vmem:[%s1106] sm:$0xff]
        %v1108 = vld [vmem:[%s1106 + $0x10] sm:$0xff]
        %v1109 = vld [vmem:[%s1106 + $0x20] sm:$0xff]
        %v1110 = vld [vmem:[%s1106 + $0x30] sm:$0xff]
        %v1111 = vld [vmem:[%s1106 + $0x40] sm:$0xff]
        %v1112 = vld [vmem:[%s1106 + $0x50] sm:$0xff]
        %v1113 = vld [vmem:[%s1106 + $0x60] sm:$0xff]
        %v1114 = vld [vmem:[%s1106 + $0x70] sm:$0xff]
        %v1115 = vld [vmem:[%s1106 + $0xa0] sm:$0xff]
        %v1116 = vld [vmem:[%s1106 + $0xb0] sm:$0xff]
        %v1117 = vld [vmem:[%s1106 + $0xc0] sm:$0xff]
        %v1118 = vld [vmem:[%s1106 + $0xd0] sm:$0xff]
        %v1119 = vld [vmem:[%s1106 + $0xe0] sm:$0xff]
        %v1120 = vld [vmem:[%s1106 + $0xf0] sm:$0xff]
        %v1121 = vld [vmem:[%s1106 + $0x100] sm:$0xff]
        %v1122 = vld [vmem:[%s1106 + $0x110] sm:$0xff]
        %v1123 = vld [vmem:[%s1106 + $0x140] sm:$0xff]
        %v1124 = vld [vmem:[%s1106 + $0x150] sm:$0xff]
        %v1125 = vld [vmem:[%s1106 + $0x160] sm:$0xff]
        %v1126 = vld [vmem:[%s1106 + $0x170] sm:$0xff]
        %v1127 = vld [vmem:[%s1106 + $0x180] sm:$0xff]
        %v1128 = vld [vmem:[%s1106 + $0x190] sm:$0xff]
        %v1129 = vld [vmem:[%s1106 + $0x1a0] sm:$0xff]
        %v1130 = vld [vmem:[%s1106 + $0x1b0] sm:$0xff]
        %v1131 = vld [vmem:[%s1106 + $0x1e0] sm:$0xff]
        %v1132 = vld [vmem:[%s1106 + $0x1f0] sm:$0xff]
        %v1133 = vld [vmem:[%s1106 + $0x200] sm:$0xff]
        %v1134 = vld [vmem:[%s1106 + $0x210] sm:$0xff]
        %v1135 = vld [vmem:[%s1106 + $0x220] sm:$0xff]
        %v1136 = vld [vmem:[%s1106 + $0x230] sm:$0xff]
        %v1137 = vld [vmem:[%s1106 + $0x240] sm:$0xff]
        %v1138 = vld [vmem:[%s1106 + $0x250] sm:$0xff]
        %v1139 = vld [vmem:[%s1106 + $0x280] sm:$0xff]
        %v1140 = vld [vmem:[%s1106 + $0x290] sm:$0xff]
        %v1141 = vld [vmem:[%s1106 + $0x2a0] sm:$0xff]
        %v1142 = vld [vmem:[%s1106 + $0x2b0] sm:$0xff]
        %v1143 = vld [vmem:[%s1106 + $0x2c0] sm:$0xff]
        %v1144 = vld [vmem:[%s1106 + $0x2d0] sm:$0xff]
        %v1145 = vld [vmem:[%s1106 + $0x2e0] sm:$0xff]
        %v1146 = vld [vmem:[%s1106 + $0x2f0] sm:$0xff]
        %v1147 = vld [vmem:[%s1106 + $0x320] sm:$0xff]
        %v1148 = vld [vmem:[%s1106 + $0x330] sm:$0xff]
        %v1149 = vld [vmem:[%s1106 + $0x340] sm:$0xff]
        %v1150 = vld [vmem:[%s1106 + $0x350] sm:$0xff]
        %v1151 = vld [vmem:[%s1106 + $0x360] sm:$0xff]
        %v1152 = vld [vmem:[%s1106 + $0x370] sm:$0xff]
        %v1153 = vld [vmem:[%s1106 + $0x380] sm:$0xff]
        %v1154 = vld [vmem:[%s1106 + $0x390] sm:$0xff]
        %v1155 = vld [vmem:[%s1106 + $0x3c0] sm:$0xff]
        %v1156 = vld [vmem:[%s1106 + $0x3d0] sm:$0xff]
        %v1157 = vld [vmem:[%s1106 + $0x3e0] sm:$0xff]
        %v1158 = vld [vmem:[%s1106 + $0x3f0] sm:$0xff]
        %v1159 = vld [vmem:[%s1106 + $0x400] sm:$0xff]
        %v1160 = vld [vmem:[%s1106 + $0x410] sm:$0xff]
        %v1161 = vld [vmem:[%s1106 + $0x420] sm:$0xff]
        %v1162 = vld [vmem:[%s1106 + $0x430] sm:$0xff]
        %v1163 = vld [vmem:[%s1106 + $0x460] sm:$0xff]
        %v1164 = vld [vmem:[%s1106 + $0x470] sm:$0xff]
        %v1165 = vld [vmem:[%s1106 + $0x480] sm:$0xff]
        %v1166 = vld [vmem:[%s1106 + $0x490] sm:$0xff]
        %v1167 = vld [vmem:[%s1106 + $0x4a0] sm:$0xff]
        %v1168 = vld [vmem:[%s1106 + $0x4b0] sm:$0xff]
        %v1169 = vld [vmem:[%s1106 + $0x4c0] sm:$0xff]
        %v1170 = vld [vmem:[%s1106 + $0x4d0] sm:$0xff]
        %1235 = vrot.lane.b32.xlu0 %v1107, 12
        %v1236 = vpop.permute.xlu0 %1235
        %1237 = vrot.lane.b32.xlu0 %v1108, 12
        %v1238 = vpop.permute.xlu0 %1237
        %1239 = vrot.lane.b32.xlu0 %v1109, 12
        %v1240 = vpop.permute.xlu0 %1239
        %1241 = vrot.lane.b32.xlu0 %v1110, 12
        %v1242 = vpop.permute.xlu0 %1241
        %1243 = vrot.lane.b32.xlu0 %v1111, 12
        %v1244 = vpop.permute.xlu0 %1243
        %1245 = vrot.lane.b32.xlu0 %v1112, 12
        %v1246 = vpop.permute.xlu0 %1245
        %1247 = vrot.lane.b32.xlu0 %v1113, 12
        %v1248 = vpop.permute.xlu0 %1247
        %1249 = vrot.lane.b32.xlu0 %v1114, 12
        %v1250 = vpop.permute.xlu0 %1249
        %1251 = vrot.lane.b32.xlu0 %v1115, 12
        %v1252 = vpop.permute.xlu0 %1251
        %1253 = vrot.lane.b32.xlu0 %v1116, 12
        %v1254 = vpop.permute.xlu0 %1253
        %1255 = vrot.lane.b32.xlu0 %v1117, 12
        %v1256 = vpop.permute.xlu0 %1255
        %1257 = vrot.lane.b32.xlu0 %v1118, 12
        %v1258 = vpop.permute.xlu0 %1257
        %1259 = vrot.lane.b32.xlu0 %v1119, 12
        %v1260 = vpop.permute.xlu0 %1259
        %1261 = vrot.lane.b32.xlu0 %v1120, 12
        %v1262 = vpop.permute.xlu0 %1261
        %1263 = vrot.lane.b32.xlu0 %v1121, 12
        %v1264 = vpop.permute.xlu0 %1263
        %1265 = vrot.lane.b32.xlu0 %v1122, 12
        %v1266 = vpop.permute.xlu0 %1265
        %1267 = vrot.lane.b32.xlu0 %v1123, 12
        %v1268 = vpop.permute.xlu0 %1267
        %1269 = vrot.lane.b32.xlu0 %v1124, 12
        %v1270 = vpop.permute.xlu0 %1269
        %1271 = vrot.lane.b32.xlu0 %v1125, 12
        %v1272 = vpop.permute.xlu0 %1271
        %1273 = vrot.lane.b32.xlu0 %v1126, 12
        %v1274 = vpop.permute.xlu0 %1273
        %1275 = vrot.lane.b32.xlu0 %v1127, 12
        %v1276 = vpop.permute.xlu0 %1275
        %1277 = vrot.lane.b32.xlu0 %v1128, 12
        %v1278 = vpop.permute.xlu0 %1277
        %1279 = vrot.lane.b32.xlu0 %v1129, 12
        %v1280 = vpop.permute.xlu0 %1279
        %1281 = vrot.lane.b32.xlu0 %v1130, 12
        %v1282 = vpop.permute.xlu0 %1281
        %1283 = vrot.lane.b32.xlu0 %v1131, 12
        %v1284 = vpop.permute.xlu0 %1283
        %1285 = vrot.lane.b32.xlu0 %v1132, 12
        %v1286 = vpop.permute.xlu0 %1285
        %1287 = vrot.lane.b32.xlu0 %v1133, 12
        %v1288 = vpop.permute.xlu0 %1287
        %1289 = vrot.lane.b32.xlu0 %v1134, 12
        %v1290 = vpop.permute.xlu0 %1289
        %1291 = vrot.lane.b32.xlu0 %v1135, 12
        %v1292 = vpop.permute.xlu0 %1291
        %1293 = vrot.lane.b32.xlu0 %v1136, 12
        %v1294 = vpop.permute.xlu0 %1293
        %1295 = vrot.lane.b32.xlu0 %v1137, 12
        %v1296 = vpop.permute.xlu0 %1295
        %1297 = vrot.lane.b32.xlu0 %v1138, 12
        %v1298 = vpop.permute.xlu0 %1297
        %1299 = vrot.lane.b32.xlu0 %v1139, 12
        %v1300 = vpop.permute.xlu0 %1299
        %1301 = vrot.lane.b32.xlu0 %v1140, 12
        %v1302 = vpop.permute.xlu0 %1301
        %1303 = vrot.lane.b32.xlu0 %v1141, 12
        %v1304 = vpop.permute.xlu0 %1303
        %1305 = vrot.lane.b32.xlu0 %v1142, 12
        %v1306 = vpop.permute.xlu0 %1305
        %1307 = vrot.lane.b32.xlu0 %v1143, 12
        %v1308 = vpop.permute.xlu0 %1307
        %1309 = vrot.lane.b32.xlu0 %v1144, 12
        %v1310 = vpop.permute.xlu0 %1309
        %1311 = vrot.lane.b32.xlu0 %v1145, 12
        %v1312 = vpop.permute.xlu0 %1311
        %1313 = vrot.lane.b32.xlu0 %v1146, 12
        %v1314 = vpop.permute.xlu0 %1313
        %1315 = vrot.lane.b32.xlu0 %v1147, 12
        %v1316 = vpop.permute.xlu0 %1315
        %1317 = vrot.lane.b32.xlu0 %v1148, 12
        %v1318 = vpop.permute.xlu0 %1317
        %1319 = vrot.lane.b32.xlu0 %v1149, 12
        %v1320 = vpop.permute.xlu0 %1319
        %1321 = vrot.lane.b32.xlu0 %v1150, 12
        %v1322 = vpop.permute.xlu0 %1321
        %1323 = vrot.lane.b32.xlu0 %v1151, 12
        %v1324 = vpop.permute.xlu0 %1323
        %1325 = vrot.lane.b32.xlu0 %v1152, 12
        %v1326 = vpop.permute.xlu0 %1325
        %1327 = vrot.lane.b32.xlu0 %v1153, 12
        %v1328 = vpop.permute.xlu0 %1327
        %1329 = vrot.lane.b32.xlu0 %v1154, 12
        %v1330 = vpop.permute.xlu0 %1329
        %1331 = vrot.lane.b32.xlu0 %v1155, 12
        %v1332 = vpop.permute.xlu0 %1331
        %1333 = vrot.lane.b32.xlu0 %v1156, 12
        %v1334 = vpop.permute.xlu0 %1333
        %1335 = vrot.lane.b32.xlu0 %v1157, 12
        %v1336 = vpop.permute.xlu0 %1335
        %1337 = vrot.lane.b32.xlu0 %v1158, 12
        %v1338 = vpop.permute.xlu0 %1337
        %1339 = vrot.lane.b32.xlu0 %v1159, 12
        %v1340 = vpop.permute.xlu0 %1339
        %1341 = vrot.lane.b32.xlu0 %v1160, 12
        %v1342 = vpop.permute.xlu0 %1341
        %1343 = vrot.lane.b32.xlu0 %v1161, 12
        %v1344 = vpop.permute.xlu0 %1343
        %1345 = vrot.lane.b32.xlu0 %v1162, 12
        %v1346 = vpop.permute.xlu0 %1345
        %1347 = vrot.lane.b32.xlu0 %v1163, 12
        %v1348 = vpop.permute.xlu0 %1347
        %1349 = vrot.lane.b32.xlu0 %v1164, 12
        %v1350 = vpop.permute.xlu0 %1349
        %1351 = vrot.lane.b32.xlu0 %v1165, 12
        %v1352 = vpop.permute.xlu0 %1351
        %1353 = vrot.lane.b32.xlu0 %v1166, 12
        %v1354 = vpop.permute.xlu0 %1353
        %1355 = vrot.lane.b32.xlu0 %v1167, 12
        %v1356 = vpop.permute.xlu0 %1355
        %1357 = vrot.lane.b32.xlu0 %v1168, 12
        %v1358 = vpop.permute.xlu0 %1357
        %1359 = vrot.lane.b32.xlu0 %v1169, 12
        %v1360 = vpop.permute.xlu0 %1359
        %1361 = vrot.lane.b32.xlu0 %v1170, 12
        %v1362 = vpop.permute.xlu0 %1361
        %vm1427 = vcmask 130144
        %1428 = vst.msk [vmem:[#allocation2] sm:$0xff] %vm1427, %v1236
        %1429 = vst.msk [vmem:[#allocation2 + $0x8] sm:$0xff] %vm1427, %v1238
        %1430 = vst.msk [vmem:[#allocation2 + $0x10] sm:$0xff] %vm1427, %v1240
        %1431 = vst.msk [vmem:[#allocation2 + $0x18] sm:$0xff] %vm1427, %v1242
        %1432 = vst.msk [vmem:[#allocation2 + $0x20] sm:$0xff] %vm1427, %v1244
        %1433 = vst.msk [vmem:[#allocation2 + $0x28] sm:$0xff] %vm1427, %v1246
        %1434 = vst.msk [vmem:[#allocation2 + $0x30] sm:$0xff] %vm1427, %v1248
        %1435 = vst.msk [vmem:[#allocation2 + $0x38] sm:$0xff] %vm1427, %v1250
        %1436 = vst.msk [vmem:[#allocation2 + $0x40] sm:$0xff] %vm1427, %v1252
        %1437 = vst.msk [vmem:[#allocation2 + $0x48] sm:$0xff] %vm1427, %v1254
        %1438 = vst.msk [vmem:[#allocation2 + $0x50] sm:$0xff] %vm1427, %v1256
        %1439 = vst.msk [vmem:[#allocation2 + $0x58] sm:$0xff] %vm1427, %v1258
        %1440 = vst.msk [vmem:[#allocation2 + $0x60] sm:$0xff] %vm1427, %v1260
        %1441 = vst.msk [vmem:[#allocation2 + $0x68] sm:$0xff] %vm1427, %v1262
        %1442 = vst.msk [vmem:[#allocation2 + $0x70] sm:$0xff] %vm1427, %v1264
        %1443 = vst.msk [vmem:[#allocation2 + $0x78] sm:$0xff] %vm1427, %v1266
        %1444 = vst.msk [vmem:[#allocation2 + $0x80] sm:$0xff] %vm1427, %v1268
        %1445 = vst.msk [vmem:[#allocation2 + $0x88] sm:$0xff] %vm1427, %v1270
        %1446 = vst.msk [vmem:[#allocation2 + $0x90] sm:$0xff] %vm1427, %v1272
        %1447 = vst.msk [vmem:[#allocation2 + $0x98] sm:$0xff] %vm1427, %v1274
        %1448 = vst.msk [vmem:[#allocation2 + $0xa0] sm:$0xff] %vm1427, %v1276
        %1449 = vst.msk [vmem:[#allocation2 + $0xa8] sm:$0xff] %vm1427, %v1278
        %1450 = vst.msk [vmem:[#allocation2 + $0xb0] sm:$0xff] %vm1427, %v1280
        %1451 = vst.msk [vmem:[#allocation2 + $0xb8] sm:$0xff] %vm1427, %v1282
        %1452 = vst.msk [vmem:[#allocation2 + $0xc0] sm:$0xff] %vm1427, %v1284
        %1453 = vst.msk [vmem:[#allocation2 + $0xc8] sm:$0xff] %vm1427, %v1286
        %1454 = vst.msk [vmem:[#allocation2 + $0xd0] sm:$0xff] %vm1427, %v1288
        %1455 = vst.msk [vmem:[#allocation2 + $0xd8] sm:$0xff] %vm1427, %v1290
        %1456 = vst.msk [vmem:[#allocation2 + $0xe0] sm:$0xff] %vm1427, %v1292
        %1457 = vst.msk [vmem:[#allocation2 + $0xe8] sm:$0xff] %vm1427, %v1294
        %1458 = vst.msk [vmem:[#allocation2 + $0xf0] sm:$0xff] %vm1427, %v1296
        %1459 = vst.msk [vmem:[#allocation2 + $0xf8] sm:$0xff] %vm1427, %v1298
        %1460 = vst.msk [vmem:[#allocation2 + $0x100] sm:$0xff] %vm1427, %v1300
        %1461 = vst.msk [vmem:[#allocation2 + $0x108] sm:$0xff] %vm1427, %v1302
        %1462 = vst.msk [vmem:[#allocation2 + $0x110] sm:$0xff] %vm1427, %v1304
        %1463 = vst.msk [vmem:[#allocation2 + $0x118] sm:$0xff] %vm1427, %v1306
        %1464 = vst.msk [vmem:[#allocation2 + $0x120] sm:$0xff] %vm1427, %v1308
        %1465 = vst.msk [vmem:[#allocation2 + $0x128] sm:$0xff] %vm1427, %v1310
        %1466 = vst.msk [vmem:[#allocation2 + $0x130] sm:$0xff] %vm1427, %v1312
        %1467 = vst.msk [vmem:[#allocation2 + $0x138] sm:$0xff] %vm1427, %v1314
        %1468 = vst.msk [vmem:[#allocation2 + $0x140] sm:$0xff] %vm1427, %v1316
        %1469 = vst.msk [vmem:[#allocation2 + $0x148] sm:$0xff] %vm1427, %v1318
        %1470 = vst.msk [vmem:[#allocation2 + $0x150] sm:$0xff] %vm1427, %v1320
        %1471 = vst.msk [vmem:[#allocation2 + $0x158] sm:$0xff] %vm1427, %v1322
        %1472 = vst.msk [vmem:[#allocation2 + $0x160] sm:$0xff] %vm1427, %v1324
        %1473 = vst.msk [vmem:[#allocation2 + $0x168] sm:$0xff] %vm1427, %v1326
        %1474 = vst.msk [vmem:[#allocation2 + $0x170] sm:$0xff] %vm1427, %v1328
        %1475 = vst.msk [vmem:[#allocation2 + $0x178] sm:$0xff] %vm1427, %v1330
        %1476 = vst.msk [vmem:[#allocation2 + $0x180] sm:$0xff] %vm1427, %v1332
        %1477 = vst.msk [vmem:[#allocation2 + $0x188] sm:$0xff] %vm1427, %v1334
        %1478 = vst.msk [vmem:[#allocation2 + $0x190] sm:$0xff] %vm1427, %v1336
        %1479 = vst.msk [vmem:[#allocation2 + $0x198] sm:$0xff] %vm1427, %v1338
        %1480 = vst.msk [vmem:[#allocation2 + $0x1a0] sm:$0xff] %vm1427, %v1340
        %1481 = vst.msk [vmem:[#allocation2 + $0x1a8] sm:$0xff] %vm1427, %v1342
        %1482 = vst.msk [vmem:[#allocation2 + $0x1b0] sm:$0xff] %vm1427, %v1344
        %1483 = vst.msk [vmem:[#allocation2 + $0x1b8] sm:$0xff] %vm1427, %v1346
        %1484 = vst.msk [vmem:[#allocation2 + $0x1c0] sm:$0xff] %vm1427, %v1348
        %1485 = vst.msk [vmem:[#allocation2 + $0x1c8] sm:$0xff] %vm1427, %v1350
        %1486 = vst.msk [vmem:[#allocation2 + $0x1d0] sm:$0xff] %vm1427, %v1352
        %1487 = vst.msk [vmem:[#allocation2 + $0x1d8] sm:$0xff] %vm1427, %v1354
        %1488 = vst.msk [vmem:[#allocation2 + $0x1e0] sm:$0xff] %vm1427, %v1356
        %1489 = vst.msk [vmem:[#allocation2 + $0x1e8] sm:$0xff] %vm1427, %v1358
        %1490 = vst.msk [vmem:[#allocation2 + $0x1f0] sm:$0xff] %vm1427, %v1360
        %1491 = vst.msk [vmem:[#allocation2 + $0x1f8] sm:$0xff] %vm1427, %v1362
        %v1492 = vld [vmem:[%s1106 + $0x1] sm:$0xff]
        %v1493 = vld [vmem:[%s1106 + $0x11] sm:$0xff]
        %v1494 = vld [vmem:[%s1106 + $0x21] sm:$0xff]
        %v1495 = vld [vmem:[%s1106 + $0x31] sm:$0xff]
        %v1496 = vld [vmem:[%s1106 + $0x41] sm:$0xff]
        %v1497 = vld [vmem:[%s1106 + $0x51] sm:$0xff]
        %v1498 = vld [vmem:[%s1106 + $0x61] sm:$0xff]
        %v1499 = vld [vmem:[%s1106 + $0x71] sm:$0xff]
        %v1500 = vld [vmem:[%s1106 + $0xa1] sm:$0xff]
        %v1501 = vld [vmem:[%s1106 + $0xb1] sm:$0xff]
        %v1502 = vld [vmem:[%s1106 + $0xc1] sm:$0xff]
        %v1503 = vld [vmem:[%s1106 + $0xd1] sm:$0xff]
        %v1504 = vld [vmem:[%s1106 + $0xe1] sm:$0xff]
        %v1505 = vld [vmem:[%s1106 + $0xf1] sm:$0xff]
        %v1506 = vld [vmem:[%s1106 + $0x101] sm:$0xff]
        %v1507 = vld [vmem:[%s1106 + $0x111] sm:$0xff]
        %v1508 = vld [vmem:[%s1106 + $0x141] sm:$0xff]
        %v1509 = vld [vmem:[%s1106 + $0x151] sm:$0xff]
        %v1510 = vld [vmem:[%s1106 + $0x161] sm:$0xff]
        %v1511 = vld [vmem:[%s1106 + $0x171] sm:$0xff]
        %v1512 = vld [vmem:[%s1106 + $0x181] sm:$0xff]
        %v1513 = vld [vmem:[%s1106 + $0x191] sm:$0xff]
        %v1514 = vld [vmem:[%s1106 + $0x1a1] sm:$0xff]
        %v1515 = vld [vmem:[%s1106 + $0x1b1] sm:$0xff]
        %v1516 = vld [vmem:[%s1106 + $0x1e1] sm:$0xff]
        %v1517 = vld [vmem:[%s1106 + $0x1f1] sm:$0xff]
        %v1518 = vld [vmem:[%s1106 + $0x201] sm:$0xff]
        %v1519 = vld [vmem:[%s1106 + $0x211] sm:$0xff]
        %v1520 = vld [vmem:[%s1106 + $0x221] sm:$0xff]
        %v1521 = vld [vmem:[%s1106 + $0x231] sm:$0xff]
        %v1522 = vld [vmem:[%s1106 + $0x241] sm:$0xff]
        %v1523 = vld [vmem:[%s1106 + $0x251] sm:$0xff]
        %v1524 = vld [vmem:[%s1106 + $0x281] sm:$0xff]
        %v1525 = vld [vmem:[%s1106 + $0x291] sm:$0xff]
        %v1526 = vld [vmem:[%s1106 + $0x2a1] sm:$0xff]
        %v1527 = vld [vmem:[%s1106 + $0x2b1] sm:$0xff]
        %v1528 = vld [vmem:[%s1106 + $0x2c1] sm:$0xff]
        %v1529 = vld [vmem:[%s1106 + $0x2d1] sm:$0xff]
        %v1530 = vld [vmem:[%s1106 + $0x2e1] sm:$0xff]
        %v1531 = vld [vmem:[%s1106 + $0x2f1] sm:$0xff]
        %v1532 = vld [vmem:[%s1106 + $0x321] sm:$0xff]
        %v1533 = vld [vmem:[%s1106 + $0x331] sm:$0xff]
        %v1534 = vld [vmem:[%s1106 + $0x341] sm:$0xff]
        %v1535 = vld [vmem:[%s1106 + $0x351] sm:$0xff]
        %v1536 = vld [vmem:[%s1106 + $0x361] sm:$0xff]
        %v1537 = vld [vmem:[%s1106 + $0x371] sm:$0xff]
        %v1538 = vld [vmem:[%s1106 + $0x381] sm:$0xff]
        %v1539 = vld [vmem:[%s1106 + $0x391] sm:$0xff]
        %v1540 = vld [vmem:[%s1106 + $0x3c1] sm:$0xff]
        %v1541 = vld [vmem:[%s1106 + $0x3d1] sm:$0xff]
        %v1542 = vld [vmem:[%s1106 + $0x3e1] sm:$0xff]
        %v1543 = vld [vmem:[%s1106 + $0x3f1] sm:$0xff]
        %v1544 = vld [vmem:[%s1106 + $0x401] sm:$0xff]
        %v1545 = vld [vmem:[%s1106 + $0x411] sm:$0xff]
        %v1546 = vld [vmem:[%s1106 + $0x421] sm:$0xff]
        %v1547 = vld [vmem:[%s1106 + $0x431] sm:$0xff]
        %v1548 = vld [vmem:[%s1106 + $0x461] sm:$0xff]
        %v1549 = vld [vmem:[%s1106 + $0x471] sm:$0xff]
        %v1550 = vld [vmem:[%s1106 + $0x481] sm:$0xff]
        %v1551 = vld [vmem:[%s1106 + $0x491] sm:$0xff]
        %v1552 = vld [vmem:[%s1106 + $0x4a1] sm:$0xff]
        %v1553 = vld [vmem:[%s1106 + $0x4b1] sm:$0xff]
        %v1554 = vld [vmem:[%s1106 + $0x4c1] sm:$0xff]
        %v1555 = vld [vmem:[%s1106 + $0x4d1] sm:$0xff]
        %1620 = vrot.lane.b32.xlu0 %v1492, 16
        %v1621 = vpop.permute.xlu0 %1620
        %1622 = vrot.lane.b32.xlu0 %v1493, 16
        %v1623 = vpop.permute.xlu0 %1622
        %1624 = vrot.lane.b32.xlu0 %v1494, 16
        %v1625 = vpop.permute.xlu0 %1624
        %1626 = vrot.lane.b32.xlu0 %v1495, 16
        %v1627 = vpop.permute.xlu0 %1626
        %1628 = vrot.lane.b32.xlu0 %v1496, 16
        %v1629 = vpop.permute.xlu0 %1628
        %1630 = vrot.lane.b32.xlu0 %v1497, 16
        %v1631 = vpop.permute.xlu0 %1630
        %1632 = vrot.lane.b32.xlu0 %v1498, 16
        %v1633 = vpop.permute.xlu0 %1632
        %1634 = vrot.lane.b32.xlu0 %v1499, 16
        %v1635 = vpop.permute.xlu0 %1634
        %1636 = vrot.lane.b32.xlu0 %v1500, 16
        %v1637 = vpop.permute.xlu0 %1636
        %1638 = vrot.lane.b32.xlu0 %v1501, 16
        %v1639 = vpop.permute.xlu0 %1638
        %1640 = vrot.lane.b32.xlu0 %v1502, 16
        %v1641 = vpop.permute.xlu0 %1640
        %1642 = vrot.lane.b32.xlu0 %v1503, 16
        %v1643 = vpop.permute.xlu0 %1642
        %1644 = vrot.lane.b32.xlu0 %v1504, 16
        %v1645 = vpop.permute.xlu0 %1644
        %1646 = vrot.lane.b32.xlu0 %v1505, 16
        %v1647 = vpop.permute.xlu0 %1646
        %1648 = vrot.lane.b32.xlu0 %v1506, 16
        %v1649 = vpop.permute.xlu0 %1648
        %1650 = vrot.lane.b32.xlu0 %v1507, 16
        %v1651 = vpop.permute.xlu0 %1650
        %1652 = vrot.lane.b32.xlu0 %v1508, 16
        %v1653 = vpop.permute.xlu0 %1652
        %1654 = vrot.lane.b32.xlu0 %v1509, 16
        %v1655 = vpop.permute.xlu0 %1654
        %1656 = vrot.lane.b32.xlu0 %v1510, 16
        %v1657 = vpop.permute.xlu0 %1656
        %1658 = vrot.lane.b32.xlu0 %v1511, 16
        %v1659 = vpop.permute.xlu0 %1658
        %1660 = vrot.lane.b32.xlu0 %v1512, 16
        %v1661 = vpop.permute.xlu0 %1660
        %1662 = vrot.lane.b32.xlu0 %v1513, 16
        %v1663 = vpop.permute.xlu0 %1662
        %1664 = vrot.lane.b32.xlu0 %v1514, 16
        %v1665 = vpop.permute.xlu0 %1664
        %1666 = vrot.lane.b32.xlu0 %v1515, 16
        %v1667 = vpop.permute.xlu0 %1666
        %1668 = vrot.lane.b32.xlu0 %v1516, 16
        %v1669 = vpop.permute.xlu0 %1668
        %1670 = vrot.lane.b32.xlu0 %v1517, 16
        %v1671 = vpop.permute.xlu0 %1670
        %1672 = vrot.lane.b32.xlu0 %v1518, 16
        %v1673 = vpop.permute.xlu0 %1672
        %1674 = vrot.lane.b32.xlu0 %v1519, 16
        %v1675 = vpop.permute.xlu0 %1674
        %1676 = vrot.lane.b32.xlu0 %v1520, 16
        %v1677 = vpop.permute.xlu0 %1676
        %1678 = vrot.lane.b32.xlu0 %v1521, 16
        %v1679 = vpop.permute.xlu0 %1678
        %1680 = vrot.lane.b32.xlu0 %v1522, 16
        %v1681 = vpop.permute.xlu0 %1680
        %1682 = vrot.lane.b32.xlu0 %v1523, 16
        %v1683 = vpop.permute.xlu0 %1682
        %1684 = vrot.lane.b32.xlu0 %v1524, 16
        %v1685 = vpop.permute.xlu0 %1684
        %1686 = vrot.lane.b32.xlu0 %v1525, 16
        %v1687 = vpop.permute.xlu0 %1686
        %1688 = vrot.lane.b32.xlu0 %v1526, 16
        %v1689 = vpop.permute.xlu0 %1688
        %1690 = vrot.lane.b32.xlu0 %v1527, 16
        %v1691 = vpop.permute.xlu0 %1690
        %1692 = vrot.lane.b32.xlu0 %v1528, 16
        %v1693 = vpop.permute.xlu0 %1692
        %1694 = vrot.lane.b32.xlu0 %v1529, 16
        %v1695 = vpop.permute.xlu0 %1694
        %1696 = vrot.lane.b32.xlu0 %v1530, 16
        %v1697 = vpop.permute.xlu0 %1696
        %1698 = vrot.lane.b32.xlu0 %v1531, 16
        %v1699 = vpop.permute.xlu0 %1698
        %1700 = vrot.lane.b32.xlu0 %v1532, 16
        %v1701 = vpop.permute.xlu0 %1700
        %1702 = vrot.lane.b32.xlu0 %v1533, 16
        %v1703 = vpop.permute.xlu0 %1702
        %1704 = vrot.lane.b32.xlu0 %v1534, 16
        %v1705 = vpop.permute.xlu0 %1704
        %1706 = vrot.lane.b32.xlu0 %v1535, 16
        %v1707 = vpop.permute.xlu0 %1706
        %1708 = vrot.lane.b32.xlu0 %v1536, 16
        %v1709 = vpop.permute.xlu0 %1708
        %1710 = vrot.lane.b32.xlu0 %v1537, 16
        %v1711 = vpop.permute.xlu0 %1710
        %1712 = vrot.lane.b32.xlu0 %v1538, 16
        %v1713 = vpop.permute.xlu0 %1712
        %1714 = vrot.lane.b32.xlu0 %v1539, 16
        %v1715 = vpop.permute.xlu0 %1714
        %1716 = vrot.lane.b32.xlu0 %v1540, 16
        %v1717 = vpop.permute.xlu0 %1716
        %1718 = vrot.lane.b32.xlu0 %v1541, 16
        %v1719 = vpop.permute.xlu0 %1718
        %1720 = vrot.lane.b32.xlu0 %v1542, 16
        %v1721 = vpop.permute.xlu0 %1720
        %1722 = vrot.lane.b32.xlu0 %v1543, 16
        %v1723 = vpop.permute.xlu0 %1722
        %1724 = vrot.lane.b32.xlu0 %v1544, 16
        %v1725 = vpop.permute.xlu0 %1724
        %1726 = vrot.lane.b32.xlu0 %v1545, 16
        %v1727 = vpop.permute.xlu0 %1726
        %1728 = vrot.lane.b32.xlu0 %v1546, 16
        %v1729 = vpop.permute.xlu0 %1728
        %1730 = vrot.lane.b32.xlu0 %v1547, 16
        %v1731 = vpop.permute.xlu0 %1730
        %1732 = vrot.lane.b32.xlu0 %v1548, 16
        %v1733 = vpop.permute.xlu0 %1732
        %1734 = vrot.lane.b32.xlu0 %v1549, 16
        %v1735 = vpop.permute.xlu0 %1734
        %1736 = vrot.lane.b32.xlu0 %v1550, 16
        %v1737 = vpop.permute.xlu0 %1736
        %1738 = vrot.lane.b32.xlu0 %v1551, 16
        %v1739 = vpop.permute.xlu0 %1738
        %1740 = vrot.lane.b32.xlu0 %v1552, 16
        %v1741 = vpop.permute.xlu0 %1740
        %1742 = vrot.lane.b32.xlu0 %v1553, 16
        %v1743 = vpop.permute.xlu0 %1742
        %1744 = vrot.lane.b32.xlu0 %v1554, 16
        %v1745 = vpop.permute.xlu0 %1744
        %1746 = vrot.lane.b32.xlu0 %v1555, 16
        %v1747 = vpop.permute.xlu0 %1746
        %vm1812 = vcmask 162944
        %1813 = vst.msk [vmem:[#allocation2] sm:$0xff] %vm1812, %v1621
        %1814 = vst.msk [vmem:[#allocation2 + $0x8] sm:$0xff] %vm1812, %v1623
        %1815 = vst.msk [vmem:[#allocation2 + $0x10] sm:$0xff] %vm1812, %v1625
        %1816 = vst.msk [vmem:[#allocation2 + $0x18] sm:$0xff] %vm1812, %v1627
        %1817 = vst.msk [vmem:[#allocation2 + $0x20] sm:$0xff] %vm1812, %v1629
        %1818 = vst.msk [vmem:[#allocation2 + $0x28] sm:$0xff] %vm1812, %v1631
        %1819 = vst.msk [vmem:[#allocation2 + $0x30] sm:$0xff] %vm1812, %v1633
        %1820 = vst.msk [vmem:[#allocation2 + $0x38] sm:$0xff] %vm1812, %v1635
        %1821 = vst.msk [vmem:[#allocation2 + $0x40] sm:$0xff] %vm1812, %v1637
        %1822 = vst.msk [vmem:[#allocation2 + $0x48] sm:$0xff] %vm1812, %v1639
        %1823 = vst.msk [vmem:[#allocation2 + $0x50] sm:$0xff] %vm1812, %v1641
        %1824 = vst.msk [vmem:[#allocation2 + $0x58] sm:$0xff] %vm1812, %v1643
        %1825 = vst.msk [vmem:[#allocation2 + $0x60] sm:$0xff] %vm1812, %v1645
        %1826 = vst.msk [vmem:[#allocation2 + $0x68] sm:$0xff] %vm1812, %v1647
        %1827 = vst.msk [vmem:[#allocation2 + $0x70] sm:$0xff] %vm1812, %v1649
        %1828 = vst.msk [vmem:[#allocation2 + $0x78] sm:$0xff] %vm1812, %v1651
        %1829 = vst.msk [vmem:[#allocation2 + $0x80] sm:$0xff] %vm1812, %v1653
        %1830 = vst.msk [vmem:[#allocation2 + $0x88] sm:$0xff] %vm1812, %v1655
        %1831 = vst.msk [vmem:[#allocation2 + $0x90] sm:$0xff] %vm1812, %v1657
        %1832 = vst.msk [vmem:[#allocation2 + $0x98] sm:$0xff] %vm1812, %v1659
        %1833 = vst.msk [vmem:[#allocation2 + $0xa0] sm:$0xff] %vm1812, %v1661
        %1834 = vst.msk [vmem:[#allocation2 + $0xa8] sm:$0xff] %vm1812, %v1663
        %1835 = vst.msk [vmem:[#allocation2 + $0xb0] sm:$0xff] %vm1812, %v1665
        %1836 = vst.msk [vmem:[#allocation2 + $0xb8] sm:$0xff] %vm1812, %v1667
        %1837 = vst.msk [vmem:[#allocation2 + $0xc0] sm:$0xff] %vm1812, %v1669
        %1838 = vst.msk [vmem:[#allocation2 + $0xc8] sm:$0xff] %vm1812, %v1671
        %1839 = vst.msk [vmem:[#allocation2 + $0xd0] sm:$0xff] %vm1812, %v1673
        %1840 = vst.msk [vmem:[#allocation2 + $0xd8] sm:$0xff] %vm1812, %v1675
        %1841 = vst.msk [vmem:[#allocation2 + $0xe0] sm:$0xff] %vm1812, %v1677
        %1842 = vst.msk [vmem:[#allocation2 + $0xe8] sm:$0xff] %vm1812, %v1679
        %1843 = vst.msk [vmem:[#allocation2 + $0xf0] sm:$0xff] %vm1812, %v1681
        %1844 = vst.msk [vmem:[#allocation2 + $0xf8] sm:$0xff] %vm1812, %v1683
        %1845 = vst.msk [vmem:[#allocation2 + $0x100] sm:$0xff] %vm1812, %v1685
        %1846 = vst.msk [vmem:[#allocation2 + $0x108] sm:$0xff] %vm1812, %v1687
        %1847 = vst.msk [vmem:[#allocation2 + $0x110] sm:$0xff] %vm1812, %v1689
        %1848 = vst.msk [vmem:[#allocation2 + $0x118] sm:$0xff] %vm1812, %v1691
        %1849 = vst.msk [vmem:[#allocation2 + $0x120] sm:$0xff] %vm1812, %v1693
        %1850 = vst.msk [vmem:[#allocation2 + $0x128] sm:$0xff] %vm1812, %v1695
        %1851 = vst.msk [vmem:[#allocation2 + $0x130] sm:$0xff] %vm1812, %v1697
        %1852 = vst.msk [vmem:[#allocation2 + $0x138] sm:$0xff] %vm1812, %v1699
        %1853 = vst.msk [vmem:[#allocation2 + $0x140] sm:$0xff] %vm1812, %v1701
        %1854 = vst.msk [vmem:[#allocation2 + $0x148] sm:$0xff] %vm1812, %v1703
        %1855 = vst.msk [vmem:[#allocation2 + $0x150] sm:$0xff] %vm1812, %v1705
        %1856 = vst.msk [vmem:[#allocation2 + $0x158] sm:$0xff] %vm1812, %v1707
        %1857 = vst.msk [vmem:[#allocation2 + $0x160] sm:$0xff] %vm1812, %v1709
        %1858 = vst.msk [vmem:[#allocation2 + $0x168] sm:$0xff] %vm1812, %v1711
        %1859 = vst.msk [vmem:[#allocation2 + $0x170] sm:$0xff] %vm1812, %v1713
        %1860 = vst.msk [vmem:[#allocation2 + $0x178] sm:$0xff] %vm1812, %v1715
        %1861 = vst.msk [vmem:[#allocation2 + $0x180] sm:$0xff] %vm1812, %v1717
        %1862 = vst.msk [vmem:[#allocation2 + $0x188] sm:$0xff] %vm1812, %v1719
        %1863 = vst.msk [vmem:[#allocation2 + $0x190] sm:$0xff] %vm1812, %v1721
        %1864 = vst.msk [vmem:[#allocation2 + $0x198] sm:$0xff] %vm1812, %v1723
        %1865 = vst.msk [vmem:[#allocation2 + $0x1a0] sm:$0xff] %vm1812, %v1725
        %1866 = vst.msk [vmem:[#allocation2 + $0x1a8] sm:$0xff] %vm1812, %v1727
        %1867 = vst.msk [vmem:[#allocation2 + $0x1b0] sm:$0xff] %vm1812, %v1729
        %1868 = vst.msk [vmem:[#allocation2 + $0x1b8] sm:$0xff] %vm1812, %v1731
        %1869 = vst.msk [vmem:[#allocation2 + $0x1c0] sm:$0xff] %vm1812, %v1733
        %1870 = vst.msk [vmem:[#allocation2 + $0x1c8] sm:$0xff] %vm1812, %v1735
        %1871 = vst.msk [vmem:[#allocation2 + $0x1d0] sm:$0xff] %vm1812, %v1737
        %1872 = vst.msk [vmem:[#allocation2 + $0x1d8] sm:$0xff] %vm1812, %v1739
        %1873 = vst.msk [vmem:[#allocation2 + $0x1e0] sm:$0xff] %vm1812, %v1741
        %1874 = vst.msk [vmem:[#allocation2 + $0x1e8] sm:$0xff] %vm1812, %v1743
        %1875 = vst.msk [vmem:[#allocation2 + $0x1f0] sm:$0xff] %vm1812, %v1745
        %1876 = vst.msk [vmem:[#allocation2 + $0x1f8] sm:$0xff] %vm1812, %v1747
        %v1877 = vld [vmem:[%s1106 + $0x2] sm:$0xff]
        %v1878 = vld [vmem:[%s1106 + $0x12] sm:$0xff]
        %v1879 = vld [vmem:[%s1106 + $0x22] sm:$0xff]
        %v1880 = vld [vmem:[%s1106 + $0x32] sm:$0xff]
        %v1881 = vld [vmem:[%s1106 + $0x42] sm:$0xff]
        %v1882 = vld [vmem:[%s1106 + $0x52] sm:$0xff]
        %v1883 = vld [vmem:[%s1106 + $0x62] sm:$0xff]
        %v1884 = vld [vmem:[%s1106 + $0x72] sm:$0xff]
        %v1885 = vld [vmem:[%s1106 + $0xa2] sm:$0xff]
        %v1886 = vld [vmem:[%s1106 + $0xb2] sm:$0xff]
        %v1887 = vld [vmem:[%s1106 + $0xc2] sm:$0xff]
        %v1888 = vld [vmem:[%s1106 + $0xd2] sm:$0xff]
        %v1889 = vld [vmem:[%s1106 + $0xe2] sm:$0xff]
        %v1890 = vld [vmem:[%s1106 + $0xf2] sm:$0xff]
        %v1891 = vld [vmem:[%s1106 + $0x102] sm:$0xff]
        %v1892 = vld [vmem:[%s1106 + $0x112] sm:$0xff]
        %v1893 = vld [vmem:[%s1106 + $0x142] sm:$0xff]
        %v1894 = vld [vmem:[%s1106 + $0x152] sm:$0xff]
        %v1895 = vld [vmem:[%s1106 + $0x162] sm:$0xff]
        %v1896 = vld [vmem:[%s1106 + $0x172] sm:$0xff]
        %v1897 = vld [vmem:[%s1106 + $0x182] sm:$0xff]
        %v1898 = vld [vmem:[%s1106 + $0x192] sm:$0xff]
        %v1899 = vld [vmem:[%s1106 + $0x1a2] sm:$0xff]
        %v1900 = vld [vmem:[%s1106 + $0x1b2] sm:$0xff]
        %v1901 = vld [vmem:[%s1106 + $0x1e2] sm:$0xff]
        %v1902 = vld [vmem:[%s1106 + $0x1f2] sm:$0xff]
        %v1903 = vld [vmem:[%s1106 + $0x202] sm:$0xff]
        %v1904 = vld [vmem:[%s1106 + $0x212] sm:$0xff]
        %v1905 = vld [vmem:[%s1106 + $0x222] sm:$0xff]
        %v1906 = vld [vmem:[%s1106 + $0x232] sm:$0xff]
        %v1907 = vld [vmem:[%s1106 + $0x242] sm:$0xff]
        %v1908 = vld [vmem:[%s1106 + $0x252] sm:$0xff]
        %v1909 = vld [vmem:[%s1106 + $0x282] sm:$0xff]
        %v1910 = vld [vmem:[%s1106 + $0x292] sm:$0xff]
        %v1911 = vld [vmem:[%s1106 + $0x2a2] sm:$0xff]
        %v1912 = vld [vmem:[%s1106 + $0x2b2] sm:$0xff]
        %v1913 = vld [vmem:[%s1106 + $0x2c2] sm:$0xff]
        %v1914 = vld [vmem:[%s1106 + $0x2d2] sm:$0xff]
        %v1915 = vld [vmem:[%s1106 + $0x2e2] sm:$0xff]
        %v1916 = vld [vmem:[%s1106 + $0x2f2] sm:$0xff]
        %v1917 = vld [vmem:[%s1106 + $0x322] sm:$0xff]
        %v1918 = vld [vmem:[%s1106 + $0x332] sm:$0xff]
        %v1919 = vld [vmem:[%s1106 + $0x342] sm:$0xff]
        %v1920 = vld [vmem:[%s1106 + $0x352] sm:$0xff]
        %v1921 = vld [vmem:[%s1106 + $0x362] sm:$0xff]
        %v1922 = vld [vmem:[%s1106 + $0x372] sm:$0xff]
        %v1923 = vld [vmem:[%s1106 + $0x382] sm:$0xff]
        %v1924 = vld [vmem:[%s1106 + $0x392] sm:$0xff]
        %v1925 = vld [vmem:[%s1106 + $0x3c2] sm:$0xff]
        %v1926 = vld [vmem:[%s1106 + $0x3d2] sm:$0xff]
        %v1927 = vld [vmem:[%s1106 + $0x3e2] sm:$0xff]
        %v1928 = vld [vmem:[%s1106 + $0x3f2] sm:$0xff]
        %v1929 = vld [vmem:[%s1106 + $0x402] sm:$0xff]
        %v1930 = vld [vmem:[%s1106 + $0x412] sm:$0xff]
        %v1931 = vld [vmem:[%s1106 + $0x422] sm:$0xff]
        %v1932 = vld [vmem:[%s1106 + $0x432] sm:$0xff]
        %v1933 = vld [vmem:[%s1106 + $0x462] sm:$0xff]
        %v1934 = vld [vmem:[%s1106 + $0x472] sm:$0xff]
        %v1935 = vld [vmem:[%s1106 + $0x482] sm:$0xff]
        %v1936 = vld [vmem:[%s1106 + $0x492] sm:$0xff]
        %v1937 = vld [vmem:[%s1106 + $0x4a2] sm:$0xff]
        %v1938 = vld [vmem:[%s1106 + $0x4b2] sm:$0xff]
        %v1939 = vld [vmem:[%s1106 + $0x4c2] sm:$0xff]
        %v1940 = vld [vmem:[%s1106 + $0x4d2] sm:$0xff]
        %2005 = vrot.lane.b32.xlu0 %v1877, 20
        %v2006 = vpop.permute.xlu0 %2005
        %2007 = vrot.lane.b32.xlu0 %v1878, 20
        %v2008 = vpop.permute.xlu0 %2007
        %2009 = vrot.lane.b32.xlu0 %v1879, 20
        %v2010 = vpop.permute.xlu0 %2009
        %2011 = vrot.lane.b32.xlu0 %v1880, 20
        %v2012 = vpop.permute.xlu0 %2011
        %2013 = vrot.lane.b32.xlu0 %v1881, 20
        %v2014 = vpop.permute.xlu0 %2013
        %2015 = vrot.lane.b32.xlu0 %v1882, 20
        %v2016 = vpop.permute.xlu0 %2015
        %2017 = vrot.lane.b32.xlu0 %v1883, 20
        %v2018 = vpop.permute.xlu0 %2017
        %2019 = vrot.lane.b32.xlu0 %v1884, 20
        %v2020 = vpop.permute.xlu0 %2019
        %2021 = vrot.lane.b32.xlu0 %v1885, 20
        %v2022 = vpop.permute.xlu0 %2021
        %2023 = vrot.lane.b32.xlu0 %v1886, 20
        %v2024 = vpop.permute.xlu0 %2023
        %2025 = vrot.lane.b32.xlu0 %v1887, 20
        %v2026 = vpop.permute.xlu0 %2025
        %2027 = vrot.lane.b32.xlu0 %v1888, 20
        %v2028 = vpop.permute.xlu0 %2027
        %2029 = vrot.lane.b32.xlu0 %v1889, 20
        %v2030 = vpop.permute.xlu0 %2029
        %2031 = vrot.lane.b32.xlu0 %v1890, 20
        %v2032 = vpop.permute.xlu0 %2031
        %2033 = vrot.lane.b32.xlu0 %v1891, 20
        %v2034 = vpop.permute.xlu0 %2033
        %2035 = vrot.lane.b32.xlu0 %v1892, 20
        %v2036 = vpop.permute.xlu0 %2035
        %2037 = vrot.lane.b32.xlu0 %v1893, 20
        %v2038 = vpop.permute.xlu0 %2037
        %2039 = vrot.lane.b32.xlu0 %v1894, 20
        %v2040 = vpop.permute.xlu0 %2039
        %2041 = vrot.lane.b32.xlu0 %v1895, 20
        %v2042 = vpop.permute.xlu0 %2041
        %2043 = vrot.lane.b32.xlu0 %v1896, 20
        %v2044 = vpop.permute.xlu0 %2043
        %2045 = vrot.lane.b32.xlu0 %v1897, 20
        %v2046 = vpop.permute.xlu0 %2045
        %2047 = vrot.lane.b32.xlu0 %v1898, 20
        %v2048 = vpop.permute.xlu0 %2047
        %2049 = vrot.lane.b32.xlu0 %v1899, 20
        %v2050 = vpop.permute.xlu0 %2049
        %2051 = vrot.lane.b32.xlu0 %v1900, 20
        %v2052 = vpop.permute.xlu0 %2051
        %2053 = vrot.lane.b32.xlu0 %v1901, 20
        %v2054 = vpop.permute.xlu0 %2053
        %2055 = vrot.lane.b32.xlu0 %v1902, 20
        %v2056 = vpop.permute.xlu0 %2055
        %2057 = vrot.lane.b32.xlu0 %v1903, 20
        %v2058 = vpop.permute.xlu0 %2057
        %2059 = vrot.lane.b32.xlu0 %v1904, 20
        %v2060 = vpop.permute.xlu0 %2059
        %2061 = vrot.lane.b32.xlu0 %v1905, 20
        %v2062 = vpop.permute.xlu0 %2061
        %2063 = vrot.lane.b32.xlu0 %v1906, 20
        %v2064 = vpop.permute.xlu0 %2063
        %2065 = vrot.lane.b32.xlu0 %v1907, 20
        %v2066 = vpop.permute.xlu0 %2065
        %2067 = vrot.lane.b32.xlu0 %v1908, 20
        %v2068 = vpop.permute.xlu0 %2067
        %2069 = vrot.lane.b32.xlu0 %v1909, 20
        %v2070 = vpop.permute.xlu0 %2069
        %2071 = vrot.lane.b32.xlu0 %v1910, 20
        %v2072 = vpop.permute.xlu0 %2071
        %2073 = vrot.lane.b32.xlu0 %v1911, 20
        %v2074 = vpop.permute.xlu0 %2073
        %2075 = vrot.lane.b32.xlu0 %v1912, 20
        %v2076 = vpop.permute.xlu0 %2075
        %2077 = vrot.lane.b32.xlu0 %v1913, 20
        %v2078 = vpop.permute.xlu0 %2077
        %2079 = vrot.lane.b32.xlu0 %v1914, 20
        %v2080 = vpop.permute.xlu0 %2079
        %2081 = vrot.lane.b32.xlu0 %v1915, 20
        %v2082 = vpop.permute.xlu0 %2081
        %2083 = vrot.lane.b32.xlu0 %v1916, 20
        %v2084 = vpop.permute.xlu0 %2083
        %2085 = vrot.lane.b32.xlu0 %v1917, 20
        %v2086 = vpop.permute.xlu0 %2085
        %2087 = vrot.lane.b32.xlu0 %v1918, 20
        %v2088 = vpop.permute.xlu0 %2087
        %2089 = vrot.lane.b32.xlu0 %v1919, 20
        %v2090 = vpop.permute.xlu0 %2089
        %2091 = vrot.lane.b32.xlu0 %v1920, 20
        %v2092 = vpop.permute.xlu0 %2091
        %2093 = vrot.lane.b32.xlu0 %v1921, 20
        %v2094 = vpop.permute.xlu0 %2093
        %2095 = vrot.lane.b32.xlu0 %v1922, 20
        %v2096 = vpop.permute.xlu0 %2095
        %2097 = vrot.lane.b32.xlu0 %v1923, 20
        %v2098 = vpop.permute.xlu0 %2097
        %2099 = vrot.lane.b32.xlu0 %v1924, 20
        %v2100 = vpop.permute.xlu0 %2099
        %2101 = vrot.lane.b32.xlu0 %v1925, 20
        %v2102 = vpop.permute.xlu0 %2101
        %2103 = vrot.lane.b32.xlu0 %v1926, 20
        %v2104 = vpop.permute.xlu0 %2103
        %2105 = vrot.lane.b32.xlu0 %v1927, 20
        %v2106 = vpop.permute.xlu0 %2105
        %2107 = vrot.lane.b32.xlu0 %v1928, 20
        %v2108 = vpop.permute.xlu0 %2107
        %2109 = vrot.lane.b32.xlu0 %v1929, 20
        %v2110 = vpop.permute.xlu0 %2109
        %2111 = vrot.lane.b32.xlu0 %v1930, 20
        %v2112 = vpop.permute.xlu0 %2111
        %2113 = vrot.lane.b32.xlu0 %v1931, 20
        %v2114 = vpop.permute.xlu0 %2113
        %2115 = vrot.lane.b32.xlu0 %v1932, 20
        %v2116 = vpop.permute.xlu0 %2115
        %2117 = vrot.lane.b32.xlu0 %v1933, 20
        %v2118 = vpop.permute.xlu0 %2117
        %2119 = vrot.lane.b32.xlu0 %v1934, 20
        %v2120 = vpop.permute.xlu0 %2119
        %2121 = vrot.lane.b32.xlu0 %v1935, 20
        %v2122 = vpop.permute.xlu0 %2121
        %2123 = vrot.lane.b32.xlu0 %v1936, 20
        %v2124 = vpop.permute.xlu0 %2123
        %2125 = vrot.lane.b32.xlu0 %v1937, 20
        %v2126 = vpop.permute.xlu0 %2125
        %2127 = vrot.lane.b32.xlu0 %v1938, 20
        %v2128 = vpop.permute.xlu0 %2127
        %2129 = vrot.lane.b32.xlu0 %v1939, 20
        %v2130 = vpop.permute.xlu0 %2129
        %2131 = vrot.lane.b32.xlu0 %v1940, 20
        %v2132 = vpop.permute.xlu0 %2131
        %vm2197 = vcmask 195744
        %2198 = vst.msk [vmem:[#allocation2] sm:$0xff] %vm2197, %v2006
        %2199 = vst.msk [vmem:[#allocation2 + $0x8] sm:$0xff] %vm2197, %v2008
        %2200 = vst.msk [vmem:[#allocation2 + $0x10] sm:$0xff] %vm2197, %v2010
        %2201 = vst.msk [vmem:[#allocation2 + $0x18] sm:$0xff] %vm2197, %v2012
        %2202 = vst.msk [vmem:[#allocation2 + $0x20] sm:$0xff] %vm2197, %v2014
        %2203 = vst.msk [vmem:[#allocation2 + $0x28] sm:$0xff] %vm2197, %v2016
        %2204 = vst.msk [vmem:[#allocation2 + $0x30] sm:$0xff] %vm2197, %v2018
        %2205 = vst.msk [vmem:[#allocation2 + $0x38] sm:$0xff] %vm2197, %v2020
        %2206 = vst.msk [vmem:[#allocation2 + $0x40] sm:$0xff] %vm2197, %v2022
        %2207 = vst.msk [vmem:[#allocation2 + $0x48] sm:$0xff] %vm2197, %v2024
        %2208 = vst.msk [vmem:[#allocation2 + $0x50] sm:$0xff] %vm2197, %v2026
        %2209 = vst.msk [vmem:[#allocation2 + $0x58] sm:$0xff] %vm2197, %v2028
        %2210 = vst.msk [vmem:[#allocation2 + $0x60] sm:$0xff] %vm2197, %v2030
        %2211 = vst.msk [vmem:[#allocation2 + $0x68] sm:$0xff] %vm2197, %v2032
        %2212 = vst.msk [vmem:[#allocation2 + $0x70] sm:$0xff] %vm2197, %v2034
        %2213 = vst.msk [vmem:[#allocation2 + $0x78] sm:$0xff] %vm2197, %v2036
        %2214 = vst.msk [vmem:[#allocation2 + $0x80] sm:$0xff] %vm2197, %v2038
        %2215 = vst.msk [vmem:[#allocation2 + $0x88] sm:$0xff] %vm2197, %v2040
        %2216 = vst.msk [vmem:[#allocation2 + $0x90] sm:$0xff] %vm2197, %v2042
        %2217 = vst.msk [vmem:[#allocation2 + $0x98] sm:$0xff] %vm2197, %v2044
        %2218 = vst.msk [vmem:[#allocation2 + $0xa0] sm:$0xff] %vm2197, %v2046
        %2219 = vst.msk [vmem:[#allocation2 + $0xa8] sm:$0xff] %vm2197, %v2048
        %2220 = vst.msk [vmem:[#allocation2 + $0xb0] sm:$0xff] %vm2197, %v2050
        %2221 = vst.msk [vmem:[#allocation2 + $0xb8] sm:$0xff] %vm2197, %v2052
        %2222 = vst.msk [vmem:[#allocation2 + $0xc0] sm:$0xff] %vm2197, %v2054
        %2223 = vst.msk [vmem:[#allocation2 + $0xc8] sm:$0xff] %vm2197, %v2056
        %2224 = vst.msk [vmem:[#allocation2 + $0xd0] sm:$0xff] %vm2197, %v2058
        %2225 = vst.msk [vmem:[#allocation2 + $0xd8] sm:$0xff] %vm2197, %v2060
        %2226 = vst.msk [vmem:[#allocation2 + $0xe0] sm:$0xff] %vm2197, %v2062
        %2227 = vst.msk [vmem:[#allocation2 + $0xe8] sm:$0xff] %vm2197, %v2064
        %2228 = vst.msk [vmem:[#allocation2 + $0xf0] sm:$0xff] %vm2197, %v2066
        %2229 = vst.msk [vmem:[#allocation2 + $0xf8] sm:$0xff] %vm2197, %v2068
        %2230 = vst.msk [vmem:[#allocation2 + $0x100] sm:$0xff] %vm2197, %v2070
        %2231 = vst.msk [vmem:[#allocation2 + $0x108] sm:$0xff] %vm2197, %v2072
        %2232 = vst.msk [vmem:[#allocation2 + $0x110] sm:$0xff] %vm2197, %v2074
        %2233 = vst.msk [vmem:[#allocation2 + $0x118] sm:$0xff] %vm2197, %v2076
        %2234 = vst.msk [vmem:[#allocation2 + $0x120] sm:$0xff] %vm2197, %v2078
        %2235 = vst.msk [vmem:[#allocation2 + $0x128] sm:$0xff] %vm2197, %v2080
        %2236 = vst.msk [vmem:[#allocation2 + $0x130] sm:$0xff] %vm2197, %v2082
        %2237 = vst.msk [vmem:[#allocation2 + $0x138] sm:$0xff] %vm2197, %v2084
        %2238 = vst.msk [vmem:[#allocation2 + $0x140] sm:$0xff] %vm2197, %v2086
        %2239 = vst.msk [vmem:[#allocation2 + $0x148] sm:$0xff] %vm2197, %v2088
        %2240 = vst.msk [vmem:[#allocation2 + $0x150] sm:$0xff] %vm2197, %v2090
        %2241 = vst.msk [vmem:[#allocation2 + $0x158] sm:$0xff] %vm2197, %v2092
        %2242 = vst.msk [vmem:[#allocation2 + $0x160] sm:$0xff] %vm2197, %v2094
        %2243 = vst.msk [vmem:[#allocation2 + $0x168] sm:$0xff] %vm2197, %v2096
        %2244 = vst.msk [vmem:[#allocation2 + $0x170] sm:$0xff] %vm2197, %v2098
        %2245 = vst.msk [vmem:[#allocation2 + $0x178] sm:$0xff] %vm2197, %v2100
        %2246 = vst.msk [vmem:[#allocation2 + $0x180] sm:$0xff] %vm2197, %v2102
        %2247 = vst.msk [vmem:[#allocation2 + $0x188] sm:$0xff] %vm2197, %v2104
        %2248 = vst.msk [vmem:[#allocation2 + $0x190] sm:$0xff] %vm2197, %v2106
        %2249 = vst.msk [vmem:[#allocation2 + $0x198] sm:$0xff] %vm2197, %v2108
        %2250 = vst.msk [vmem:[#allocation2 + $0x1a0] sm:$0xff] %vm2197, %v2110
        %2251 = vst.msk [vmem:[#allocation2 + $0x1a8] sm:$0xff] %vm2197, %v2112
        %2252 = vst.msk [vmem:[#allocation2 + $0x1b0] sm:$0xff] %vm2197, %v2114
        %2253 = vst.msk [vmem:[#allocation2 + $0x1b8] sm:$0xff] %vm2197, %v2116
        %2254 = vst.msk [vmem:[#allocation2 + $0x1c0] sm:$0xff] %vm2197, %v2118
        %2255 = vst.msk [vmem:[#allocation2 + $0x1c8] sm:$0xff] %vm2197, %v2120
        %2256 = vst.msk [vmem:[#allocation2 + $0x1d0] sm:$0xff] %vm2197, %v2122
        %2257 = vst.msk [vmem:[#allocation2 + $0x1d8] sm:$0xff] %vm2197, %v2124
        %2258 = vst.msk [vmem:[#allocation2 + $0x1e0] sm:$0xff] %vm2197, %v2126
        %2259 = vst.msk [vmem:[#allocation2 + $0x1e8] sm:$0xff] %vm2197, %v2128
        %2260 = vst.msk [vmem:[#allocation2 + $0x1f0] sm:$0xff] %vm2197, %v2130
        %2261 = vst.msk [vmem:[#allocation2 + $0x1f8] sm:$0xff] %vm2197, %v2132
        %s2262 = scalar_lea.vmem %s141, 32
        %v2263 = vld [vmem:[%s2262] sm:$0xff]
        %v2264 = vld [vmem:[%s2262 + $0x10] sm:$0xff]
        %v2265 = vld [vmem:[%s2262 + $0x20] sm:$0xff]
        %v2266 = vld [vmem:[%s2262 + $0x30] sm:$0xff]
        %v2267 = vld [vmem:[%s2262 + $0x40] sm:$0xff]
        %v2268 = vld [vmem:[%s2262 + $0x50] sm:$0xff]
        %v2269 = vld [vmem:[%s2262 + $0x60] sm:$0xff]
        %v2270 = vld [vmem:[%s2262 + $0x70] sm:$0xff]
        %v2271 = vld [vmem:[%s2262 + $0xa0] sm:$0xff]
        %v2272 = vld [vmem:[%s2262 + $0xb0] sm:$0xff]
        %v2273 = vld [vmem:[%s2262 + $0xc0] sm:$0xff]
        %v2274 = vld [vmem:[%s2262 + $0xd0] sm:$0xff]
        %v2275 = vld [vmem:[%s2262 + $0xe0] sm:$0xff]
        %v2276 = vld [vmem:[%s2262 + $0xf0] sm:$0xff]
        %v2277 = vld [vmem:[%s2262 + $0x100] sm:$0xff]
        %v2278 = vld [vmem:[%s2262 + $0x110] sm:$0xff]
        %v2279 = vld [vmem:[%s2262 + $0x140] sm:$0xff]
        %v2280 = vld [vmem:[%s2262 + $0x150] sm:$0xff]
        %v2281 = vld [vmem:[%s2262 + $0x160] sm:$0xff]
        %v2282 = vld [vmem:[%s2262 + $0x170] sm:$0xff]
        %v2283 = vld [vmem:[%s2262 + $0x180] sm:$0xff]
        %v2284 = vld [vmem:[%s2262 + $0x190] sm:$0xff]
        %v2285 = vld [vmem:[%s2262 + $0x1a0] sm:$0xff]
        %v2286 = vld [vmem:[%s2262 + $0x1b0] sm:$0xff]
        %v2287 = vld [vmem:[%s2262 + $0x1e0] sm:$0xff]
        %v2288 = vld [vmem:[%s2262 + $0x1f0] sm:$0xff]
        %v2289 = vld [vmem:[%s2262 + $0x200] sm:$0xff]
        %v2290 = vld [vmem:[%s2262 + $0x210] sm:$0xff]
        %v2291 = vld [vmem:[%s2262 + $0x220] sm:$0xff]
        %v2292 = vld [vmem:[%s2262 + $0x230] sm:$0xff]
        %v2293 = vld [vmem:[%s2262 + $0x240] sm:$0xff]
        %v2294 = vld [vmem:[%s2262 + $0x250] sm:$0xff]
        %v2295 = vld [vmem:[%s2262 + $0x280] sm:$0xff]
        %v2296 = vld [vmem:[%s2262 + $0x290] sm:$0xff]
        %v2297 = vld [vmem:[%s2262 + $0x2a0] sm:$0xff]
        %v2298 = vld [vmem:[%s2262 + $0x2b0] sm:$0xff]
        %v2299 = vld [vmem:[%s2262 + $0x2c0] sm:$0xff]
        %v2300 = vld [vmem:[%s2262 + $0x2d0] sm:$0xff]
        %v2301 = vld [vmem:[%s2262 + $0x2e0] sm:$0xff]
        %v2302 = vld [vmem:[%s2262 + $0x2f0] sm:$0xff]
        %v2303 = vld [vmem:[%s2262 + $0x320] sm:$0xff]
        %v2304 = vld [vmem:[%s2262 + $0x330] sm:$0xff]
        %v2305 = vld [vmem:[%s2262 + $0x340] sm:$0xff]
        %v2306 = vld [vmem:[%s2262 + $0x350] sm:$0xff]
        %v2307 = vld [vmem:[%s2262 + $0x360] sm:$0xff]
        %v2308 = vld [vmem:[%s2262 + $0x370] sm:$0xff]
        %v2309 = vld [vmem:[%s2262 + $0x380] sm:$0xff]
        %v2310 = vld [vmem:[%s2262 + $0x390] sm:$0xff]
        %v2311 = vld [vmem:[%s2262 + $0x3c0] sm:$0xff]
        %v2312 = vld [vmem:[%s2262 + $0x3d0] sm:$0xff]
        %v2313 = vld [vmem:[%s2262 + $0x3e0] sm:$0xff]
        %v2314 = vld [vmem:[%s2262 + $0x3f0] sm:$0xff]
        %v2315 = vld [vmem:[%s2262 + $0x400] sm:$0xff]
        %v2316 = vld [vmem:[%s2262 + $0x410] sm:$0xff]
        %v2317 = vld [vmem:[%s2262 + $0x420] sm:$0xff]
        %v2318 = vld [vmem:[%s2262 + $0x430] sm:$0xff]
        %v2319 = vld [vmem:[%s2262 + $0x460] sm:$0xff]
        %v2320 = vld [vmem:[%s2262 + $0x470] sm:$0xff]
        %v2321 = vld [vmem:[%s2262 + $0x480] sm:$0xff]
        %v2322 = vld [vmem:[%s2262 + $0x490] sm:$0xff]
        %v2323 = vld [vmem:[%s2262 + $0x4a0] sm:$0xff]
        %v2324 = vld [vmem:[%s2262 + $0x4b0] sm:$0xff]
        %v2325 = vld [vmem:[%s2262 + $0x4c0] sm:$0xff]
        %v2326 = vld [vmem:[%s2262 + $0x4d0] sm:$0xff]
        %2391 = vrot.lane.b32.xlu0 %v2263, 24
        %v2392 = vpop.permute.xlu0 %2391
        %2393 = vrot.lane.b32.xlu0 %v2264, 24
        %v2394 = vpop.permute.xlu0 %2393
        %2395 = vrot.lane.b32.xlu0 %v2265, 24
        %v2396 = vpop.permute.xlu0 %2395
        %2397 = vrot.lane.b32.xlu0 %v2266, 24
        %v2398 = vpop.permute.xlu0 %2397
        %2399 = vrot.lane.b32.xlu0 %v2267, 24
        %v2400 = vpop.permute.xlu0 %2399
        %2401 = vrot.lane.b32.xlu0 %v2268, 24
        %v2402 = vpop.permute.xlu0 %2401
        %2403 = vrot.lane.b32.xlu0 %v2269, 24
        %v2404 = vpop.permute.xlu0 %2403
        %2405 = vrot.lane.b32.xlu0 %v2270, 24
        %v2406 = vpop.permute.xlu0 %2405
        %2407 = vrot.lane.b32.xlu0 %v2271, 24
        %v2408 = vpop.permute.xlu0 %2407
        %2409 = vrot.lane.b32.xlu0 %v2272, 24
        %v2410 = vpop.permute.xlu0 %2409
        %2411 = vrot.lane.b32.xlu0 %v2273, 24
        %v2412 = vpop.permute.xlu0 %2411
        %2413 = vrot.lane.b32.xlu0 %v2274, 24
        %v2414 = vpop.permute.xlu0 %2413
        %2415 = vrot.lane.b32.xlu0 %v2275, 24
        %v2416 = vpop.permute.xlu0 %2415
        %2417 = vrot.lane.b32.xlu0 %v2276, 24
        %v2418 = vpop.permute.xlu0 %2417
        %2419 = vrot.lane.b32.xlu0 %v2277, 24
        %v2420 = vpop.permute.xlu0 %2419
        %2421 = vrot.lane.b32.xlu0 %v2278, 24
        %v2422 = vpop.permute.xlu0 %2421
        %2423 = vrot.lane.b32.xlu0 %v2279, 24
        %v2424 = vpop.permute.xlu0 %2423
        %2425 = vrot.lane.b32.xlu0 %v2280, 24
        %v2426 = vpop.permute.xlu0 %2425
        %2427 = vrot.lane.b32.xlu0 %v2281, 24
        %v2428 = vpop.permute.xlu0 %2427
        %2429 = vrot.lane.b32.xlu0 %v2282, 24
        %v2430 = vpop.permute.xlu0 %2429
        %2431 = vrot.lane.b32.xlu0 %v2283, 24
        %v2432 = vpop.permute.xlu0 %2431
        %2433 = vrot.lane.b32.xlu0 %v2284, 24
        %v2434 = vpop.permute.xlu0 %2433
        %2435 = vrot.lane.b32.xlu0 %v2285, 24
        %v2436 = vpop.permute.xlu0 %2435
        %2437 = vrot.lane.b32.xlu0 %v2286, 24
        %v2438 = vpop.permute.xlu0 %2437
        %2439 = vrot.lane.b32.xlu0 %v2287, 24
        %v2440 = vpop.permute.xlu0 %2439
        %2441 = vrot.lane.b32.xlu0 %v2288, 24
        %v2442 = vpop.permute.xlu0 %2441
        %2443 = vrot.lane.b32.xlu0 %v2289, 24
        %v2444 = vpop.permute.xlu0 %2443
        %2445 = vrot.lane.b32.xlu0 %v2290, 24
        %v2446 = vpop.permute.xlu0 %2445
        %2447 = vrot.lane.b32.xlu0 %v2291, 24
        %v2448 = vpop.permute.xlu0 %2447
        %2449 = vrot.lane.b32.xlu0 %v2292, 24
        %v2450 = vpop.permute.xlu0 %2449
        %2451 = vrot.lane.b32.xlu0 %v2293, 24
        %v2452 = vpop.permute.xlu0 %2451
        %2453 = vrot.lane.b32.xlu0 %v2294, 24
        %v2454 = vpop.permute.xlu0 %2453
        %2455 = vrot.lane.b32.xlu0 %v2295, 24
        %v2456 = vpop.permute.xlu0 %2455
        %2457 = vrot.lane.b32.xlu0 %v2296, 24
        %v2458 = vpop.permute.xlu0 %2457
        %2459 = vrot.lane.b32.xlu0 %v2297, 24
        %v2460 = vpop.permute.xlu0 %2459
        %2461 = vrot.lane.b32.xlu0 %v2298, 24
        %v2462 = vpop.permute.xlu0 %2461
        %2463 = vrot.lane.b32.xlu0 %v2299, 24
        %v2464 = vpop.permute.xlu0 %2463
        %2465 = vrot.lane.b32.xlu0 %v2300, 24
        %v2466 = vpop.permute.xlu0 %2465
        %2467 = vrot.lane.b32.xlu0 %v2301, 24
        %v2468 = vpop.permute.xlu0 %2467
        %2469 = vrot.lane.b32.xlu0 %v2302, 24
        %v2470 = vpop.permute.xlu0 %2469
        %2471 = vrot.lane.b32.xlu0 %v2303, 24
        %v2472 = vpop.permute.xlu0 %2471
        %2473 = vrot.lane.b32.xlu0 %v2304, 24
        %v2474 = vpop.permute.xlu0 %2473
        %2475 = vrot.lane.b32.xlu0 %v2305, 24
        %v2476 = vpop.permute.xlu0 %2475
        %2477 = vrot.lane.b32.xlu0 %v2306, 24
        %v2478 = vpop.permute.xlu0 %2477
        %2479 = vrot.lane.b32.xlu0 %v2307, 24
        %v2480 = vpop.permute.xlu0 %2479
        %2481 = vrot.lane.b32.xlu0 %v2308, 24
        %v2482 = vpop.permute.xlu0 %2481
        %2483 = vrot.lane.b32.xlu0 %v2309, 24
        %v2484 = vpop.permute.xlu0 %2483
        %2485 = vrot.lane.b32.xlu0 %v2310, 24
        %v2486 = vpop.permute.xlu0 %2485
        %2487 = vrot.lane.b32.xlu0 %v2311, 24
        %v2488 = vpop.permute.xlu0 %2487
        %2489 = vrot.lane.b32.xlu0 %v2312, 24
        %v2490 = vpop.permute.xlu0 %2489
        %2491 = vrot.lane.b32.xlu0 %v2313, 24
        %v2492 = vpop.permute.xlu0 %2491
        %2493 = vrot.lane.b32.xlu0 %v2314, 24
        %v2494 = vpop.permute.xlu0 %2493
        %2495 = vrot.lane.b32.xlu0 %v2315, 24
        %v2496 = vpop.permute.xlu0 %2495
        %2497 = vrot.lane.b32.xlu0 %v2316, 24
        %v2498 = vpop.permute.xlu0 %2497
        %2499 = vrot.lane.b32.xlu0 %v2317, 24
        %v2500 = vpop.permute.xlu0 %2499
        %2501 = vrot.lane.b32.xlu0 %v2318, 24
        %v2502 = vpop.permute.xlu0 %2501
        %2503 = vrot.lane.b32.xlu0 %v2319, 24
        %v2504 = vpop.permute.xlu0 %2503
        %2505 = vrot.lane.b32.xlu0 %v2320, 24
        %v2506 = vpop.permute.xlu0 %2505
        %2507 = vrot.lane.b32.xlu0 %v2321, 24
        %v2508 = vpop.permute.xlu0 %2507
        %2509 = vrot.lane.b32.xlu0 %v2322, 24
        %v2510 = vpop.permute.xlu0 %2509
        %2511 = vrot.lane.b32.xlu0 %v2323, 24
        %v2512 = vpop.permute.xlu0 %2511
        %2513 = vrot.lane.b32.xlu0 %v2324, 24
        %v2514 = vpop.permute.xlu0 %2513
        %2515 = vrot.lane.b32.xlu0 %v2325, 24
        %v2516 = vpop.permute.xlu0 %2515
        %2517 = vrot.lane.b32.xlu0 %v2326, 24
        %v2518 = vpop.permute.xlu0 %2517
        %vm2583 = vcmask 228544
        %2584 = vst.msk [vmem:[#allocation2] sm:$0xff] %vm2583, %v2392
        %2585 = vst.msk [vmem:[#allocation2 + $0x8] sm:$0xff] %vm2583, %v2394
        %2586 = vst.msk [vmem:[#allocation2 + $0x10] sm:$0xff] %vm2583, %v2396
        %2587 = vst.msk [vmem:[#allocation2 + $0x18] sm:$0xff] %vm2583, %v2398
        %2588 = vst.msk [vmem:[#allocation2 + $0x20] sm:$0xff] %vm2583, %v2400
        %2589 = vst.msk [vmem:[#allocation2 + $0x28] sm:$0xff] %vm2583, %v2402
        %2590 = vst.msk [vmem:[#allocation2 + $0x30] sm:$0xff] %vm2583, %v2404
        %2591 = vst.msk [vmem:[#allocation2 + $0x38] sm:$0xff] %vm2583, %v2406
        %2592 = vst.msk [vmem:[#allocation2 + $0x40] sm:$0xff] %vm2583, %v2408
        %2593 = vst.msk [vmem:[#allocation2 + $0x48] sm:$0xff] %vm2583, %v2410
        %2594 = vst.msk [vmem:[#allocation2 + $0x50] sm:$0xff] %vm2583, %v2412
        %2595 = vst.msk [vmem:[#allocation2 + $0x58] sm:$0xff] %vm2583, %v2414
        %2596 = vst.msk [vmem:[#allocation2 + $0x60] sm:$0xff] %vm2583, %v2416
        %2597 = vst.msk [vmem:[#allocation2 + $0x68] sm:$0xff] %vm2583, %v2418
        %2598 = vst.msk [vmem:[#allocation2 + $0x70] sm:$0xff] %vm2583, %v2420
        %2599 = vst.msk [vmem:[#allocation2 + $0x78] sm:$0xff] %vm2583, %v2422
        %2600 = vst.msk [vmem:[#allocation2 + $0x80] sm:$0xff] %vm2583, %v2424
        %2601 = vst.msk [vmem:[#allocation2 + $0x88] sm:$0xff] %vm2583, %v2426
        %2602 = vst.msk [vmem:[#allocation2 + $0x90] sm:$0xff] %vm2583, %v2428
        %2603 = vst.msk [vmem:[#allocation2 + $0x98] sm:$0xff] %vm2583, %v2430
        %2604 = vst.msk [vmem:[#allocation2 + $0xa0] sm:$0xff] %vm2583, %v2432
        %2605 = vst.msk [vmem:[#allocation2 + $0xa8] sm:$0xff] %vm2583, %v2434
        %2606 = vst.msk [vmem:[#allocation2 + $0xb0] sm:$0xff] %vm2583, %v2436
        %2607 = vst.msk [vmem:[#allocation2 + $0xb8] sm:$0xff] %vm2583, %v2438
        %2608 = vst.msk [vmem:[#allocation2 + $0xc0] sm:$0xff] %vm2583, %v2440
        %2609 = vst.msk [vmem:[#allocation2 + $0xc8] sm:$0xff] %vm2583, %v2442
        %2610 = vst.msk [vmem:[#allocation2 + $0xd0] sm:$0xff] %vm2583, %v2444
        %2611 = vst.msk [vmem:[#allocation2 + $0xd8] sm:$0xff] %vm2583, %v2446
        %2612 = vst.msk [vmem:[#allocation2 + $0xe0] sm:$0xff] %vm2583, %v2448
        %2613 = vst.msk [vmem:[#allocation2 + $0xe8] sm:$0xff] %vm2583, %v2450
        %2614 = vst.msk [vmem:[#allocation2 + $0xf0] sm:$0xff] %vm2583, %v2452
        %2615 = vst.msk [vmem:[#allocation2 + $0xf8] sm:$0xff] %vm2583, %v2454
        %2616 = vst.msk [vmem:[#allocation2 + $0x100] sm:$0xff] %vm2583, %v2456
        %2617 = vst.msk [vmem:[#allocation2 + $0x108] sm:$0xff] %vm2583, %v2458
        %2618 = vst.msk [vmem:[#allocation2 + $0x110] sm:$0xff] %vm2583, %v2460
        %2619 = vst.msk [vmem:[#allocation2 + $0x118] sm:$0xff] %vm2583, %v2462
        %2620 = vst.msk [vmem:[#allocation2 + $0x120] sm:$0xff] %vm2583, %v2464
        %2621 = vst.msk [vmem:[#allocation2 + $0x128] sm:$0xff] %vm2583, %v2466
        %2622 = vst.msk [vmem:[#allocation2 + $0x130] sm:$0xff] %vm2583, %v2468
        %2623 = vst.msk [vmem:[#allocation2 + $0x138] sm:$0xff] %vm2583, %v2470
        %2624 = vst.msk [vmem:[#allocation2 + $0x140] sm:$0xff] %vm2583, %v2472
        %2625 = vst.msk [vmem:[#allocation2 + $0x148] sm:$0xff] %vm2583, %v2474
        %2626 = vst.msk [vmem:[#allocation2 + $0x150] sm:$0xff] %vm2583, %v2476
        %2627 = vst.msk [vmem:[#allocation2 + $0x158] sm:$0xff] %vm2583, %v2478
        %2628 = vst.msk [vmem:[#allocation2 + $0x160] sm:$0xff] %vm2583, %v2480
        %2629 = vst.msk [vmem:[#allocation2 + $0x168] sm:$0xff] %vm2583, %v2482
        %2630 = vst.msk [vmem:[#allocation2 + $0x170] sm:$0xff] %vm2583, %v2484
        %2631 = vst.msk [vmem:[#allocation2 + $0x178] sm:$0xff] %vm2583, %v2486
        %2632 = vst.msk [vmem:[#allocation2 + $0x180] sm:$0xff] %vm2583, %v2488
        %2633 = vst.msk [vmem:[#allocation2 + $0x188] sm:$0xff] %vm2583, %v2490
        %2634 = vst.msk [vmem:[#allocation2 + $0x190] sm:$0xff] %vm2583, %v2492
        %2635 = vst.msk [vmem:[#allocation2 + $0x198] sm:$0xff] %vm2583, %v2494
        %2636 = vst.msk [vmem:[#allocation2 + $0x1a0] sm:$0xff] %vm2583, %v2496
        %2637 = vst.msk [vmem:[#allocation2 + $0x1a8] sm:$0xff] %vm2583, %v2498
        %2638 = vst.msk [vmem:[#allocation2 + $0x1b0] sm:$0xff] %vm2583, %v2500
        %2639 = vst.msk [vmem:[#allocation2 + $0x1b8] sm:$0xff] %vm2583, %v2502
        %2640 = vst.msk [vmem:[#allocation2 + $0x1c0] sm:$0xff] %vm2583, %v2504
        %2641 = vst.msk [vmem:[#allocation2 + $0x1c8] sm:$0xff] %vm2583, %v2506
        %2642 = vst.msk [vmem:[#allocation2 + $0x1d0] sm:$0xff] %vm2583, %v2508
        %2643 = vst.msk [vmem:[#allocation2 + $0x1d8] sm:$0xff] %vm2583, %v2510
        %2644 = vst.msk [vmem:[#allocation2 + $0x1e0] sm:$0xff] %vm2583, %v2512
        %2645 = vst.msk [vmem:[#allocation2 + $0x1e8] sm:$0xff] %vm2583, %v2514
        %2646 = vst.msk [vmem:[#allocation2 + $0x1f0] sm:$0xff] %vm2583, %v2516
        %2647 = vst.msk [vmem:[#allocation2 + $0x1f8] sm:$0xff] %vm2583, %v2518
        %v2648 = vld [vmem:[%s2262 + $0x1] sm:$0xff]
        %v2649 = vld [vmem:[%s2262 + $0x11] sm:$0xff]
        %v2650 = vld [vmem:[%s2262 + $0x21] sm:$0xff]
        %v2651 = vld [vmem:[%s2262 + $0x31] sm:$0xff]
        %v2652 = vld [vmem:[%s2262 + $0x41] sm:$0xff]
        %v2653 = vld [vmem:[%s2262 + $0x51] sm:$0xff]
        %v2654 = vld [vmem:[%s2262 + $0x61] sm:$0xff]
        %v2655 = vld [vmem:[%s2262 + $0x71] sm:$0xff]
        %v2656 = vld [vmem:[%s2262 + $0xa1] sm:$0xff]
        %v2657 = vld [vmem:[%s2262 + $0xb1] sm:$0xff]
        %v2658 = vld [vmem:[%s2262 + $0xc1] sm:$0xff]
        %v2659 = vld [vmem:[%s2262 + $0xd1] sm:$0xff]
        %v2660 = vld [vmem:[%s2262 + $0xe1] sm:$0xff]
        %v2661 = vld [vmem:[%s2262 + $0xf1] sm:$0xff]
        %v2662 = vld [vmem:[%s2262 + $0x101] sm:$0xff]
        %v2663 = vld [vmem:[%s2262 + $0x111] sm:$0xff]
        %v2664 = vld [vmem:[%s2262 + $0x141] sm:$0xff]
        %v2665 = vld [vmem:[%s2262 + $0x151] sm:$0xff]
        %v2666 = vld [vmem:[%s2262 + $0x161] sm:$0xff]
        %v2667 = vld [vmem:[%s2262 + $0x171] sm:$0xff]
        %v2668 = vld [vmem:[%s2262 + $0x181] sm:$0xff]
        %v2669 = vld [vmem:[%s2262 + $0x191] sm:$0xff]
        %v2670 = vld [vmem:[%s2262 + $0x1a1] sm:$0xff]
        %v2671 = vld [vmem:[%s2262 + $0x1b1] sm:$0xff]
        %v2672 = vld [vmem:[%s2262 + $0x1e1] sm:$0xff]
        %v2673 = vld [vmem:[%s2262 + $0x1f1] sm:$0xff]
        %v2674 = vld [vmem:[%s2262 + $0x201] sm:$0xff]
        %v2675 = vld [vmem:[%s2262 + $0x211] sm:$0xff]
        %v2676 = vld [vmem:[%s2262 + $0x221] sm:$0xff]
        %v2677 = vld [vmem:[%s2262 + $0x231] sm:$0xff]
        %v2678 = vld [vmem:[%s2262 + $0x241] sm:$0xff]
        %v2679 = vld [vmem:[%s2262 + $0x251] sm:$0xff]
        %v2680 = vld [vmem:[%s2262 + $0x281] sm:$0xff]
        %v2681 = vld [vmem:[%s2262 + $0x291] sm:$0xff]
        %v2682 = vld [vmem:[%s2262 + $0x2a1] sm:$0xff]
        %v2683 = vld [vmem:[%s2262 + $0x2b1] sm:$0xff]
        %v2684 = vld [vmem:[%s2262 + $0x2c1] sm:$0xff]
        %v2685 = vld [vmem:[%s2262 + $0x2d1] sm:$0xff]
        %v2686 = vld [vmem:[%s2262 + $0x2e1] sm:$0xff]
        %v2687 = vld [vmem:[%s2262 + $0x2f1] sm:$0xff]
        %v2688 = vld [vmem:[%s2262 + $0x321] sm:$0xff]
        %v2689 = vld [vmem:[%s2262 + $0x331] sm:$0xff]
        %v2690 = vld [vmem:[%s2262 + $0x341] sm:$0xff]
        %v2691 = vld [vmem:[%s2262 + $0x351] sm:$0xff]
        %v2692 = vld [vmem:[%s2262 + $0x361] sm:$0xff]
        %v2693 = vld [vmem:[%s2262 + $0x371] sm:$0xff]
        %v2694 = vld [vmem:[%s2262 + $0x381] sm:$0xff]
        %v2695 = vld [vmem:[%s2262 + $0x391] sm:$0xff]
        %v2696 = vld [vmem:[%s2262 + $0x3c1] sm:$0xff]
        %v2697 = vld [vmem:[%s2262 + $0x3d1] sm:$0xff]
        %v2698 = vld [vmem:[%s2262 + $0x3e1] sm:$0xff]
        %v2699 = vld [vmem:[%s2262 + $0x3f1] sm:$0xff]
        %v2700 = vld [vmem:[%s2262 + $0x401] sm:$0xff]
        %v2701 = vld [vmem:[%s2262 + $0x411] sm:$0xff]
        %v2702 = vld [vmem:[%s2262 + $0x421] sm:$0xff]
        %v2703 = vld [vmem:[%s2262 + $0x431] sm:$0xff]
        %v2704 = vld [vmem:[%s2262 + $0x461] sm:$0xff]
        %v2705 = vld [vmem:[%s2262 + $0x471] sm:$0xff]
        %v2706 = vld [vmem:[%s2262 + $0x481] sm:$0xff]
        %v2707 = vld [vmem:[%s2262 + $0x491] sm:$0xff]
        %v2708 = vld [vmem:[%s2262 + $0x4a1] sm:$0xff]
        %v2709 = vld [vmem:[%s2262 + $0x4b1] sm:$0xff]
        %v2710 = vld [vmem:[%s2262 + $0x4c1] sm:$0xff]
        %v2711 = vld [vmem:[%s2262 + $0x4d1] sm:$0xff]
        %2776 = vrot.lane.b32.xlu0 %v2648, 28
        %v2777 = vpop.permute.xlu0 %2776
        %2778 = vrot.lane.b32.xlu0 %v2649, 28
        %v2779 = vpop.permute.xlu0 %2778
        %2780 = vrot.lane.b32.xlu0 %v2650, 28
        %v2781 = vpop.permute.xlu0 %2780
        %2782 = vrot.lane.b32.xlu0 %v2651, 28
        %v2783 = vpop.permute.xlu0 %2782
        %2784 = vrot.lane.b32.xlu0 %v2652, 28
        %v2785 = vpop.permute.xlu0 %2784
        %2786 = vrot.lane.b32.xlu0 %v2653, 28
        %v2787 = vpop.permute.xlu0 %2786
        %2788 = vrot.lane.b32.xlu0 %v2654, 28
        %v2789 = vpop.permute.xlu0 %2788
        %2790 = vrot.lane.b32.xlu0 %v2655, 28
        %v2791 = vpop.permute.xlu0 %2790
        %2792 = vrot.lane.b32.xlu0 %v2656, 28
        %v2793 = vpop.permute.xlu0 %2792
        %2794 = vrot.lane.b32.xlu0 %v2657, 28
        %v2795 = vpop.permute.xlu0 %2794
        %2796 = vrot.lane.b32.xlu0 %v2658, 28
        %v2797 = vpop.permute.xlu0 %2796
        %2798 = vrot.lane.b32.xlu0 %v2659, 28
        %v2799 = vpop.permute.xlu0 %2798
        %2800 = vrot.lane.b32.xlu0 %v2660, 28
        %v2801 = vpop.permute.xlu0 %2800
        %2802 = vrot.lane.b32.xlu0 %v2661, 28
        %v2803 = vpop.permute.xlu0 %2802
        %2804 = vrot.lane.b32.xlu0 %v2662, 28
        %v2805 = vpop.permute.xlu0 %2804
        %2806 = vrot.lane.b32.xlu0 %v2663, 28
        %v2807 = vpop.permute.xlu0 %2806
        %2808 = vrot.lane.b32.xlu0 %v2664, 28
        %v2809 = vpop.permute.xlu0 %2808
        %2810 = vrot.lane.b32.xlu0 %v2665, 28
        %v2811 = vpop.permute.xlu0 %2810
        %2812 = vrot.lane.b32.xlu0 %v2666, 28
        %v2813 = vpop.permute.xlu0 %2812
        %2814 = vrot.lane.b32.xlu0 %v2667, 28
        %v2815 = vpop.permute.xlu0 %2814
        %2816 = vrot.lane.b32.xlu0 %v2668, 28
        %v2817 = vpop.permute.xlu0 %2816
        %2818 = vrot.lane.b32.xlu0 %v2669, 28
        %v2819 = vpop.permute.xlu0 %2818
        %2820 = vrot.lane.b32.xlu0 %v2670, 28
        %v2821 = vpop.permute.xlu0 %2820
        %2822 = vrot.lane.b32.xlu0 %v2671, 28
        %v2823 = vpop.permute.xlu0 %2822
        %2824 = vrot.lane.b32.xlu0 %v2672, 28
        %v2825 = vpop.permute.xlu0 %2824
        %2826 = vrot.lane.b32.xlu0 %v2673, 28
        %v2827 = vpop.permute.xlu0 %2826
        %2828 = vrot.lane.b32.xlu0 %v2674, 28
        %v2829 = vpop.permute.xlu0 %2828
        %2830 = vrot.lane.b32.xlu0 %v2675, 28
        %v2831 = vpop.permute.xlu0 %2830
        %2832 = vrot.lane.b32.xlu0 %v2676, 28
        %v2833 = vpop.permute.xlu0 %2832
        %2834 = vrot.lane.b32.xlu0 %v2677, 28
        %v2835 = vpop.permute.xlu0 %2834
        %2836 = vrot.lane.b32.xlu0 %v2678, 28
        %v2837 = vpop.permute.xlu0 %2836
        %2838 = vrot.lane.b32.xlu0 %v2679, 28
        %v2839 = vpop.permute.xlu0 %2838
        %2840 = vrot.lane.b32.xlu0 %v2680, 28
        %v2841 = vpop.permute.xlu0 %2840
        %2842 = vrot.lane.b32.xlu0 %v2681, 28
        %v2843 = vpop.permute.xlu0 %2842
        %2844 = vrot.lane.b32.xlu0 %v2682, 28
        %v2845 = vpop.permute.xlu0 %2844
        %2846 = vrot.lane.b32.xlu0 %v2683, 28
        %v2847 = vpop.permute.xlu0 %2846
        %2848 = vrot.lane.b32.xlu0 %v2684, 28
        %v2849 = vpop.permute.xlu0 %2848
        %2850 = vrot.lane.b32.xlu0 %v2685, 28
        %v2851 = vpop.permute.xlu0 %2850
        %2852 = vrot.lane.b32.xlu0 %v2686, 28
        %v2853 = vpop.permute.xlu0 %2852
        %2854 = vrot.lane.b32.xlu0 %v2687, 28
        %v2855 = vpop.permute.xlu0 %2854
        %2856 = vrot.lane.b32.xlu0 %v2688, 28
        %v2857 = vpop.permute.xlu0 %2856
        %2858 = vrot.lane.b32.xlu0 %v2689, 28
        %v2859 = vpop.permute.xlu0 %2858
        %2860 = vrot.lane.b32.xlu0 %v2690, 28
        %v2861 = vpop.permute.xlu0 %2860
        %2862 = vrot.lane.b32.xlu0 %v2691, 28
        %v2863 = vpop.permute.xlu0 %2862
        %2864 = vrot.lane.b32.xlu0 %v2692, 28
        %v2865 = vpop.permute.xlu0 %2864
        %2866 = vrot.lane.b32.xlu0 %v2693, 28
        %v2867 = vpop.permute.xlu0 %2866
        %2868 = vrot.lane.b32.xlu0 %v2694, 28
        %v2869 = vpop.permute.xlu0 %2868
        %2870 = vrot.lane.b32.xlu0 %v2695, 28
        %v2871 = vpop.permute.xlu0 %2870
        %2872 = vrot.lane.b32.xlu0 %v2696, 28
        %v2873 = vpop.permute.xlu0 %2872
        %2874 = vrot.lane.b32.xlu0 %v2697, 28
        %v2875 = vpop.permute.xlu0 %2874
        %2876 = vrot.lane.b32.xlu0 %v2698, 28
        %v2877 = vpop.permute.xlu0 %2876
        %2878 = vrot.lane.b32.xlu0 %v2699, 28
        %v2879 = vpop.permute.xlu0 %2878
        %2880 = vrot.lane.b32.xlu0 %v2700, 28
        %v2881 = vpop.permute.xlu0 %2880
        %2882 = vrot.lane.b32.xlu0 %v2701, 28
        %v2883 = vpop.permute.xlu0 %2882
        %2884 = vrot.lane.b32.xlu0 %v2702, 28
        %v2885 = vpop.permute.xlu0 %2884
        %2886 = vrot.lane.b32.xlu0 %v2703, 28
        %v2887 = vpop.permute.xlu0 %2886
        %2888 = vrot.lane.b32.xlu0 %v2704, 28
        %v2889 = vpop.permute.xlu0 %2888
        %2890 = vrot.lane.b32.xlu0 %v2705, 28
        %v2891 = vpop.permute.xlu0 %2890
        %2892 = vrot.lane.b32.xlu0 %v2706, 28
        %v2893 = vpop.permute.xlu0 %2892
        %2894 = vrot.lane.b32.xlu0 %v2707, 28
        %v2895 = vpop.permute.xlu0 %2894
        %2896 = vrot.lane.b32.xlu0 %v2708, 28
        %v2897 = vpop.permute.xlu0 %2896
        %2898 = vrot.lane.b32.xlu0 %v2709, 28
        %v2899 = vpop.permute.xlu0 %2898
        %2900 = vrot.lane.b32.xlu0 %v2710, 28
        %v2901 = vpop.permute.xlu0 %2900
        %2902 = vrot.lane.b32.xlu0 %v2711, 28
        %v2903 = vpop.permute.xlu0 %2902
        %vm2968 = vcmask 261344
        %2969 = vst.msk [vmem:[#allocation2] sm:$0xff] %vm2968, %v2777
        %2970 = vst.msk [vmem:[#allocation2 + $0x8] sm:$0xff] %vm2968, %v2779
        %2971 = vst.msk [vmem:[#allocation2 + $0x10] sm:$0xff] %vm2968, %v2781
        %2972 = vst.msk [vmem:[#allocation2 + $0x18] sm:$0xff] %vm2968, %v2783
        %2973 = vst.msk [vmem:[#allocation2 + $0x20] sm:$0xff] %vm2968, %v2785
        %2974 = vst.msk [vmem:[#allocation2 + $0x28] sm:$0xff] %vm2968, %v2787
        %2975 = vst.msk [vmem:[#allocation2 + $0x30] sm:$0xff] %vm2968, %v2789
        %2976 = vst.msk [vmem:[#allocation2 + $0x38] sm:$0xff] %vm2968, %v2791
        %2977 = vst.msk [vmem:[#allocation2 + $0x40] sm:$0xff] %vm2968, %v2793
        %2978 = vst.msk [vmem:[#allocation2 + $0x48] sm:$0xff] %vm2968, %v2795
        %2979 = vst.msk [vmem:[#allocation2 + $0x50] sm:$0xff] %vm2968, %v2797
        %2980 = vst.msk [vmem:[#allocation2 + $0x58] sm:$0xff] %vm2968, %v2799
        %2981 = vst.msk [vmem:[#allocation2 + $0x60] sm:$0xff] %vm2968, %v2801
        %2982 = vst.msk [vmem:[#allocation2 + $0x68] sm:$0xff] %vm2968, %v2803
        %2983 = vst.msk [vmem:[#allocation2 + $0x70] sm:$0xff] %vm2968, %v2805
        %2984 = vst.msk [vmem:[#allocation2 + $0x78] sm:$0xff] %vm2968, %v2807
        %2985 = vst.msk [vmem:[#allocation2 + $0x80] sm:$0xff] %vm2968, %v2809
        %2986 = vst.msk [vmem:[#allocation2 + $0x88] sm:$0xff] %vm2968, %v2811
        %2987 = vst.msk [vmem:[#allocation2 + $0x90] sm:$0xff] %vm2968, %v2813
        %2988 = vst.msk [vmem:[#allocation2 + $0x98] sm:$0xff] %vm2968, %v2815
        %2989 = vst.msk [vmem:[#allocation2 + $0xa0] sm:$0xff] %vm2968, %v2817
        %2990 = vst.msk [vmem:[#allocation2 + $0xa8] sm:$0xff] %vm2968, %v2819
        %2991 = vst.msk [vmem:[#allocation2 + $0xb0] sm:$0xff] %vm2968, %v2821
        %2992 = vst.msk [vmem:[#allocation2 + $0xb8] sm:$0xff] %vm2968, %v2823
        %2993 = vst.msk [vmem:[#allocation2 + $0xc0] sm:$0xff] %vm2968, %v2825
        %2994 = vst.msk [vmem:[#allocation2 + $0xc8] sm:$0xff] %vm2968, %v2827
        %2995 = vst.msk [vmem:[#allocation2 + $0xd0] sm:$0xff] %vm2968, %v2829
        %2996 = vst.msk [vmem:[#allocation2 + $0xd8] sm:$0xff] %vm2968, %v2831
        %2997 = vst.msk [vmem:[#allocation2 + $0xe0] sm:$0xff] %vm2968, %v2833
        %2998 = vst.msk [vmem:[#allocation2 + $0xe8] sm:$0xff] %vm2968, %v2835
        %2999 = vst.msk [vmem:[#allocation2 + $0xf0] sm:$0xff] %vm2968, %v2837
        %3000 = vst.msk [vmem:[#allocation2 + $0xf8] sm:$0xff] %vm2968, %v2839
        %3001 = vst.msk [vmem:[#allocation2 + $0x100] sm:$0xff] %vm2968, %v2841
        %3002 = vst.msk [vmem:[#allocation2 + $0x108] sm:$0xff] %vm2968, %v2843
        %3003 = vst.msk [vmem:[#allocation2 + $0x110] sm:$0xff] %vm2968, %v2845
        %3004 = vst.msk [vmem:[#allocation2 + $0x118] sm:$0xff] %vm2968, %v2847
        %3005 = vst.msk [vmem:[#allocation2 + $0x120] sm:$0xff] %vm2968, %v2849
        %3006 = vst.msk [vmem:[#allocation2 + $0x128] sm:$0xff] %vm2968, %v2851
        %3007 = vst.msk [vmem:[#allocation2 + $0x130] sm:$0xff] %vm2968, %v2853
        %3008 = vst.msk [vmem:[#allocation2 + $0x138] sm:$0xff] %vm2968, %v2855
        %3009 = vst.msk [vmem:[#allocation2 + $0x140] sm:$0xff] %vm2968, %v2857
        %3010 = vst.msk [vmem:[#allocation2 + $0x148] sm:$0xff] %vm2968, %v2859
        %3011 = vst.msk [vmem:[#allocation2 + $0x150] sm:$0xff] %vm2968, %v2861
        %3012 = vst.msk [vmem:[#allocation2 + $0x158] sm:$0xff] %vm2968, %v2863
        %3013 = vst.msk [vmem:[#allocation2 + $0x160] sm:$0xff] %vm2968, %v2865
        %3014 = vst.msk [vmem:[#allocation2 + $0x168] sm:$0xff] %vm2968, %v2867
        %3015 = vst.msk [vmem:[#allocation2 + $0x170] sm:$0xff] %vm2968, %v2869
        %3016 = vst.msk [vmem:[#allocation2 + $0x178] sm:$0xff] %vm2968, %v2871
        %3017 = vst.msk [vmem:[#allocation2 + $0x180] sm:$0xff] %vm2968, %v2873
        %3018 = vst.msk [vmem:[#allocation2 + $0x188] sm:$0xff] %vm2968, %v2875
        %3019 = vst.msk [vmem:[#allocation2 + $0x190] sm:$0xff] %vm2968, %v2877
        %3020 = vst.msk [vmem:[#allocation2 + $0x198] sm:$0xff] %vm2968, %v2879
        %3021 = vst.msk [vmem:[#allocation2 + $0x1a0] sm:$0xff] %vm2968, %v2881
        %3022 = vst.msk [vmem:[#allocation2 + $0x1a8] sm:$0xff] %vm2968, %v2883
        %3023 = vst.msk [vmem:[#allocation2 + $0x1b0] sm:$0xff] %vm2968, %v2885
        %3024 = vst.msk [vmem:[#allocation2 + $0x1b8] sm:$0xff] %vm2968, %v2887
        %3025 = vst.msk [vmem:[#allocation2 + $0x1c0] sm:$0xff] %vm2968, %v2889
        %3026 = vst.msk [vmem:[#allocation2 + $0x1c8] sm:$0xff] %vm2968, %v2891
        %3027 = vst.msk [vmem:[#allocation2 + $0x1d0] sm:$0xff] %vm2968, %v2893
        %3028 = vst.msk [vmem:[#allocation2 + $0x1d8] sm:$0xff] %vm2968, %v2895
        %3029 = vst.msk [vmem:[#allocation2 + $0x1e0] sm:$0xff] %vm2968, %v2897
        %3030 = vst.msk [vmem:[#allocation2 + $0x1e8] sm:$0xff] %vm2968, %v2899
        %3031 = vst.msk [vmem:[#allocation2 + $0x1f0] sm:$0xff] %vm2968, %v2901
        %3032 = vst.msk [vmem:[#allocation2 + $0x1f8] sm:$0xff] %vm2968, %v2903
        %v3033 = vld [vmem:[%s2262 + $0x2] sm:$0xff]
        %v3034 = vld [vmem:[%s2262 + $0x12] sm:$0xff]
        %v3035 = vld [vmem:[%s2262 + $0x22] sm:$0xff]
        %v3036 = vld [vmem:[%s2262 + $0x32] sm:$0xff]
        %v3037 = vld [vmem:[%s2262 + $0x42] sm:$0xff]
        %v3038 = vld [vmem:[%s2262 + $0x52] sm:$0xff]
        %v3039 = vld [vmem:[%s2262 + $0x62] sm:$0xff]
        %v3040 = vld [vmem:[%s2262 + $0x72] sm:$0xff]
        %v3041 = vld [vmem:[%s2262 + $0xa2] sm:$0xff]
        %v3042 = vld [vmem:[%s2262 + $0xb2] sm:$0xff]
        %v3043 = vld [vmem:[%s2262 + $0xc2] sm:$0xff]
        %v3044 = vld [vmem:[%s2262 + $0xd2] sm:$0xff]
        %v3045 = vld [vmem:[%s2262 + $0xe2] sm:$0xff]
        %v3046 = vld [vmem:[%s2262 + $0xf2] sm:$0xff]
        %v3047 = vld [vmem:[%s2262 + $0x102] sm:$0xff]
        %v3048 = vld [vmem:[%s2262 + $0x112] sm:$0xff]
        %v3049 = vld [vmem:[%s2262 + $0x142] sm:$0xff]
        %v3050 = vld [vmem:[%s2262 + $0x152] sm:$0xff]
        %v3051 = vld [vmem:[%s2262 + $0x162] sm:$0xff]
        %v3052 = vld [vmem:[%s2262 + $0x172] sm:$0xff]
        %v3053 = vld [vmem:[%s2262 + $0x182] sm:$0xff]
        %v3054 = vld [vmem:[%s2262 + $0x192] sm:$0xff]
        %v3055 = vld [vmem:[%s2262 + $0x1a2] sm:$0xff]
        %v3056 = vld [vmem:[%s2262 + $0x1b2] sm:$0xff]
        %v3057 = vld [vmem:[%s2262 + $0x1e2] sm:$0xff]
        %v3058 = vld [vmem:[%s2262 + $0x1f2] sm:$0xff]
        %v3059 = vld [vmem:[%s2262 + $0x202] sm:$0xff]
        %v3060 = vld [vmem:[%s2262 + $0x212] sm:$0xff]
        %v3061 = vld [vmem:[%s2262 + $0x222] sm:$0xff]
        %v3062 = vld [vmem:[%s2262 + $0x232] sm:$0xff]
        %v3063 = vld [vmem:[%s2262 + $0x242] sm:$0xff]
        %v3064 = vld [vmem:[%s2262 + $0x252] sm:$0xff]
        %v3065 = vld [vmem:[%s2262 + $0x282] sm:$0xff]
        %v3066 = vld [vmem:[%s2262 + $0x292] sm:$0xff]
        %v3067 = vld [vmem:[%s2262 + $0x2a2] sm:$0xff]
        %v3068 = vld [vmem:[%s2262 + $0x2b2] sm:$0xff]
        %v3069 = vld [vmem:[%s2262 + $0x2c2] sm:$0xff]
        %v3070 = vld [vmem:[%s2262 + $0x2d2] sm:$0xff]
        %v3071 = vld [vmem:[%s2262 + $0x2e2] sm:$0xff]
        %v3072 = vld [vmem:[%s2262 + $0x2f2] sm:$0xff]
        %v3073 = vld [vmem:[%s2262 + $0x322] sm:$0xff]
        %v3074 = vld [vmem:[%s2262 + $0x332] sm:$0xff]
        %v3075 = vld [vmem:[%s2262 + $0x342] sm:$0xff]
        %v3076 = vld [vmem:[%s2262 + $0x352] sm:$0xff]
        %v3077 = vld [vmem:[%s2262 + $0x362] sm:$0xff]
        %v3078 = vld [vmem:[%s2262 + $0x372] sm:$0xff]
        %v3079 = vld [vmem:[%s2262 + $0x382] sm:$0xff]
        %v3080 = vld [vmem:[%s2262 + $0x392] sm:$0xff]
        %v3081 = vld [vmem:[%s2262 + $0x3c2] sm:$0xff]
        %v3082 = vld [vmem:[%s2262 + $0x3d2] sm:$0xff]
        %v3083 = vld [vmem:[%s2262 + $0x3e2] sm:$0xff]
        %v3084 = vld [vmem:[%s2262 + $0x3f2] sm:$0xff]
        %v3085 = vld [vmem:[%s2262 + $0x402] sm:$0xff]
        %v3086 = vld [vmem:[%s2262 + $0x412] sm:$0xff]
        %v3087 = vld [vmem:[%s2262 + $0x422] sm:$0xff]
        %v3088 = vld [vmem:[%s2262 + $0x432] sm:$0xff]
        %v3089 = vld [vmem:[%s2262 + $0x462] sm:$0xff]
        %v3090 = vld [vmem:[%s2262 + $0x472] sm:$0xff]
        %v3091 = vld [vmem:[%s2262 + $0x482] sm:$0xff]
        %v3092 = vld [vmem:[%s2262 + $0x492] sm:$0xff]
        %v3093 = vld [vmem:[%s2262 + $0x4a2] sm:$0xff]
        %v3094 = vld [vmem:[%s2262 + $0x4b2] sm:$0xff]
        %v3095 = vld [vmem:[%s2262 + $0x4c2] sm:$0xff]
        %v3096 = vld [vmem:[%s2262 + $0x4d2] sm:$0xff]
        %3161 = vrot.lane.b32.xlu0 %v3033, 32
        %v3162 = vpop.permute.xlu0 %3161
        %3163 = vrot.lane.b32.xlu0 %v3034, 32
        %v3164 = vpop.permute.xlu0 %3163
        %3165 = vrot.lane.b32.xlu0 %v3035, 32
        %v3166 = vpop.permute.xlu0 %3165
        %3167 = vrot.lane.b32.xlu0 %v3036, 32
        %v3168 = vpop.permute.xlu0 %3167
        %3169 = vrot.lane.b32.xlu0 %v3037, 32
        %v3170 = vpop.permute.xlu0 %3169
        %3171 = vrot.lane.b32.xlu0 %v3038, 32
        %v3172 = vpop.permute.xlu0 %3171
        %3173 = vrot.lane.b32.xlu0 %v3039, 32
        %v3174 = vpop.permute.xlu0 %3173
        %3175 = vrot.lane.b32.xlu0 %v3040, 32
        %v3176 = vpop.permute.xlu0 %3175
        %3177 = vrot.lane.b32.xlu0 %v3041, 32
        %v3178 = vpop.permute.xlu0 %3177
        %3179 = vrot.lane.b32.xlu0 %v3042, 32
        %v3180 = vpop.permute.xlu0 %3179
        %3181 = vrot.lane.b32.xlu0 %v3043, 32
        %v3182 = vpop.permute.xlu0 %3181
        %3183 = vrot.lane.b32.xlu0 %v3044, 32
        %v3184 = vpop.permute.xlu0 %3183
        %3185 = vrot.lane.b32.xlu0 %v3045, 32
        %v3186 = vpop.permute.xlu0 %3185
        %3187 = vrot.lane.b32.xlu0 %v3046, 32
        %v3188 = vpop.permute.xlu0 %3187
        %3189 = vrot.lane.b32.xlu0 %v3047, 32
        %v3190 = vpop.permute.xlu0 %3189
        %3191 = vrot.lane.b32.xlu0 %v3048, 32
        %v3192 = vpop.permute.xlu0 %3191
        %3193 = vrot.lane.b32.xlu0 %v3049, 32
        %v3194 = vpop.permute.xlu0 %3193
        %3195 = vrot.lane.b32.xlu0 %v3050, 32
        %v3196 = vpop.permute.xlu0 %3195
        %3197 = vrot.lane.b32.xlu0 %v3051, 32
        %v3198 = vpop.permute.xlu0 %3197
        %3199 = vrot.lane.b32.xlu0 %v3052, 32
        %v3200 = vpop.permute.xlu0 %3199
        %3201 = vrot.lane.b32.xlu0 %v3053, 32
        %v3202 = vpop.permute.xlu0 %3201
        %3203 = vrot.lane.b32.xlu0 %v3054, 32
        %v3204 = vpop.permute.xlu0 %3203
        %3205 = vrot.lane.b32.xlu0 %v3055, 32
        %v3206 = vpop.permute.xlu0 %3205
        %3207 = vrot.lane.b32.xlu0 %v3056, 32
        %v3208 = vpop.permute.xlu0 %3207
        %3209 = vrot.lane.b32.xlu0 %v3057, 32
        %v3210 = vpop.permute.xlu0 %3209
        %3211 = vrot.lane.b32.xlu0 %v3058, 32
        %v3212 = vpop.permute.xlu0 %3211
        %3213 = vrot.lane.b32.xlu0 %v3059, 32
        %v3214 = vpop.permute.xlu0 %3213
        %3215 = vrot.lane.b32.xlu0 %v3060, 32
        %v3216 = vpop.permute.xlu0 %3215
        %3217 = vrot.lane.b32.xlu0 %v3061, 32
        %v3218 = vpop.permute.xlu0 %3217
        %3219 = vrot.lane.b32.xlu0 %v3062, 32
        %v3220 = vpop.permute.xlu0 %3219
        %3221 = vrot.lane.b32.xlu0 %v3063, 32
        %v3222 = vpop.permute.xlu0 %3221
        %3223 = vrot.lane.b32.xlu0 %v3064, 32
        %v3224 = vpop.permute.xlu0 %3223
        %3225 = vrot.lane.b32.xlu0 %v3065, 32
        %v3226 = vpop.permute.xlu0 %3225
        %3227 = vrot.lane.b32.xlu0 %v3066, 32
        %v3228 = vpop.permute.xlu0 %3227
        %3229 = vrot.lane.b32.xlu0 %v3067, 32
        %v3230 = vpop.permute.xlu0 %3229
        %3231 = vrot.lane.b32.xlu0 %v3068, 32
        %v3232 = vpop.permute.xlu0 %3231
        %3233 = vrot.lane.b32.xlu0 %v3069, 32
        %v3234 = vpop.permute.xlu0 %3233
        %3235 = vrot.lane.b32.xlu0 %v3070, 32
        %v3236 = vpop.permute.xlu0 %3235
        %3237 = vrot.lane.b32.xlu0 %v3071, 32
        %v3238 = vpop.permute.xlu0 %3237
        %3239 = vrot.lane.b32.xlu0 %v3072, 32
        %v3240 = vpop.permute.xlu0 %3239
        %3241 = vrot.lane.b32.xlu0 %v3073, 32
        %v3242 = vpop.permute.xlu0 %3241
        %3243 = vrot.lane.b32.xlu0 %v3074, 32
        %v3244 = vpop.permute.xlu0 %3243
        %3245 = vrot.lane.b32.xlu0 %v3075, 32
        %v3246 = vpop.permute.xlu0 %3245
        %3247 = vrot.lane.b32.xlu0 %v3076, 32
        %v3248 = vpop.permute.xlu0 %3247
        %3249 = vrot.lane.b32.xlu0 %v3077, 32
        %v3250 = vpop.permute.xlu0 %3249
        %3251 = vrot.lane.b32.xlu0 %v3078, 32
        %v3252 = vpop.permute.xlu0 %3251
        %3253 = vrot.lane.b32.xlu0 %v3079, 32
        %v3254 = vpop.permute.xlu0 %3253
        %3255 = vrot.lane.b32.xlu0 %v3080, 32
        %v3256 = vpop.permute.xlu0 %3255
        %3257 = vrot.lane.b32.xlu0 %v3081, 32
        %v3258 = vpop.permute.xlu0 %3257
        %3259 = vrot.lane.b32.xlu0 %v3082, 32
        %v3260 = vpop.permute.xlu0 %3259
        %3261 = vrot.lane.b32.xlu0 %v3083, 32
        %v3262 = vpop.permute.xlu0 %3261
        %3263 = vrot.lane.b32.xlu0 %v3084, 32
        %v3264 = vpop.permute.xlu0 %3263
        %3265 = vrot.lane.b32.xlu0 %v3085, 32
        %v3266 = vpop.permute.xlu0 %3265
        %3267 = vrot.lane.b32.xlu0 %v3086, 32
        %v3268 = vpop.permute.xlu0 %3267
        %3269 = vrot.lane.b32.xlu0 %v3087, 32
        %v3270 = vpop.permute.xlu0 %3269
        %3271 = vrot.lane.b32.xlu0 %v3088, 32
        %v3272 = vpop.permute.xlu0 %3271
        %3273 = vrot.lane.b32.xlu0 %v3089, 32
        %v3274 = vpop.permute.xlu0 %3273
        %3275 = vrot.lane.b32.xlu0 %v3090, 32
        %v3276 = vpop.permute.xlu0 %3275
        %3277 = vrot.lane.b32.xlu0 %v3091, 32
        %v3278 = vpop.permute.xlu0 %3277
        %3279 = vrot.lane.b32.xlu0 %v3092, 32
        %v3280 = vpop.permute.xlu0 %3279
        %3281 = vrot.lane.b32.xlu0 %v3093, 32
        %v3282 = vpop.permute.xlu0 %3281
        %3283 = vrot.lane.b32.xlu0 %v3094, 32
        %v3284 = vpop.permute.xlu0 %3283
        %3285 = vrot.lane.b32.xlu0 %v3095, 32
        %v3286 = vpop.permute.xlu0 %3285
        %3287 = vrot.lane.b32.xlu0 %v3096, 32
        %v3288 = vpop.permute.xlu0 %3287
        %vm3353 = vcmask 294144
        %3354 = vst.msk [vmem:[#allocation2] sm:$0xff] %vm3353, %v3162
        %3355 = vst.msk [vmem:[#allocation2 + $0x8] sm:$0xff] %vm3353, %v3164
        %3356 = vst.msk [vmem:[#allocation2 + $0x10] sm:$0xff] %vm3353, %v3166
        %3357 = vst.msk [vmem:[#allocation2 + $0x18] sm:$0xff] %vm3353, %v3168
        %3358 = vst.msk [vmem:[#allocation2 + $0x20] sm:$0xff] %vm3353, %v3170
        %3359 = vst.msk [vmem:[#allocation2 + $0x28] sm:$0xff] %vm3353, %v3172
        %3360 = vst.msk [vmem:[#allocation2 + $0x30] sm:$0xff] %vm3353, %v3174
        %3361 = vst.msk [vmem:[#allocation2 + $0x38] sm:$0xff] %vm3353, %v3176
        %3362 = vst.msk [vmem:[#allocation2 + $0x40] sm:$0xff] %vm3353, %v3178
        %3363 = vst.msk [vmem:[#allocation2 + $0x48] sm:$0xff] %vm3353, %v3180
        %3364 = vst.msk [vmem:[#allocation2 + $0x50] sm:$0xff] %vm3353, %v3182
        %3365 = vst.msk [vmem:[#allocation2 + $0x58] sm:$0xff] %vm3353, %v3184
        %3366 = vst.msk [vmem:[#allocation2 + $0x60] sm:$0xff] %vm3353, %v3186
        %3367 = vst.msk [vmem:[#allocation2 + $0x68] sm:$0xff] %vm3353, %v3188
        %3368 = vst.msk [vmem:[#allocation2 + $0x70] sm:$0xff] %vm3353, %v3190
        %3369 = vst.msk [vmem:[#allocation2 + $0x78] sm:$0xff] %vm3353, %v3192
        %3370 = vst.msk [vmem:[#allocation2 + $0x80] sm:$0xff] %vm3353, %v3194
        %3371 = vst.msk [vmem:[#allocation2 + $0x88] sm:$0xff] %vm3353, %v3196
        %3372 = vst.msk [vmem:[#allocation2 + $0x90] sm:$0xff] %vm3353, %v3198
        %3373 = vst.msk [vmem:[#allocation2 + $0x98] sm:$0xff] %vm3353, %v3200
        %3374 = vst.msk [vmem:[#allocation2 + $0xa0] sm:$0xff] %vm3353, %v3202
        %3375 = vst.msk [vmem:[#allocation2 + $0xa8] sm:$0xff] %vm3353, %v3204
        %3376 = vst.msk [vmem:[#allocation2 + $0xb0] sm:$0xff] %vm3353, %v3206
        %3377 = vst.msk [vmem:[#allocation2 + $0xb8] sm:$0xff] %vm3353, %v3208
        %3378 = vst.msk [vmem:[#allocation2 + $0xc0] sm:$0xff] %vm3353, %v3210
        %3379 = vst.msk [vmem:[#allocation2 + $0xc8] sm:$0xff] %vm3353, %v3212
        %3380 = vst.msk [vmem:[#allocation2 + $0xd0] sm:$0xff] %vm3353, %v3214
        %3381 = vst.msk [vmem:[#allocation2 + $0xd8] sm:$0xff] %vm3353, %v3216
        %3382 = vst.msk [vmem:[#allocation2 + $0xe0] sm:$0xff] %vm3353, %v3218
        %3383 = vst.msk [vmem:[#allocation2 + $0xe8] sm:$0xff] %vm3353, %v3220
        %3384 = vst.msk [vmem:[#allocation2 + $0xf0] sm:$0xff] %vm3353, %v3222
        %3385 = vst.msk [vmem:[#allocation2 + $0xf8] sm:$0xff] %vm3353, %v3224
        %3386 = vst.msk [vmem:[#allocation2 + $0x100] sm:$0xff] %vm3353, %v3226
        %3387 = vst.msk [vmem:[#allocation2 + $0x108] sm:$0xff] %vm3353, %v3228
        %3388 = vst.msk [vmem:[#allocation2 + $0x110] sm:$0xff] %vm3353, %v3230
        %3389 = vst.msk [vmem:[#allocation2 + $0x118] sm:$0xff] %vm3353, %v3232
        %3390 = vst.msk [vmem:[#allocation2 + $0x120] sm:$0xff] %vm3353, %v3234
        %3391 = vst.msk [vmem:[#allocation2 + $0x128] sm:$0xff] %vm3353, %v3236
        %3392 = vst.msk [vmem:[#allocation2 + $0x130] sm:$0xff] %vm3353, %v3238
        %3393 = vst.msk [vmem:[#allocation2 + $0x138] sm:$0xff] %vm3353, %v3240
        %3394 = vst.msk [vmem:[#allocation2 + $0x140] sm:$0xff] %vm3353, %v3242
        %3395 = vst.msk [vmem:[#allocation2 + $0x148] sm:$0xff] %vm3353, %v3244
        %3396 = vst.msk [vmem:[#allocation2 + $0x150] sm:$0xff] %vm3353, %v3246
        %3397 = vst.msk [vmem:[#allocation2 + $0x158] sm:$0xff] %vm3353, %v3248
        %3398 = vst.msk [vmem:[#allocation2 + $0x160] sm:$0xff] %vm3353, %v3250
        %3399 = vst.msk [vmem:[#allocation2 + $0x168] sm:$0xff] %vm3353, %v3252
        %3400 = vst.msk [vmem:[#allocation2 + $0x170] sm:$0xff] %vm3353, %v3254
        %3401 = vst.msk [vmem:[#allocation2 + $0x178] sm:$0xff] %vm3353, %v3256
        %3402 = vst.msk [vmem:[#allocation2 + $0x180] sm:$0xff] %vm3353, %v3258
        %3403 = vst.msk [vmem:[#allocation2 + $0x188] sm:$0xff] %vm3353, %v3260
        %3404 = vst.msk [vmem:[#allocation2 + $0x190] sm:$0xff] %vm3353, %v3262
        %3405 = vst.msk [vmem:[#allocation2 + $0x198] sm:$0xff] %vm3353, %v3264
        %3406 = vst.msk [vmem:[#allocation2 + $0x1a0] sm:$0xff] %vm3353, %v3266
        %3407 = vst.msk [vmem:[#allocation2 + $0x1a8] sm:$0xff] %vm3353, %v3268
        %3408 = vst.msk [vmem:[#allocation2 + $0x1b0] sm:$0xff] %vm3353, %v3270
        %3409 = vst.msk [vmem:[#allocation2 + $0x1b8] sm:$0xff] %vm3353, %v3272
        %3410 = vst.msk [vmem:[#allocation2 + $0x1c0] sm:$0xff] %vm3353, %v3274
        %3411 = vst.msk [vmem:[#allocation2 + $0x1c8] sm:$0xff] %vm3353, %v3276
        %3412 = vst.msk [vmem:[#allocation2 + $0x1d0] sm:$0xff] %vm3353, %v3278
        %3413 = vst.msk [vmem:[#allocation2 + $0x1d8] sm:$0xff] %vm3353, %v3280
        %3414 = vst.msk [vmem:[#allocation2 + $0x1e0] sm:$0xff] %vm3353, %v3282
        %3415 = vst.msk [vmem:[#allocation2 + $0x1e8] sm:$0xff] %vm3353, %v3284
        %3416 = vst.msk [vmem:[#allocation2 + $0x1f0] sm:$0xff] %vm3353, %v3286
        %3417 = vst.msk [vmem:[#allocation2 + $0x1f8] sm:$0xff] %vm3353, %v3288
        %s3418 = scalar_lea.vmem %s141, 160
        %v3419 = vld [vmem:[%s3418] sm:$0xff]
        %v3420 = vld [vmem:[%s3418 + $0x10] sm:$0xff]
        %v3421 = vld [vmem:[%s3418 + $0x20] sm:$0xff]
        %v3422 = vld [vmem:[%s3418 + $0x30] sm:$0xff]
        %v3423 = vld [vmem:[%s3418 + $0x40] sm:$0xff]
        %v3424 = vld [vmem:[%s3418 + $0x50] sm:$0xff]
        %v3425 = vld [vmem:[%s3418 + $0x60] sm:$0xff]
        %v3426 = vld [vmem:[%s3418 + $0x70] sm:$0xff]
        %v3427 = vld [vmem:[%s3418 + $0xa0] sm:$0xff]
        %v3428 = vld [vmem:[%s3418 + $0xb0] sm:$0xff]
        %v3429 = vld [vmem:[%s3418 + $0xc0] sm:$0xff]
        %v3430 = vld [vmem:[%s3418 + $0xd0] sm:$0xff]
        %v3431 = vld [vmem:[%s3418 + $0xe0] sm:$0xff]
        %v3432 = vld [vmem:[%s3418 + $0xf0] sm:$0xff]
        %v3433 = vld [vmem:[%s3418 + $0x100] sm:$0xff]
        %v3434 = vld [vmem:[%s3418 + $0x110] sm:$0xff]
        %v3435 = vld [vmem:[%s3418 + $0x140] sm:$0xff]
        %v3436 = vld [vmem:[%s3418 + $0x150] sm:$0xff]
        %v3437 = vld [vmem:[%s3418 + $0x160] sm:$0xff]
        %v3438 = vld [vmem:[%s3418 + $0x170] sm:$0xff]
        %v3439 = vld [vmem:[%s3418 + $0x180] sm:$0xff]
        %v3440 = vld [vmem:[%s3418 + $0x190] sm:$0xff]
        %v3441 = vld [vmem:[%s3418 + $0x1a0] sm:$0xff]
        %v3442 = vld [vmem:[%s3418 + $0x1b0] sm:$0xff]
        %v3443 = vld [vmem:[%s3418 + $0x1e0] sm:$0xff]
        %v3444 = vld [vmem:[%s3418 + $0x1f0] sm:$0xff]
        %v3445 = vld [vmem:[%s3418 + $0x200] sm:$0xff]
        %v3446 = vld [vmem:[%s3418 + $0x210] sm:$0xff]
        %v3447 = vld [vmem:[%s3418 + $0x220] sm:$0xff]
        %v3448 = vld [vmem:[%s3418 + $0x230] sm:$0xff]
        %v3449 = vld [vmem:[%s3418 + $0x240] sm:$0xff]
        %v3450 = vld [vmem:[%s3418 + $0x250] sm:$0xff]
        %v3451 = vld [vmem:[%s3418 + $0x280] sm:$0xff]
        %v3452 = vld [vmem:[%s3418 + $0x290] sm:$0xff]
        %v3453 = vld [vmem:[%s3418 + $0x2a0] sm:$0xff]
        %v3454 = vld [vmem:[%s3418 + $0x2b0] sm:$0xff]
        %v3455 = vld [vmem:[%s3418 + $0x2c0] sm:$0xff]
        %v3456 = vld [vmem:[%s3418 + $0x2d0] sm:$0xff]
        %v3457 = vld [vmem:[%s3418 + $0x2e0] sm:$0xff]
        %v3458 = vld [vmem:[%s3418 + $0x2f0] sm:$0xff]
        %v3459 = vld [vmem:[%s3418 + $0x320] sm:$0xff]
        %v3460 = vld [vmem:[%s3418 + $0x330] sm:$0xff]
        %v3461 = vld [vmem:[%s3418 + $0x340] sm:$0xff]
        %v3462 = vld [vmem:[%s3418 + $0x350] sm:$0xff]
        %v3463 = vld [vmem:[%s3418 + $0x360] sm:$0xff]
        %v3464 = vld [vmem:[%s3418 + $0x370] sm:$0xff]
        %v3465 = vld [vmem:[%s3418 + $0x380] sm:$0xff]
        %v3466 = vld [vmem:[%s3418 + $0x390] sm:$0xff]
        %v3467 = vld [vmem:[%s3418 + $0x3c0] sm:$0xff]
        %v3468 = vld [vmem:[%s3418 + $0x3d0] sm:$0xff]
        %v3469 = vld [vmem:[%s3418 + $0x3e0] sm:$0xff]
        %v3470 = vld [vmem:[%s3418 + $0x3f0] sm:$0xff]
        %v3471 = vld [vmem:[%s3418 + $0x400] sm:$0xff]
        %v3472 = vld [vmem:[%s3418 + $0x410] sm:$0xff]
        %v3473 = vld [vmem:[%s3418 + $0x420] sm:$0xff]
        %v3474 = vld [vmem:[%s3418 + $0x430] sm:$0xff]
        %v3475 = vld [vmem:[%s3418 + $0x460] sm:$0xff]
        %v3476 = vld [vmem:[%s3418 + $0x470] sm:$0xff]
        %v3477 = vld [vmem:[%s3418 + $0x480] sm:$0xff]
        %v3478 = vld [vmem:[%s3418 + $0x490] sm:$0xff]
        %v3479 = vld [vmem:[%s3418 + $0x4a0] sm:$0xff]
        %v3480 = vld [vmem:[%s3418 + $0x4b0] sm:$0xff]
        %v3481 = vld [vmem:[%s3418 + $0x4c0] sm:$0xff]
        %v3482 = vld [vmem:[%s3418 + $0x4d0] sm:$0xff]
        %3547 = vrot.lane.b32.xlu0 %v3419, 36
        %v3548 = vpop.permute.xlu0 %3547
        %3549 = vrot.lane.b32.xlu0 %v3420, 36
        %v3550 = vpop.permute.xlu0 %3549
        %3551 = vrot.lane.b32.xlu0 %v3421, 36
        %v3552 = vpop.permute.xlu0 %3551
        %3553 = vrot.lane.b32.xlu0 %v3422, 36
        %v3554 = vpop.permute.xlu0 %3553
        %3555 = vrot.lane.b32.xlu0 %v3423, 36
        %v3556 = vpop.permute.xlu0 %3555
        %3557 = vrot.lane.b32.xlu0 %v3424, 36
        %v3558 = vpop.permute.xlu0 %3557
        %3559 = vrot.lane.b32.xlu0 %v3425, 36
        %v3560 = vpop.permute.xlu0 %3559
        %3561 = vrot.lane.b32.xlu0 %v3426, 36
        %v3562 = vpop.permute.xlu0 %3561
        %3563 = vrot.lane.b32.xlu0 %v3427, 36
        %v3564 = vpop.permute.xlu0 %3563
        %3565 = vrot.lane.b32.xlu0 %v3428, 36
        %v3566 = vpop.permute.xlu0 %3565
        %3567 = vrot.lane.b32.xlu0 %v3429, 36
        %v3568 = vpop.permute.xlu0 %3567
        %3569 = vrot.lane.b32.xlu0 %v3430, 36
        %v3570 = vpop.permute.xlu0 %3569
        %3571 = vrot.lane.b32.xlu0 %v3431, 36
        %v3572 = vpop.permute.xlu0 %3571
        %3573 = vrot.lane.b32.xlu0 %v3432, 36
        %v3574 = vpop.permute.xlu0 %3573
        %3575 = vrot.lane.b32.xlu0 %v3433, 36
        %v3576 = vpop.permute.xlu0 %3575
        %3577 = vrot.lane.b32.xlu0 %v3434, 36
        %v3578 = vpop.permute.xlu0 %3577
        %3579 = vrot.lane.b32.xlu0 %v3435, 36
        %v3580 = vpop.permute.xlu0 %3579
        %3581 = vrot.lane.b32.xlu0 %v3436, 36
        %v3582 = vpop.permute.xlu0 %3581
        %3583 = vrot.lane.b32.xlu0 %v3437, 36
        %v3584 = vpop.permute.xlu0 %3583
        %3585 = vrot.lane.b32.xlu0 %v3438, 36
        %v3586 = vpop.permute.xlu0 %3585
        %3587 = vrot.lane.b32.xlu0 %v3439, 36
        %v3588 = vpop.permute.xlu0 %3587
        %3589 = vrot.lane.b32.xlu0 %v3440, 36
        %v3590 = vpop.permute.xlu0 %3589
        %3591 = vrot.lane.b32.xlu0 %v3441, 36
        %v3592 = vpop.permute.xlu0 %3591
        %3593 = vrot.lane.b32.xlu0 %v3442, 36
        %v3594 = vpop.permute.xlu0 %3593
        %3595 = vrot.lane.b32.xlu0 %v3443, 36
        %v3596 = vpop.permute.xlu0 %3595
        %3597 = vrot.lane.b32.xlu0 %v3444, 36
        %v3598 = vpop.permute.xlu0 %3597
        %3599 = vrot.lane.b32.xlu0 %v3445, 36
        %v3600 = vpop.permute.xlu0 %3599
        %3601 = vrot.lane.b32.xlu0 %v3446, 36
        %v3602 = vpop.permute.xlu0 %3601
        %3603 = vrot.lane.b32.xlu0 %v3447, 36
        %v3604 = vpop.permute.xlu0 %3603
        %3605 = vrot.lane.b32.xlu0 %v3448, 36
        %v3606 = vpop.permute.xlu0 %3605
        %3607 = vrot.lane.b32.xlu0 %v3449, 36
        %v3608 = vpop.permute.xlu0 %3607
        %3609 = vrot.lane.b32.xlu0 %v3450, 36
        %v3610 = vpop.permute.xlu0 %3609
        %3611 = vrot.lane.b32.xlu0 %v3451, 36
        %v3612 = vpop.permute.xlu0 %3611
        %3613 = vrot.lane.b32.xlu0 %v3452, 36
        %v3614 = vpop.permute.xlu0 %3613
        %3615 = vrot.lane.b32.xlu0 %v3453, 36
        %v3616 = vpop.permute.xlu0 %3615
        %3617 = vrot.lane.b32.xlu0 %v3454, 36
        %v3618 = vpop.permute.xlu0 %3617
        %3619 = vrot.lane.b32.xlu0 %v3455, 36
        %v3620 = vpop.permute.xlu0 %3619
        %3621 = vrot.lane.b32.xlu0 %v3456, 36
        %v3622 = vpop.permute.xlu0 %3621
        %3623 = vrot.lane.b32.xlu0 %v3457, 36
        %v3624 = vpop.permute.xlu0 %3623
        %3625 = vrot.lane.b32.xlu0 %v3458, 36
        %v3626 = vpop.permute.xlu0 %3625
        %3627 = vrot.lane.b32.xlu0 %v3459, 36
        %v3628 = vpop.permute.xlu0 %3627
        %3629 = vrot.lane.b32.xlu0 %v3460, 36
        %v3630 = vpop.permute.xlu0 %3629
        %3631 = vrot.lane.b32.xlu0 %v3461, 36
        %v3632 = vpop.permute.xlu0 %3631
        %3633 = vrot.lane.b32.xlu0 %v3462, 36
        %v3634 = vpop.permute.xlu0 %3633
        %3635 = vrot.lane.b32.xlu0 %v3463, 36
        %v3636 = vpop.permute.xlu0 %3635
        %3637 = vrot.lane.b32.xlu0 %v3464, 36
        %v3638 = vpop.permute.xlu0 %3637
        %3639 = vrot.lane.b32.xlu0 %v3465, 36
        %v3640 = vpop.permute.xlu0 %3639
        %3641 = vrot.lane.b32.xlu0 %v3466, 36
        %v3642 = vpop.permute.xlu0 %3641
        %3643 = vrot.lane.b32.xlu0 %v3467, 36
        %v3644 = vpop.permute.xlu0 %3643
        %3645 = vrot.lane.b32.xlu0 %v3468, 36
        %v3646 = vpop.permute.xlu0 %3645
        %3647 = vrot.lane.b32.xlu0 %v3469, 36
        %v3648 = vpop.permute.xlu0 %3647
        %3649 = vrot.lane.b32.xlu0 %v3470, 36
        %v3650 = vpop.permute.xlu0 %3649
        %3651 = vrot.lane.b32.xlu0 %v3471, 36
        %v3652 = vpop.permute.xlu0 %3651
        %3653 = vrot.lane.b32.xlu0 %v3472, 36
        %v3654 = vpop.permute.xlu0 %3653
        %3655 = vrot.lane.b32.xlu0 %v3473, 36
        %v3656 = vpop.permute.xlu0 %3655
        %3657 = vrot.lane.b32.xlu0 %v3474, 36
        %v3658 = vpop.permute.xlu0 %3657
        %3659 = vrot.lane.b32.xlu0 %v3475, 36
        %v3660 = vpop.permute.xlu0 %3659
        %3661 = vrot.lane.b32.xlu0 %v3476, 36
        %v3662 = vpop.permute.xlu0 %3661
        %3663 = vrot.lane.b32.xlu0 %v3477, 36
        %v3664 = vpop.permute.xlu0 %3663
        %3665 = vrot.lane.b32.xlu0 %v3478, 36
        %v3666 = vpop.permute.xlu0 %3665
        %3667 = vrot.lane.b32.xlu0 %v3479, 36
        %v3668 = vpop.permute.xlu0 %3667
        %3669 = vrot.lane.b32.xlu0 %v3480, 36
        %v3670 = vpop.permute.xlu0 %3669
        %3671 = vrot.lane.b32.xlu0 %v3481, 36
        %v3672 = vpop.permute.xlu0 %3671
        %3673 = vrot.lane.b32.xlu0 %v3482, 36
        %v3674 = vpop.permute.xlu0 %3673
        %vm3739 = vcmask 326944
        %3740 = vst.msk [vmem:[#allocation2] sm:$0xff] %vm3739, %v3548
        %3741 = vst.msk [vmem:[#allocation2 + $0x8] sm:$0xff] %vm3739, %v3550
        %3742 = vst.msk [vmem:[#allocation2 + $0x10] sm:$0xff] %vm3739, %v3552
        %3743 = vst.msk [vmem:[#allocation2 + $0x18] sm:$0xff] %vm3739, %v3554
        %3744 = vst.msk [vmem:[#allocation2 + $0x20] sm:$0xff] %vm3739, %v3556
        %3745 = vst.msk [vmem:[#allocation2 + $0x28] sm:$0xff] %vm3739, %v3558
        %3746 = vst.msk [vmem:[#allocation2 + $0x30] sm:$0xff] %vm3739, %v3560
        %3747 = vst.msk [vmem:[#allocation2 + $0x38] sm:$0xff] %vm3739, %v3562
        %3748 = vst.msk [vmem:[#allocation2 + $0x40] sm:$0xff] %vm3739, %v3564
        %3749 = vst.msk [vmem:[#allocation2 + $0x48] sm:$0xff] %vm3739, %v3566
        %3750 = vst.msk [vmem:[#allocation2 + $0x50] sm:$0xff] %vm3739, %v3568
        %3751 = vst.msk [vmem:[#allocation2 + $0x58] sm:$0xff] %vm3739, %v3570
        %3752 = vst.msk [vmem:[#allocation2 + $0x60] sm:$0xff] %vm3739, %v3572
        %3753 = vst.msk [vmem:[#allocation2 + $0x68] sm:$0xff] %vm3739, %v3574
        %3754 = vst.msk [vmem:[#allocation2 + $0x70] sm:$0xff] %vm3739, %v3576
        %3755 = vst.msk [vmem:[#allocation2 + $0x78] sm:$0xff] %vm3739, %v3578
        %3756 = vst.msk [vmem:[#allocation2 + $0x80] sm:$0xff] %vm3739, %v3580
        %3757 = vst.msk [vmem:[#allocation2 + $0x88] sm:$0xff] %vm3739, %v3582
        %3758 = vst.msk [vmem:[#allocation2 + $0x90] sm:$0xff] %vm3739, %v3584
        %3759 = vst.msk [vmem:[#allocation2 + $0x98] sm:$0xff] %vm3739, %v3586
        %3760 = vst.msk [vmem:[#allocation2 + $0xa0] sm:$0xff] %vm3739, %v3588
        %3761 = vst.msk [vmem:[#allocation2 + $0xa8] sm:$0xff] %vm3739, %v3590
        %3762 = vst.msk [vmem:[#allocation2 + $0xb0] sm:$0xff] %vm3739, %v3592
        %3763 = vst.msk [vmem:[#allocation2 + $0xb8] sm:$0xff] %vm3739, %v3594
        %3764 = vst.msk [vmem:[#allocation2 + $0xc0] sm:$0xff] %vm3739, %v3596
        %3765 = vst.msk [vmem:[#allocation2 + $0xc8] sm:$0xff] %vm3739, %v3598
        %3766 = vst.msk [vmem:[#allocation2 + $0xd0] sm:$0xff] %vm3739, %v3600
        %3767 = vst.msk [vmem:[#allocation2 + $0xd8] sm:$0xff] %vm3739, %v3602
        %3768 = vst.msk [vmem:[#allocation2 + $0xe0] sm:$0xff] %vm3739, %v3604
        %3769 = vst.msk [vmem:[#allocation2 + $0xe8] sm:$0xff] %vm3739, %v3606
        %3770 = vst.msk [vmem:[#allocation2 + $0xf0] sm:$0xff] %vm3739, %v3608
        %3771 = vst.msk [vmem:[#allocation2 + $0xf8] sm:$0xff] %vm3739, %v3610
        %3772 = vst.msk [vmem:[#allocation2 + $0x100] sm:$0xff] %vm3739, %v3612
        %3773 = vst.msk [vmem:[#allocation2 + $0x108] sm:$0xff] %vm3739, %v3614
        %3774 = vst.msk [vmem:[#allocation2 + $0x110] sm:$0xff] %vm3739, %v3616
        %3775 = vst.msk [vmem:[#allocation2 + $0x118] sm:$0xff] %vm3739, %v3618
        %3776 = vst.msk [vmem:[#allocation2 + $0x120] sm:$0xff] %vm3739, %v3620
        %3777 = vst.msk [vmem:[#allocation2 + $0x128] sm:$0xff] %vm3739, %v3622
        %3778 = vst.msk [vmem:[#allocation2 + $0x130] sm:$0xff] %vm3739, %v3624
        %3779 = vst.msk [vmem:[#allocation2 + $0x138] sm:$0xff] %vm3739, %v3626
        %3780 = vst.msk [vmem:[#allocation2 + $0x140] sm:$0xff] %vm3739, %v3628
        %3781 = vst.msk [vmem:[#allocation2 + $0x148] sm:$0xff] %vm3739, %v3630
        %3782 = vst.msk [vmem:[#allocation2 + $0x150] sm:$0xff] %vm3739, %v3632
        %3783 = vst.msk [vmem:[#allocation2 + $0x158] sm:$0xff] %vm3739, %v3634
        %3784 = vst.msk [vmem:[#allocation2 + $0x160] sm:$0xff] %vm3739, %v3636
        %3785 = vst.msk [vmem:[#allocation2 + $0x168] sm:$0xff] %vm3739, %v3638
        %3786 = vst.msk [vmem:[#allocation2 + $0x170] sm:$0xff] %vm3739, %v3640
        %3787 = vst.msk [vmem:[#allocation2 + $0x178] sm:$0xff] %vm3739, %v3642
        %3788 = vst.msk [vmem:[#allocation2 + $0x180] sm:$0xff] %vm3739, %v3644
        %3789 = vst.msk [vmem:[#allocation2 + $0x188] sm:$0xff] %vm3739, %v3646
        %3790 = vst.msk [vmem:[#allocation2 + $0x190] sm:$0xff] %vm3739, %v3648
        %3791 = vst.msk [vmem:[#allocation2 + $0x198] sm:$0xff] %vm3739, %v3650
        %3792 = vst.msk [vmem:[#allocation2 + $0x1a0] sm:$0xff] %vm3739, %v3652
        %3793 = vst.msk [vmem:[#allocation2 + $0x1a8] sm:$0xff] %vm3739, %v3654
        %3794 = vst.msk [vmem:[#allocation2 + $0x1b0] sm:$0xff] %vm3739, %v3656
        %3795 = vst.msk [vmem:[#allocation2 + $0x1b8] sm:$0xff] %vm3739, %v3658
        %3796 = vst.msk [vmem:[#allocation2 + $0x1c0] sm:$0xff] %vm3739, %v3660
        %3797 = vst.msk [vmem:[#allocation2 + $0x1c8] sm:$0xff] %vm3739, %v3662
        %3798 = vst.msk [vmem:[#allocation2 + $0x1d0] sm:$0xff] %vm3739, %v3664
        %3799 = vst.msk [vmem:[#allocation2 + $0x1d8] sm:$0xff] %vm3739, %v3666
        %3800 = vst.msk [vmem:[#allocation2 + $0x1e0] sm:$0xff] %vm3739, %v3668
        %3801 = vst.msk [vmem:[#allocation2 + $0x1e8] sm:$0xff] %vm3739, %v3670
        %3802 = vst.msk [vmem:[#allocation2 + $0x1f0] sm:$0xff] %vm3739, %v3672
        %3803 = vst.msk [vmem:[#allocation2 + $0x1f8] sm:$0xff] %vm3739, %v3674
        %v3804 = vld [vmem:[%s3418 + $0x1] sm:$0xff]
        %v3805 = vld [vmem:[%s3418 + $0x11] sm:$0xff]
        %v3806 = vld [vmem:[%s3418 + $0x21] sm:$0xff]
        %v3807 = vld [vmem:[%s3418 + $0x31] sm:$0xff]
        %v3808 = vld [vmem:[%s3418 + $0x41] sm:$0xff]
        %v3809 = vld [vmem:[%s3418 + $0x51] sm:$0xff]
        %v3810 = vld [vmem:[%s3418 + $0x61] sm:$0xff]
        %v3811 = vld [vmem:[%s3418 + $0x71] sm:$0xff]
        %v3812 = vld [vmem:[%s3418 + $0xa1] sm:$0xff]
        %v3813 = vld [vmem:[%s3418 + $0xb1] sm:$0xff]
        %v3814 = vld [vmem:[%s3418 + $0xc1] sm:$0xff]
        %v3815 = vld [vmem:[%s3418 + $0xd1] sm:$0xff]
        %v3816 = vld [vmem:[%s3418 + $0xe1] sm:$0xff]
        %v3817 = vld [vmem:[%s3418 + $0xf1] sm:$0xff]
        %v3818 = vld [vmem:[%s3418 + $0x101] sm:$0xff]
        %v3819 = vld [vmem:[%s3418 + $0x111] sm:$0xff]
        %v3820 = vld [vmem:[%s3418 + $0x141] sm:$0xff]
        %v3821 = vld [vmem:[%s3418 + $0x151] sm:$0xff]
        %v3822 = vld [vmem:[%s3418 + $0x161] sm:$0xff]
        %v3823 = vld [vmem:[%s3418 + $0x171] sm:$0xff]
        %v3824 = vld [vmem:[%s3418 + $0x181] sm:$0xff]
        %v3825 = vld [vmem:[%s3418 + $0x191] sm:$0xff]
        %v3826 = vld [vmem:[%s3418 + $0x1a1] sm:$0xff]
        %v3827 = vld [vmem:[%s3418 + $0x1b1] sm:$0xff]
        %v3828 = vld [vmem:[%s3418 + $0x1e1] sm:$0xff]
        %v3829 = vld [vmem:[%s3418 + $0x1f1] sm:$0xff]
        %v3830 = vld [vmem:[%s3418 + $0x201] sm:$0xff]
        %v3831 = vld [vmem:[%s3418 + $0x211] sm:$0xff]
        %v3832 = vld [vmem:[%s3418 + $0x221] sm:$0xff]
        %v3833 = vld [vmem:[%s3418 + $0x231] sm:$0xff]
        %v3834 = vld [vmem:[%s3418 + $0x241] sm:$0xff]
        %v3835 = vld [vmem:[%s3418 + $0x251] sm:$0xff]
        %v3836 = vld [vmem:[%s3418 + $0x281] sm:$0xff]
        %v3837 = vld [vmem:[%s3418 + $0x291] sm:$0xff]
        %v3838 = vld [vmem:[%s3418 + $0x2a1] sm:$0xff]
        %v3839 = vld [vmem:[%s3418 + $0x2b1] sm:$0xff]
        %v3840 = vld [vmem:[%s3418 + $0x2c1] sm:$0xff]
        %v3841 = vld [vmem:[%s3418 + $0x2d1] sm:$0xff]
        %v3842 = vld [vmem:[%s3418 + $0x2e1] sm:$0xff]
        %v3843 = vld [vmem:[%s3418 + $0x2f1] sm:$0xff]
        %v3844 = vld [vmem:[%s3418 + $0x321] sm:$0xff]
        %v3845 = vld [vmem:[%s3418 + $0x331] sm:$0xff]
        %v3846 = vld [vmem:[%s3418 + $0x341] sm:$0xff]
        %v3847 = vld [vmem:[%s3418 + $0x351] sm:$0xff]
        %v3848 = vld [vmem:[%s3418 + $0x361] sm:$0xff]
        %v3849 = vld [vmem:[%s3418 + $0x371] sm:$0xff]
        %v3850 = vld [vmem:[%s3418 + $0x381] sm:$0xff]
        %v3851 = vld [vmem:[%s3418 + $0x391] sm:$0xff]
        %v3852 = vld [vmem:[%s3418 + $0x3c1] sm:$0xff]
        %v3853 = vld [vmem:[%s3418 + $0x3d1] sm:$0xff]
        %v3854 = vld [vmem:[%s3418 + $0x3e1] sm:$0xff]
        %v3855 = vld [vmem:[%s3418 + $0x3f1] sm:$0xff]
        %v3856 = vld [vmem:[%s3418 + $0x401] sm:$0xff]
        %v3857 = vld [vmem:[%s3418 + $0x411] sm:$0xff]
        %v3858 = vld [vmem:[%s3418 + $0x421] sm:$0xff]
        %v3859 = vld [vmem:[%s3418 + $0x431] sm:$0xff]
        %v3860 = vld [vmem:[%s3418 + $0x461] sm:$0xff]
        %v3861 = vld [vmem:[%s3418 + $0x471] sm:$0xff]
        %v3862 = vld [vmem:[%s3418 + $0x481] sm:$0xff]
        %v3863 = vld [vmem:[%s3418 + $0x491] sm:$0xff]
        %v3864 = vld [vmem:[%s3418 + $0x4a1] sm:$0xff]
        %v3865 = vld [vmem:[%s3418 + $0x4b1] sm:$0xff]
        %v3866 = vld [vmem:[%s3418 + $0x4c1] sm:$0xff]
        %v3867 = vld [vmem:[%s3418 + $0x4d1] sm:$0xff]
        %3932 = vrot.lane.b32.xlu0 %v3804, 40
        %v3933 = vpop.permute.xlu0 %3932
        %3934 = vrot.lane.b32.xlu0 %v3805, 40
        %v3935 = vpop.permute.xlu0 %3934
        %3936 = vrot.lane.b32.xlu0 %v3806, 40
        %v3937 = vpop.permute.xlu0 %3936
        %3938 = vrot.lane.b32.xlu0 %v3807, 40
        %v3939 = vpop.permute.xlu0 %3938
        %3940 = vrot.lane.b32.xlu0 %v3808, 40
        %v3941 = vpop.permute.xlu0 %3940
        %3942 = vrot.lane.b32.xlu0 %v3809, 40
        %v3943 = vpop.permute.xlu0 %3942
        %3944 = vrot.lane.b32.xlu0 %v3810, 40
        %v3945 = vpop.permute.xlu0 %3944
        %3946 = vrot.lane.b32.xlu0 %v3811, 40
        %v3947 = vpop.permute.xlu0 %3946
        %3948 = vrot.lane.b32.xlu0 %v3812, 40
        %v3949 = vpop.permute.xlu0 %3948
        %3950 = vrot.lane.b32.xlu0 %v3813, 40
        %v3951 = vpop.permute.xlu0 %3950
        %3952 = vrot.lane.b32.xlu0 %v3814, 40
        %v3953 = vpop.permute.xlu0 %3952
        %3954 = vrot.lane.b32.xlu0 %v3815, 40
        %v3955 = vpop.permute.xlu0 %3954
        %3956 = vrot.lane.b32.xlu0 %v3816, 40
        %v3957 = vpop.permute.xlu0 %3956
        %3958 = vrot.lane.b32.xlu0 %v3817, 40
        %v3959 = vpop.permute.xlu0 %3958
        %3960 = vrot.lane.b32.xlu0 %v3818, 40
        %v3961 = vpop.permute.xlu0 %3960
        %3962 = vrot.lane.b32.xlu0 %v3819, 40
        %v3963 = vpop.permute.xlu0 %3962
        %3964 = vrot.lane.b32.xlu0 %v3820, 40
        %v3965 = vpop.permute.xlu0 %3964
        %3966 = vrot.lane.b32.xlu0 %v3821, 40
        %v3967 = vpop.permute.xlu0 %3966
        %3968 = vrot.lane.b32.xlu0 %v3822, 40
        %v3969 = vpop.permute.xlu0 %3968
        %3970 = vrot.lane.b32.xlu0 %v3823, 40
        %v3971 = vpop.permute.xlu0 %3970
        %3972 = vrot.lane.b32.xlu0 %v3824, 40
        %v3973 = vpop.permute.xlu0 %3972
        %3974 = vrot.lane.b32.xlu0 %v3825, 40
        %v3975 = vpop.permute.xlu0 %3974
        %3976 = vrot.lane.b32.xlu0 %v3826, 40
        %v3977 = vpop.permute.xlu0 %3976
        %3978 = vrot.lane.b32.xlu0 %v3827, 40
        %v3979 = vpop.permute.xlu0 %3978
        %3980 = vrot.lane.b32.xlu0 %v3828, 40
        %v3981 = vpop.permute.xlu0 %3980
        %3982 = vrot.lane.b32.xlu0 %v3829, 40
        %v3983 = vpop.permute.xlu0 %3982
        %3984 = vrot.lane.b32.xlu0 %v3830, 40
        %v3985 = vpop.permute.xlu0 %3984
        %3986 = vrot.lane.b32.xlu0 %v3831, 40
        %v3987 = vpop.permute.xlu0 %3986
        %3988 = vrot.lane.b32.xlu0 %v3832, 40
        %v3989 = vpop.permute.xlu0 %3988
        %3990 = vrot.lane.b32.xlu0 %v3833, 40
        %v3991 = vpop.permute.xlu0 %3990
        %3992 = vrot.lane.b32.xlu0 %v3834, 40
        %v3993 = vpop.permute.xlu0 %3992
        %3994 = vrot.lane.b32.xlu0 %v3835, 40
        %v3995 = vpop.permute.xlu0 %3994
        %3996 = vrot.lane.b32.xlu0 %v3836, 40
        %v3997 = vpop.permute.xlu0 %3996
        %3998 = vrot.lane.b32.xlu0 %v3837, 40
        %v3999 = vpop.permute.xlu0 %3998
        %4000 = vrot.lane.b32.xlu0 %v3838, 40
        %v4001 = vpop.permute.xlu0 %4000
        %4002 = vrot.lane.b32.xlu0 %v3839, 40
        %v4003 = vpop.permute.xlu0 %4002
        %4004 = vrot.lane.b32.xlu0 %v3840, 40
        %v4005 = vpop.permute.xlu0 %4004
        %4006 = vrot.lane.b32.xlu0 %v3841, 40
        %v4007 = vpop.permute.xlu0 %4006
        %4008 = vrot.lane.b32.xlu0 %v3842, 40
        %v4009 = vpop.permute.xlu0 %4008
        %4010 = vrot.lane.b32.xlu0 %v3843, 40
        %v4011 = vpop.permute.xlu0 %4010
        %4012 = vrot.lane.b32.xlu0 %v3844, 40
        %v4013 = vpop.permute.xlu0 %4012
        %4014 = vrot.lane.b32.xlu0 %v3845, 40
        %v4015 = vpop.permute.xlu0 %4014
        %4016 = vrot.lane.b32.xlu0 %v3846, 40
        %v4017 = vpop.permute.xlu0 %4016
        %4018 = vrot.lane.b32.xlu0 %v3847, 40
        %v4019 = vpop.permute.xlu0 %4018
        %4020 = vrot.lane.b32.xlu0 %v3848, 40
        %v4021 = vpop.permute.xlu0 %4020
        %4022 = vrot.lane.b32.xlu0 %v3849, 40
        %v4023 = vpop.permute.xlu0 %4022
        %4024 = vrot.lane.b32.xlu0 %v3850, 40
        %v4025 = vpop.permute.xlu0 %4024
        %4026 = vrot.lane.b32.xlu0 %v3851, 40
        %v4027 = vpop.permute.xlu0 %4026
        %4028 = vrot.lane.b32.xlu0 %v3852, 40
        %v4029 = vpop.permute.xlu0 %4028
        %4030 = vrot.lane.b32.xlu0 %v3853, 40
        %v4031 = vpop.permute.xlu0 %4030
        %4032 = vrot.lane.b32.xlu0 %v3854, 40
        %v4033 = vpop.permute.xlu0 %4032
        %4034 = vrot.lane.b32.xlu0 %v3855, 40
        %v4035 = vpop.permute.xlu0 %4034
        %4036 = vrot.lane.b32.xlu0 %v3856, 40
        %v4037 = vpop.permute.xlu0 %4036
        %4038 = vrot.lane.b32.xlu0 %v3857, 40
        %v4039 = vpop.permute.xlu0 %4038
        %4040 = vrot.lane.b32.xlu0 %v3858, 40
        %v4041 = vpop.permute.xlu0 %4040
        %4042 = vrot.lane.b32.xlu0 %v3859, 40
        %v4043 = vpop.permute.xlu0 %4042
        %4044 = vrot.lane.b32.xlu0 %v3860, 40
        %v4045 = vpop.permute.xlu0 %4044
        %4046 = vrot.lane.b32.xlu0 %v3861, 40
        %v4047 = vpop.permute.xlu0 %4046
        %4048 = vrot.lane.b32.xlu0 %v3862, 40
        %v4049 = vpop.permute.xlu0 %4048
        %4050 = vrot.lane.b32.xlu0 %v3863, 40
        %v4051 = vpop.permute.xlu0 %4050
        %4052 = vrot.lane.b32.xlu0 %v3864, 40
        %v4053 = vpop.permute.xlu0 %4052
        %4054 = vrot.lane.b32.xlu0 %v3865, 40
        %v4055 = vpop.permute.xlu0 %4054
        %4056 = vrot.lane.b32.xlu0 %v3866, 40
        %v4057 = vpop.permute.xlu0 %4056
        %4058 = vrot.lane.b32.xlu0 %v3867, 40
        %v4059 = vpop.permute.xlu0 %4058
        %vm4124 = vcmask 359744
        %4125 = vst.msk [vmem:[#allocation2] sm:$0xff] %vm4124, %v3933
        %4126 = vst.msk [vmem:[#allocation2 + $0x8] sm:$0xff] %vm4124, %v3935
        %4127 = vst.msk [vmem:[#allocation2 + $0x10] sm:$0xff] %vm4124, %v3937
        %4128 = vst.msk [vmem:[#allocation2 + $0x18] sm:$0xff] %vm4124, %v3939
        %4129 = vst.msk [vmem:[#allocation2 + $0x20] sm:$0xff] %vm4124, %v3941
        %4130 = vst.msk [vmem:[#allocation2 + $0x28] sm:$0xff] %vm4124, %v3943
        %4131 = vst.msk [vmem:[#allocation2 + $0x30] sm:$0xff] %vm4124, %v3945
        %4132 = vst.msk [vmem:[#allocation2 + $0x38] sm:$0xff] %vm4124, %v3947
        %4133 = vst.msk [vmem:[#allocation2 + $0x40] sm:$0xff] %vm4124, %v3949
        %4134 = vst.msk [vmem:[#allocation2 + $0x48] sm:$0xff] %vm4124, %v3951
        %4135 = vst.msk [vmem:[#allocation2 + $0x50] sm:$0xff] %vm4124, %v3953
        %4136 = vst.msk [vmem:[#allocation2 + $0x58] sm:$0xff] %vm4124, %v3955
        %4137 = vst.msk [vmem:[#allocation2 + $0x60] sm:$0xff] %vm4124, %v3957
        %4138 = vst.msk [vmem:[#allocation2 + $0x68] sm:$0xff] %vm4124, %v3959
        %4139 = vst.msk [vmem:[#allocation2 + $0x70] sm:$0xff] %vm4124, %v3961
        %4140 = vst.msk [vmem:[#allocation2 + $0x78] sm:$0xff] %vm4124, %v3963
        %4141 = vst.msk [vmem:[#allocation2 + $0x80] sm:$0xff] %vm4124, %v3965
        %4142 = vst.msk [vmem:[#allocation2 + $0x88] sm:$0xff] %vm4124, %v3967
        %4143 = vst.msk [vmem:[#allocation2 + $0x90] sm:$0xff] %vm4124, %v3969
        %4144 = vst.msk [vmem:[#allocation2 + $0x98] sm:$0xff] %vm4124, %v3971
        %4145 = vst.msk [vmem:[#allocation2 + $0xa0] sm:$0xff] %vm4124, %v3973
        %4146 = vst.msk [vmem:[#allocation2 + $0xa8] sm:$0xff] %vm4124, %v3975
        %4147 = vst.msk [vmem:[#allocation2 + $0xb0] sm:$0xff] %vm4124, %v3977
        %4148 = vst.msk [vmem:[#allocation2 + $0xb8] sm:$0xff] %vm4124, %v3979
        %4149 = vst.msk [vmem:[#allocation2 + $0xc0] sm:$0xff] %vm4124, %v3981
        %4150 = vst.msk [vmem:[#allocation2 + $0xc8] sm:$0xff] %vm4124, %v3983
        %4151 = vst.msk [vmem:[#allocation2 + $0xd0] sm:$0xff] %vm4124, %v3985
        %4152 = vst.msk [vmem:[#allocation2 + $0xd8] sm:$0xff] %vm4124, %v3987
        %4153 = vst.msk [vmem:[#allocation2 + $0xe0] sm:$0xff] %vm4124, %v3989
        %4154 = vst.msk [vmem:[#allocation2 + $0xe8] sm:$0xff] %vm4124, %v3991
        %4155 = vst.msk [vmem:[#allocation2 + $0xf0] sm:$0xff] %vm4124, %v3993
        %4156 = vst.msk [vmem:[#allocation2 + $0xf8] sm:$0xff] %vm4124, %v3995
        %4157 = vst.msk [vmem:[#allocation2 + $0x100] sm:$0xff] %vm4124, %v3997
        %4158 = vst.msk [vmem:[#allocation2 + $0x108] sm:$0xff] %vm4124, %v3999
        %4159 = vst.msk [vmem:[#allocation2 + $0x110] sm:$0xff] %vm4124, %v4001
        %4160 = vst.msk [vmem:[#allocation2 + $0x118] sm:$0xff] %vm4124, %v4003
        %4161 = vst.msk [vmem:[#allocation2 + $0x120] sm:$0xff] %vm4124, %v4005
        %4162 = vst.msk [vmem:[#allocation2 + $0x128] sm:$0xff] %vm4124, %v4007
        %4163 = vst.msk [vmem:[#allocation2 + $0x130] sm:$0xff] %vm4124, %v4009
        %4164 = vst.msk [vmem:[#allocation2 + $0x138] sm:$0xff] %vm4124, %v4011
        %4165 = vst.msk [vmem:[#allocation2 + $0x140] sm:$0xff] %vm4124, %v4013
        %4166 = vst.msk [vmem:[#allocation2 + $0x148] sm:$0xff] %vm4124, %v4015
        %4167 = vst.msk [vmem:[#allocation2 + $0x150] sm:$0xff] %vm4124, %v4017
        %4168 = vst.msk [vmem:[#allocation2 + $0x158] sm:$0xff] %vm4124, %v4019
        %4169 = vst.msk [vmem:[#allocation2 + $0x160] sm:$0xff] %vm4124, %v4021
        %4170 = vst.msk [vmem:[#allocation2 + $0x168] sm:$0xff] %vm4124, %v4023
        %4171 = vst.msk [vmem:[#allocation2 + $0x170] sm:$0xff] %vm4124, %v4025
        %4172 = vst.msk [vmem:[#allocation2 + $0x178] sm:$0xff] %vm4124, %v4027
        %4173 = vst.msk [vmem:[#allocation2 + $0x180] sm:$0xff] %vm4124, %v4029
        %4174 = vst.msk [vmem:[#allocation2 + $0x188] sm:$0xff] %vm4124, %v4031
        %4175 = vst.msk [vmem:[#allocation2 + $0x190] sm:$0xff] %vm4124, %v4033
        %4176 = vst.msk [vmem:[#allocation2 + $0x198] sm:$0xff] %vm4124, %v4035
        %4177 = vst.msk [vmem:[#allocation2 + $0x1a0] sm:$0xff] %vm4124, %v4037
        %4178 = vst.msk [vmem:[#allocation2 + $0x1a8] sm:$0xff] %vm4124, %v4039
        %4179 = vst.msk [vmem:[#allocation2 + $0x1b0] sm:$0xff] %vm4124, %v4041
        %4180 = vst.msk [vmem:[#allocation2 + $0x1b8] sm:$0xff] %vm4124, %v4043
        %4181 = vst.msk [vmem:[#allocation2 + $0x1c0] sm:$0xff] %vm4124, %v4045
        %4182 = vst.msk [vmem:[#allocation2 + $0x1c8] sm:$0xff] %vm4124, %v4047
        %4183 = vst.msk [vmem:[#allocation2 + $0x1d0] sm:$0xff] %vm4124, %v4049
        %4184 = vst.msk [vmem:[#allocation2 + $0x1d8] sm:$0xff] %vm4124, %v4051
        %4185 = vst.msk [vmem:[#allocation2 + $0x1e0] sm:$0xff] %vm4124, %v4053
        %4186 = vst.msk [vmem:[#allocation2 + $0x1e8] sm:$0xff] %vm4124, %v4055
        %4187 = vst.msk [vmem:[#allocation2 + $0x1f0] sm:$0xff] %vm4124, %v4057
        %4188 = vst.msk [vmem:[#allocation2 + $0x1f8] sm:$0xff] %vm4124, %v4059
        %v4189 = vld [vmem:[%s3418 + $0x2] sm:$0xff]
        %v4190 = vld [vmem:[%s3418 + $0x12] sm:$0xff]
        %v4191 = vld [vmem:[%s3418 + $0x22] sm:$0xff]
        %v4192 = vld [vmem:[%s3418 + $0x32] sm:$0xff]
        %v4193 = vld [vmem:[%s3418 + $0x42] sm:$0xff]
        %v4194 = vld [vmem:[%s3418 + $0x52] sm:$0xff]
        %v4195 = vld [vmem:[%s3418 + $0x62] sm:$0xff]
        %v4196 = vld [vmem:[%s3418 + $0x72] sm:$0xff]
        %v4197 = vld [vmem:[%s3418 + $0xa2] sm:$0xff]
        %v4198 = vld [vmem:[%s3418 + $0xb2] sm:$0xff]
        %v4199 = vld [vmem:[%s3418 + $0xc2] sm:$0xff]
        %v4200 = vld [vmem:[%s3418 + $0xd2] sm:$0xff]
        %v4201 = vld [vmem:[%s3418 + $0xe2] sm:$0xff]
        %v4202 = vld [vmem:[%s3418 + $0xf2] sm:$0xff]
        %v4203 = vld [vmem:[%s3418 + $0x102] sm:$0xff]
        %v4204 = vld [vmem:[%s3418 + $0x112] sm:$0xff]
        %v4205 = vld [vmem:[%s3418 + $0x142] sm:$0xff]
        %v4206 = vld [vmem:[%s3418 + $0x152] sm:$0xff]
        %v4207 = vld [vmem:[%s3418 + $0x162] sm:$0xff]
        %v4208 = vld [vmem:[%s3418 + $0x172] sm:$0xff]
        %v4209 = vld [vmem:[%s3418 + $0x182] sm:$0xff]
        %v4210 = vld [vmem:[%s3418 + $0x192] sm:$0xff]
        %v4211 = vld [vmem:[%s3418 + $0x1a2] sm:$0xff]
        %v4212 = vld [vmem:[%s3418 + $0x1b2] sm:$0xff]
        %v4213 = vld [vmem:[%s3418 + $0x1e2] sm:$0xff]
        %v4214 = vld [vmem:[%s3418 + $0x1f2] sm:$0xff]
        %v4215 = vld [vmem:[%s3418 + $0x202] sm:$0xff]
        %v4216 = vld [vmem:[%s3418 + $0x212] sm:$0xff]
        %v4217 = vld [vmem:[%s3418 + $0x222] sm:$0xff]
        %v4218 = vld [vmem:[%s3418 + $0x232] sm:$0xff]
        %v4219 = vld [vmem:[%s3418 + $0x242] sm:$0xff]
        %v4220 = vld [vmem:[%s3418 + $0x252] sm:$0xff]
        %v4221 = vld [vmem:[%s3418 + $0x282] sm:$0xff]
        %v4222 = vld [vmem:[%s3418 + $0x292] sm:$0xff]
        %v4223 = vld [vmem:[%s3418 + $0x2a2] sm:$0xff]
        %v4224 = vld [vmem:[%s3418 + $0x2b2] sm:$0xff]
        %v4225 = vld [vmem:[%s3418 + $0x2c2] sm:$0xff]
        %v4226 = vld [vmem:[%s3418 + $0x2d2] sm:$0xff]
        %v4227 = vld [vmem:[%s3418 + $0x2e2] sm:$0xff]
        %v4228 = vld [vmem:[%s3418 + $0x2f2] sm:$0xff]
        %v4229 = vld [vmem:[%s3418 + $0x322] sm:$0xff]
        %v4230 = vld [vmem:[%s3418 + $0x332] sm:$0xff]
        %v4231 = vld [vmem:[%s3418 + $0x342] sm:$0xff]
        %v4232 = vld [vmem:[%s3418 + $0x352] sm:$0xff]
        %v4233 = vld [vmem:[%s3418 + $0x362] sm:$0xff]
        %v4234 = vld [vmem:[%s3418 + $0x372] sm:$0xff]
        %v4235 = vld [vmem:[%s3418 + $0x382] sm:$0xff]
        %v4236 = vld [vmem:[%s3418 + $0x392] sm:$0xff]
        %v4237 = vld [vmem:[%s3418 + $0x3c2] sm:$0xff]
        %v4238 = vld [vmem:[%s3418 + $0x3d2] sm:$0xff]
        %v4239 = vld [vmem:[%s3418 + $0x3e2] sm:$0xff]
        %v4240 = vld [vmem:[%s3418 + $0x3f2] sm:$0xff]
        %v4241 = vld [vmem:[%s3418 + $0x402] sm:$0xff]
        %v4242 = vld [vmem:[%s3418 + $0x412] sm:$0xff]
        %v4243 = vld [vmem:[%s3418 + $0x422] sm:$0xff]
        %v4244 = vld [vmem:[%s3418 + $0x432] sm:$0xff]
        %v4245 = vld [vmem:[%s3418 + $0x462] sm:$0xff]
        %v4246 = vld [vmem:[%s3418 + $0x472] sm:$0xff]
        %v4247 = vld [vmem:[%s3418 + $0x482] sm:$0xff]
        %v4248 = vld [vmem:[%s3418 + $0x492] sm:$0xff]
        %v4249 = vld [vmem:[%s3418 + $0x4a2] sm:$0xff]
        %v4250 = vld [vmem:[%s3418 + $0x4b2] sm:$0xff]
        %v4251 = vld [vmem:[%s3418 + $0x4c2] sm:$0xff]
        %v4252 = vld [vmem:[%s3418 + $0x4d2] sm:$0xff]
        %4317 = vrot.lane.b32.xlu0 %v4189, 44
        %v4318 = vpop.permute.xlu0 %4317
        %4319 = vrot.lane.b32.xlu0 %v4190, 44
        %v4320 = vpop.permute.xlu0 %4319
        %4321 = vrot.lane.b32.xlu0 %v4191, 44
        %v4322 = vpop.permute.xlu0 %4321
        %4323 = vrot.lane.b32.xlu0 %v4192, 44
        %v4324 = vpop.permute.xlu0 %4323
        %4325 = vrot.lane.b32.xlu0 %v4193, 44
        %v4326 = vpop.permute.xlu0 %4325
        %4327 = vrot.lane.b32.xlu0 %v4194, 44
        %v4328 = vpop.permute.xlu0 %4327
        %4329 = vrot.lane.b32.xlu0 %v4195, 44
        %v4330 = vpop.permute.xlu0 %4329
        %4331 = vrot.lane.b32.xlu0 %v4196, 44
        %v4332 = vpop.permute.xlu0 %4331
        %4333 = vrot.lane.b32.xlu0 %v4197, 44
        %v4334 = vpop.permute.xlu0 %4333
        %4335 = vrot.lane.b32.xlu0 %v4198, 44
        %v4336 = vpop.permute.xlu0 %4335
        %4337 = vrot.lane.b32.xlu0 %v4199, 44
        %v4338 = vpop.permute.xlu0 %4337
        %4339 = vrot.lane.b32.xlu0 %v4200, 44
        %v4340 = vpop.permute.xlu0 %4339
        %4341 = vrot.lane.b32.xlu0 %v4201, 44
        %v4342 = vpop.permute.xlu0 %4341
        %4343 = vrot.lane.b32.xlu0 %v4202, 44
        %v4344 = vpop.permute.xlu0 %4343
        %4345 = vrot.lane.b32.xlu0 %v4203, 44
        %v4346 = vpop.permute.xlu0 %4345
        %4347 = vrot.lane.b32.xlu0 %v4204, 44
        %v4348 = vpop.permute.xlu0 %4347
        %4349 = vrot.lane.b32.xlu0 %v4205, 44
        %v4350 = vpop.permute.xlu0 %4349
        %4351 = vrot.lane.b32.xlu0 %v4206, 44
        %v4352 = vpop.permute.xlu0 %4351
        %4353 = vrot.lane.b32.xlu0 %v4207, 44
        %v4354 = vpop.permute.xlu0 %4353
        %4355 = vrot.lane.b32.xlu0 %v4208, 44
        %v4356 = vpop.permute.xlu0 %4355
        %4357 = vrot.lane.b32.xlu0 %v4209, 44
        %v4358 = vpop.permute.xlu0 %4357
        %4359 = vrot.lane.b32.xlu0 %v4210, 44
        %v4360 = vpop.permute.xlu0 %4359
        %4361 = vrot.lane.b32.xlu0 %v4211, 44
        %v4362 = vpop.permute.xlu0 %4361
        %4363 = vrot.lane.b32.xlu0 %v4212, 44
        %v4364 = vpop.permute.xlu0 %4363
        %4365 = vrot.lane.b32.xlu0 %v4213, 44
        %v4366 = vpop.permute.xlu0 %4365
        %4367 = vrot.lane.b32.xlu0 %v4214, 44
        %v4368 = vpop.permute.xlu0 %4367
        %4369 = vrot.lane.b32.xlu0 %v4215, 44
        %v4370 = vpop.permute.xlu0 %4369
        %4371 = vrot.lane.b32.xlu0 %v4216, 44
        %v4372 = vpop.permute.xlu0 %4371
        %4373 = vrot.lane.b32.xlu0 %v4217, 44
        %v4374 = vpop.permute.xlu0 %4373
        %4375 = vrot.lane.b32.xlu0 %v4218, 44
        %v4376 = vpop.permute.xlu0 %4375
        %4377 = vrot.lane.b32.xlu0 %v4219, 44
        %v4378 = vpop.permute.xlu0 %4377
        %4379 = vrot.lane.b32.xlu0 %v4220, 44
        %v4380 = vpop.permute.xlu0 %4379
        %4381 = vrot.lane.b32.xlu0 %v4221, 44
        %v4382 = vpop.permute.xlu0 %4381
        %4383 = vrot.lane.b32.xlu0 %v4222, 44
        %v4384 = vpop.permute.xlu0 %4383
        %4385 = vrot.lane.b32.xlu0 %v4223, 44
        %v4386 = vpop.permute.xlu0 %4385
        %4387 = vrot.lane.b32.xlu0 %v4224, 44
        %v4388 = vpop.permute.xlu0 %4387
        %4389 = vrot.lane.b32.xlu0 %v4225, 44
        %v4390 = vpop.permute.xlu0 %4389
        %4391 = vrot.lane.b32.xlu0 %v4226, 44
        %v4392 = vpop.permute.xlu0 %4391
        %4393 = vrot.lane.b32.xlu0 %v4227, 44
        %v4394 = vpop.permute.xlu0 %4393
        %4395 = vrot.lane.b32.xlu0 %v4228, 44
        %v4396 = vpop.permute.xlu0 %4395
        %4397 = vrot.lane.b32.xlu0 %v4229, 44
        %v4398 = vpop.permute.xlu0 %4397
        %4399 = vrot.lane.b32.xlu0 %v4230, 44
        %v4400 = vpop.permute.xlu0 %4399
        %4401 = vrot.lane.b32.xlu0 %v4231, 44
        %v4402 = vpop.permute.xlu0 %4401
        %4403 = vrot.lane.b32.xlu0 %v4232, 44
        %v4404 = vpop.permute.xlu0 %4403
        %4405 = vrot.lane.b32.xlu0 %v4233, 44
        %v4406 = vpop.permute.xlu0 %4405
        %4407 = vrot.lane.b32.xlu0 %v4234, 44
        %v4408 = vpop.permute.xlu0 %4407
        %4409 = vrot.lane.b32.xlu0 %v4235, 44
        %v4410 = vpop.permute.xlu0 %4409
        %4411 = vrot.lane.b32.xlu0 %v4236, 44
        %v4412 = vpop.permute.xlu0 %4411
        %4413 = vrot.lane.b32.xlu0 %v4237, 44
        %v4414 = vpop.permute.xlu0 %4413
        %4415 = vrot.lane.b32.xlu0 %v4238, 44
        %v4416 = vpop.permute.xlu0 %4415
        %4417 = vrot.lane.b32.xlu0 %v4239, 44
        %v4418 = vpop.permute.xlu0 %4417
        %4419 = vrot.lane.b32.xlu0 %v4240, 44
        %v4420 = vpop.permute.xlu0 %4419
        %4421 = vrot.lane.b32.xlu0 %v4241, 44
        %v4422 = vpop.permute.xlu0 %4421
        %4423 = vrot.lane.b32.xlu0 %v4242, 44
        %v4424 = vpop.permute.xlu0 %4423
        %4425 = vrot.lane.b32.xlu0 %v4243, 44
        %v4426 = vpop.permute.xlu0 %4425
        %4427 = vrot.lane.b32.xlu0 %v4244, 44
        %v4428 = vpop.permute.xlu0 %4427
        %4429 = vrot.lane.b32.xlu0 %v4245, 44
        %v4430 = vpop.permute.xlu0 %4429
        %4431 = vrot.lane.b32.xlu0 %v4246, 44
        %v4432 = vpop.permute.xlu0 %4431
        %4433 = vrot.lane.b32.xlu0 %v4247, 44
        %v4434 = vpop.permute.xlu0 %4433
        %4435 = vrot.lane.b32.xlu0 %v4248, 44
        %v4436 = vpop.permute.xlu0 %4435
        %4437 = vrot.lane.b32.xlu0 %v4249, 44
        %v4438 = vpop.permute.xlu0 %4437
        %4439 = vrot.lane.b32.xlu0 %v4250, 44
        %v4440 = vpop.permute.xlu0 %4439
        %4441 = vrot.lane.b32.xlu0 %v4251, 44
        %v4442 = vpop.permute.xlu0 %4441
        %4443 = vrot.lane.b32.xlu0 %v4252, 44
        %v4444 = vpop.permute.xlu0 %4443
        %vm4509 = vcmask 392544
        %4510 = vst.msk [vmem:[#allocation2] sm:$0xff] %vm4509, %v4318
        %4511 = vst.msk [vmem:[#allocation2 + $0x8] sm:$0xff] %vm4509, %v4320
        %4512 = vst.msk [vmem:[#allocation2 + $0x10] sm:$0xff] %vm4509, %v4322
        %4513 = vst.msk [vmem:[#allocation2 + $0x18] sm:$0xff] %vm4509, %v4324
        %4514 = vst.msk [vmem:[#allocation2 + $0x20] sm:$0xff] %vm4509, %v4326
        %4515 = vst.msk [vmem:[#allocation2 + $0x28] sm:$0xff] %vm4509, %v4328
        %4516 = vst.msk [vmem:[#allocation2 + $0x30] sm:$0xff] %vm4509, %v4330
        %4517 = vst.msk [vmem:[#allocation2 + $0x38] sm:$0xff] %vm4509, %v4332
        %4518 = vst.msk [vmem:[#allocation2 + $0x40] sm:$0xff] %vm4509, %v4334
        %4519 = vst.msk [vmem:[#allocation2 + $0x48] sm:$0xff] %vm4509, %v4336
        %4520 = vst.msk [vmem:[#allocation2 + $0x50] sm:$0xff] %vm4509, %v4338
        %4521 = vst.msk [vmem:[#allocation2 + $0x58] sm:$0xff] %vm4509, %v4340
        %4522 = vst.msk [vmem:[#allocation2 + $0x60] sm:$0xff] %vm4509, %v4342
        %4523 = vst.msk [vmem:[#allocation2 + $0x68] sm:$0xff] %vm4509, %v4344
        %4524 = vst.msk [vmem:[#allocation2 + $0x70] sm:$0xff] %vm4509, %v4346
        %4525 = vst.msk [vmem:[#allocation2 + $0x78] sm:$0xff] %vm4509, %v4348
        %4526 = vst.msk [vmem:[#allocation2 + $0x80] sm:$0xff] %vm4509, %v4350
        %4527 = vst.msk [vmem:[#allocation2 + $0x88] sm:$0xff] %vm4509, %v4352
        %4528 = vst.msk [vmem:[#allocation2 + $0x90] sm:$0xff] %vm4509, %v4354
        %4529 = vst.msk [vmem:[#allocation2 + $0x98] sm:$0xff] %vm4509, %v4356
        %4530 = vst.msk [vmem:[#allocation2 + $0xa0] sm:$0xff] %vm4509, %v4358
        %4531 = vst.msk [vmem:[#allocation2 + $0xa8] sm:$0xff] %vm4509, %v4360
        %4532 = vst.msk [vmem:[#allocation2 + $0xb0] sm:$0xff] %vm4509, %v4362
        %4533 = vst.msk [vmem:[#allocation2 + $0xb8] sm:$0xff] %vm4509, %v4364
        %4534 = vst.msk [vmem:[#allocation2 + $0xc0] sm:$0xff] %vm4509, %v4366
        %4535 = vst.msk [vmem:[#allocation2 + $0xc8] sm:$0xff] %vm4509, %v4368
        %4536 = vst.msk [vmem:[#allocation2 + $0xd0] sm:$0xff] %vm4509, %v4370
        %4537 = vst.msk [vmem:[#allocation2 + $0xd8] sm:$0xff] %vm4509, %v4372
        %4538 = vst.msk [vmem:[#allocation2 + $0xe0] sm:$0xff] %vm4509, %v4374
        %4539 = vst.msk [vmem:[#allocation2 + $0xe8] sm:$0xff] %vm4509, %v4376
        %4540 = vst.msk [vmem:[#allocation2 + $0xf0] sm:$0xff] %vm4509, %v4378
        %4541 = vst.msk [vmem:[#allocation2 + $0xf8] sm:$0xff] %vm4509, %v4380
        %4542 = vst.msk [vmem:[#allocation2 + $0x100] sm:$0xff] %vm4509, %v4382
        %4543 = vst.msk [vmem:[#allocation2 + $0x108] sm:$0xff] %vm4509, %v4384
        %4544 = vst.msk [vmem:[#allocation2 + $0x110] sm:$0xff] %vm4509, %v4386
        %4545 = vst.msk [vmem:[#allocation2 + $0x118] sm:$0xff] %vm4509, %v4388
        %4546 = vst.msk [vmem:[#allocation2 + $0x120] sm:$0xff] %vm4509, %v4390
        %4547 = vst.msk [vmem:[#allocation2 + $0x128] sm:$0xff] %vm4509, %v4392
        %4548 = vst.msk [vmem:[#allocation2 + $0x130] sm:$0xff] %vm4509, %v4394
        %4549 = vst.msk [vmem:[#allocation2 + $0x138] sm:$0xff] %vm4509, %v4396
        %4550 = vst.msk [vmem:[#allocation2 + $0x140] sm:$0xff] %vm4509, %v4398
        %4551 = vst.msk [vmem:[#allocation2 + $0x148] sm:$0xff] %vm4509, %v4400
        %4552 = vst.msk [vmem:[#allocation2 + $0x150] sm:$0xff] %vm4509, %v4402
        %4553 = vst.msk [vmem:[#allocation2 + $0x158] sm:$0xff] %vm4509, %v4404
        %4554 = vst.msk [vmem:[#allocation2 + $0x160] sm:$0xff] %vm4509, %v4406
        %4555 = vst.msk [vmem:[#allocation2 + $0x168] sm:$0xff] %vm4509, %v4408
        %4556 = vst.msk [vmem:[#allocation2 + $0x170] sm:$0xff] %vm4509, %v4410
        %4557 = vst.msk [vmem:[#allocation2 + $0x178] sm:$0xff] %vm4509, %v4412
        %4558 = vst.msk [vmem:[#allocation2 + $0x180] sm:$0xff] %vm4509, %v4414
        %4559 = vst.msk [vmem:[#allocation2 + $0x188] sm:$0xff] %vm4509, %v4416
        %4560 = vst.msk [vmem:[#allocation2 + $0x190] sm:$0xff] %vm4509, %v4418
        %4561 = vst.msk [vmem:[#allocation2 + $0x198] sm:$0xff] %vm4509, %v4420
        %4562 = vst.msk [vmem:[#allocation2 + $0x1a0] sm:$0xff] %vm4509, %v4422
        %4563 = vst.msk [vmem:[#allocation2 + $0x1a8] sm:$0xff] %vm4509, %v4424
        %4564 = vst.msk [vmem:[#allocation2 + $0x1b0] sm:$0xff] %vm4509, %v4426
        %4565 = vst.msk [vmem:[#allocation2 + $0x1b8] sm:$0xff] %vm4509, %v4428
        %4566 = vst.msk [vmem:[#allocation2 + $0x1c0] sm:$0xff] %vm4509, %v4430
        %4567 = vst.msk [vmem:[#allocation2 + $0x1c8] sm:$0xff] %vm4509, %v4432
        %4568 = vst.msk [vmem:[#allocation2 + $0x1d0] sm:$0xff] %vm4509, %v4434
        %4569 = vst.msk [vmem:[#allocation2 + $0x1d8] sm:$0xff] %vm4509, %v4436
        %4570 = vst.msk [vmem:[#allocation2 + $0x1e0] sm:$0xff] %vm4509, %v4438
        %4571 = vst.msk [vmem:[#allocation2 + $0x1e8] sm:$0xff] %vm4509, %v4440
        %4572 = vst.msk [vmem:[#allocation2 + $0x1f0] sm:$0xff] %vm4509, %v4442
        %4573 = vst.msk [vmem:[#allocation2 + $0x1f8] sm:$0xff] %vm4509, %v4444
        %s4574 = scalar_lea.vmem %s141, 176
        %v4575 = vld [vmem:[%s4574] sm:$0xff]
        %v4576 = vld [vmem:[%s4574 + $0x10] sm:$0xff]
        %v4577 = vld [vmem:[%s4574 + $0x20] sm:$0xff]
        %v4578 = vld [vmem:[%s4574 + $0x30] sm:$0xff]
        %v4579 = vld [vmem:[%s4574 + $0x40] sm:$0xff]
        %v4580 = vld [vmem:[%s4574 + $0x50] sm:$0xff]
        %v4581 = vld [vmem:[%s4574 + $0x60] sm:$0xff]
        %v4582 = vld [vmem:[%s4574 + $0x70] sm:$0xff]
        %v4583 = vld [vmem:[%s4574 + $0xa0] sm:$0xff]
        %v4584 = vld [vmem:[%s4574 + $0xb0] sm:$0xff]
        %v4585 = vld [vmem:[%s4574 + $0xc0] sm:$0xff]
        %v4586 = vld [vmem:[%s4574 + $0xd0] sm:$0xff]
        %v4587 = vld [vmem:[%s4574 + $0xe0] sm:$0xff]
        %v4588 = vld [vmem:[%s4574 + $0xf0] sm:$0xff]
        %v4589 = vld [vmem:[%s4574 + $0x100] sm:$0xff]
        %v4590 = vld [vmem:[%s4574 + $0x110] sm:$0xff]
        %v4591 = vld [vmem:[%s4574 + $0x140] sm:$0xff]
        %v4592 = vld [vmem:[%s4574 + $0x150] sm:$0xff]
        %v4593 = vld [vmem:[%s4574 + $0x160] sm:$0xff]
        %v4594 = vld [vmem:[%s4574 + $0x170] sm:$0xff]
        %v4595 = vld [vmem:[%s4574 + $0x180] sm:$0xff]
        %v4596 = vld [vmem:[%s4574 + $0x190] sm:$0xff]
        %v4597 = vld [vmem:[%s4574 + $0x1a0] sm:$0xff]
        %v4598 = vld [vmem:[%s4574 + $0x1b0] sm:$0xff]
        %v4599 = vld [vmem:[%s4574 + $0x1e0] sm:$0xff]
        %v4600 = vld [vmem:[%s4574 + $0x1f0] sm:$0xff]
        %v4601 = vld [vmem:[%s4574 + $0x200] sm:$0xff]
        %v4602 = vld [vmem:[%s4574 + $0x210] sm:$0xff]
        %v4603 = vld [vmem:[%s4574 + $0x220] sm:$0xff]
        %v4604 = vld [vmem:[%s4574 + $0x230] sm:$0xff]
        %v4605 = vld [vmem:[%s4574 + $0x240] sm:$0xff]
        %v4606 = vld [vmem:[%s4574 + $0x250] sm:$0xff]
        %v4607 = vld [vmem:[%s4574 + $0x280] sm:$0xff]
        %v4608 = vld [vmem:[%s4574 + $0x290] sm:$0xff]
        %v4609 = vld [vmem:[%s4574 + $0x2a0] sm:$0xff]
        %v4610 = vld [vmem:[%s4574 + $0x2b0] sm:$0xff]
        %v4611 = vld [vmem:[%s4574 + $0x2c0] sm:$0xff]
        %v4612 = vld [vmem:[%s4574 + $0x2d0] sm:$0xff]
        %v4613 = vld [vmem:[%s4574 + $0x2e0] sm:$0xff]
        %v4614 = vld [vmem:[%s4574 + $0x2f0] sm:$0xff]
        %v4615 = vld [vmem:[%s4574 + $0x320] sm:$0xff]
        %v4616 = vld [vmem:[%s4574 + $0x330] sm:$0xff]
        %v4617 = vld [vmem:[%s4574 + $0x340] sm:$0xff]
        %v4618 = vld [vmem:[%s4574 + $0x350] sm:$0xff]
        %v4619 = vld [vmem:[%s4574 + $0x360] sm:$0xff]
        %v4620 = vld [vmem:[%s4574 + $0x370] sm:$0xff]
        %v4621 = vld [vmem:[%s4574 + $0x380] sm:$0xff]
        %v4622 = vld [vmem:[%s4574 + $0x390] sm:$0xff]
        %v4623 = vld [vmem:[%s4574 + $0x3c0] sm:$0xff]
        %v4624 = vld [vmem:[%s4574 + $0x3d0] sm:$0xff]
        %v4625 = vld [vmem:[%s4574 + $0x3e0] sm:$0xff]
        %v4626 = vld [vmem:[%s4574 + $0x3f0] sm:$0xff]
        %v4627 = vld [vmem:[%s4574 + $0x400] sm:$0xff]
        %v4628 = vld [vmem:[%s4574 + $0x410] sm:$0xff]
        %v4629 = vld [vmem:[%s4574 + $0x420] sm:$0xff]
        %v4630 = vld [vmem:[%s4574 + $0x430] sm:$0xff]
        %v4631 = vld [vmem:[%s4574 + $0x460] sm:$0xff]
        %v4632 = vld [vmem:[%s4574 + $0x470] sm:$0xff]
        %v4633 = vld [vmem:[%s4574 + $0x480] sm:$0xff]
        %v4634 = vld [vmem:[%s4574 + $0x490] sm:$0xff]
        %v4635 = vld [vmem:[%s4574 + $0x4a0] sm:$0xff]
        %v4636 = vld [vmem:[%s4574 + $0x4b0] sm:$0xff]
        %v4637 = vld [vmem:[%s4574 + $0x4c0] sm:$0xff]
        %v4638 = vld [vmem:[%s4574 + $0x4d0] sm:$0xff]
        %4703 = vrot.lane.b32.xlu0 %v4575, 48
        %v4704 = vpop.permute.xlu0 %4703
        %4705 = vrot.lane.b32.xlu0 %v4576, 48
        %v4706 = vpop.permute.xlu0 %4705
        %4707 = vrot.lane.b32.xlu0 %v4577, 48
        %v4708 = vpop.permute.xlu0 %4707
        %4709 = vrot.lane.b32.xlu0 %v4578, 48
        %v4710 = vpop.permute.xlu0 %4709
        %4711 = vrot.lane.b32.xlu0 %v4579, 48
        %v4712 = vpop.permute.xlu0 %4711
        %4713 = vrot.lane.b32.xlu0 %v4580, 48
        %v4714 = vpop.permute.xlu0 %4713
        %4715 = vrot.lane.b32.xlu0 %v4581, 48
        %v4716 = vpop.permute.xlu0 %4715
        %4717 = vrot.lane.b32.xlu0 %v4582, 48
        %v4718 = vpop.permute.xlu0 %4717
        %4719 = vrot.lane.b32.xlu0 %v4583, 48
        %v4720 = vpop.permute.xlu0 %4719
        %4721 = vrot.lane.b32.xlu0 %v4584, 48
        %v4722 = vpop.permute.xlu0 %4721
        %4723 = vrot.lane.b32.xlu0 %v4585, 48
        %v4724 = vpop.permute.xlu0 %4723
        %4725 = vrot.lane.b32.xlu0 %v4586, 48
        %v4726 = vpop.permute.xlu0 %4725
        %4727 = vrot.lane.b32.xlu0 %v4587, 48
        %v4728 = vpop.permute.xlu0 %4727
        %4729 = vrot.lane.b32.xlu0 %v4588, 48
        %v4730 = vpop.permute.xlu0 %4729
        %4731 = vrot.lane.b32.xlu0 %v4589, 48
        %v4732 = vpop.permute.xlu0 %4731
        %4733 = vrot.lane.b32.xlu0 %v4590, 48
        %v4734 = vpop.permute.xlu0 %4733
        %4735 = vrot.lane.b32.xlu0 %v4591, 48
        %v4736 = vpop.permute.xlu0 %4735
        %4737 = vrot.lane.b32.xlu0 %v4592, 48
        %v4738 = vpop.permute.xlu0 %4737
        %4739 = vrot.lane.b32.xlu0 %v4593, 48
        %v4740 = vpop.permute.xlu0 %4739
        %4741 = vrot.lane.b32.xlu0 %v4594, 48
        %v4742 = vpop.permute.xlu0 %4741
        %4743 = vrot.lane.b32.xlu0 %v4595, 48
        %v4744 = vpop.permute.xlu0 %4743
        %4745 = vrot.lane.b32.xlu0 %v4596, 48
        %v4746 = vpop.permute.xlu0 %4745
        %4747 = vrot.lane.b32.xlu0 %v4597, 48
        %v4748 = vpop.permute.xlu0 %4747
        %4749 = vrot.lane.b32.xlu0 %v4598, 48
        %v4750 = vpop.permute.xlu0 %4749
        %4751 = vrot.lane.b32.xlu0 %v4599, 48
        %v4752 = vpop.permute.xlu0 %4751
        %4753 = vrot.lane.b32.xlu0 %v4600, 48
        %v4754 = vpop.permute.xlu0 %4753
        %4755 = vrot.lane.b32.xlu0 %v4601, 48
        %v4756 = vpop.permute.xlu0 %4755
        %4757 = vrot.lane.b32.xlu0 %v4602, 48
        %v4758 = vpop.permute.xlu0 %4757
        %4759 = vrot.lane.b32.xlu0 %v4603, 48
        %v4760 = vpop.permute.xlu0 %4759
        %4761 = vrot.lane.b32.xlu0 %v4604, 48
        %v4762 = vpop.permute.xlu0 %4761
        %4763 = vrot.lane.b32.xlu0 %v4605, 48
        %v4764 = vpop.permute.xlu0 %4763
        %4765 = vrot.lane.b32.xlu0 %v4606, 48
        %v4766 = vpop.permute.xlu0 %4765
        %4767 = vrot.lane.b32.xlu0 %v4607, 48
        %v4768 = vpop.permute.xlu0 %4767
        %4769 = vrot.lane.b32.xlu0 %v4608, 48
        %v4770 = vpop.permute.xlu0 %4769
        %4771 = vrot.lane.b32.xlu0 %v4609, 48
        %v4772 = vpop.permute.xlu0 %4771
        %4773 = vrot.lane.b32.xlu0 %v4610, 48
        %v4774 = vpop.permute.xlu0 %4773
        %4775 = vrot.lane.b32.xlu0 %v4611, 48
        %v4776 = vpop.permute.xlu0 %4775
        %4777 = vrot.lane.b32.xlu0 %v4612, 48
        %v4778 = vpop.permute.xlu0 %4777
        %4779 = vrot.lane.b32.xlu0 %v4613, 48
        %v4780 = vpop.permute.xlu0 %4779
        %4781 = vrot.lane.b32.xlu0 %v4614, 48
        %v4782 = vpop.permute.xlu0 %4781
        %4783 = vrot.lane.b32.xlu0 %v4615, 48
        %v4784 = vpop.permute.xlu0 %4783
        %4785 = vrot.lane.b32.xlu0 %v4616, 48
        %v4786 = vpop.permute.xlu0 %4785
        %4787 = vrot.lane.b32.xlu0 %v4617, 48
        %v4788 = vpop.permute.xlu0 %4787
        %4789 = vrot.lane.b32.xlu0 %v4618, 48
        %v4790 = vpop.permute.xlu0 %4789
        %4791 = vrot.lane.b32.xlu0 %v4619, 48
        %v4792 = vpop.permute.xlu0 %4791
        %4793 = vrot.lane.b32.xlu0 %v4620, 48
        %v4794 = vpop.permute.xlu0 %4793
        %4795 = vrot.lane.b32.xlu0 %v4621, 48
        %v4796 = vpop.permute.xlu0 %4795
        %4797 = vrot.lane.b32.xlu0 %v4622, 48
        %v4798 = vpop.permute.xlu0 %4797
        %4799 = vrot.lane.b32.xlu0 %v4623, 48
        %v4800 = vpop.permute.xlu0 %4799
        %4801 = vrot.lane.b32.xlu0 %v4624, 48
        %v4802 = vpop.permute.xlu0 %4801
        %4803 = vrot.lane.b32.xlu0 %v4625, 48
        %v4804 = vpop.permute.xlu0 %4803
        %4805 = vrot.lane.b32.xlu0 %v4626, 48
        %v4806 = vpop.permute.xlu0 %4805
        %4807 = vrot.lane.b32.xlu0 %v4627, 48
        %v4808 = vpop.permute.xlu0 %4807
        %4809 = vrot.lane.b32.xlu0 %v4628, 48
        %v4810 = vpop.permute.xlu0 %4809
        %4811 = vrot.lane.b32.xlu0 %v4629, 48
        %v4812 = vpop.permute.xlu0 %4811
        %4813 = vrot.lane.b32.xlu0 %v4630, 48
        %v4814 = vpop.permute.xlu0 %4813
        %4815 = vrot.lane.b32.xlu0 %v4631, 48
        %v4816 = vpop.permute.xlu0 %4815
        %4817 = vrot.lane.b32.xlu0 %v4632, 48
        %v4818 = vpop.permute.xlu0 %4817
        %4819 = vrot.lane.b32.xlu0 %v4633, 48
        %v4820 = vpop.permute.xlu0 %4819
        %4821 = vrot.lane.b32.xlu0 %v4634, 48
        %v4822 = vpop.permute.xlu0 %4821
        %4823 = vrot.lane.b32.xlu0 %v4635, 48
        %v4824 = vpop.permute.xlu0 %4823
        %4825 = vrot.lane.b32.xlu0 %v4636, 48
        %v4826 = vpop.permute.xlu0 %4825
        %4827 = vrot.lane.b32.xlu0 %v4637, 48
        %v4828 = vpop.permute.xlu0 %4827
        %4829 = vrot.lane.b32.xlu0 %v4638, 48
        %v4830 = vpop.permute.xlu0 %4829
        %vm4895 = vcmask 425344
        %4896 = vst.msk [vmem:[#allocation2] sm:$0xff] %vm4895, %v4704
        %4897 = vst.msk [vmem:[#allocation2 + $0x8] sm:$0xff] %vm4895, %v4706
        %4898 = vst.msk [vmem:[#allocation2 + $0x10] sm:$0xff] %vm4895, %v4708
        %4899 = vst.msk [vmem:[#allocation2 + $0x18] sm:$0xff] %vm4895, %v4710
        %4900 = vst.msk [vmem:[#allocation2 + $0x20] sm:$0xff] %vm4895, %v4712
        %4901 = vst.msk [vmem:[#allocation2 + $0x28] sm:$0xff] %vm4895, %v4714
        %4902 = vst.msk [vmem:[#allocation2 + $0x30] sm:$0xff] %vm4895, %v4716
        %4903 = vst.msk [vmem:[#allocation2 + $0x38] sm:$0xff] %vm4895, %v4718
        %4904 = vst.msk [vmem:[#allocation2 + $0x40] sm:$0xff] %vm4895, %v4720
        %4905 = vst.msk [vmem:[#allocation2 + $0x48] sm:$0xff] %vm4895, %v4722
        %4906 = vst.msk [vmem:[#allocation2 + $0x50] sm:$0xff] %vm4895, %v4724
        %4907 = vst.msk [vmem:[#allocation2 + $0x58] sm:$0xff] %vm4895, %v4726
        %4908 = vst.msk [vmem:[#allocation2 + $0x60] sm:$0xff] %vm4895, %v4728
        %4909 = vst.msk [vmem:[#allocation2 + $0x68] sm:$0xff] %vm4895, %v4730
        %4910 = vst.msk [vmem:[#allocation2 + $0x70] sm:$0xff] %vm4895, %v4732
        %4911 = vst.msk [vmem:[#allocation2 + $0x78] sm:$0xff] %vm4895, %v4734
        %4912 = vst.msk [vmem:[#allocation2 + $0x80] sm:$0xff] %vm4895, %v4736
        %4913 = vst.msk [vmem:[#allocation2 + $0x88] sm:$0xff] %vm4895, %v4738
        %4914 = vst.msk [vmem:[#allocation2 + $0x90] sm:$0xff] %vm4895, %v4740
        %4915 = vst.msk [vmem:[#allocation2 + $0x98] sm:$0xff] %vm4895, %v4742
        %4916 = vst.msk [vmem:[#allocation2 + $0xa0] sm:$0xff] %vm4895, %v4744
        %4917 = vst.msk [vmem:[#allocation2 + $0xa8] sm:$0xff] %vm4895, %v4746
        %4918 = vst.msk [vmem:[#allocation2 + $0xb0] sm:$0xff] %vm4895, %v4748
        %4919 = vst.msk [vmem:[#allocation2 + $0xb8] sm:$0xff] %vm4895, %v4750
        %4920 = vst.msk [vmem:[#allocation2 + $0xc0] sm:$0xff] %vm4895, %v4752
        %4921 = vst.msk [vmem:[#allocation2 + $0xc8] sm:$0xff] %vm4895, %v4754
        %4922 = vst.msk [vmem:[#allocation2 + $0xd0] sm:$0xff] %vm4895, %v4756
        %4923 = vst.msk [vmem:[#allocation2 + $0xd8] sm:$0xff] %vm4895, %v4758
        %4924 = vst.msk [vmem:[#allocation2 + $0xe0] sm:$0xff] %vm4895, %v4760
        %4925 = vst.msk [vmem:[#allocation2 + $0xe8] sm:$0xff] %vm4895, %v4762
        %4926 = vst.msk [vmem:[#allocation2 + $0xf0] sm:$0xff] %vm4895, %v4764
        %4927 = vst.msk [vmem:[#allocation2 + $0xf8] sm:$0xff] %vm4895, %v4766
        %4928 = vst.msk [vmem:[#allocation2 + $0x100] sm:$0xff] %vm4895, %v4768
        %4929 = vst.msk [vmem:[#allocation2 + $0x108] sm:$0xff] %vm4895, %v4770
        %4930 = vst.msk [vmem:[#allocation2 + $0x110] sm:$0xff] %vm4895, %v4772
        %4931 = vst.msk [vmem:[#allocation2 + $0x118] sm:$0xff] %vm4895, %v4774
        %4932 = vst.msk [vmem:[#allocation2 + $0x120] sm:$0xff] %vm4895, %v4776
        %4933 = vst.msk [vmem:[#allocation2 + $0x128] sm:$0xff] %vm4895, %v4778
        %4934 = vst.msk [vmem:[#allocation2 + $0x130] sm:$0xff] %vm4895, %v4780
        %4935 = vst.msk [vmem:[#allocation2 + $0x138] sm:$0xff] %vm4895, %v4782
        %4936 = vst.msk [vmem:[#allocation2 + $0x140] sm:$0xff] %vm4895, %v4784
        %4937 = vst.msk [vmem:[#allocation2 + $0x148] sm:$0xff] %vm4895, %v4786
        %4938 = vst.msk [vmem:[#allocation2 + $0x150] sm:$0xff] %vm4895, %v4788
        %4939 = vst.msk [vmem:[#allocation2 + $0x158] sm:$0xff] %vm4895, %v4790
        %4940 = vst.msk [vmem:[#allocation2 + $0x160] sm:$0xff] %vm4895, %v4792
        %4941 = vst.msk [vmem:[#allocation2 + $0x168] sm:$0xff] %vm4895, %v4794
        %4942 = vst.msk [vmem:[#allocation2 + $0x170] sm:$0xff] %vm4895, %v4796
        %4943 = vst.msk [vmem:[#allocation2 + $0x178] sm:$0xff] %vm4895, %v4798
        %4944 = vst.msk [vmem:[#allocation2 + $0x180] sm:$0xff] %vm4895, %v4800
        %4945 = vst.msk [vmem:[#allocation2 + $0x188] sm:$0xff] %vm4895, %v4802
        %4946 = vst.msk [vmem:[#allocation2 + $0x190] sm:$0xff] %vm4895, %v4804
        %4947 = vst.msk [vmem:[#allocation2 + $0x198] sm:$0xff] %vm4895, %v4806
        %4948 = vst.msk [vmem:[#allocation2 + $0x1a0] sm:$0xff] %vm4895, %v4808
        %4949 = vst.msk [vmem:[#allocation2 + $0x1a8] sm:$0xff] %vm4895, %v4810
        %4950 = vst.msk [vmem:[#allocation2 + $0x1b0] sm:$0xff] %vm4895, %v4812
        %4951 = vst.msk [vmem:[#allocation2 + $0x1b8] sm:$0xff] %vm4895, %v4814
        %4952 = vst.msk [vmem:[#allocation2 + $0x1c0] sm:$0xff] %vm4895, %v4816
        %4953 = vst.msk [vmem:[#allocation2 + $0x1c8] sm:$0xff] %vm4895, %v4818
        %4954 = vst.msk [vmem:[#allocation2 + $0x1d0] sm:$0xff] %vm4895, %v4820
        %4955 = vst.msk [vmem:[#allocation2 + $0x1d8] sm:$0xff] %vm4895, %v4822
        %4956 = vst.msk [vmem:[#allocation2 + $0x1e0] sm:$0xff] %vm4895, %v4824
        %4957 = vst.msk [vmem:[#allocation2 + $0x1e8] sm:$0xff] %vm4895, %v4826
        %4958 = vst.msk [vmem:[#allocation2 + $0x1f0] sm:$0xff] %vm4895, %v4828
        %4959 = vst.msk [vmem:[#allocation2 + $0x1f8] sm:$0xff] %vm4895, %v4830
        %v4960 = vld [vmem:[%s4574 + $0x1] sm:$0xff]
        %v4961 = vld [vmem:[%s4574 + $0x11] sm:$0xff]
        %v4962 = vld [vmem:[%s4574 + $0x21] sm:$0xff]
        %v4963 = vld [vmem:[%s4574 + $0x31] sm:$0xff]
        %v4964 = vld [vmem:[%s4574 + $0x41] sm:$0xff]
        %v4965 = vld [vmem:[%s4574 + $0x51] sm:$0xff]
        %v4966 = vld [vmem:[%s4574 + $0x61] sm:$0xff]
        %v4967 = vld [vmem:[%s4574 + $0x71] sm:$0xff]
        %v4968 = vld [vmem:[%s4574 + $0xa1] sm:$0xff]
        %v4969 = vld [vmem:[%s4574 + $0xb1] sm:$0xff]
        %v4970 = vld [vmem:[%s4574 + $0xc1] sm:$0xff]
        %v4971 = vld [vmem:[%s4574 + $0xd1] sm:$0xff]
        %v4972 = vld [vmem:[%s4574 + $0xe1] sm:$0xff]
        %v4973 = vld [vmem:[%s4574 + $0xf1] sm:$0xff]
        %v4974 = vld [vmem:[%s4574 + $0x101] sm:$0xff]
        %v4975 = vld [vmem:[%s4574 + $0x111] sm:$0xff]
        %v4976 = vld [vmem:[%s4574 + $0x141] sm:$0xff]
        %v4977 = vld [vmem:[%s4574 + $0x151] sm:$0xff]
        %v4978 = vld [vmem:[%s4574 + $0x161] sm:$0xff]
        %v4979 = vld [vmem:[%s4574 + $0x171] sm:$0xff]
        %v4980 = vld [vmem:[%s4574 + $0x181] sm:$0xff]
        %v4981 = vld [vmem:[%s4574 + $0x191] sm:$0xff]
        %v4982 = vld [vmem:[%s4574 + $0x1a1] sm:$0xff]
        %v4983 = vld [vmem:[%s4574 + $0x1b1] sm:$0xff]
        %v4984 = vld [vmem:[%s4574 + $0x1e1] sm:$0xff]
        %v4985 = vld [vmem:[%s4574 + $0x1f1] sm:$0xff]
        %v4986 = vld [vmem:[%s4574 + $0x201] sm:$0xff]
        %v4987 = vld [vmem:[%s4574 + $0x211] sm:$0xff]
        %v4988 = vld [vmem:[%s4574 + $0x221] sm:$0xff]
        %v4989 = vld [vmem:[%s4574 + $0x231] sm:$0xff]
        %v4990 = vld [vmem:[%s4574 + $0x241] sm:$0xff]
        %v4991 = vld [vmem:[%s4574 + $0x251] sm:$0xff]
        %v4992 = vld [vmem:[%s4574 + $0x281] sm:$0xff]
        %v4993 = vld [vmem:[%s4574 + $0x291] sm:$0xff]
        %v4994 = vld [vmem:[%s4574 + $0x2a1] sm:$0xff]
        %v4995 = vld [vmem:[%s4574 + $0x2b1] sm:$0xff]
        %v4996 = vld [vmem:[%s4574 + $0x2c1] sm:$0xff]
        %v4997 = vld [vmem:[%s4574 + $0x2d1] sm:$0xff]
        %v4998 = vld [vmem:[%s4574 + $0x2e1] sm:$0xff]
        %v4999 = vld [vmem:[%s4574 + $0x2f1] sm:$0xff]
        %v5000 = vld [vmem:[%s4574 + $0x321] sm:$0xff]
        %v5001 = vld [vmem:[%s4574 + $0x331] sm:$0xff]
        %v5002 = vld [vmem:[%s4574 + $0x341] sm:$0xff]
        %v5003 = vld [vmem:[%s4574 + $0x351] sm:$0xff]
        %v5004 = vld [vmem:[%s4574 + $0x361] sm:$0xff]
        %v5005 = vld [vmem:[%s4574 + $0x371] sm:$0xff]
        %v5006 = vld [vmem:[%s4574 + $0x381] sm:$0xff]
        %v5007 = vld [vmem:[%s4574 + $0x391] sm:$0xff]
        %v5008 = vld [vmem:[%s4574 + $0x3c1] sm:$0xff]
        %v5009 = vld [vmem:[%s4574 + $0x3d1] sm:$0xff]
        %v5010 = vld [vmem:[%s4574 + $0x3e1] sm:$0xff]
        %v5011 = vld [vmem:[%s4574 + $0x3f1] sm:$0xff]
        %v5012 = vld [vmem:[%s4574 + $0x401] sm:$0xff]
        %v5013 = vld [vmem:[%s4574 + $0x411] sm:$0xff]
        %v5014 = vld [vmem:[%s4574 + $0x421] sm:$0xff]
        %v5015 = vld [vmem:[%s4574 + $0x431] sm:$0xff]
        %v5016 = vld [vmem:[%s4574 + $0x461] sm:$0xff]
        %v5017 = vld [vmem:[%s4574 + $0x471] sm:$0xff]
        %v5018 = vld [vmem:[%s4574 + $0x481] sm:$0xff]
        %v5019 = vld [vmem:[%s4574 + $0x491] sm:$0xff]
        %v5020 = vld [vmem:[%s4574 + $0x4a1] sm:$0xff]
        %v5021 = vld [vmem:[%s4574 + $0x4b1] sm:$0xff]
        %v5022 = vld [vmem:[%s4574 + $0x4c1] sm:$0xff]
        %v5023 = vld [vmem:[%s4574 + $0x4d1] sm:$0xff]
        %5088 = vrot.lane.b32.xlu0 %v4960, 52
        %v5089 = vpop.permute.xlu0 %5088
        %5090 = vrot.lane.b32.xlu0 %v4961, 52
        %v5091 = vpop.permute.xlu0 %5090
        %5092 = vrot.lane.b32.xlu0 %v4962, 52
        %v5093 = vpop.permute.xlu0 %5092
        %5094 = vrot.lane.b32.xlu0 %v4963, 52
        %v5095 = vpop.permute.xlu0 %5094
        %5096 = vrot.lane.b32.xlu0 %v4964, 52
        %v5097 = vpop.permute.xlu0 %5096
        %5098 = vrot.lane.b32.xlu0 %v4965, 52
        %v5099 = vpop.permute.xlu0 %5098
        %5100 = vrot.lane.b32.xlu0 %v4966, 52
        %v5101 = vpop.permute.xlu0 %5100
        %5102 = vrot.lane.b32.xlu0 %v4967, 52
        %v5103 = vpop.permute.xlu0 %5102
        %5104 = vrot.lane.b32.xlu0 %v4968, 52
        %v5105 = vpop.permute.xlu0 %5104
        %5106 = vrot.lane.b32.xlu0 %v4969, 52
        %v5107 = vpop.permute.xlu0 %5106
        %5108 = vrot.lane.b32.xlu0 %v4970, 52
        %v5109 = vpop.permute.xlu0 %5108
        %5110 = vrot.lane.b32.xlu0 %v4971, 52
        %v5111 = vpop.permute.xlu0 %5110
        %5112 = vrot.lane.b32.xlu0 %v4972, 52
        %v5113 = vpop.permute.xlu0 %5112
        %5114 = vrot.lane.b32.xlu0 %v4973, 52
        %v5115 = vpop.permute.xlu0 %5114
        %5116 = vrot.lane.b32.xlu0 %v4974, 52
        %v5117 = vpop.permute.xlu0 %5116
        %5118 = vrot.lane.b32.xlu0 %v4975, 52
        %v5119 = vpop.permute.xlu0 %5118
        %5120 = vrot.lane.b32.xlu0 %v4976, 52
        %v5121 = vpop.permute.xlu0 %5120
        %5122 = vrot.lane.b32.xlu0 %v4977, 52
        %v5123 = vpop.permute.xlu0 %5122
        %5124 = vrot.lane.b32.xlu0 %v4978, 52
        %v5125 = vpop.permute.xlu0 %5124
        %5126 = vrot.lane.b32.xlu0 %v4979, 52
        %v5127 = vpop.permute.xlu0 %5126
        %5128 = vrot.lane.b32.xlu0 %v4980, 52
        %v5129 = vpop.permute.xlu0 %5128
        %5130 = vrot.lane.b32.xlu0 %v4981, 52
        %v5131 = vpop.permute.xlu0 %5130
        %5132 = vrot.lane.b32.xlu0 %v4982, 52
        %v5133 = vpop.permute.xlu0 %5132
        %5134 = vrot.lane.b32.xlu0 %v4983, 52
        %v5135 = vpop.permute.xlu0 %5134
        %5136 = vrot.lane.b32.xlu0 %v4984, 52
        %v5137 = vpop.permute.xlu0 %5136
        %5138 = vrot.lane.b32.xlu0 %v4985, 52
        %v5139 = vpop.permute.xlu0 %5138
        %5140 = vrot.lane.b32.xlu0 %v4986, 52
        %v5141 = vpop.permute.xlu0 %5140
        %5142 = vrot.lane.b32.xlu0 %v4987, 52
        %v5143 = vpop.permute.xlu0 %5142
        %5144 = vrot.lane.b32.xlu0 %v4988, 52
        %v5145 = vpop.permute.xlu0 %5144
        %5146 = vrot.lane.b32.xlu0 %v4989, 52
        %v5147 = vpop.permute.xlu0 %5146
        %5148 = vrot.lane.b32.xlu0 %v4990, 52
        %v5149 = vpop.permute.xlu0 %5148
        %5150 = vrot.lane.b32.xlu0 %v4991, 52
        %v5151 = vpop.permute.xlu0 %5150
        %5152 = vrot.lane.b32.xlu0 %v4992, 52
        %v5153 = vpop.permute.xlu0 %5152
        %5154 = vrot.lane.b32.xlu0 %v4993, 52
        %v5155 = vpop.permute.xlu0 %5154
        %5156 = vrot.lane.b32.xlu0 %v4994, 52
        %v5157 = vpop.permute.xlu0 %5156
        %5158 = vrot.lane.b32.xlu0 %v4995, 52
        %v5159 = vpop.permute.xlu0 %5158
        %5160 = vrot.lane.b32.xlu0 %v4996, 52
        %v5161 = vpop.permute.xlu0 %5160
        %5162 = vrot.lane.b32.xlu0 %v4997, 52
        %v5163 = vpop.permute.xlu0 %5162
        %5164 = vrot.lane.b32.xlu0 %v4998, 52
        %v5165 = vpop.permute.xlu0 %5164
        %5166 = vrot.lane.b32.xlu0 %v4999, 52
        %v5167 = vpop.permute.xlu0 %5166
        %5168 = vrot.lane.b32.xlu0 %v5000, 52
        %v5169 = vpop.permute.xlu0 %5168
        %5170 = vrot.lane.b32.xlu0 %v5001, 52
        %v5171 = vpop.permute.xlu0 %5170
        %5172 = vrot.lane.b32.xlu0 %v5002, 52
        %v5173 = vpop.permute.xlu0 %5172
        %5174 = vrot.lane.b32.xlu0 %v5003, 52
        %v5175 = vpop.permute.xlu0 %5174
        %5176 = vrot.lane.b32.xlu0 %v5004, 52
        %v5177 = vpop.permute.xlu0 %5176
        %5178 = vrot.lane.b32.xlu0 %v5005, 52
        %v5179 = vpop.permute.xlu0 %5178
        %5180 = vrot.lane.b32.xlu0 %v5006, 52
        %v5181 = vpop.permute.xlu0 %5180
        %5182 = vrot.lane.b32.xlu0 %v5007, 52
        %v5183 = vpop.permute.xlu0 %5182
        %5184 = vrot.lane.b32.xlu0 %v5008, 52
        %v5185 = vpop.permute.xlu0 %5184
        %5186 = vrot.lane.b32.xlu0 %v5009, 52
        %v5187 = vpop.permute.xlu0 %5186
        %5188 = vrot.lane.b32.xlu0 %v5010, 52
        %v5189 = vpop.permute.xlu0 %5188
        %5190 = vrot.lane.b32.xlu0 %v5011, 52
        %v5191 = vpop.permute.xlu0 %5190
        %5192 = vrot.lane.b32.xlu0 %v5012, 52
        %v5193 = vpop.permute.xlu0 %5192
        %5194 = vrot.lane.b32.xlu0 %v5013, 52
        %v5195 = vpop.permute.xlu0 %5194
        %5196 = vrot.lane.b32.xlu0 %v5014, 52
        %v5197 = vpop.permute.xlu0 %5196
        %5198 = vrot.lane.b32.xlu0 %v5015, 52
        %v5199 = vpop.permute.xlu0 %5198
        %5200 = vrot.lane.b32.xlu0 %v5016, 52
        %v5201 = vpop.permute.xlu0 %5200
        %5202 = vrot.lane.b32.xlu0 %v5017, 52
        %v5203 = vpop.permute.xlu0 %5202
        %5204 = vrot.lane.b32.xlu0 %v5018, 52
        %v5205 = vpop.permute.xlu0 %5204
        %5206 = vrot.lane.b32.xlu0 %v5019, 52
        %v5207 = vpop.permute.xlu0 %5206
        %5208 = vrot.lane.b32.xlu0 %v5020, 52
        %v5209 = vpop.permute.xlu0 %5208
        %5210 = vrot.lane.b32.xlu0 %v5021, 52
        %v5211 = vpop.permute.xlu0 %5210
        %5212 = vrot.lane.b32.xlu0 %v5022, 52
        %v5213 = vpop.permute.xlu0 %5212
        %5214 = vrot.lane.b32.xlu0 %v5023, 52
        %v5215 = vpop.permute.xlu0 %5214
        %vm5280 = vcmask 458144
        %5281 = vst.msk [vmem:[#allocation2] sm:$0xff] %vm5280, %v5089
        %5282 = vst.msk [vmem:[#allocation2 + $0x8] sm:$0xff] %vm5280, %v5091
        %5283 = vst.msk [vmem:[#allocation2 + $0x10] sm:$0xff] %vm5280, %v5093
        %5284 = vst.msk [vmem:[#allocation2 + $0x18] sm:$0xff] %vm5280, %v5095
        %5285 = vst.msk [vmem:[#allocation2 + $0x20] sm:$0xff] %vm5280, %v5097
        %5286 = vst.msk [vmem:[#allocation2 + $0x28] sm:$0xff] %vm5280, %v5099
        %5287 = vst.msk [vmem:[#allocation2 + $0x30] sm:$0xff] %vm5280, %v5101
        %5288 = vst.msk [vmem:[#allocation2 + $0x38] sm:$0xff] %vm5280, %v5103
        %5289 = vst.msk [vmem:[#allocation2 + $0x40] sm:$0xff] %vm5280, %v5105
        %5290 = vst.msk [vmem:[#allocation2 + $0x48] sm:$0xff] %vm5280, %v5107
        %5291 = vst.msk [vmem:[#allocation2 + $0x50] sm:$0xff] %vm5280, %v5109
        %5292 = vst.msk [vmem:[#allocation2 + $0x58] sm:$0xff] %vm5280, %v5111
        %5293 = vst.msk [vmem:[#allocation2 + $0x60] sm:$0xff] %vm5280, %v5113
        %5294 = vst.msk [vmem:[#allocation2 + $0x68] sm:$0xff] %vm5280, %v5115
        %5295 = vst.msk [vmem:[#allocation2 + $0x70] sm:$0xff] %vm5280, %v5117
        %5296 = vst.msk [vmem:[#allocation2 + $0x78] sm:$0xff] %vm5280, %v5119
        %5297 = vst.msk [vmem:[#allocation2 + $0x80] sm:$0xff] %vm5280, %v5121
        %5298 = vst.msk [vmem:[#allocation2 + $0x88] sm:$0xff] %vm5280, %v5123
        %5299 = vst.msk [vmem:[#allocation2 + $0x90] sm:$0xff] %vm5280, %v5125
        %5300 = vst.msk [vmem:[#allocation2 + $0x98] sm:$0xff] %vm5280, %v5127
        %5301 = vst.msk [vmem:[#allocation2 + $0xa0] sm:$0xff] %vm5280, %v5129
        %5302 = vst.msk [vmem:[#allocation2 + $0xa8] sm:$0xff] %vm5280, %v5131
        %5303 = vst.msk [vmem:[#allocation2 + $0xb0] sm:$0xff] %vm5280, %v5133
        %5304 = vst.msk [vmem:[#allocation2 + $0xb8] sm:$0xff] %vm5280, %v5135
        %5305 = vst.msk [vmem:[#allocation2 + $0xc0] sm:$0xff] %vm5280, %v5137
        %5306 = vst.msk [vmem:[#allocation2 + $0xc8] sm:$0xff] %vm5280, %v5139
        %5307 = vst.msk [vmem:[#allocation2 + $0xd0] sm:$0xff] %vm5280, %v5141
        %5308 = vst.msk [vmem:[#allocation2 + $0xd8] sm:$0xff] %vm5280, %v5143
        %5309 = vst.msk [vmem:[#allocation2 + $0xe0] sm:$0xff] %vm5280, %v5145
        %5310 = vst.msk [vmem:[#allocation2 + $0xe8] sm:$0xff] %vm5280, %v5147
        %5311 = vst.msk [vmem:[#allocation2 + $0xf0] sm:$0xff] %vm5280, %v5149
        %5312 = vst.msk [vmem:[#allocation2 + $0xf8] sm:$0xff] %vm5280, %v5151
        %5313 = vst.msk [vmem:[#allocation2 + $0x100] sm:$0xff] %vm5280, %v5153
        %5314 = vst.msk [vmem:[#allocation2 + $0x108] sm:$0xff] %vm5280, %v5155
        %5315 = vst.msk [vmem:[#allocation2 + $0x110] sm:$0xff] %vm5280, %v5157
        %5316 = vst.msk [vmem:[#allocation2 + $0x118] sm:$0xff] %vm5280, %v5159
        %5317 = vst.msk [vmem:[#allocation2 + $0x120] sm:$0xff] %vm5280, %v5161
        %5318 = vst.msk [vmem:[#allocation2 + $0x128] sm:$0xff] %vm5280, %v5163
        %5319 = vst.msk [vmem:[#allocation2 + $0x130] sm:$0xff] %vm5280, %v5165
        %5320 = vst.msk [vmem:[#allocation2 + $0x138] sm:$0xff] %vm5280, %v5167
        %5321 = vst.msk [vmem:[#allocation2 + $0x140] sm:$0xff] %vm5280, %v5169
        %5322 = vst.msk [vmem:[#allocation2 + $0x148] sm:$0xff] %vm5280, %v5171
        %5323 = vst.msk [vmem:[#allocation2 + $0x150] sm:$0xff] %vm5280, %v5173
        %5324 = vst.msk [vmem:[#allocation2 + $0x158] sm:$0xff] %vm5280, %v5175
        %5325 = vst.msk [vmem:[#allocation2 + $0x160] sm:$0xff] %vm5280, %v5177
        %5326 = vst.msk [vmem:[#allocation2 + $0x168] sm:$0xff] %vm5280, %v5179
        %5327 = vst.msk [vmem:[#allocation2 + $0x170] sm:$0xff] %vm5280, %v5181
        %5328 = vst.msk [vmem:[#allocation2 + $0x178] sm:$0xff] %vm5280, %v5183
        %5329 = vst.msk [vmem:[#allocation2 + $0x180] sm:$0xff] %vm5280, %v5185
        %5330 = vst.msk [vmem:[#allocation2 + $0x188] sm:$0xff] %vm5280, %v5187
        %5331 = vst.msk [vmem:[#allocation2 + $0x190] sm:$0xff] %vm5280, %v5189
        %5332 = vst.msk [vmem:[#allocation2 + $0x198] sm:$0xff] %vm5280, %v5191
        %5333 = vst.msk [vmem:[#allocation2 + $0x1a0] sm:$0xff] %vm5280, %v5193
        %5334 = vst.msk [vmem:[#allocation2 + $0x1a8] sm:$0xff] %vm5280, %v5195
        %5335 = vst.msk [vmem:[#allocation2 + $0x1b0] sm:$0xff] %vm5280, %v5197
        %5336 = vst.msk [vmem:[#allocation2 + $0x1b8] sm:$0xff] %vm5280, %v5199
        %5337 = vst.msk [vmem:[#allocation2 + $0x1c0] sm:$0xff] %vm5280, %v5201
        %5338 = vst.msk [vmem:[#allocation2 + $0x1c8] sm:$0xff] %vm5280, %v5203
        %5339 = vst.msk [vmem:[#allocation2 + $0x1d0] sm:$0xff] %vm5280, %v5205
        %5340 = vst.msk [vmem:[#allocation2 + $0x1d8] sm:$0xff] %vm5280, %v5207
        %5341 = vst.msk [vmem:[#allocation2 + $0x1e0] sm:$0xff] %vm5280, %v5209
        %5342 = vst.msk [vmem:[#allocation2 + $0x1e8] sm:$0xff] %vm5280, %v5211
        %5343 = vst.msk [vmem:[#allocation2 + $0x1f0] sm:$0xff] %vm5280, %v5213
        %5344 = vst.msk [vmem:[#allocation2 + $0x1f8] sm:$0xff] %vm5280, %v5215
        %v5345 = vld [vmem:[%s4574 + $0x2] sm:$0xff]
        %v5346 = vld [vmem:[%s4574 + $0x12] sm:$0xff]
        %v5347 = vld [vmem:[%s4574 + $0x22] sm:$0xff]
        %v5348 = vld [vmem:[%s4574 + $0x32] sm:$0xff]
        %v5349 = vld [vmem:[%s4574 + $0x42] sm:$0xff]
        %v5350 = vld [vmem:[%s4574 + $0x52] sm:$0xff]
        %v5351 = vld [vmem:[%s4574 + $0x62] sm:$0xff]
        %v5352 = vld [vmem:[%s4574 + $0x72] sm:$0xff]
        %v5353 = vld [vmem:[%s4574 + $0xa2] sm:$0xff]
        %v5354 = vld [vmem:[%s4574 + $0xb2] sm:$0xff]
        %v5355 = vld [vmem:[%s4574 + $0xc2] sm:$0xff]
        %v5356 = vld [vmem:[%s4574 + $0xd2] sm:$0xff]
        %v5357 = vld [vmem:[%s4574 + $0xe2] sm:$0xff]
        %v5358 = vld [vmem:[%s4574 + $0xf2] sm:$0xff]
        %v5359 = vld [vmem:[%s4574 + $0x102] sm:$0xff]
        %v5360 = vld [vmem:[%s4574 + $0x112] sm:$0xff]
        %v5361 = vld [vmem:[%s4574 + $0x142] sm:$0xff]
        %v5362 = vld [vmem:[%s4574 + $0x152] sm:$0xff]
        %v5363 = vld [vmem:[%s4574 + $0x162] sm:$0xff]
        %v5364 = vld [vmem:[%s4574 + $0x172] sm:$0xff]
        %v5365 = vld [vmem:[%s4574 + $0x182] sm:$0xff]
        %v5366 = vld [vmem:[%s4574 + $0x192] sm:$0xff]
        %v5367 = vld [vmem:[%s4574 + $0x1a2] sm:$0xff]
        %v5368 = vld [vmem:[%s4574 + $0x1b2] sm:$0xff]
        %v5369 = vld [vmem:[%s4574 + $0x1e2] sm:$0xff]
        %v5370 = vld [vmem:[%s4574 + $0x1f2] sm:$0xff]
        %v5371 = vld [vmem:[%s4574 + $0x202] sm:$0xff]
        %v5372 = vld [vmem:[%s4574 + $0x212] sm:$0xff]
        %v5373 = vld [vmem:[%s4574 + $0x222] sm:$0xff]
        %v5374 = vld [vmem:[%s4574 + $0x232] sm:$0xff]
        %v5375 = vld [vmem:[%s4574 + $0x242] sm:$0xff]
        %v5376 = vld [vmem:[%s4574 + $0x252] sm:$0xff]
        %v5377 = vld [vmem:[%s4574 + $0x282] sm:$0xff]
        %v5378 = vld [vmem:[%s4574 + $0x292] sm:$0xff]
        %v5379 = vld [vmem:[%s4574 + $0x2a2] sm:$0xff]
        %v5380 = vld [vmem:[%s4574 + $0x2b2] sm:$0xff]
        %v5381 = vld [vmem:[%s4574 + $0x2c2] sm:$0xff]
        %v5382 = vld [vmem:[%s4574 + $0x2d2] sm:$0xff]
        %v5383 = vld [vmem:[%s4574 + $0x2e2] sm:$0xff]
        %v5384 = vld [vmem:[%s4574 + $0x2f2] sm:$0xff]
        %v5385 = vld [vmem:[%s4574 + $0x322] sm:$0xff]
        %v5386 = vld [vmem:[%s4574 + $0x332] sm:$0xff]
        %v5387 = vld [vmem:[%s4574 + $0x342] sm:$0xff]
        %v5388 = vld [vmem:[%s4574 + $0x352] sm:$0xff]
        %v5389 = vld [vmem:[%s4574 + $0x362] sm:$0xff]
        %v5390 = vld [vmem:[%s4574 + $0x372] sm:$0xff]
        %v5391 = vld [vmem:[%s4574 + $0x382] sm:$0xff]
        %v5392 = vld [vmem:[%s4574 + $0x392] sm:$0xff]
        %v5393 = vld [vmem:[%s4574 + $0x3c2] sm:$0xff]
        %v5394 = vld [vmem:[%s4574 + $0x3d2] sm:$0xff]
        %v5395 = vld [vmem:[%s4574 + $0x3e2] sm:$0xff]
        %v5396 = vld [vmem:[%s4574 + $0x3f2] sm:$0xff]
        %v5397 = vld [vmem:[%s4574 + $0x402] sm:$0xff]
        %v5398 = vld [vmem:[%s4574 + $0x412] sm:$0xff]
        %v5399 = vld [vmem:[%s4574 + $0x422] sm:$0xff]
        %v5400 = vld [vmem:[%s4574 + $0x432] sm:$0xff]
        %v5401 = vld [vmem:[%s4574 + $0x462] sm:$0xff]
        %v5402 = vld [vmem:[%s4574 + $0x472] sm:$0xff]
        %v5403 = vld [vmem:[%s4574 + $0x482] sm:$0xff]
        %v5404 = vld [vmem:[%s4574 + $0x492] sm:$0xff]
        %v5405 = vld [vmem:[%s4574 + $0x4a2] sm:$0xff]
        %v5406 = vld [vmem:[%s4574 + $0x4b2] sm:$0xff]
        %v5407 = vld [vmem:[%s4574 + $0x4c2] sm:$0xff]
        %v5408 = vld [vmem:[%s4574 + $0x4d2] sm:$0xff]
        %5473 = vrot.lane.b32.xlu0 %v5345, 56
        %v5474 = vpop.permute.xlu0 %5473
        %5475 = vrot.lane.b32.xlu0 %v5346, 56
        %v5476 = vpop.permute.xlu0 %5475
        %5477 = vrot.lane.b32.xlu0 %v5347, 56
        %v5478 = vpop.permute.xlu0 %5477
        %5479 = vrot.lane.b32.xlu0 %v5348, 56
        %v5480 = vpop.permute.xlu0 %5479
        %5481 = vrot.lane.b32.xlu0 %v5349, 56
        %v5482 = vpop.permute.xlu0 %5481
        %5483 = vrot.lane.b32.xlu0 %v5350, 56
        %v5484 = vpop.permute.xlu0 %5483
        %5485 = vrot.lane.b32.xlu0 %v5351, 56
        %v5486 = vpop.permute.xlu0 %5485
        %5487 = vrot.lane.b32.xlu0 %v5352, 56
        %v5488 = vpop.permute.xlu0 %5487
        %5489 = vrot.lane.b32.xlu0 %v5353, 56
        %v5490 = vpop.permute.xlu0 %5489
        %5491 = vrot.lane.b32.xlu0 %v5354, 56
        %v5492 = vpop.permute.xlu0 %5491
        %5493 = vrot.lane.b32.xlu0 %v5355, 56
        %v5494 = vpop.permute.xlu0 %5493
        %5495 = vrot.lane.b32.xlu0 %v5356, 56
        %v5496 = vpop.permute.xlu0 %5495
        %5497 = vrot.lane.b32.xlu0 %v5357, 56
        %v5498 = vpop.permute.xlu0 %5497
        %5499 = vrot.lane.b32.xlu0 %v5358, 56
        %v5500 = vpop.permute.xlu0 %5499
        %5501 = vrot.lane.b32.xlu0 %v5359, 56
        %v5502 = vpop.permute.xlu0 %5501
        %5503 = vrot.lane.b32.xlu0 %v5360, 56
        %v5504 = vpop.permute.xlu0 %5503
        %5505 = vrot.lane.b32.xlu0 %v5361, 56
        %v5506 = vpop.permute.xlu0 %5505
        %5507 = vrot.lane.b32.xlu0 %v5362, 56
        %v5508 = vpop.permute.xlu0 %5507
        %5509 = vrot.lane.b32.xlu0 %v5363, 56
        %v5510 = vpop.permute.xlu0 %5509
        %5511 = vrot.lane.b32.xlu0 %v5364, 56
        %v5512 = vpop.permute.xlu0 %5511
        %5513 = vrot.lane.b32.xlu0 %v5365, 56
        %v5514 = vpop.permute.xlu0 %5513
        %5515 = vrot.lane.b32.xlu0 %v5366, 56
        %v5516 = vpop.permute.xlu0 %5515
        %5517 = vrot.lane.b32.xlu0 %v5367, 56
        %v5518 = vpop.permute.xlu0 %5517
        %5519 = vrot.lane.b32.xlu0 %v5368, 56
        %v5520 = vpop.permute.xlu0 %5519
        %5521 = vrot.lane.b32.xlu0 %v5369, 56
        %v5522 = vpop.permute.xlu0 %5521
        %5523 = vrot.lane.b32.xlu0 %v5370, 56
        %v5524 = vpop.permute.xlu0 %5523
        %5525 = vrot.lane.b32.xlu0 %v5371, 56
        %v5526 = vpop.permute.xlu0 %5525
        %5527 = vrot.lane.b32.xlu0 %v5372, 56
        %v5528 = vpop.permute.xlu0 %5527
        %5529 = vrot.lane.b32.xlu0 %v5373, 56
        %v5530 = vpop.permute.xlu0 %5529
        %5531 = vrot.lane.b32.xlu0 %v5374, 56
        %v5532 = vpop.permute.xlu0 %5531
        %5533 = vrot.lane.b32.xlu0 %v5375, 56
        %v5534 = vpop.permute.xlu0 %5533
        %5535 = vrot.lane.b32.xlu0 %v5376, 56
        %v5536 = vpop.permute.xlu0 %5535
        %5537 = vrot.lane.b32.xlu0 %v5377, 56
        %v5538 = vpop.permute.xlu0 %5537
        %5539 = vrot.lane.b32.xlu0 %v5378, 56
        %v5540 = vpop.permute.xlu0 %5539
        %5541 = vrot.lane.b32.xlu0 %v5379, 56
        %v5542 = vpop.permute.xlu0 %5541
        %5543 = vrot.lane.b32.xlu0 %v5380, 56
        %v5544 = vpop.permute.xlu0 %5543
        %5545 = vrot.lane.b32.xlu0 %v5381, 56
        %v5546 = vpop.permute.xlu0 %5545
        %5547 = vrot.lane.b32.xlu0 %v5382, 56
        %v5548 = vpop.permute.xlu0 %5547
        %5549 = vrot.lane.b32.xlu0 %v5383, 56
        %v5550 = vpop.permute.xlu0 %5549
        %5551 = vrot.lane.b32.xlu0 %v5384, 56
        %v5552 = vpop.permute.xlu0 %5551
        %5553 = vrot.lane.b32.xlu0 %v5385, 56
        %v5554 = vpop.permute.xlu0 %5553
        %5555 = vrot.lane.b32.xlu0 %v5386, 56
        %v5556 = vpop.permute.xlu0 %5555
        %5557 = vrot.lane.b32.xlu0 %v5387, 56
        %v5558 = vpop.permute.xlu0 %5557
        %5559 = vrot.lane.b32.xlu0 %v5388, 56
        %v5560 = vpop.permute.xlu0 %5559
        %5561 = vrot.lane.b32.xlu0 %v5389, 56
        %v5562 = vpop.permute.xlu0 %5561
        %5563 = vrot.lane.b32.xlu0 %v5390, 56
        %v5564 = vpop.permute.xlu0 %5563
        %5565 = vrot.lane.b32.xlu0 %v5391, 56
        %v5566 = vpop.permute.xlu0 %5565
        %5567 = vrot.lane.b32.xlu0 %v5392, 56
        %v5568 = vpop.permute.xlu0 %5567
        %5569 = vrot.lane.b32.xlu0 %v5393, 56
        %v5570 = vpop.permute.xlu0 %5569
        %5571 = vrot.lane.b32.xlu0 %v5394, 56
        %v5572 = vpop.permute.xlu0 %5571
        %5573 = vrot.lane.b32.xlu0 %v5395, 56
        %v5574 = vpop.permute.xlu0 %5573
        %5575 = vrot.lane.b32.xlu0 %v5396, 56
        %v5576 = vpop.permute.xlu0 %5575
        %5577 = vrot.lane.b32.xlu0 %v5397, 56
        %v5578 = vpop.permute.xlu0 %5577
        %5579 = vrot.lane.b32.xlu0 %v5398, 56
        %v5580 = vpop.permute.xlu0 %5579
        %5581 = vrot.lane.b32.xlu0 %v5399, 56
        %v5582 = vpop.permute.xlu0 %5581
        %5583 = vrot.lane.b32.xlu0 %v5400, 56
        %v5584 = vpop.permute.xlu0 %5583
        %5585 = vrot.lane.b32.xlu0 %v5401, 56
        %v5586 = vpop.permute.xlu0 %5585
        %5587 = vrot.lane.b32.xlu0 %v5402, 56
        %v5588 = vpop.permute.xlu0 %5587
        %5589 = vrot.lane.b32.xlu0 %v5403, 56
        %v5590 = vpop.permute.xlu0 %5589
        %5591 = vrot.lane.b32.xlu0 %v5404, 56
        %v5592 = vpop.permute.xlu0 %5591
        %5593 = vrot.lane.b32.xlu0 %v5405, 56
        %v5594 = vpop.permute.xlu0 %5593
        %5595 = vrot.lane.b32.xlu0 %v5406, 56
        %v5596 = vpop.permute.xlu0 %5595
        %5597 = vrot.lane.b32.xlu0 %v5407, 56
        %v5598 = vpop.permute.xlu0 %5597
        %5599 = vrot.lane.b32.xlu0 %v5408, 56
        %v5600 = vpop.permute.xlu0 %5599
        %vm5665 = vcmask 490944
        %5666 = vst.msk [vmem:[#allocation2] sm:$0xff] %vm5665, %v5474
        %5667 = vst.msk [vmem:[#allocation2 + $0x8] sm:$0xff] %vm5665, %v5476
        %5668 = vst.msk [vmem:[#allocation2 + $0x10] sm:$0xff] %vm5665, %v5478
        %5669 = vst.msk [vmem:[#allocation2 + $0x18] sm:$0xff] %vm5665, %v5480
        %5670 = vst.msk [vmem:[#allocation2 + $0x20] sm:$0xff] %vm5665, %v5482
        %5671 = vst.msk [vmem:[#allocation2 + $0x28] sm:$0xff] %vm5665, %v5484
        %5672 = vst.msk [vmem:[#allocation2 + $0x30] sm:$0xff] %vm5665, %v5486
        %5673 = vst.msk [vmem:[#allocation2 + $0x38] sm:$0xff] %vm5665, %v5488
        %5674 = vst.msk [vmem:[#allocation2 + $0x40] sm:$0xff] %vm5665, %v5490
        %5675 = vst.msk [vmem:[#allocation2 + $0x48] sm:$0xff] %vm5665, %v5492
        %5676 = vst.msk [vmem:[#allocation2 + $0x50] sm:$0xff] %vm5665, %v5494
        %5677 = vst.msk [vmem:[#allocation2 + $0x58] sm:$0xff] %vm5665, %v5496
        %5678 = vst.msk [vmem:[#allocation2 + $0x60] sm:$0xff] %vm5665, %v5498
        %5679 = vst.msk [vmem:[#allocation2 + $0x68] sm:$0xff] %vm5665, %v5500
        %5680 = vst.msk [vmem:[#allocation2 + $0x70] sm:$0xff] %vm5665, %v5502
        %5681 = vst.msk [vmem:[#allocation2 + $0x78] sm:$0xff] %vm5665, %v5504
        %5682 = vst.msk [vmem:[#allocation2 + $0x80] sm:$0xff] %vm5665, %v5506
        %5683 = vst.msk [vmem:[#allocation2 + $0x88] sm:$0xff] %vm5665, %v5508
        %5684 = vst.msk [vmem:[#allocation2 + $0x90] sm:$0xff] %vm5665, %v5510
        %5685 = vst.msk [vmem:[#allocation2 + $0x98] sm:$0xff] %vm5665, %v5512
        %5686 = vst.msk [vmem:[#allocation2 + $0xa0] sm:$0xff] %vm5665, %v5514
        %5687 = vst.msk [vmem:[#allocation2 + $0xa8] sm:$0xff] %vm5665, %v5516
        %5688 = vst.msk [vmem:[#allocation2 + $0xb0] sm:$0xff] %vm5665, %v5518
        %5689 = vst.msk [vmem:[#allocation2 + $0xb8] sm:$0xff] %vm5665, %v5520
        %5690 = vst.msk [vmem:[#allocation2 + $0xc0] sm:$0xff] %vm5665, %v5522
        %5691 = vst.msk [vmem:[#allocation2 + $0xc8] sm:$0xff] %vm5665, %v5524
        %5692 = vst.msk [vmem:[#allocation2 + $0xd0] sm:$0xff] %vm5665, %v5526
        %5693 = vst.msk [vmem:[#allocation2 + $0xd8] sm:$0xff] %vm5665, %v5528
        %5694 = vst.msk [vmem:[#allocation2 + $0xe0] sm:$0xff] %vm5665, %v5530
        %5695 = vst.msk [vmem:[#allocation2 + $0xe8] sm:$0xff] %vm5665, %v5532
        %5696 = vst.msk [vmem:[#allocation2 + $0xf0] sm:$0xff] %vm5665, %v5534
        %5697 = vst.msk [vmem:[#allocation2 + $0xf8] sm:$0xff] %vm5665, %v5536
        %5698 = vst.msk [vmem:[#allocation2 + $0x100] sm:$0xff] %vm5665, %v5538
        %5699 = vst.msk [vmem:[#allocation2 + $0x108] sm:$0xff] %vm5665, %v5540
        %5700 = vst.msk [vmem:[#allocation2 + $0x110] sm:$0xff] %vm5665, %v5542
        %5701 = vst.msk [vmem:[#allocation2 + $0x118] sm:$0xff] %vm5665, %v5544
        %5702 = vst.msk [vmem:[#allocation2 + $0x120] sm:$0xff] %vm5665, %v5546
        %5703 = vst.msk [vmem:[#allocation2 + $0x128] sm:$0xff] %vm5665, %v5548
        %5704 = vst.msk [vmem:[#allocation2 + $0x130] sm:$0xff] %vm5665, %v5550
        %5705 = vst.msk [vmem:[#allocation2 + $0x138] sm:$0xff] %vm5665, %v5552
        %5706 = vst.msk [vmem:[#allocation2 + $0x140] sm:$0xff] %vm5665, %v5554
        %5707 = vst.msk [vmem:[#allocation2 + $0x148] sm:$0xff] %vm5665, %v5556
        %5708 = vst.msk [vmem:[#allocation2 + $0x150] sm:$0xff] %vm5665, %v5558
        %5709 = vst.msk [vmem:[#allocation2 + $0x158] sm:$0xff] %vm5665, %v5560
        %5710 = vst.msk [vmem:[#allocation2 + $0x160] sm:$0xff] %vm5665, %v5562
        %5711 = vst.msk [vmem:[#allocation2 + $0x168] sm:$0xff] %vm5665, %v5564
        %5712 = vst.msk [vmem:[#allocation2 + $0x170] sm:$0xff] %vm5665, %v5566
        %5713 = vst.msk [vmem:[#allocation2 + $0x178] sm:$0xff] %vm5665, %v5568
        %5714 = vst.msk [vmem:[#allocation2 + $0x180] sm:$0xff] %vm5665, %v5570
        %5715 = vst.msk [vmem:[#allocation2 + $0x188] sm:$0xff] %vm5665, %v5572
        %5716 = vst.msk [vmem:[#allocation2 + $0x190] sm:$0xff] %vm5665, %v5574
        %5717 = vst.msk [vmem:[#allocation2 + $0x198] sm:$0xff] %vm5665, %v5576
        %5718 = vst.msk [vmem:[#allocation2 + $0x1a0] sm:$0xff] %vm5665, %v5578
        %5719 = vst.msk [vmem:[#allocation2 + $0x1a8] sm:$0xff] %vm5665, %v5580
        %5720 = vst.msk [vmem:[#allocation2 + $0x1b0] sm:$0xff] %vm5665, %v5582
        %5721 = vst.msk [vmem:[#allocation2 + $0x1b8] sm:$0xff] %vm5665, %v5584
        %5722 = vst.msk [vmem:[#allocation2 + $0x1c0] sm:$0xff] %vm5665, %v5586
        %5723 = vst.msk [vmem:[#allocation2 + $0x1c8] sm:$0xff] %vm5665, %v5588
        %5724 = vst.msk [vmem:[#allocation2 + $0x1d0] sm:$0xff] %vm5665, %v5590
        %5725 = vst.msk [vmem:[#allocation2 + $0x1d8] sm:$0xff] %vm5665, %v5592
        %5726 = vst.msk [vmem:[#allocation2 + $0x1e0] sm:$0xff] %vm5665, %v5594
        %5727 = vst.msk [vmem:[#allocation2 + $0x1e8] sm:$0xff] %vm5665, %v5596
        %5728 = vst.msk [vmem:[#allocation2 + $0x1f0] sm:$0xff] %vm5665, %v5598
        %5729 = vst.msk [vmem:[#allocation2 + $0x1f8] sm:$0xff] %vm5665, %v5600
        %s5730 = scalar_lea.vmem %s141, 192
        %v5731 = vld [vmem:[%s5730] sm:$0xff]
        %v5732 = vld [vmem:[%s5730 + $0x10] sm:$0xff]
        %v5733 = vld [vmem:[%s5730 + $0x20] sm:$0xff]
        %v5734 = vld [vmem:[%s5730 + $0x30] sm:$0xff]
        %v5735 = vld [vmem:[%s5730 + $0x40] sm:$0xff]
        %v5736 = vld [vmem:[%s5730 + $0x50] sm:$0xff]
        %v5737 = vld [vmem:[%s5730 + $0x60] sm:$0xff]
        %v5738 = vld [vmem:[%s5730 + $0x70] sm:$0xff]
        %v5739 = vld [vmem:[%s5730 + $0xa0] sm:$0xff]
        %v5740 = vld [vmem:[%s5730 + $0xb0] sm:$0xff]
        %v5741 = vld [vmem:[%s5730 + $0xc0] sm:$0xff]
        %v5742 = vld [vmem:[%s5730 + $0xd0] sm:$0xff]
        %v5743 = vld [vmem:[%s5730 + $0xe0] sm:$0xff]
        %v5744 = vld [vmem:[%s5730 + $0xf0] sm:$0xff]
        %v5745 = vld [vmem:[%s5730 + $0x100] sm:$0xff]
        %v5746 = vld [vmem:[%s5730 + $0x110] sm:$0xff]
        %v5747 = vld [vmem:[%s5730 + $0x140] sm:$0xff]
        %v5748 = vld [vmem:[%s5730 + $0x150] sm:$0xff]
        %v5749 = vld [vmem:[%s5730 + $0x160] sm:$0xff]
        %v5750 = vld [vmem:[%s5730 + $0x170] sm:$0xff]
        %v5751 = vld [vmem:[%s5730 + $0x180] sm:$0xff]
        %v5752 = vld [vmem:[%s5730 + $0x190] sm:$0xff]
        %v5753 = vld [vmem:[%s5730 + $0x1a0] sm:$0xff]
        %v5754 = vld [vmem:[%s5730 + $0x1b0] sm:$0xff]
        %v5755 = vld [vmem:[%s5730 + $0x1e0] sm:$0xff]
        %v5756 = vld [vmem:[%s5730 + $0x1f0] sm:$0xff]
        %v5757 = vld [vmem:[%s5730 + $0x200] sm:$0xff]
        %v5758 = vld [vmem:[%s5730 + $0x210] sm:$0xff]
        %v5759 = vld [vmem:[%s5730 + $0x220] sm:$0xff]
        %v5760 = vld [vmem:[%s5730 + $0x230] sm:$0xff]
        %v5761 = vld [vmem:[%s5730 + $0x240] sm:$0xff]
        %v5762 = vld [vmem:[%s5730 + $0x250] sm:$0xff]
        %v5763 = vld [vmem:[%s5730 + $0x280] sm:$0xff]
        %v5764 = vld [vmem:[%s5730 + $0x290] sm:$0xff]
        %v5765 = vld [vmem:[%s5730 + $0x2a0] sm:$0xff]
        %v5766 = vld [vmem:[%s5730 + $0x2b0] sm:$0xff]
        %v5767 = vld [vmem:[%s5730 + $0x2c0] sm:$0xff]
        %v5768 = vld [vmem:[%s5730 + $0x2d0] sm:$0xff]
        %v5769 = vld [vmem:[%s5730 + $0x2e0] sm:$0xff]
        %v5770 = vld [vmem:[%s5730 + $0x2f0] sm:$0xff]
        %v5771 = vld [vmem:[%s5730 + $0x320] sm:$0xff]
        %v5772 = vld [vmem:[%s5730 + $0x330] sm:$0xff]
        %v5773 = vld [vmem:[%s5730 + $0x340] sm:$0xff]
        %v5774 = vld [vmem:[%s5730 + $0x350] sm:$0xff]
        %v5775 = vld [vmem:[%s5730 + $0x360] sm:$0xff]
        %v5776 = vld [vmem:[%s5730 + $0x370] sm:$0xff]
        %v5777 = vld [vmem:[%s5730 + $0x380] sm:$0xff]
        %v5778 = vld [vmem:[%s5730 + $0x390] sm:$0xff]
        %v5779 = vld [vmem:[%s5730 + $0x3c0] sm:$0xff]
        %v5780 = vld [vmem:[%s5730 + $0x3d0] sm:$0xff]
        %v5781 = vld [vmem:[%s5730 + $0x3e0] sm:$0xff]
        %v5782 = vld [vmem:[%s5730 + $0x3f0] sm:$0xff]
        %v5783 = vld [vmem:[%s5730 + $0x400] sm:$0xff]
        %v5784 = vld [vmem:[%s5730 + $0x410] sm:$0xff]
        %v5785 = vld [vmem:[%s5730 + $0x420] sm:$0xff]
        %v5786 = vld [vmem:[%s5730 + $0x430] sm:$0xff]
        %v5787 = vld [vmem:[%s5730 + $0x460] sm:$0xff]
        %v5788 = vld [vmem:[%s5730 + $0x470] sm:$0xff]
        %v5789 = vld [vmem:[%s5730 + $0x480] sm:$0xff]
        %v5790 = vld [vmem:[%s5730 + $0x490] sm:$0xff]
        %v5791 = vld [vmem:[%s5730 + $0x4a0] sm:$0xff]
        %v5792 = vld [vmem:[%s5730 + $0x4b0] sm:$0xff]
        %v5793 = vld [vmem:[%s5730 + $0x4c0] sm:$0xff]
        %v5794 = vld [vmem:[%s5730 + $0x4d0] sm:$0xff]
        %5859 = vrot.lane.b32.xlu0 %v5731, 60
        %v5860 = vpop.permute.xlu0 %5859
        %5861 = vrot.lane.b32.xlu0 %v5732, 60
        %v5862 = vpop.permute.xlu0 %5861
        %5863 = vrot.lane.b32.xlu0 %v5733, 60
        %v5864 = vpop.permute.xlu0 %5863
        %5865 = vrot.lane.b32.xlu0 %v5734, 60
        %v5866 = vpop.permute.xlu0 %5865
        %5867 = vrot.lane.b32.xlu0 %v5735, 60
        %v5868 = vpop.permute.xlu0 %5867
        %5869 = vrot.lane.b32.xlu0 %v5736, 60
        %v5870 = vpop.permute.xlu0 %5869
        %5871 = vrot.lane.b32.xlu0 %v5737, 60
        %v5872 = vpop.permute.xlu0 %5871
        %5873 = vrot.lane.b32.xlu0 %v5738, 60
        %v5874 = vpop.permute.xlu0 %5873
        %5875 = vrot.lane.b32.xlu0 %v5739, 60
        %v5876 = vpop.permute.xlu0 %5875
        %5877 = vrot.lane.b32.xlu0 %v5740, 60
        %v5878 = vpop.permute.xlu0 %5877
        %5879 = vrot.lane.b32.xlu0 %v5741, 60
        %v5880 = vpop.permute.xlu0 %5879
        %5881 = vrot.lane.b32.xlu0 %v5742, 60
        %v5882 = vpop.permute.xlu0 %5881
        %5883 = vrot.lane.b32.xlu0 %v5743, 60
        %v5884 = vpop.permute.xlu0 %5883
        %5885 = vrot.lane.b32.xlu0 %v5744, 60
        %v5886 = vpop.permute.xlu0 %5885
        %5887 = vrot.lane.b32.xlu0 %v5745, 60
        %v5888 = vpop.permute.xlu0 %5887
        %5889 = vrot.lane.b32.xlu0 %v5746, 60
        %v5890 = vpop.permute.xlu0 %5889
        %5891 = vrot.lane.b32.xlu0 %v5747, 60
        %v5892 = vpop.permute.xlu0 %5891
        %5893 = vrot.lane.b32.xlu0 %v5748, 60
        %v5894 = vpop.permute.xlu0 %5893
        %5895 = vrot.lane.b32.xlu0 %v5749, 60
        %v5896 = vpop.permute.xlu0 %5895
        %5897 = vrot.lane.b32.xlu0 %v5750, 60
        %v5898 = vpop.permute.xlu0 %5897
        %5899 = vrot.lane.b32.xlu0 %v5751, 60
        %v5900 = vpop.permute.xlu0 %5899
        %5901 = vrot.lane.b32.xlu0 %v5752, 60
        %v5902 = vpop.permute.xlu0 %5901
        %5903 = vrot.lane.b32.xlu0 %v5753, 60
        %v5904 = vpop.permute.xlu0 %5903
        %5905 = vrot.lane.b32.xlu0 %v5754, 60
        %v5906 = vpop.permute.xlu0 %5905
        %5907 = vrot.lane.b32.xlu0 %v5755, 60
        %v5908 = vpop.permute.xlu0 %5907
        %5909 = vrot.lane.b32.xlu0 %v5756, 60
        %v5910 = vpop.permute.xlu0 %5909
        %5911 = vrot.lane.b32.xlu0 %v5757, 60
        %v5912 = vpop.permute.xlu0 %5911
        %5913 = vrot.lane.b32.xlu0 %v5758, 60
        %v5914 = vpop.permute.xlu0 %5913
        %5915 = vrot.lane.b32.xlu0 %v5759, 60
        %v5916 = vpop.permute.xlu0 %5915
        %5917 = vrot.lane.b32.xlu0 %v5760, 60
        %v5918 = vpop.permute.xlu0 %5917
        %5919 = vrot.lane.b32.xlu0 %v5761, 60
        %v5920 = vpop.permute.xlu0 %5919
        %5921 = vrot.lane.b32.xlu0 %v5762, 60
        %v5922 = vpop.permute.xlu0 %5921
        %5923 = vrot.lane.b32.xlu0 %v5763, 60
        %v5924 = vpop.permute.xlu0 %5923
        %5925 = vrot.lane.b32.xlu0 %v5764, 60
        %v5926 = vpop.permute.xlu0 %5925
        %5927 = vrot.lane.b32.xlu0 %v5765, 60
        %v5928 = vpop.permute.xlu0 %5927
        %5929 = vrot.lane.b32.xlu0 %v5766, 60
        %v5930 = vpop.permute.xlu0 %5929
        %5931 = vrot.lane.b32.xlu0 %v5767, 60
        %v5932 = vpop.permute.xlu0 %5931
        %5933 = vrot.lane.b32.xlu0 %v5768, 60
        %v5934 = vpop.permute.xlu0 %5933
        %5935 = vrot.lane.b32.xlu0 %v5769, 60
        %v5936 = vpop.permute.xlu0 %5935
        %5937 = vrot.lane.b32.xlu0 %v5770, 60
        %v5938 = vpop.permute.xlu0 %5937
        %5939 = vrot.lane.b32.xlu0 %v5771, 60
        %v5940 = vpop.permute.xlu0 %5939
        %5941 = vrot.lane.b32.xlu0 %v5772, 60
        %v5942 = vpop.permute.xlu0 %5941
        %5943 = vrot.lane.b32.xlu0 %v5773, 60
        %v5944 = vpop.permute.xlu0 %5943
        %5945 = vrot.lane.b32.xlu0 %v5774, 60
        %v5946 = vpop.permute.xlu0 %5945
        %5947 = vrot.lane.b32.xlu0 %v5775, 60
        %v5948 = vpop.permute.xlu0 %5947
        %5949 = vrot.lane.b32.xlu0 %v5776, 60
        %v5950 = vpop.permute.xlu0 %5949
        %5951 = vrot.lane.b32.xlu0 %v5777, 60
        %v5952 = vpop.permute.xlu0 %5951
        %5953 = vrot.lane.b32.xlu0 %v5778, 60
        %v5954 = vpop.permute.xlu0 %5953
        %5955 = vrot.lane.b32.xlu0 %v5779, 60
        %v5956 = vpop.permute.xlu0 %5955
        %5957 = vrot.lane.b32.xlu0 %v5780, 60
        %v5958 = vpop.permute.xlu0 %5957
        %5959 = vrot.lane.b32.xlu0 %v5781, 60
        %v5960 = vpop.permute.xlu0 %5959
        %5961 = vrot.lane.b32.xlu0 %v5782, 60
        %v5962 = vpop.permute.xlu0 %5961
        %5963 = vrot.lane.b32.xlu0 %v5783, 60
        %v5964 = vpop.permute.xlu0 %5963
        %5965 = vrot.lane.b32.xlu0 %v5784, 60
        %v5966 = vpop.permute.xlu0 %5965
        %5967 = vrot.lane.b32.xlu0 %v5785, 60
        %v5968 = vpop.permute.xlu0 %5967
        %5969 = vrot.lane.b32.xlu0 %v5786, 60
        %v5970 = vpop.permute.xlu0 %5969
        %5971 = vrot.lane.b32.xlu0 %v5787, 60
        %v5972 = vpop.permute.xlu0 %5971
        %5973 = vrot.lane.b32.xlu0 %v5788, 60
        %v5974 = vpop.permute.xlu0 %5973
        %5975 = vrot.lane.b32.xlu0 %v5789, 60
        %v5976 = vpop.permute.xlu0 %5975
        %5977 = vrot.lane.b32.xlu0 %v5790, 60
        %v5978 = vpop.permute.xlu0 %5977
        %5979 = vrot.lane.b32.xlu0 %v5791, 60
        %v5980 = vpop.permute.xlu0 %5979
        %5981 = vrot.lane.b32.xlu0 %v5792, 60
        %v5982 = vpop.permute.xlu0 %5981
        %5983 = vrot.lane.b32.xlu0 %v5793, 60
        %v5984 = vpop.permute.xlu0 %5983
        %5985 = vrot.lane.b32.xlu0 %v5794, 60
        %v5986 = vpop.permute.xlu0 %5985
        %vm6051 = vcmask 523744
        %6052 = vst.msk [vmem:[#allocation2] sm:$0xff] %vm6051, %v5860
        %6053 = vst.msk [vmem:[#allocation2 + $0x8] sm:$0xff] %vm6051, %v5862
        %6054 = vst.msk [vmem:[#allocation2 + $0x10] sm:$0xff] %vm6051, %v5864
        %6055 = vst.msk [vmem:[#allocation2 + $0x18] sm:$0xff] %vm6051, %v5866
        %6056 = vst.msk [vmem:[#allocation2 + $0x20] sm:$0xff] %vm6051, %v5868
        %6057 = vst.msk [vmem:[#allocation2 + $0x28] sm:$0xff] %vm6051, %v5870
        %6058 = vst.msk [vmem:[#allocation2 + $0x30] sm:$0xff] %vm6051, %v5872
        %6059 = vst.msk [vmem:[#allocation2 + $0x38] sm:$0xff] %vm6051, %v5874
        %6060 = vst.msk [vmem:[#allocation2 + $0x40] sm:$0xff] %vm6051, %v5876
        %6061 = vst.msk [vmem:[#allocation2 + $0x48] sm:$0xff] %vm6051, %v5878
        %6062 = vst.msk [vmem:[#allocation2 + $0x50] sm:$0xff] %vm6051, %v5880
        %6063 = vst.msk [vmem:[#allocation2 + $0x58] sm:$0xff] %vm6051, %v5882
        %6064 = vst.msk [vmem:[#allocation2 + $0x60] sm:$0xff] %vm6051, %v5884
        %6065 = vst.msk [vmem:[#allocation2 + $0x68] sm:$0xff] %vm6051, %v5886
        %6066 = vst.msk [vmem:[#allocation2 + $0x70] sm:$0xff] %vm6051, %v5888
        %6067 = vst.msk [vmem:[#allocation2 + $0x78] sm:$0xff] %vm6051, %v5890
        %6068 = vst.msk [vmem:[#allocation2 + $0x80] sm:$0xff] %vm6051, %v5892
        %6069 = vst.msk [vmem:[#allocation2 + $0x88] sm:$0xff] %vm6051, %v5894
        %6070 = vst.msk [vmem:[#allocation2 + $0x90] sm:$0xff] %vm6051, %v5896
        %6071 = vst.msk [vmem:[#allocation2 + $0x98] sm:$0xff] %vm6051, %v5898
        %6072 = vst.msk [vmem:[#allocation2 + $0xa0] sm:$0xff] %vm6051, %v5900
        %6073 = vst.msk [vmem:[#allocation2 + $0xa8] sm:$0xff] %vm6051, %v5902
        %6074 = vst.msk [vmem:[#allocation2 + $0xb0] sm:$0xff] %vm6051, %v5904
        %6075 = vst.msk [vmem:[#allocation2 + $0xb8] sm:$0xff] %vm6051, %v5906
        %6076 = vst.msk [vmem:[#allocation2 + $0xc0] sm:$0xff] %vm6051, %v5908
        %6077 = vst.msk [vmem:[#allocation2 + $0xc8] sm:$0xff] %vm6051, %v5910
        %6078 = vst.msk [vmem:[#allocation2 + $0xd0] sm:$0xff] %vm6051, %v5912
        %6079 = vst.msk [vmem:[#allocation2 + $0xd8] sm:$0xff] %vm6051, %v5914
        %6080 = vst.msk [vmem:[#allocation2 + $0xe0] sm:$0xff] %vm6051, %v5916
        %6081 = vst.msk [vmem:[#allocation2 + $0xe8] sm:$0xff] %vm6051, %v5918
        %6082 = vst.msk [vmem:[#allocation2 + $0xf0] sm:$0xff] %vm6051, %v5920
        %6083 = vst.msk [vmem:[#allocation2 + $0xf8] sm:$0xff] %vm6051, %v5922
        %6084 = vst.msk [vmem:[#allocation2 + $0x100] sm:$0xff] %vm6051, %v5924
        %6085 = vst.msk [vmem:[#allocation2 + $0x108] sm:$0xff] %vm6051, %v5926
        %6086 = vst.msk [vmem:[#allocation2 + $0x110] sm:$0xff] %vm6051, %v5928
        %6087 = vst.msk [vmem:[#allocation2 + $0x118] sm:$0xff] %vm6051, %v5930
        %6088 = vst.msk [vmem:[#allocation2 + $0x120] sm:$0xff] %vm6051, %v5932
        %6089 = vst.msk [vmem:[#allocation2 + $0x128] sm:$0xff] %vm6051, %v5934
        %6090 = vst.msk [vmem:[#allocation2 + $0x130] sm:$0xff] %vm6051, %v5936
        %6091 = vst.msk [vmem:[#allocation2 + $0x138] sm:$0xff] %vm6051, %v5938
        %6092 = vst.msk [vmem:[#allocation2 + $0x140] sm:$0xff] %vm6051, %v5940
        %6093 = vst.msk [vmem:[#allocation2 + $0x148] sm:$0xff] %vm6051, %v5942
        %6094 = vst.msk [vmem:[#allocation2 + $0x150] sm:$0xff] %vm6051, %v5944
        %6095 = vst.msk [vmem:[#allocation2 + $0x158] sm:$0xff] %vm6051, %v5946
        %6096 = vst.msk [vmem:[#allocation2 + $0x160] sm:$0xff] %vm6051, %v5948
        %6097 = vst.msk [vmem:[#allocation2 + $0x168] sm:$0xff] %vm6051, %v5950
        %6098 = vst.msk [vmem:[#allocation2 + $0x170] sm:$0xff] %vm6051, %v5952
        %6099 = vst.msk [vmem:[#allocation2 + $0x178] sm:$0xff] %vm6051, %v5954
        %6100 = vst.msk [vmem:[#allocation2 + $0x180] sm:$0xff] %vm6051, %v5956
        %6101 = vst.msk [vmem:[#allocation2 + $0x188] sm:$0xff] %vm6051, %v5958
        %6102 = vst.msk [vmem:[#allocation2 + $0x190] sm:$0xff] %vm6051, %v5960
        %6103 = vst.msk [vmem:[#allocation2 + $0x198] sm:$0xff] %vm6051, %v5962
        %6104 = vst.msk [vmem:[#allocation2 + $0x1a0] sm:$0xff] %vm6051, %v5964
        %6105 = vst.msk [vmem:[#allocation2 + $0x1a8] sm:$0xff] %vm6051, %v5966
        %6106 = vst.msk [vmem:[#allocation2 + $0x1b0] sm:$0xff] %vm6051, %v5968
        %6107 = vst.msk [vmem:[#allocation2 + $0x1b8] sm:$0xff] %vm6051, %v5970
        %6108 = vst.msk [vmem:[#allocation2 + $0x1c0] sm:$0xff] %vm6051, %v5972
        %6109 = vst.msk [vmem:[#allocation2 + $0x1c8] sm:$0xff] %vm6051, %v5974
        %6110 = vst.msk [vmem:[#allocation2 + $0x1d0] sm:$0xff] %vm6051, %v5976
        %6111 = vst.msk [vmem:[#allocation2 + $0x1d8] sm:$0xff] %vm6051, %v5978
        %6112 = vst.msk [vmem:[#allocation2 + $0x1e0] sm:$0xff] %vm6051, %v5980
        %6113 = vst.msk [vmem:[#allocation2 + $0x1e8] sm:$0xff] %vm6051, %v5982
        %6114 = vst.msk [vmem:[#allocation2 + $0x1f0] sm:$0xff] %vm6051, %v5984
        %6115 = vst.msk [vmem:[#allocation2 + $0x1f8] sm:$0xff] %vm6051, %v5986
        %v6116 = vld [vmem:[%s5730 + $0x1] sm:$0xff]
        %v6117 = vld [vmem:[%s5730 + $0x11] sm:$0xff]
        %v6118 = vld [vmem:[%s5730 + $0x21] sm:$0xff]
        %v6119 = vld [vmem:[%s5730 + $0x31] sm:$0xff]
        %v6120 = vld [vmem:[%s5730 + $0x41] sm:$0xff]
        %v6121 = vld [vmem:[%s5730 + $0x51] sm:$0xff]
        %v6122 = vld [vmem:[%s5730 + $0x61] sm:$0xff]
        %v6123 = vld [vmem:[%s5730 + $0x71] sm:$0xff]
        %v6124 = vld [vmem:[%s5730 + $0xa1] sm:$0xff]
        %v6125 = vld [vmem:[%s5730 + $0xb1] sm:$0xff]
        %v6126 = vld [vmem:[%s5730 + $0xc1] sm:$0xff]
        %v6127 = vld [vmem:[%s5730 + $0xd1] sm:$0xff]
        %v6128 = vld [vmem:[%s5730 + $0xe1] sm:$0xff]
        %v6129 = vld [vmem:[%s5730 + $0xf1] sm:$0xff]
        %v6130 = vld [vmem:[%s5730 + $0x101] sm:$0xff]
        %v6131 = vld [vmem:[%s5730 + $0x111] sm:$0xff]
        %v6132 = vld [vmem:[%s5730 + $0x141] sm:$0xff]
        %v6133 = vld [vmem:[%s5730 + $0x151] sm:$0xff]
        %v6134 = vld [vmem:[%s5730 + $0x161] sm:$0xff]
        %v6135 = vld [vmem:[%s5730 + $0x171] sm:$0xff]
        %v6136 = vld [vmem:[%s5730 + $0x181] sm:$0xff]
        %v6137 = vld [vmem:[%s5730 + $0x191] sm:$0xff]
        %v6138 = vld [vmem:[%s5730 + $0x1a1] sm:$0xff]
        %v6139 = vld [vmem:[%s5730 + $0x1b1] sm:$0xff]
        %v6140 = vld [vmem:[%s5730 + $0x1e1] sm:$0xff]
        %v6141 = vld [vmem:[%s5730 + $0x1f1] sm:$0xff]
        %v6142 = vld [vmem:[%s5730 + $0x201] sm:$0xff]
        %v6143 = vld [vmem:[%s5730 + $0x211] sm:$0xff]
        %v6144 = vld [vmem:[%s5730 + $0x221] sm:$0xff]
        %v6145 = vld [vmem:[%s5730 + $0x231] sm:$0xff]
        %v6146 = vld [vmem:[%s5730 + $0x241] sm:$0xff]
        %v6147 = vld [vmem:[%s5730 + $0x251] sm:$0xff]
        %v6148 = vld [vmem:[%s5730 + $0x281] sm:$0xff]
        %v6149 = vld [vmem:[%s5730 + $0x291] sm:$0xff]
        %v6150 = vld [vmem:[%s5730 + $0x2a1] sm:$0xff]
        %v6151 = vld [vmem:[%s5730 + $0x2b1] sm:$0xff]
        %v6152 = vld [vmem:[%s5730 + $0x2c1] sm:$0xff]
        %v6153 = vld [vmem:[%s5730 + $0x2d1] sm:$0xff]
        %v6154 = vld [vmem:[%s5730 + $0x2e1] sm:$0xff]
        %v6155 = vld [vmem:[%s5730 + $0x2f1] sm:$0xff]
        %v6156 = vld [vmem:[%s5730 + $0x321] sm:$0xff]
        %v6157 = vld [vmem:[%s5730 + $0x331] sm:$0xff]
        %v6158 = vld [vmem:[%s5730 + $0x341] sm:$0xff]
        %v6159 = vld [vmem:[%s5730 + $0x351] sm:$0xff]
        %v6160 = vld [vmem:[%s5730 + $0x361] sm:$0xff]
        %v6161 = vld [vmem:[%s5730 + $0x371] sm:$0xff]
        %v6162 = vld [vmem:[%s5730 + $0x381] sm:$0xff]
        %v6163 = vld [vmem:[%s5730 + $0x391] sm:$0xff]
        %v6164 = vld [vmem:[%s5730 + $0x3c1] sm:$0xff]
        %v6165 = vld [vmem:[%s5730 + $0x3d1] sm:$0xff]
        %v6166 = vld [vmem:[%s5730 + $0x3e1] sm:$0xff]
        %v6167 = vld [vmem:[%s5730 + $0x3f1] sm:$0xff]
        %v6168 = vld [vmem:[%s5730 + $0x401] sm:$0xff]
        %v6169 = vld [vmem:[%s5730 + $0x411] sm:$0xff]
        %v6170 = vld [vmem:[%s5730 + $0x421] sm:$0xff]
        %v6171 = vld [vmem:[%s5730 + $0x431] sm:$0xff]
        %v6172 = vld [vmem:[%s5730 + $0x461] sm:$0xff]
        %v6173 = vld [vmem:[%s5730 + $0x471] sm:$0xff]
        %v6174 = vld [vmem:[%s5730 + $0x481] sm:$0xff]
        %v6175 = vld [vmem:[%s5730 + $0x491] sm:$0xff]
        %v6176 = vld [vmem:[%s5730 + $0x4a1] sm:$0xff]
        %v6177 = vld [vmem:[%s5730 + $0x4b1] sm:$0xff]
        %v6178 = vld [vmem:[%s5730 + $0x4c1] sm:$0xff]
        %v6179 = vld [vmem:[%s5730 + $0x4d1] sm:$0xff]
        %6244 = vrot.lane.b32.xlu0 %v6116, 64
        %v6245 = vpop.permute.xlu0 %6244
        %6246 = vrot.lane.b32.xlu0 %v6117, 64
        %v6247 = vpop.permute.xlu0 %6246
        %6248 = vrot.lane.b32.xlu0 %v6118, 64
        %v6249 = vpop.permute.xlu0 %6248
        %6250 = vrot.lane.b32.xlu0 %v6119, 64
        %v6251 = vpop.permute.xlu0 %6250
        %6252 = vrot.lane.b32.xlu0 %v6120, 64
        %v6253 = vpop.permute.xlu0 %6252
        %6254 = vrot.lane.b32.xlu0 %v6121, 64
        %v6255 = vpop.permute.xlu0 %6254
        %6256 = vrot.lane.b32.xlu0 %v6122, 64
        %v6257 = vpop.permute.xlu0 %6256
        %6258 = vrot.lane.b32.xlu0 %v6123, 64
        %v6259 = vpop.permute.xlu0 %6258
        %6260 = vrot.lane.b32.xlu0 %v6124, 64
        %v6261 = vpop.permute.xlu0 %6260
        %6262 = vrot.lane.b32.xlu0 %v6125, 64
        %v6263 = vpop.permute.xlu0 %6262
        %6264 = vrot.lane.b32.xlu0 %v6126, 64
        %v6265 = vpop.permute.xlu0 %6264
        %6266 = vrot.lane.b32.xlu0 %v6127, 64
        %v6267 = vpop.permute.xlu0 %6266
        %6268 = vrot.lane.b32.xlu0 %v6128, 64
        %v6269 = vpop.permute.xlu0 %6268
        %6270 = vrot.lane.b32.xlu0 %v6129, 64
        %v6271 = vpop.permute.xlu0 %6270
        %6272 = vrot.lane.b32.xlu0 %v6130, 64
        %v6273 = vpop.permute.xlu0 %6272
        %6274 = vrot.lane.b32.xlu0 %v6131, 64
        %v6275 = vpop.permute.xlu0 %6274
        %6276 = vrot.lane.b32.xlu0 %v6132, 64
        %v6277 = vpop.permute.xlu0 %6276
        %6278 = vrot.lane.b32.xlu0 %v6133, 64
        %v6279 = vpop.permute.xlu0 %6278
        %6280 = vrot.lane.b32.xlu0 %v6134, 64
        %v6281 = vpop.permute.xlu0 %6280
        %6282 = vrot.lane.b32.xlu0 %v6135, 64
        %v6283 = vpop.permute.xlu0 %6282
        %6284 = vrot.lane.b32.xlu0 %v6136, 64
        %v6285 = vpop.permute.xlu0 %6284
        %6286 = vrot.lane.b32.xlu0 %v6137, 64
        %v6287 = vpop.permute.xlu0 %6286
        %6288 = vrot.lane.b32.xlu0 %v6138, 64
        %v6289 = vpop.permute.xlu0 %6288
        %6290 = vrot.lane.b32.xlu0 %v6139, 64
        %v6291 = vpop.permute.xlu0 %6290
        %6292 = vrot.lane.b32.xlu0 %v6140, 64
        %v6293 = vpop.permute.xlu0 %6292
        %6294 = vrot.lane.b32.xlu0 %v6141, 64
        %v6295 = vpop.permute.xlu0 %6294
        %6296 = vrot.lane.b32.xlu0 %v6142, 64
        %v6297 = vpop.permute.xlu0 %6296
        %6298 = vrot.lane.b32.xlu0 %v6143, 64
        %v6299 = vpop.permute.xlu0 %6298
        %6300 = vrot.lane.b32.xlu0 %v6144, 64
        %v6301 = vpop.permute.xlu0 %6300
        %6302 = vrot.lane.b32.xlu0 %v6145, 64
        %v6303 = vpop.permute.xlu0 %6302
        %6304 = vrot.lane.b32.xlu0 %v6146, 64
        %v6305 = vpop.permute.xlu0 %6304
        %6306 = vrot.lane.b32.xlu0 %v6147, 64
        %v6307 = vpop.permute.xlu0 %6306
        %6308 = vrot.lane.b32.xlu0 %v6148, 64
        %v6309 = vpop.permute.xlu0 %6308
        %6310 = vrot.lane.b32.xlu0 %v6149, 64
        %v6311 = vpop.permute.xlu0 %6310
        %6312 = vrot.lane.b32.xlu0 %v6150, 64
        %v6313 = vpop.permute.xlu0 %6312
        %6314 = vrot.lane.b32.xlu0 %v6151, 64
        %v6315 = vpop.permute.xlu0 %6314
        %6316 = vrot.lane.b32.xlu0 %v6152, 64
        %v6317 = vpop.permute.xlu0 %6316
        %6318 = vrot.lane.b32.xlu0 %v6153, 64
        %v6319 = vpop.permute.xlu0 %6318
        %6320 = vrot.lane.b32.xlu0 %v6154, 64
        %v6321 = vpop.permute.xlu0 %6320
        %6322 = vrot.lane.b32.xlu0 %v6155, 64
        %v6323 = vpop.permute.xlu0 %6322
        %6324 = vrot.lane.b32.xlu0 %v6156, 64
        %v6325 = vpop.permute.xlu0 %6324
        %6326 = vrot.lane.b32.xlu0 %v6157, 64
        %v6327 = vpop.permute.xlu0 %6326
        %6328 = vrot.lane.b32.xlu0 %v6158, 64
        %v6329 = vpop.permute.xlu0 %6328
        %6330 = vrot.lane.b32.xlu0 %v6159, 64
        %v6331 = vpop.permute.xlu0 %6330
        %6332 = vrot.lane.b32.xlu0 %v6160, 64
        %v6333 = vpop.permute.xlu0 %6332
        %6334 = vrot.lane.b32.xlu0 %v6161, 64
        %v6335 = vpop.permute.xlu0 %6334
        %6336 = vrot.lane.b32.xlu0 %v6162, 64
        %v6337 = vpop.permute.xlu0 %6336
        %6338 = vrot.lane.b32.xlu0 %v6163, 64
        %v6339 = vpop.permute.xlu0 %6338
        %6340 = vrot.lane.b32.xlu0 %v6164, 64
        %v6341 = vpop.permute.xlu0 %6340
        %6342 = vrot.lane.b32.xlu0 %v6165, 64
        %v6343 = vpop.permute.xlu0 %6342
        %6344 = vrot.lane.b32.xlu0 %v6166, 64
        %v6345 = vpop.permute.xlu0 %6344
        %6346 = vrot.lane.b32.xlu0 %v6167, 64
        %v6347 = vpop.permute.xlu0 %6346
        %6348 = vrot.lane.b32.xlu0 %v6168, 64
        %v6349 = vpop.permute.xlu0 %6348
        %6350 = vrot.lane.b32.xlu0 %v6169, 64
        %v6351 = vpop.permute.xlu0 %6350
        %6352 = vrot.lane.b32.xlu0 %v6170, 64
        %v6353 = vpop.permute.xlu0 %6352
        %6354 = vrot.lane.b32.xlu0 %v6171, 64
        %v6355 = vpop.permute.xlu0 %6354
        %6356 = vrot.lane.b32.xlu0 %v6172, 64
        %v6357 = vpop.permute.xlu0 %6356
        %6358 = vrot.lane.b32.xlu0 %v6173, 64
        %v6359 = vpop.permute.xlu0 %6358
        %6360 = vrot.lane.b32.xlu0 %v6174, 64
        %v6361 = vpop.permute.xlu0 %6360
        %6362 = vrot.lane.b32.xlu0 %v6175, 64
        %v6363 = vpop.permute.xlu0 %6362
        %6364 = vrot.lane.b32.xlu0 %v6176, 64
        %v6365 = vpop.permute.xlu0 %6364
        %6366 = vrot.lane.b32.xlu0 %v6177, 64
        %v6367 = vpop.permute.xlu0 %6366
        %6368 = vrot.lane.b32.xlu0 %v6178, 64
        %v6369 = vpop.permute.xlu0 %6368
        %6370 = vrot.lane.b32.xlu0 %v6179, 64
        %v6371 = vpop.permute.xlu0 %6370
        %vm6436 = vcmask 556544
        %6437 = vst.msk [vmem:[#allocation2] sm:$0xff] %vm6436, %v6245
        %6438 = vst.msk [vmem:[#allocation2 + $0x8] sm:$0xff] %vm6436, %v6247
        %6439 = vst.msk [vmem:[#allocation2 + $0x10] sm:$0xff] %vm6436, %v6249
        %6440 = vst.msk [vmem:[#allocation2 + $0x18] sm:$0xff] %vm6436, %v6251
        %6441 = vst.msk [vmem:[#allocation2 + $0x20] sm:$0xff] %vm6436, %v6253
        %6442 = vst.msk [vmem:[#allocation2 + $0x28] sm:$0xff] %vm6436, %v6255
        %6443 = vst.msk [vmem:[#allocation2 + $0x30] sm:$0xff] %vm6436, %v6257
        %6444 = vst.msk [vmem:[#allocation2 + $0x38] sm:$0xff] %vm6436, %v6259
        %6445 = vst.msk [vmem:[#allocation2 + $0x40] sm:$0xff] %vm6436, %v6261
        %6446 = vst.msk [vmem:[#allocation2 + $0x48] sm:$0xff] %vm6436, %v6263
        %6447 = vst.msk [vmem:[#allocation2 + $0x50] sm:$0xff] %vm6436, %v6265
        %6448 = vst.msk [vmem:[#allocation2 + $0x58] sm:$0xff] %vm6436, %v6267
        %6449 = vst.msk [vmem:[#allocation2 + $0x60] sm:$0xff] %vm6436, %v6269
        %6450 = vst.msk [vmem:[#allocation2 + $0x68] sm:$0xff] %vm6436, %v6271
        %6451 = vst.msk [vmem:[#allocation2 + $0x70] sm:$0xff] %vm6436, %v6273
        %6452 = vst.msk [vmem:[#allocation2 + $0x78] sm:$0xff] %vm6436, %v6275
        %6453 = vst.msk [vmem:[#allocation2 + $0x80] sm:$0xff] %vm6436, %v6277
        %6454 = vst.msk [vmem:[#allocation2 + $0x88] sm:$0xff] %vm6436, %v6279
        %6455 = vst.msk [vmem:[#allocation2 + $0x90] sm:$0xff] %vm6436, %v6281
        %6456 = vst.msk [vmem:[#allocation2 + $0x98] sm:$0xff] %vm6436, %v6283
        %6457 = vst.msk [vmem:[#allocation2 + $0xa0] sm:$0xff] %vm6436, %v6285
        %6458 = vst.msk [vmem:[#allocation2 + $0xa8] sm:$0xff] %vm6436, %v6287
        %6459 = vst.msk [vmem:[#allocation2 + $0xb0] sm:$0xff] %vm6436, %v6289
        %6460 = vst.msk [vmem:[#allocation2 + $0xb8] sm:$0xff] %vm6436, %v6291
        %6461 = vst.msk [vmem:[#allocation2 + $0xc0] sm:$0xff] %vm6436, %v6293
        %6462 = vst.msk [vmem:[#allocation2 + $0xc8] sm:$0xff] %vm6436, %v6295
        %6463 = vst.msk [vmem:[#allocation2 + $0xd0] sm:$0xff] %vm6436, %v6297
        %6464 = vst.msk [vmem:[#allocation2 + $0xd8] sm:$0xff] %vm6436, %v6299
        %6465 = vst.msk [vmem:[#allocation2 + $0xe0] sm:$0xff] %vm6436, %v6301
        %6466 = vst.msk [vmem:[#allocation2 + $0xe8] sm:$0xff] %vm6436, %v6303
        %6467 = vst.msk [vmem:[#allocation2 + $0xf0] sm:$0xff] %vm6436, %v6305
        %6468 = vst.msk [vmem:[#allocation2 + $0xf8] sm:$0xff] %vm6436, %v6307
        %6469 = vst.msk [vmem:[#allocation2 + $0x100] sm:$0xff] %vm6436, %v6309
        %6470 = vst.msk [vmem:[#allocation2 + $0x108] sm:$0xff] %vm6436, %v6311
        %6471 = vst.msk [vmem:[#allocation2 + $0x110] sm:$0xff] %vm6436, %v6313
        %6472 = vst.msk [vmem:[#allocation2 + $0x118] sm:$0xff] %vm6436, %v6315
        %6473 = vst.msk [vmem:[#allocation2 + $0x120] sm:$0xff] %vm6436, %v6317
        %6474 = vst.msk [vmem:[#allocation2 + $0x128] sm:$0xff] %vm6436, %v6319
        %6475 = vst.msk [vmem:[#allocation2 + $0x130] sm:$0xff] %vm6436, %v6321
        %6476 = vst.msk [vmem:[#allocation2 + $0x138] sm:$0xff] %vm6436, %v6323
        %6477 = vst.msk [vmem:[#allocation2 + $0x140] sm:$0xff] %vm6436, %v6325
        %6478 = vst.msk [vmem:[#allocation2 + $0x148] sm:$0xff] %vm6436, %v6327
        %6479 = vst.msk [vmem:[#allocation2 + $0x150] sm:$0xff] %vm6436, %v6329
        %6480 = vst.msk [vmem:[#allocation2 + $0x158] sm:$0xff] %vm6436, %v6331
        %6481 = vst.msk [vmem:[#allocation2 + $0x160] sm:$0xff] %vm6436, %v6333
        %6482 = vst.msk [vmem:[#allocation2 + $0x168] sm:$0xff] %vm6436, %v6335
        %6483 = vst.msk [vmem:[#allocation2 + $0x170] sm:$0xff] %vm6436, %v6337
        %6484 = vst.msk [vmem:[#allocation2 + $0x178] sm:$0xff] %vm6436, %v6339
        %6485 = vst.msk [vmem:[#allocation2 + $0x180] sm:$0xff] %vm6436, %v6341
        %6486 = vst.msk [vmem:[#allocation2 + $0x188] sm:$0xff] %vm6436, %v6343
        %6487 = vst.msk [vmem:[#allocation2 + $0x190] sm:$0xff] %vm6436, %v6345
        %6488 = vst.msk [vmem:[#allocation2 + $0x198] sm:$0xff] %vm6436, %v6347
        %6489 = vst.msk [vmem:[#allocation2 + $0x1a0] sm:$0xff] %vm6436, %v6349
        %6490 = vst.msk [vmem:[#allocation2 + $0x1a8] sm:$0xff] %vm6436, %v6351
        %6491 = vst.msk [vmem:[#allocation2 + $0x1b0] sm:$0xff] %vm6436, %v6353
        %6492 = vst.msk [vmem:[#allocation2 + $0x1b8] sm:$0xff] %vm6436, %v6355
        %6493 = vst.msk [vmem:[#allocation2 + $0x1c0] sm:$0xff] %vm6436, %v6357
        %6494 = vst.msk [vmem:[#allocation2 + $0x1c8] sm:$0xff] %vm6436, %v6359
        %6495 = vst.msk [vmem:[#allocation2 + $0x1d0] sm:$0xff] %vm6436, %v6361
        %6496 = vst.msk [vmem:[#allocation2 + $0x1d8] sm:$0xff] %vm6436, %v6363
        %6497 = vst.msk [vmem:[#allocation2 + $0x1e0] sm:$0xff] %vm6436, %v6365
        %6498 = vst.msk [vmem:[#allocation2 + $0x1e8] sm:$0xff] %vm6436, %v6367
        %6499 = vst.msk [vmem:[#allocation2 + $0x1f0] sm:$0xff] %vm6436, %v6369
        %6500 = vst.msk [vmem:[#allocation2 + $0x1f8] sm:$0xff] %vm6436, %v6371
        %v6501 = vld [vmem:[%s5730 + $0x2] sm:$0xff]
        %v6502 = vld [vmem:[%s5730 + $0x12] sm:$0xff]
        %v6503 = vld [vmem:[%s5730 + $0x22] sm:$0xff]
        %v6504 = vld [vmem:[%s5730 + $0x32] sm:$0xff]
        %v6505 = vld [vmem:[%s5730 + $0x42] sm:$0xff]
        %v6506 = vld [vmem:[%s5730 + $0x52] sm:$0xff]
        %v6507 = vld [vmem:[%s5730 + $0x62] sm:$0xff]
        %v6508 = vld [vmem:[%s5730 + $0x72] sm:$0xff]
        %v6509 = vld [vmem:[%s5730 + $0xa2] sm:$0xff]
        %v6510 = vld [vmem:[%s5730 + $0xb2] sm:$0xff]
        %v6511 = vld [vmem:[%s5730 + $0xc2] sm:$0xff]
        %v6512 = vld [vmem:[%s5730 + $0xd2] sm:$0xff]
        %v6513 = vld [vmem:[%s5730 + $0xe2] sm:$0xff]
        %v6514 = vld [vmem:[%s5730 + $0xf2] sm:$0xff]
        %v6515 = vld [vmem:[%s5730 + $0x102] sm:$0xff]
        %v6516 = vld [vmem:[%s5730 + $0x112] sm:$0xff]
        %v6517 = vld [vmem:[%s5730 + $0x142] sm:$0xff]
        %v6518 = vld [vmem:[%s5730 + $0x152] sm:$0xff]
        %v6519 = vld [vmem:[%s5730 + $0x162] sm:$0xff]
        %v6520 = vld [vmem:[%s5730 + $0x172] sm:$0xff]
        %v6521 = vld [vmem:[%s5730 + $0x182] sm:$0xff]
        %v6522 = vld [vmem:[%s5730 + $0x192] sm:$0xff]
        %v6523 = vld [vmem:[%s5730 + $0x1a2] sm:$0xff]
        %v6524 = vld [vmem:[%s5730 + $0x1b2] sm:$0xff]
        %v6525 = vld [vmem:[%s5730 + $0x1e2] sm:$0xff]
        %v6526 = vld [vmem:[%s5730 + $0x1f2] sm:$0xff]
        %v6527 = vld [vmem:[%s5730 + $0x202] sm:$0xff]
        %v6528 = vld [vmem:[%s5730 + $0x212] sm:$0xff]
        %v6529 = vld [vmem:[%s5730 + $0x222] sm:$0xff]
        %v6530 = vld [vmem:[%s5730 + $0x232] sm:$0xff]
        %v6531 = vld [vmem:[%s5730 + $0x242] sm:$0xff]
        %v6532 = vld [vmem:[%s5730 + $0x252] sm:$0xff]
        %v6533 = vld [vmem:[%s5730 + $0x282] sm:$0xff]
        %v6534 = vld [vmem:[%s5730 + $0x292] sm:$0xff]
        %v6535 = vld [vmem:[%s5730 + $0x2a2] sm:$0xff]
        %v6536 = vld [vmem:[%s5730 + $0x2b2] sm:$0xff]
        %v6537 = vld [vmem:[%s5730 + $0x2c2] sm:$0xff]
        %v6538 = vld [vmem:[%s5730 + $0x2d2] sm:$0xff]
        %v6539 = vld [vmem:[%s5730 + $0x2e2] sm:$0xff]
        %v6540 = vld [vmem:[%s5730 + $0x2f2] sm:$0xff]
        %v6541 = vld [vmem:[%s5730 + $0x322] sm:$0xff]
        %v6542 = vld [vmem:[%s5730 + $0x332] sm:$0xff]
        %v6543 = vld [vmem:[%s5730 + $0x342] sm:$0xff]
        %v6544 = vld [vmem:[%s5730 + $0x352] sm:$0xff]
        %v6545 = vld [vmem:[%s5730 + $0x362] sm:$0xff]
        %v6546 = vld [vmem:[%s5730 + $0x372] sm:$0xff]
        %v6547 = vld [vmem:[%s5730 + $0x382] sm:$0xff]
        %v6548 = vld [vmem:[%s5730 + $0x392] sm:$0xff]
        %v6549 = vld [vmem:[%s5730 + $0x3c2] sm:$0xff]
        %v6550 = vld [vmem:[%s5730 + $0x3d2] sm:$0xff]
        %v6551 = vld [vmem:[%s5730 + $0x3e2] sm:$0xff]
        %v6552 = vld [vmem:[%s5730 + $0x3f2] sm:$0xff]
        %v6553 = vld [vmem:[%s5730 + $0x402] sm:$0xff]
        %v6554 = vld [vmem:[%s5730 + $0x412] sm:$0xff]
        %v6555 = vld [vmem:[%s5730 + $0x422] sm:$0xff]
        %v6556 = vld [vmem:[%s5730 + $0x432] sm:$0xff]
        %v6557 = vld [vmem:[%s5730 + $0x462] sm:$0xff]
        %v6558 = vld [vmem:[%s5730 + $0x472] sm:$0xff]
        %v6559 = vld [vmem:[%s5730 + $0x482] sm:$0xff]
        %v6560 = vld [vmem:[%s5730 + $0x492] sm:$0xff]
        %v6561 = vld [vmem:[%s5730 + $0x4a2] sm:$0xff]
        %v6562 = vld [vmem:[%s5730 + $0x4b2] sm:$0xff]
        %v6563 = vld [vmem:[%s5730 + $0x4c2] sm:$0xff]
        %v6564 = vld [vmem:[%s5730 + $0x4d2] sm:$0xff]
        %6629 = vrot.lane.b32.xlu0 %v6501, 68
        %v6630 = vpop.permute.xlu0 %6629
        %6631 = vrot.lane.b32.xlu0 %v6502, 68
        %v6632 = vpop.permute.xlu0 %6631
        %6633 = vrot.lane.b32.xlu0 %v6503, 68
        %v6634 = vpop.permute.xlu0 %6633
        %6635 = vrot.lane.b32.xlu0 %v6504, 68
        %v6636 = vpop.permute.xlu0 %6635
        %6637 = vrot.lane.b32.xlu0 %v6505, 68
        %v6638 = vpop.permute.xlu0 %6637
        %6639 = vrot.lane.b32.xlu0 %v6506, 68
        %v6640 = vpop.permute.xlu0 %6639
        %6641 = vrot.lane.b32.xlu0 %v6507, 68
        %v6642 = vpop.permute.xlu0 %6641
        %6643 = vrot.lane.b32.xlu0 %v6508, 68
        %v6644 = vpop.permute.xlu0 %6643
        %6645 = vrot.lane.b32.xlu0 %v6509, 68
        %v6646 = vpop.permute.xlu0 %6645
        %6647 = vrot.lane.b32.xlu0 %v6510, 68
        %v6648 = vpop.permute.xlu0 %6647
        %6649 = vrot.lane.b32.xlu0 %v6511, 68
        %v6650 = vpop.permute.xlu0 %6649
        %6651 = vrot.lane.b32.xlu0 %v6512, 68
        %v6652 = vpop.permute.xlu0 %6651
        %6653 = vrot.lane.b32.xlu0 %v6513, 68
        %v6654 = vpop.permute.xlu0 %6653
        %6655 = vrot.lane.b32.xlu0 %v6514, 68
        %v6656 = vpop.permute.xlu0 %6655
        %6657 = vrot.lane.b32.xlu0 %v6515, 68
        %v6658 = vpop.permute.xlu0 %6657
        %6659 = vrot.lane.b32.xlu0 %v6516, 68
        %v6660 = vpop.permute.xlu0 %6659
        %6661 = vrot.lane.b32.xlu0 %v6517, 68
        %v6662 = vpop.permute.xlu0 %6661
        %6663 = vrot.lane.b32.xlu0 %v6518, 68
        %v6664 = vpop.permute.xlu0 %6663
        %6665 = vrot.lane.b32.xlu0 %v6519, 68
        %v6666 = vpop.permute.xlu0 %6665
        %6667 = vrot.lane.b32.xlu0 %v6520, 68
        %v6668 = vpop.permute.xlu0 %6667
        %6669 = vrot.lane.b32.xlu0 %v6521, 68
        %v6670 = vpop.permute.xlu0 %6669
        %6671 = vrot.lane.b32.xlu0 %v6522, 68
        %v6672 = vpop.permute.xlu0 %6671
        %6673 = vrot.lane.b32.xlu0 %v6523, 68
        %v6674 = vpop.permute.xlu0 %6673
        %6675 = vrot.lane.b32.xlu0 %v6524, 68
        %v6676 = vpop.permute.xlu0 %6675
        %6677 = vrot.lane.b32.xlu0 %v6525, 68
        %v6678 = vpop.permute.xlu0 %6677
        %6679 = vrot.lane.b32.xlu0 %v6526, 68
        %v6680 = vpop.permute.xlu0 %6679
        %6681 = vrot.lane.b32.xlu0 %v6527, 68
        %v6682 = vpop.permute.xlu0 %6681
        %6683 = vrot.lane.b32.xlu0 %v6528, 68
        %v6684 = vpop.permute.xlu0 %6683
        %6685 = vrot.lane.b32.xlu0 %v6529, 68
        %v6686 = vpop.permute.xlu0 %6685
        %6687 = vrot.lane.b32.xlu0 %v6530, 68
        %v6688 = vpop.permute.xlu0 %6687
        %6689 = vrot.lane.b32.xlu0 %v6531, 68
        %v6690 = vpop.permute.xlu0 %6689
        %6691 = vrot.lane.b32.xlu0 %v6532, 68
        %v6692 = vpop.permute.xlu0 %6691
        %6693 = vrot.lane.b32.xlu0 %v6533, 68
        %v6694 = vpop.permute.xlu0 %6693
        %6695 = vrot.lane.b32.xlu0 %v6534, 68
        %v6696 = vpop.permute.xlu0 %6695
        %6697 = vrot.lane.b32.xlu0 %v6535, 68
        %v6698 = vpop.permute.xlu0 %6697
        %6699 = vrot.lane.b32.xlu0 %v6536, 68
        %v6700 = vpop.permute.xlu0 %6699
        %6701 = vrot.lane.b32.xlu0 %v6537, 68
        %v6702 = vpop.permute.xlu0 %6701
        %6703 = vrot.lane.b32.xlu0 %v6538, 68
        %v6704 = vpop.permute.xlu0 %6703
        %6705 = vrot.lane.b32.xlu0 %v6539, 68
        %v6706 = vpop.permute.xlu0 %6705
        %6707 = vrot.lane.b32.xlu0 %v6540, 68
        %v6708 = vpop.permute.xlu0 %6707
        %6709 = vrot.lane.b32.xlu0 %v6541, 68
        %v6710 = vpop.permute.xlu0 %6709
        %6711 = vrot.lane.b32.xlu0 %v6542, 68
        %v6712 = vpop.permute.xlu0 %6711
        %6713 = vrot.lane.b32.xlu0 %v6543, 68
        %v6714 = vpop.permute.xlu0 %6713
        %6715 = vrot.lane.b32.xlu0 %v6544, 68
        %v6716 = vpop.permute.xlu0 %6715
        %6717 = vrot.lane.b32.xlu0 %v6545, 68
        %v6718 = vpop.permute.xlu0 %6717
        %6719 = vrot.lane.b32.xlu0 %v6546, 68
        %v6720 = vpop.permute.xlu0 %6719
        %6721 = vrot.lane.b32.xlu0 %v6547, 68
        %v6722 = vpop.permute.xlu0 %6721
        %6723 = vrot.lane.b32.xlu0 %v6548, 68
        %v6724 = vpop.permute.xlu0 %6723
        %6725 = vrot.lane.b32.xlu0 %v6549, 68
        %v6726 = vpop.permute.xlu0 %6725
        %6727 = vrot.lane.b32.xlu0 %v6550, 68
        %v6728 = vpop.permute.xlu0 %6727
        %6729 = vrot.lane.b32.xlu0 %v6551, 68
        %v6730 = vpop.permute.xlu0 %6729
        %6731 = vrot.lane.b32.xlu0 %v6552, 68
        %v6732 = vpop.permute.xlu0 %6731
        %6733 = vrot.lane.b32.xlu0 %v6553, 68
        %v6734 = vpop.permute.xlu0 %6733
        %6735 = vrot.lane.b32.xlu0 %v6554, 68
        %v6736 = vpop.permute.xlu0 %6735
        %6737 = vrot.lane.b32.xlu0 %v6555, 68
        %v6738 = vpop.permute.xlu0 %6737
        %6739 = vrot.lane.b32.xlu0 %v6556, 68
        %v6740 = vpop.permute.xlu0 %6739
        %6741 = vrot.lane.b32.xlu0 %v6557, 68
        %v6742 = vpop.permute.xlu0 %6741
        %6743 = vrot.lane.b32.xlu0 %v6558, 68
        %v6744 = vpop.permute.xlu0 %6743
        %6745 = vrot.lane.b32.xlu0 %v6559, 68
        %v6746 = vpop.permute.xlu0 %6745
        %6747 = vrot.lane.b32.xlu0 %v6560, 68
        %v6748 = vpop.permute.xlu0 %6747
        %6749 = vrot.lane.b32.xlu0 %v6561, 68
        %v6750 = vpop.permute.xlu0 %6749
        %6751 = vrot.lane.b32.xlu0 %v6562, 68
        %v6752 = vpop.permute.xlu0 %6751
        %6753 = vrot.lane.b32.xlu0 %v6563, 68
        %v6754 = vpop.permute.xlu0 %6753
        %6755 = vrot.lane.b32.xlu0 %v6564, 68
        %v6756 = vpop.permute.xlu0 %6755
        %vm6821 = vcmask 589344
        %6822 = vst.msk [vmem:[#allocation2] sm:$0xff] %vm6821, %v6630
        %6823 = vst.msk [vmem:[#allocation2 + $0x8] sm:$0xff] %vm6821, %v6632
        %6824 = vst.msk [vmem:[#allocation2 + $0x10] sm:$0xff] %vm6821, %v6634
        %6825 = vst.msk [vmem:[#allocation2 + $0x18] sm:$0xff] %vm6821, %v6636
        %6826 = vst.msk [vmem:[#allocation2 + $0x20] sm:$0xff] %vm6821, %v6638
        %6827 = vst.msk [vmem:[#allocation2 + $0x28] sm:$0xff] %vm6821, %v6640
        %6828 = vst.msk [vmem:[#allocation2 + $0x30] sm:$0xff] %vm6821, %v6642
        %6829 = vst.msk [vmem:[#allocation2 + $0x38] sm:$0xff] %vm6821, %v6644
        %6830 = vst.msk [vmem:[#allocation2 + $0x40] sm:$0xff] %vm6821, %v6646
        %6831 = vst.msk [vmem:[#allocation2 + $0x48] sm:$0xff] %vm6821, %v6648
        %6832 = vst.msk [vmem:[#allocation2 + $0x50] sm:$0xff] %vm6821, %v6650
        %6833 = vst.msk [vmem:[#allocation2 + $0x58] sm:$0xff] %vm6821, %v6652
        %6834 = vst.msk [vmem:[#allocation2 + $0x60] sm:$0xff] %vm6821, %v6654
        %6835 = vst.msk [vmem:[#allocation2 + $0x68] sm:$0xff] %vm6821, %v6656
        %6836 = vst.msk [vmem:[#allocation2 + $0x70] sm:$0xff] %vm6821, %v6658
        %6837 = vst.msk [vmem:[#allocation2 + $0x78] sm:$0xff] %vm6821, %v6660
        %6838 = vst.msk [vmem:[#allocation2 + $0x80] sm:$0xff] %vm6821, %v6662
        %6839 = vst.msk [vmem:[#allocation2 + $0x88] sm:$0xff] %vm6821, %v6664
        %6840 = vst.msk [vmem:[#allocation2 + $0x90] sm:$0xff] %vm6821, %v6666
        %6841 = vst.msk [vmem:[#allocation2 + $0x98] sm:$0xff] %vm6821, %v6668
        %6842 = vst.msk [vmem:[#allocation2 + $0xa0] sm:$0xff] %vm6821, %v6670
        %6843 = vst.msk [vmem:[#allocation2 + $0xa8] sm:$0xff] %vm6821, %v6672
        %6844 = vst.msk [vmem:[#allocation2 + $0xb0] sm:$0xff] %vm6821, %v6674
        %6845 = vst.msk [vmem:[#allocation2 + $0xb8] sm:$0xff] %vm6821, %v6676
        %6846 = vst.msk [vmem:[#allocation2 + $0xc0] sm:$0xff] %vm6821, %v6678
        %6847 = vst.msk [vmem:[#allocation2 + $0xc8] sm:$0xff] %vm6821, %v6680
        %6848 = vst.msk [vmem:[#allocation2 + $0xd0] sm:$0xff] %vm6821, %v6682
        %6849 = vst.msk [vmem:[#allocation2 + $0xd8] sm:$0xff] %vm6821, %v6684
        %6850 = vst.msk [vmem:[#allocation2 + $0xe0] sm:$0xff] %vm6821, %v6686
        %6851 = vst.msk [vmem:[#allocation2 + $0xe8] sm:$0xff] %vm6821, %v6688
        %6852 = vst.msk [vmem:[#allocation2 + $0xf0] sm:$0xff] %vm6821, %v6690
        %6853 = vst.msk [vmem:[#allocation2 + $0xf8] sm:$0xff] %vm6821, %v6692
        %6854 = vst.msk [vmem:[#allocation2 + $0x100] sm:$0xff] %vm6821, %v6694
        %6855 = vst.msk [vmem:[#allocation2 + $0x108] sm:$0xff] %vm6821, %v6696
        %6856 = vst.msk [vmem:[#allocation2 + $0x110] sm:$0xff] %vm6821, %v6698
        %6857 = vst.msk [vmem:[#allocation2 + $0x118] sm:$0xff] %vm6821, %v6700
        %6858 = vst.msk [vmem:[#allocation2 + $0x120] sm:$0xff] %vm6821, %v6702
        %6859 = vst.msk [vmem:[#allocation2 + $0x128] sm:$0xff] %vm6821, %v6704
        %6860 = vst.msk [vmem:[#allocation2 + $0x130] sm:$0xff] %vm6821, %v6706
        %6861 = vst.msk [vmem:[#allocation2 + $0x138] sm:$0xff] %vm6821, %v6708
        %6862 = vst.msk [vmem:[#allocation2 + $0x140] sm:$0xff] %vm6821, %v6710
        %6863 = vst.msk [vmem:[#allocation2 + $0x148] sm:$0xff] %vm6821, %v6712
        %6864 = vst.msk [vmem:[#allocation2 + $0x150] sm:$0xff] %vm6821, %v6714
        %6865 = vst.msk [vmem:[#allocation2 + $0x158] sm:$0xff] %vm6821, %v6716
        %6866 = vst.msk [vmem:[#allocation2 + $0x160] sm:$0xff] %vm6821, %v6718
        %6867 = vst.msk [vmem:[#allocation2 + $0x168] sm:$0xff] %vm6821, %v6720
        %6868 = vst.msk [vmem:[#allocation2 + $0x170] sm:$0xff] %vm6821, %v6722
        %6869 = vst.msk [vmem:[#allocation2 + $0x178] sm:$0xff] %vm6821, %v6724
        %6870 = vst.msk [vmem:[#allocation2 + $0x180] sm:$0xff] %vm6821, %v6726
        %6871 = vst.msk [vmem:[#allocation2 + $0x188] sm:$0xff] %vm6821, %v6728
        %6872 = vst.msk [vmem:[#allocation2 + $0x190] sm:$0xff] %vm6821, %v6730
        %6873 = vst.msk [vmem:[#allocation2 + $0x198] sm:$0xff] %vm6821, %v6732
        %6874 = vst.msk [vmem:[#allocation2 + $0x1a0] sm:$0xff] %vm6821, %v6734
        %6875 = vst.msk [vmem:[#allocation2 + $0x1a8] sm:$0xff] %vm6821, %v6736
        %6876 = vst.msk [vmem:[#allocation2 + $0x1b0] sm:$0xff] %vm6821, %v6738
        %6877 = vst.msk [vmem:[#allocation2 + $0x1b8] sm:$0xff] %vm6821, %v6740
        %6878 = vst.msk [vmem:[#allocation2 + $0x1c0] sm:$0xff] %vm6821, %v6742
        %6879 = vst.msk [vmem:[#allocation2 + $0x1c8] sm:$0xff] %vm6821, %v6744
        %6880 = vst.msk [vmem:[#allocation2 + $0x1d0] sm:$0xff] %vm6821, %v6746
        %6881 = vst.msk [vmem:[#allocation2 + $0x1d8] sm:$0xff] %vm6821, %v6748
        %6882 = vst.msk [vmem:[#allocation2 + $0x1e0] sm:$0xff] %vm6821, %v6750
        %6883 = vst.msk [vmem:[#allocation2 + $0x1e8] sm:$0xff] %vm6821, %v6752
        %6884 = vst.msk [vmem:[#allocation2 + $0x1f0] sm:$0xff] %vm6821, %v6754
        %6885 = vst.msk [vmem:[#allocation2 + $0x1f8] sm:$0xff] %vm6821, %v6756
        %s6886 = scalar_lea.vmem %s141, 320
        %v6887 = vld [vmem:[%s6886] sm:$0xff]
        %v6888 = vld [vmem:[%s6886 + $0x10] sm:$0xff]
        %v6889 = vld [vmem:[%s6886 + $0x20] sm:$0xff]
        %v6890 = vld [vmem:[%s6886 + $0x30] sm:$0xff]
        %v6891 = vld [vmem:[%s6886 + $0x40] sm:$0xff]
        %v6892 = vld [vmem:[%s6886 + $0x50] sm:$0xff]
        %v6893 = vld [vmem:[%s6886 + $0x60] sm:$0xff]
        %v6894 = vld [vmem:[%s6886 + $0x70] sm:$0xff]
        %v6895 = vld [vmem:[%s6886 + $0xa0] sm:$0xff]
        %v6896 = vld [vmem:[%s6886 + $0xb0] sm:$0xff]
        %v6897 = vld [vmem:[%s6886 + $0xc0] sm:$0xff]
        %v6898 = vld [vmem:[%s6886 + $0xd0] sm:$0xff]
        %v6899 = vld [vmem:[%s6886 + $0xe0] sm:$0xff]
        %v6900 = vld [vmem:[%s6886 + $0xf0] sm:$0xff]
        %v6901 = vld [vmem:[%s6886 + $0x100] sm:$0xff]
        %v6902 = vld [vmem:[%s6886 + $0x110] sm:$0xff]
        %v6903 = vld [vmem:[%s6886 + $0x140] sm:$0xff]
        %v6904 = vld [vmem:[%s6886 + $0x150] sm:$0xff]
        %v6905 = vld [vmem:[%s6886 + $0x160] sm:$0xff]
        %v6906 = vld [vmem:[%s6886 + $0x170] sm:$0xff]
        %v6907 = vld [vmem:[%s6886 + $0x180] sm:$0xff]
        %v6908 = vld [vmem:[%s6886 + $0x190] sm:$0xff]
        %v6909 = vld [vmem:[%s6886 + $0x1a0] sm:$0xff]
        %v6910 = vld [vmem:[%s6886 + $0x1b0] sm:$0xff]
        %v6911 = vld [vmem:[%s6886 + $0x1e0] sm:$0xff]
        %v6912 = vld [vmem:[%s6886 + $0x1f0] sm:$0xff]
        %v6913 = vld [vmem:[%s6886 + $0x200] sm:$0xff]
        %v6914 = vld [vmem:[%s6886 + $0x210] sm:$0xff]
        %v6915 = vld [vmem:[%s6886 + $0x220] sm:$0xff]
        %v6916 = vld [vmem:[%s6886 + $0x230] sm:$0xff]
        %v6917 = vld [vmem:[%s6886 + $0x240] sm:$0xff]
        %v6918 = vld [vmem:[%s6886 + $0x250] sm:$0xff]
        %v6919 = vld [vmem:[%s6886 + $0x280] sm:$0xff]
        %v6920 = vld [vmem:[%s6886 + $0x290] sm:$0xff]
        %v6921 = vld [vmem:[%s6886 + $0x2a0] sm:$0xff]
        %v6922 = vld [vmem:[%s6886 + $0x2b0] sm:$0xff]
        %v6923 = vld [vmem:[%s6886 + $0x2c0] sm:$0xff]
        %v6924 = vld [vmem:[%s6886 + $0x2d0] sm:$0xff]
        %v6925 = vld [vmem:[%s6886 + $0x2e0] sm:$0xff]
        %v6926 = vld [vmem:[%s6886 + $0x2f0] sm:$0xff]
        %v6927 = vld [vmem:[%s6886 + $0x320] sm:$0xff]
        %v6928 = vld [vmem:[%s6886 + $0x330] sm:$0xff]
        %v6929 = vld [vmem:[%s6886 + $0x340] sm:$0xff]
        %v6930 = vld [vmem:[%s6886 + $0x350] sm:$0xff]
        %v6931 = vld [vmem:[%s6886 + $0x360] sm:$0xff]
        %v6932 = vld [vmem:[%s6886 + $0x370] sm:$0xff]
        %v6933 = vld [vmem:[%s6886 + $0x380] sm:$0xff]
        %v6934 = vld [vmem:[%s6886 + $0x390] sm:$0xff]
        %v6935 = vld [vmem:[%s6886 + $0x3c0] sm:$0xff]
        %v6936 = vld [vmem:[%s6886 + $0x3d0] sm:$0xff]
        %v6937 = vld [vmem:[%s6886 + $0x3e0] sm:$0xff]
        %v6938 = vld [vmem:[%s6886 + $0x3f0] sm:$0xff]
        %v6939 = vld [vmem:[%s6886 + $0x400] sm:$0xff]
        %v6940 = vld [vmem:[%s6886 + $0x410] sm:$0xff]
        %v6941 = vld [vmem:[%s6886 + $0x420] sm:$0xff]
        %v6942 = vld [vmem:[%s6886 + $0x430] sm:$0xff]
        %v6943 = vld [vmem:[%s6886 + $0x460] sm:$0xff]
        %v6944 = vld [vmem:[%s6886 + $0x470] sm:$0xff]
        %v6945 = vld [vmem:[%s6886 + $0x480] sm:$0xff]
        %v6946 = vld [vmem:[%s6886 + $0x490] sm:$0xff]
        %v6947 = vld [vmem:[%s6886 + $0x4a0] sm:$0xff]
        %v6948 = vld [vmem:[%s6886 + $0x4b0] sm:$0xff]
        %v6949 = vld [vmem:[%s6886 + $0x4c0] sm:$0xff]
        %v6950 = vld [vmem:[%s6886 + $0x4d0] sm:$0xff]
        %7015 = vrot.lane.b32.xlu0 %v6887, 72
        %v7016 = vpop.permute.xlu0 %7015
        %7017 = vrot.lane.b32.xlu0 %v6888, 72
        %v7018 = vpop.permute.xlu0 %7017
        %7019 = vrot.lane.b32.xlu0 %v6889, 72
        %v7020 = vpop.permute.xlu0 %7019
        %7021 = vrot.lane.b32.xlu0 %v6890, 72
        %v7022 = vpop.permute.xlu0 %7021
        %7023 = vrot.lane.b32.xlu0 %v6891, 72
        %v7024 = vpop.permute.xlu0 %7023
        %7025 = vrot.lane.b32.xlu0 %v6892, 72
        %v7026 = vpop.permute.xlu0 %7025
        %7027 = vrot.lane.b32.xlu0 %v6893, 72
        %v7028 = vpop.permute.xlu0 %7027
        %7029 = vrot.lane.b32.xlu0 %v6894, 72
        %v7030 = vpop.permute.xlu0 %7029
        %7031 = vrot.lane.b32.xlu0 %v6895, 72
        %v7032 = vpop.permute.xlu0 %7031
        %7033 = vrot.lane.b32.xlu0 %v6896, 72
        %v7034 = vpop.permute.xlu0 %7033
        %7035 = vrot.lane.b32.xlu0 %v6897, 72
        %v7036 = vpop.permute.xlu0 %7035
        %7037 = vrot.lane.b32.xlu0 %v6898, 72
        %v7038 = vpop.permute.xlu0 %7037
        %7039 = vrot.lane.b32.xlu0 %v6899, 72
        %v7040 = vpop.permute.xlu0 %7039
        %7041 = vrot.lane.b32.xlu0 %v6900, 72
        %v7042 = vpop.permute.xlu0 %7041
        %7043 = vrot.lane.b32.xlu0 %v6901, 72
        %v7044 = vpop.permute.xlu0 %7043
        %7045 = vrot.lane.b32.xlu0 %v6902, 72
        %v7046 = vpop.permute.xlu0 %7045
        %7047 = vrot.lane.b32.xlu0 %v6903, 72
        %v7048 = vpop.permute.xlu0 %7047
        %7049 = vrot.lane.b32.xlu0 %v6904, 72
        %v7050 = vpop.permute.xlu0 %7049
        %7051 = vrot.lane.b32.xlu0 %v6905, 72
        %v7052 = vpop.permute.xlu0 %7051
        %7053 = vrot.lane.b32.xlu0 %v6906, 72
        %v7054 = vpop.permute.xlu0 %7053
        %7055 = vrot.lane.b32.xlu0 %v6907, 72
        %v7056 = vpop.permute.xlu0 %7055
        %7057 = vrot.lane.b32.xlu0 %v6908, 72
        %v7058 = vpop.permute.xlu0 %7057
        %7059 = vrot.lane.b32.xlu0 %v6909, 72
        %v7060 = vpop.permute.xlu0 %7059
        %7061 = vrot.lane.b32.xlu0 %v6910, 72
        %v7062 = vpop.permute.xlu0 %7061
        %7063 = vrot.lane.b32.xlu0 %v6911, 72
        %v7064 = vpop.permute.xlu0 %7063
        %7065 = vrot.lane.b32.xlu0 %v6912, 72
        %v7066 = vpop.permute.xlu0 %7065
        %7067 = vrot.lane.b32.xlu0 %v6913, 72
        %v7068 = vpop.permute.xlu0 %7067
        %7069 = vrot.lane.b32.xlu0 %v6914, 72
        %v7070 = vpop.permute.xlu0 %7069
        %7071 = vrot.lane.b32.xlu0 %v6915, 72
        %v7072 = vpop.permute.xlu0 %7071
        %7073 = vrot.lane.b32.xlu0 %v6916, 72
        %v7074 = vpop.permute.xlu0 %7073
        %7075 = vrot.lane.b32.xlu0 %v6917, 72
        %v7076 = vpop.permute.xlu0 %7075
        %7077 = vrot.lane.b32.xlu0 %v6918, 72
        %v7078 = vpop.permute.xlu0 %7077
        %7079 = vrot.lane.b32.xlu0 %v6919, 72
        %v7080 = vpop.permute.xlu0 %7079
        %7081 = vrot.lane.b32.xlu0 %v6920, 72
        %v7082 = vpop.permute.xlu0 %7081
        %7083 = vrot.lane.b32.xlu0 %v6921, 72
        %v7084 = vpop.permute.xlu0 %7083
        %7085 = vrot.lane.b32.xlu0 %v6922, 72
        %v7086 = vpop.permute.xlu0 %7085
        %7087 = vrot.lane.b32.xlu0 %v6923, 72
        %v7088 = vpop.permute.xlu0 %7087
        %7089 = vrot.lane.b32.xlu0 %v6924, 72
        %v7090 = vpop.permute.xlu0 %7089
        %7091 = vrot.lane.b32.xlu0 %v6925, 72
        %v7092 = vpop.permute.xlu0 %7091
        %7093 = vrot.lane.b32.xlu0 %v6926, 72
        %v7094 = vpop.permute.xlu0 %7093
        %7095 = vrot.lane.b32.xlu0 %v6927, 72
        %v7096 = vpop.permute.xlu0 %7095
        %7097 = vrot.lane.b32.xlu0 %v6928, 72
        %v7098 = vpop.permute.xlu0 %7097
        %7099 = vrot.lane.b32.xlu0 %v6929, 72
        %v7100 = vpop.permute.xlu0 %7099
        %7101 = vrot.lane.b32.xlu0 %v6930, 72
        %v7102 = vpop.permute.xlu0 %7101
        %7103 = vrot.lane.b32.xlu0 %v6931, 72
        %v7104 = vpop.permute.xlu0 %7103
        %7105 = vrot.lane.b32.xlu0 %v6932, 72
        %v7106 = vpop.permute.xlu0 %7105
        %7107 = vrot.lane.b32.xlu0 %v6933, 72
        %v7108 = vpop.permute.xlu0 %7107
        %7109 = vrot.lane.b32.xlu0 %v6934, 72
        %v7110 = vpop.permute.xlu0 %7109
        %7111 = vrot.lane.b32.xlu0 %v6935, 72
        %v7112 = vpop.permute.xlu0 %7111
        %7113 = vrot.lane.b32.xlu0 %v6936, 72
        %v7114 = vpop.permute.xlu0 %7113
        %7115 = vrot.lane.b32.xlu0 %v6937, 72
        %v7116 = vpop.permute.xlu0 %7115
        %7117 = vrot.lane.b32.xlu0 %v6938, 72
        %v7118 = vpop.permute.xlu0 %7117
        %7119 = vrot.lane.b32.xlu0 %v6939, 72
        %v7120 = vpop.permute.xlu0 %7119
        %7121 = vrot.lane.b32.xlu0 %v6940, 72
        %v7122 = vpop.permute.xlu0 %7121
        %7123 = vrot.lane.b32.xlu0 %v6941, 72
        %v7124 = vpop.permute.xlu0 %7123
        %7125 = vrot.lane.b32.xlu0 %v6942, 72
        %v7126 = vpop.permute.xlu0 %7125
        %7127 = vrot.lane.b32.xlu0 %v6943, 72
        %v7128 = vpop.permute.xlu0 %7127
        %7129 = vrot.lane.b32.xlu0 %v6944, 72
        %v7130 = vpop.permute.xlu0 %7129
        %7131 = vrot.lane.b32.xlu0 %v6945, 72
        %v7132 = vpop.permute.xlu0 %7131
        %7133 = vrot.lane.b32.xlu0 %v6946, 72
        %v7134 = vpop.permute.xlu0 %7133
        %7135 = vrot.lane.b32.xlu0 %v6947, 72
        %v7136 = vpop.permute.xlu0 %7135
        %7137 = vrot.lane.b32.xlu0 %v6948, 72
        %v7138 = vpop.permute.xlu0 %7137
        %7139 = vrot.lane.b32.xlu0 %v6949, 72
        %v7140 = vpop.permute.xlu0 %7139
        %7141 = vrot.lane.b32.xlu0 %v6950, 72
        %v7142 = vpop.permute.xlu0 %7141
        %vm7207 = vcmask 622144
        %7208 = vst.msk [vmem:[#allocation2] sm:$0xff] %vm7207, %v7016
        %7209 = vst.msk [vmem:[#allocation2 + $0x8] sm:$0xff] %vm7207, %v7018
        %7210 = vst.msk [vmem:[#allocation2 + $0x10] sm:$0xff] %vm7207, %v7020
        %7211 = vst.msk [vmem:[#allocation2 + $0x18] sm:$0xff] %vm7207, %v7022
        %7212 = vst.msk [vmem:[#allocation2 + $0x20] sm:$0xff] %vm7207, %v7024
        %7213 = vst.msk [vmem:[#allocation2 + $0x28] sm:$0xff] %vm7207, %v7026
        %7214 = vst.msk [vmem:[#allocation2 + $0x30] sm:$0xff] %vm7207, %v7028
        %7215 = vst.msk [vmem:[#allocation2 + $0x38] sm:$0xff] %vm7207, %v7030
        %7216 = vst.msk [vmem:[#allocation2 + $0x40] sm:$0xff] %vm7207, %v7032
        %7217 = vst.msk [vmem:[#allocation2 + $0x48] sm:$0xff] %vm7207, %v7034
        %7218 = vst.msk [vmem:[#allocation2 + $0x50] sm:$0xff] %vm7207, %v7036
        %7219 = vst.msk [vmem:[#allocation2 + $0x58] sm:$0xff] %vm7207, %v7038
        %7220 = vst.msk [vmem:[#allocation2 + $0x60] sm:$0xff] %vm7207, %v7040
        %7221 = vst.msk [vmem:[#allocation2 + $0x68] sm:$0xff] %vm7207, %v7042
        %7222 = vst.msk [vmem:[#allocation2 + $0x70] sm:$0xff] %vm7207, %v7044
        %7223 = vst.msk [vmem:[#allocation2 + $0x78] sm:$0xff] %vm7207, %v7046
        %7224 = vst.msk [vmem:[#allocation2 + $0x80] sm:$0xff] %vm7207, %v7048
        %7225 = vst.msk [vmem:[#allocation2 + $0x88] sm:$0xff] %vm7207, %v7050
        %7226 = vst.msk [vmem:[#allocation2 + $0x90] sm:$0xff] %vm7207, %v7052
        %7227 = vst.msk [vmem:[#allocation2 + $0x98] sm:$0xff] %vm7207, %v7054
        %7228 = vst.msk [vmem:[#allocation2 + $0xa0] sm:$0xff] %vm7207, %v7056
        %7229 = vst.msk [vmem:[#allocation2 + $0xa8] sm:$0xff] %vm7207, %v7058
        %7230 = vst.msk [vmem:[#allocation2 + $0xb0] sm:$0xff] %vm7207, %v7060
        %7231 = vst.msk [vmem:[#allocation2 + $0xb8] sm:$0xff] %vm7207, %v7062
        %7232 = vst.msk [vmem:[#allocation2 + $0xc0] sm:$0xff] %vm7207, %v7064
        %7233 = vst.msk [vmem:[#allocation2 + $0xc8] sm:$0xff] %vm7207, %v7066
        %7234 = vst.msk [vmem:[#allocation2 + $0xd0] sm:$0xff] %vm7207, %v7068
        %7235 = vst.msk [vmem:[#allocation2 + $0xd8] sm:$0xff] %vm7207, %v7070
        %7236 = vst.msk [vmem:[#allocation2 + $0xe0] sm:$0xff] %vm7207, %v7072
        %7237 = vst.msk [vmem:[#allocation2 + $0xe8] sm:$0xff] %vm7207, %v7074
        %7238 = vst.msk [vmem:[#allocation2 + $0xf0] sm:$0xff] %vm7207, %v7076
        %7239 = vst.msk [vmem:[#allocation2 + $0xf8] sm:$0xff] %vm7207, %v7078
        %7240 = vst.msk [vmem:[#allocation2 + $0x100] sm:$0xff] %vm7207, %v7080
        %7241 = vst.msk [vmem:[#allocation2 + $0x108] sm:$0xff] %vm7207, %v7082
        %7242 = vst.msk [vmem:[#allocation2 + $0x110] sm:$0xff] %vm7207, %v7084
        %7243 = vst.msk [vmem:[#allocation2 + $0x118] sm:$0xff] %vm7207, %v7086
        %7244 = vst.msk [vmem:[#allocation2 + $0x120] sm:$0xff] %vm7207, %v7088
        %7245 = vst.msk [vmem:[#allocation2 + $0x128] sm:$0xff] %vm7207, %v7090
        %7246 = vst.msk [vmem:[#allocation2 + $0x130] sm:$0xff] %vm7207, %v7092
        %7247 = vst.msk [vmem:[#allocation2 + $0x138] sm:$0xff] %vm7207, %v7094
        %7248 = vst.msk [vmem:[#allocation2 + $0x140] sm:$0xff] %vm7207, %v7096
        %7249 = vst.msk [vmem:[#allocation2 + $0x148] sm:$0xff] %vm7207, %v7098
        %7250 = vst.msk [vmem:[#allocation2 + $0x150] sm:$0xff] %vm7207, %v7100
        %7251 = vst.msk [vmem:[#allocation2 + $0x158] sm:$0xff] %vm7207, %v7102
        %7252 = vst.msk [vmem:[#allocation2 + $0x160] sm:$0xff] %vm7207, %v7104
        %7253 = vst.msk [vmem:[#allocation2 + $0x168] sm:$0xff] %vm7207, %v7106
        %7254 = vst.msk [vmem:[#allocation2 + $0x170] sm:$0xff] %vm7207, %v7108
        %7255 = vst.msk [vmem:[#allocation2 + $0x178] sm:$0xff] %vm7207, %v7110
        %7256 = vst.msk [vmem:[#allocation2 + $0x180] sm:$0xff] %vm7207, %v7112
        %7257 = vst.msk [vmem:[#allocation2 + $0x188] sm:$0xff] %vm7207, %v7114
        %7258 = vst.msk [vmem:[#allocation2 + $0x190] sm:$0xff] %vm7207, %v7116
        %7259 = vst.msk [vmem:[#allocation2 + $0x198] sm:$0xff] %vm7207, %v7118
        %7260 = vst.msk [vmem:[#allocation2 + $0x1a0] sm:$0xff] %vm7207, %v7120
        %7261 = vst.msk [vmem:[#allocation2 + $0x1a8] sm:$0xff] %vm7207, %v7122
        %7262 = vst.msk [vmem:[#allocation2 + $0x1b0] sm:$0xff] %vm7207, %v7124
        %7263 = vst.msk [vmem:[#allocation2 + $0x1b8] sm:$0xff] %vm7207, %v7126
        %7264 = vst.msk [vmem:[#allocation2 + $0x1c0] sm:$0xff] %vm7207, %v7128
        %7265 = vst.msk [vmem:[#allocation2 + $0x1c8] sm:$0xff] %vm7207, %v7130
        %7266 = vst.msk [vmem:[#allocation2 + $0x1d0] sm:$0xff] %vm7207, %v7132
        %7267 = vst.msk [vmem:[#allocation2 + $0x1d8] sm:$0xff] %vm7207, %v7134
        %7268 = vst.msk [vmem:[#allocation2 + $0x1e0] sm:$0xff] %vm7207, %v7136
        %7269 = vst.msk [vmem:[#allocation2 + $0x1e8] sm:$0xff] %vm7207, %v7138
        %7270 = vst.msk [vmem:[#allocation2 + $0x1f0] sm:$0xff] %vm7207, %v7140
        %7271 = vst.msk [vmem:[#allocation2 + $0x1f8] sm:$0xff] %vm7207, %v7142
        %v7272 = vld [vmem:[%s6886 + $0x1] sm:$0xff]
        %v7273 = vld [vmem:[%s6886 + $0x11] sm:$0xff]
        %v7274 = vld [vmem:[%s6886 + $0x21] sm:$0xff]
        %v7275 = vld [vmem:[%s6886 + $0x31] sm:$0xff]
        %v7276 = vld [vmem:[%s6886 + $0x41] sm:$0xff]
        %v7277 = vld [vmem:[%s6886 + $0x51] sm:$0xff]
        %v7278 = vld [vmem:[%s6886 + $0x61] sm:$0xff]
        %v7279 = vld [vmem:[%s6886 + $0x71] sm:$0xff]
        %v7280 = vld [vmem:[%s6886 + $0xa1] sm:$0xff]
        %v7281 = vld [vmem:[%s6886 + $0xb1] sm:$0xff]
        %v7282 = vld [vmem:[%s6886 + $0xc1] sm:$0xff]
        %v7283 = vld [vmem:[%s6886 + $0xd1] sm:$0xff]
        %v7284 = vld [vmem:[%s6886 + $0xe1] sm:$0xff]
        %v7285 = vld [vmem:[%s6886 + $0xf1] sm:$0xff]
        %v7286 = vld [vmem:[%s6886 + $0x101] sm:$0xff]
        %v7287 = vld [vmem:[%s6886 + $0x111] sm:$0xff]
        %v7288 = vld [vmem:[%s6886 + $0x141] sm:$0xff]
        %v7289 = vld [vmem:[%s6886 + $0x151] sm:$0xff]
        %v7290 = vld [vmem:[%s6886 + $0x161] sm:$0xff]
        %v7291 = vld [vmem:[%s6886 + $0x171] sm:$0xff]
        %v7292 = vld [vmem:[%s6886 + $0x181] sm:$0xff]
        %v7293 = vld [vmem:[%s6886 + $0x191] sm:$0xff]
        %v7294 = vld [vmem:[%s6886 + $0x1a1] sm:$0xff]
        %v7295 = vld [vmem:[%s6886 + $0x1b1] sm:$0xff]
        %v7296 = vld [vmem:[%s6886 + $0x1e1] sm:$0xff]
        %v7297 = vld [vmem:[%s6886 + $0x1f1] sm:$0xff]
        %v7298 = vld [vmem:[%s6886 + $0x201] sm:$0xff]
        %v7299 = vld [vmem:[%s6886 + $0x211] sm:$0xff]
        %v7300 = vld [vmem:[%s6886 + $0x221] sm:$0xff]
        %v7301 = vld [vmem:[%s6886 + $0x231] sm:$0xff]
        %v7302 = vld [vmem:[%s6886 + $0x241] sm:$0xff]
        %v7303 = vld [vmem:[%s6886 + $0x251] sm:$0xff]
        %v7304 = vld [vmem:[%s6886 + $0x281] sm:$0xff]
        %v7305 = vld [vmem:[%s6886 + $0x291] sm:$0xff]
        %v7306 = vld [vmem:[%s6886 + $0x2a1] sm:$0xff]
        %v7307 = vld [vmem:[%s6886 + $0x2b1] sm:$0xff]
        %v7308 = vld [vmem:[%s6886 + $0x2c1] sm:$0xff]
        %v7309 = vld [vmem:[%s6886 + $0x2d1] sm:$0xff]
        %v7310 = vld [vmem:[%s6886 + $0x2e1] sm:$0xff]
        %v7311 = vld [vmem:[%s6886 + $0x2f1] sm:$0xff]
        %v7312 = vld [vmem:[%s6886 + $0x321] sm:$0xff]
        %v7313 = vld [vmem:[%s6886 + $0x331] sm:$0xff]
        %v7314 = vld [vmem:[%s6886 + $0x341] sm:$0xff]
        %v7315 = vld [vmem:[%s6886 + $0x351] sm:$0xff]
        %v7316 = vld [vmem:[%s6886 + $0x361] sm:$0xff]
        %v7317 = vld [vmem:[%s6886 + $0x371] sm:$0xff]
        %v7318 = vld [vmem:[%s6886 + $0x381] sm:$0xff]
        %v7319 = vld [vmem:[%s6886 + $0x391] sm:$0xff]
        %v7320 = vld [vmem:[%s6886 + $0x3c1] sm:$0xff]
        %v7321 = vld [vmem:[%s6886 + $0x3d1] sm:$0xff]
        %v7322 = vld [vmem:[%s6886 + $0x3e1] sm:$0xff]
        %v7323 = vld [vmem:[%s6886 + $0x3f1] sm:$0xff]
        %v7324 = vld [vmem:[%s6886 + $0x401] sm:$0xff]
        %v7325 = vld [vmem:[%s6886 + $0x411] sm:$0xff]
        %v7326 = vld [vmem:[%s6886 + $0x421] sm:$0xff]
        %v7327 = vld [vmem:[%s6886 + $0x431] sm:$0xff]
        %v7328 = vld [vmem:[%s6886 + $0x461] sm:$0xff]
        %v7329 = vld [vmem:[%s6886 + $0x471] sm:$0xff]
        %v7330 = vld [vmem:[%s6886 + $0x481] sm:$0xff]
        %v7331 = vld [vmem:[%s6886 + $0x491] sm:$0xff]
        %v7332 = vld [vmem:[%s6886 + $0x4a1] sm:$0xff]
        %v7333 = vld [vmem:[%s6886 + $0x4b1] sm:$0xff]
        %v7334 = vld [vmem:[%s6886 + $0x4c1] sm:$0xff]
        %v7335 = vld [vmem:[%s6886 + $0x4d1] sm:$0xff]
        %7400 = vrot.lane.b32.xlu0 %v7272, 76
        %v7401 = vpop.permute.xlu0 %7400
        %7402 = vrot.lane.b32.xlu0 %v7273, 76
        %v7403 = vpop.permute.xlu0 %7402
        %7404 = vrot.lane.b32.xlu0 %v7274, 76
        %v7405 = vpop.permute.xlu0 %7404
        %7406 = vrot.lane.b32.xlu0 %v7275, 76
        %v7407 = vpop.permute.xlu0 %7406
        %7408 = vrot.lane.b32.xlu0 %v7276, 76
        %v7409 = vpop.permute.xlu0 %7408
        %7410 = vrot.lane.b32.xlu0 %v7277, 76
        %v7411 = vpop.permute.xlu0 %7410
        %7412 = vrot.lane.b32.xlu0 %v7278, 76
        %v7413 = vpop.permute.xlu0 %7412
        %7414 = vrot.lane.b32.xlu0 %v7279, 76
        %v7415 = vpop.permute.xlu0 %7414
        %7416 = vrot.lane.b32.xlu0 %v7280, 76
        %v7417 = vpop.permute.xlu0 %7416
        %7418 = vrot.lane.b32.xlu0 %v7281, 76
        %v7419 = vpop.permute.xlu0 %7418
        %7420 = vrot.lane.b32.xlu0 %v7282, 76
        %v7421 = vpop.permute.xlu0 %7420
        %7422 = vrot.lane.b32.xlu0 %v7283, 76
        %v7423 = vpop.permute.xlu0 %7422
        %7424 = vrot.lane.b32.xlu0 %v7284, 76
        %v7425 = vpop.permute.xlu0 %7424
        %7426 = vrot.lane.b32.xlu0 %v7285, 76
        %v7427 = vpop.permute.xlu0 %7426
        %7428 = vrot.lane.b32.xlu0 %v7286, 76
        %v7429 = vpop.permute.xlu0 %7428
        %7430 = vrot.lane.b32.xlu0 %v7287, 76
        %v7431 = vpop.permute.xlu0 %7430
        %7432 = vrot.lane.b32.xlu0 %v7288, 76
        %v7433 = vpop.permute.xlu0 %7432
        %7434 = vrot.lane.b32.xlu0 %v7289, 76
        %v7435 = vpop.permute.xlu0 %7434
        %7436 = vrot.lane.b32.xlu0 %v7290, 76
        %v7437 = vpop.permute.xlu0 %7436
        %7438 = vrot.lane.b32.xlu0 %v7291, 76
        %v7439 = vpop.permute.xlu0 %7438
        %7440 = vrot.lane.b32.xlu0 %v7292, 76
        %v7441 = vpop.permute.xlu0 %7440
        %7442 = vrot.lane.b32.xlu0 %v7293, 76
        %v7443 = vpop.permute.xlu0 %7442
        %7444 = vrot.lane.b32.xlu0 %v7294, 76
        %v7445 = vpop.permute.xlu0 %7444
        %7446 = vrot.lane.b32.xlu0 %v7295, 76
        %v7447 = vpop.permute.xlu0 %7446
        %7448 = vrot.lane.b32.xlu0 %v7296, 76
        %v7449 = vpop.permute.xlu0 %7448
        %7450 = vrot.lane.b32.xlu0 %v7297, 76
        %v7451 = vpop.permute.xlu0 %7450
        %7452 = vrot.lane.b32.xlu0 %v7298, 76
        %v7453 = vpop.permute.xlu0 %7452
        %7454 = vrot.lane.b32.xlu0 %v7299, 76
        %v7455 = vpop.permute.xlu0 %7454
        %7456 = vrot.lane.b32.xlu0 %v7300, 76
        %v7457 = vpop.permute.xlu0 %7456
        %7458 = vrot.lane.b32.xlu0 %v7301, 76
        %v7459 = vpop.permute.xlu0 %7458
        %7460 = vrot.lane.b32.xlu0 %v7302, 76
        %v7461 = vpop.permute.xlu0 %7460
        %7462 = vrot.lane.b32.xlu0 %v7303, 76
        %v7463 = vpop.permute.xlu0 %7462
        %7464 = vrot.lane.b32.xlu0 %v7304, 76
        %v7465 = vpop.permute.xlu0 %7464
        %7466 = vrot.lane.b32.xlu0 %v7305, 76
        %v7467 = vpop.permute.xlu0 %7466
        %7468 = vrot.lane.b32.xlu0 %v7306, 76
        %v7469 = vpop.permute.xlu0 %7468
        %7470 = vrot.lane.b32.xlu0 %v7307, 76
        %v7471 = vpop.permute.xlu0 %7470
        %7472 = vrot.lane.b32.xlu0 %v7308, 76
        %v7473 = vpop.permute.xlu0 %7472
        %7474 = vrot.lane.b32.xlu0 %v7309, 76
        %v7475 = vpop.permute.xlu0 %7474
        %7476 = vrot.lane.b32.xlu0 %v7310, 76
        %v7477 = vpop.permute.xlu0 %7476
        %7478 = vrot.lane.b32.xlu0 %v7311, 76
        %v7479 = vpop.permute.xlu0 %7478
        %7480 = vrot.lane.b32.xlu0 %v7312, 76
        %v7481 = vpop.permute.xlu0 %7480
        %7482 = vrot.lane.b32.xlu0 %v7313, 76
        %v7483 = vpop.permute.xlu0 %7482
        %7484 = vrot.lane.b32.xlu0 %v7314, 76
        %v7485 = vpop.permute.xlu0 %7484
        %7486 = vrot.lane.b32.xlu0 %v7315, 76
        %v7487 = vpop.permute.xlu0 %7486
        %7488 = vrot.lane.b32.xlu0 %v7316, 76
        %v7489 = vpop.permute.xlu0 %7488
        %7490 = vrot.lane.b32.xlu0 %v7317, 76
        %v7491 = vpop.permute.xlu0 %7490
        %7492 = vrot.lane.b32.xlu0 %v7318, 76
        %v7493 = vpop.permute.xlu0 %7492
        %7494 = vrot.lane.b32.xlu0 %v7319, 76
        %v7495 = vpop.permute.xlu0 %7494
        %7496 = vrot.lane.b32.xlu0 %v7320, 76
        %v7497 = vpop.permute.xlu0 %7496
        %7498 = vrot.lane.b32.xlu0 %v7321, 76
        %v7499 = vpop.permute.xlu0 %7498
        %7500 = vrot.lane.b32.xlu0 %v7322, 76
        %v7501 = vpop.permute.xlu0 %7500
        %7502 = vrot.lane.b32.xlu0 %v7323, 76
        %v7503 = vpop.permute.xlu0 %7502
        %7504 = vrot.lane.b32.xlu0 %v7324, 76
        %v7505 = vpop.permute.xlu0 %7504
        %7506 = vrot.lane.b32.xlu0 %v7325, 76
        %v7507 = vpop.permute.xlu0 %7506
        %7508 = vrot.lane.b32.xlu0 %v7326, 76
        %v7509 = vpop.permute.xlu0 %7508
        %7510 = vrot.lane.b32.xlu0 %v7327, 76
        %v7511 = vpop.permute.xlu0 %7510
        %7512 = vrot.lane.b32.xlu0 %v7328, 76
        %v7513 = vpop.permute.xlu0 %7512
        %7514 = vrot.lane.b32.xlu0 %v7329, 76
        %v7515 = vpop.permute.xlu0 %7514
        %7516 = vrot.lane.b32.xlu0 %v7330, 76
        %v7517 = vpop.permute.xlu0 %7516
        %7518 = vrot.lane.b32.xlu0 %v7331, 76
        %v7519 = vpop.permute.xlu0 %7518
        %7520 = vrot.lane.b32.xlu0 %v7332, 76
        %v7521 = vpop.permute.xlu0 %7520
        %7522 = vrot.lane.b32.xlu0 %v7333, 76
        %v7523 = vpop.permute.xlu0 %7522
        %7524 = vrot.lane.b32.xlu0 %v7334, 76
        %v7525 = vpop.permute.xlu0 %7524
        %7526 = vrot.lane.b32.xlu0 %v7335, 76
        %v7527 = vpop.permute.xlu0 %7526
        %vm7592 = vcmask 654944
        %7593 = vst.msk [vmem:[#allocation2] sm:$0xff] %vm7592, %v7401
        %7594 = vst.msk [vmem:[#allocation2 + $0x8] sm:$0xff] %vm7592, %v7403
        %7595 = vst.msk [vmem:[#allocation2 + $0x10] sm:$0xff] %vm7592, %v7405
        %7596 = vst.msk [vmem:[#allocation2 + $0x18] sm:$0xff] %vm7592, %v7407
        %7597 = vst.msk [vmem:[#allocation2 + $0x20] sm:$0xff] %vm7592, %v7409
        %7598 = vst.msk [vmem:[#allocation2 + $0x28] sm:$0xff] %vm7592, %v7411
        %7599 = vst.msk [vmem:[#allocation2 + $0x30] sm:$0xff] %vm7592, %v7413
        %7600 = vst.msk [vmem:[#allocation2 + $0x38] sm:$0xff] %vm7592, %v7415
        %7601 = vst.msk [vmem:[#allocation2 + $0x40] sm:$0xff] %vm7592, %v7417
        %7602 = vst.msk [vmem:[#allocation2 + $0x48] sm:$0xff] %vm7592, %v7419
        %7603 = vst.msk [vmem:[#allocation2 + $0x50] sm:$0xff] %vm7592, %v7421
        %7604 = vst.msk [vmem:[#allocation2 + $0x58] sm:$0xff] %vm7592, %v7423
        %7605 = vst.msk [vmem:[#allocation2 + $0x60] sm:$0xff] %vm7592, %v7425
        %7606 = vst.msk [vmem:[#allocation2 + $0x68] sm:$0xff] %vm7592, %v7427
        %7607 = vst.msk [vmem:[#allocation2 + $0x70] sm:$0xff] %vm7592, %v7429
        %7608 = vst.msk [vmem:[#allocation2 + $0x78] sm:$0xff] %vm7592, %v7431
        %7609 = vst.msk [vmem:[#allocation2 + $0x80] sm:$0xff] %vm7592, %v7433
        %7610 = vst.msk [vmem:[#allocation2 + $0x88] sm:$0xff] %vm7592, %v7435
        %7611 = vst.msk [vmem:[#allocation2 + $0x90] sm:$0xff] %vm7592, %v7437
        %7612 = vst.msk [vmem:[#allocation2 + $0x98] sm:$0xff] %vm7592, %v7439
        %7613 = vst.msk [vmem:[#allocation2 + $0xa0] sm:$0xff] %vm7592, %v7441
        %7614 = vst.msk [vmem:[#allocation2 + $0xa8] sm:$0xff] %vm7592, %v7443
        %7615 = vst.msk [vmem:[#allocation2 + $0xb0] sm:$0xff] %vm7592, %v7445
        %7616 = vst.msk [vmem:[#allocation2 + $0xb8] sm:$0xff] %vm7592, %v7447
        %7617 = vst.msk [vmem:[#allocation2 + $0xc0] sm:$0xff] %vm7592, %v7449
        %7618 = vst.msk [vmem:[#allocation2 + $0xc8] sm:$0xff] %vm7592, %v7451
        %7619 = vst.msk [vmem:[#allocation2 + $0xd0] sm:$0xff] %vm7592, %v7453
        %7620 = vst.msk [vmem:[#allocation2 + $0xd8] sm:$0xff] %vm7592, %v7455
        %7621 = vst.msk [vmem:[#allocation2 + $0xe0] sm:$0xff] %vm7592, %v7457
        %7622 = vst.msk [vmem:[#allocation2 + $0xe8] sm:$0xff] %vm7592, %v7459
        %7623 = vst.msk [vmem:[#allocation2 + $0xf0] sm:$0xff] %vm7592, %v7461
        %7624 = vst.msk [vmem:[#allocation2 + $0xf8] sm:$0xff] %vm7592, %v7463
        %7625 = vst.msk [vmem:[#allocation2 + $0x100] sm:$0xff] %vm7592, %v7465
        %7626 = vst.msk [vmem:[#allocation2 + $0x108] sm:$0xff] %vm7592, %v7467
        %7627 = vst.msk [vmem:[#allocation2 + $0x110] sm:$0xff] %vm7592, %v7469
        %7628 = vst.msk [vmem:[#allocation2 + $0x118] sm:$0xff] %vm7592, %v7471
        %7629 = vst.msk [vmem:[#allocation2 + $0x120] sm:$0xff] %vm7592, %v7473
        %7630 = vst.msk [vmem:[#allocation2 + $0x128] sm:$0xff] %vm7592, %v7475
        %7631 = vst.msk [vmem:[#allocation2 + $0x130] sm:$0xff] %vm7592, %v7477
        %7632 = vst.msk [vmem:[#allocation2 + $0x138] sm:$0xff] %vm7592, %v7479
        %7633 = vst.msk [vmem:[#allocation2 + $0x140] sm:$0xff] %vm7592, %v7481
        %7634 = vst.msk [vmem:[#allocation2 + $0x148] sm:$0xff] %vm7592, %v7483
        %7635 = vst.msk [vmem:[#allocation2 + $0x150] sm:$0xff] %vm7592, %v7485
        %7636 = vst.msk [vmem:[#allocation2 + $0x158] sm:$0xff] %vm7592, %v7487
        %7637 = vst.msk [vmem:[#allocation2 + $0x160] sm:$0xff] %vm7592, %v7489
        %7638 = vst.msk [vmem:[#allocation2 + $0x168] sm:$0xff] %vm7592, %v7491
        %7639 = vst.msk [vmem:[#allocation2 + $0x170] sm:$0xff] %vm7592, %v7493
        %7640 = vst.msk [vmem:[#allocation2 + $0x178] sm:$0xff] %vm7592, %v7495
        %7641 = vst.msk [vmem:[#allocation2 + $0x180] sm:$0xff] %vm7592, %v7497
        %7642 = vst.msk [vmem:[#allocation2 + $0x188] sm:$0xff] %vm7592, %v7499
        %7643 = vst.msk [vmem:[#allocation2 + $0x190] sm:$0xff] %vm7592, %v7501
        %7644 = vst.msk [vmem:[#allocation2 + $0x198] sm:$0xff] %vm7592, %v7503
        %7645 = vst.msk [vmem:[#allocation2 + $0x1a0] sm:$0xff] %vm7592, %v7505
        %7646 = vst.msk [vmem:[#allocation2 + $0x1a8] sm:$0xff] %vm7592, %v7507
        %7647 = vst.msk [vmem:[#allocation2 + $0x1b0] sm:$0xff] %vm7592, %v7509
        %7648 = vst.msk [vmem:[#allocation2 + $0x1b8] sm:$0xff] %vm7592, %v7511
        %7649 = vst.msk [vmem:[#allocation2 + $0x1c0] sm:$0xff] %vm7592, %v7513
        %7650 = vst.msk [vmem:[#allocation2 + $0x1c8] sm:$0xff] %vm7592, %v7515
        %7651 = vst.msk [vmem:[#allocation2 + $0x1d0] sm:$0xff] %vm7592, %v7517
        %7652 = vst.msk [vmem:[#allocation2 + $0x1d8] sm:$0xff] %vm7592, %v7519
        %7653 = vst.msk [vmem:[#allocation2 + $0x1e0] sm:$0xff] %vm7592, %v7521
        %7654 = vst.msk [vmem:[#allocation2 + $0x1e8] sm:$0xff] %vm7592, %v7523
        %7655 = vst.msk [vmem:[#allocation2 + $0x1f0] sm:$0xff] %vm7592, %v7525
        %7656 = vst.msk [vmem:[#allocation2 + $0x1f8] sm:$0xff] %vm7592, %v7527
        %v7657 = vld [vmem:[%s6886 + $0x2] sm:$0xff]
        %v7658 = vld [vmem:[%s6886 + $0x12] sm:$0xff]
        %v7659 = vld [vmem:[%s6886 + $0x22] sm:$0xff]
        %v7660 = vld [vmem:[%s6886 + $0x32] sm:$0xff]
        %v7661 = vld [vmem:[%s6886 + $0x42] sm:$0xff]
        %v7662 = vld [vmem:[%s6886 + $0x52] sm:$0xff]
        %v7663 = vld [vmem:[%s6886 + $0x62] sm:$0xff]
        %v7664 = vld [vmem:[%s6886 + $0x72] sm:$0xff]
        %v7665 = vld [vmem:[%s6886 + $0xa2] sm:$0xff]
        %v7666 = vld [vmem:[%s6886 + $0xb2] sm:$0xff]
        %v7667 = vld [vmem:[%s6886 + $0xc2] sm:$0xff]
        %v7668 = vld [vmem:[%s6886 + $0xd2] sm:$0xff]
        %v7669 = vld [vmem:[%s6886 + $0xe2] sm:$0xff]
        %v7670 = vld [vmem:[%s6886 + $0xf2] sm:$0xff]
        %v7671 = vld [vmem:[%s6886 + $0x102] sm:$0xff]
        %v7672 = vld [vmem:[%s6886 + $0x112] sm:$0xff]
        %v7673 = vld [vmem:[%s6886 + $0x142] sm:$0xff]
        %v7674 = vld [vmem:[%s6886 + $0x152] sm:$0xff]
        %v7675 = vld [vmem:[%s6886 + $0x162] sm:$0xff]
        %v7676 = vld [vmem:[%s6886 + $0x172] sm:$0xff]
        %v7677 = vld [vmem:[%s6886 + $0x182] sm:$0xff]
        %v7678 = vld [vmem:[%s6886 + $0x192] sm:$0xff]
        %v7679 = vld [vmem:[%s6886 + $0x1a2] sm:$0xff]
        %v7680 = vld [vmem:[%s6886 + $0x1b2] sm:$0xff]
        %v7681 = vld [vmem:[%s6886 + $0x1e2] sm:$0xff]
        %v7682 = vld [vmem:[%s6886 + $0x1f2] sm:$0xff]
        %v7683 = vld [vmem:[%s6886 + $0x202] sm:$0xff]
        %v7684 = vld [vmem:[%s6886 + $0x212] sm:$0xff]
        %v7685 = vld [vmem:[%s6886 + $0x222] sm:$0xff]
        %v7686 = vld [vmem:[%s6886 + $0x232] sm:$0xff]
        %v7687 = vld [vmem:[%s6886 + $0x242] sm:$0xff]
        %v7688 = vld [vmem:[%s6886 + $0x252] sm:$0xff]
        %v7689 = vld [vmem:[%s6886 + $0x282] sm:$0xff]
        %v7690 = vld [vmem:[%s6886 + $0x292] sm:$0xff]
        %v7691 = vld [vmem:[%s6886 + $0x2a2] sm:$0xff]
        %v7692 = vld [vmem:[%s6886 + $0x2b2] sm:$0xff]
        %v7693 = vld [vmem:[%s6886 + $0x2c2] sm:$0xff]
        %v7694 = vld [vmem:[%s6886 + $0x2d2] sm:$0xff]
        %v7695 = vld [vmem:[%s6886 + $0x2e2] sm:$0xff]
        %v7696 = vld [vmem:[%s6886 + $0x2f2] sm:$0xff]
        %v7697 = vld [vmem:[%s6886 + $0x322] sm:$0xff]
        %v7698 = vld [vmem:[%s6886 + $0x332] sm:$0xff]
        %v7699 = vld [vmem:[%s6886 + $0x342] sm:$0xff]
        %v7700 = vld [vmem:[%s6886 + $0x352] sm:$0xff]
        %v7701 = vld [vmem:[%s6886 + $0x362] sm:$0xff]
        %v7702 = vld [vmem:[%s6886 + $0x372] sm:$0xff]
        %v7703 = vld [vmem:[%s6886 + $0x382] sm:$0xff]
        %v7704 = vld [vmem:[%s6886 + $0x392] sm:$0xff]
        %v7705 = vld [vmem:[%s6886 + $0x3c2] sm:$0xff]
        %v7706 = vld [vmem:[%s6886 + $0x3d2] sm:$0xff]
        %v7707 = vld [vmem:[%s6886 + $0x3e2] sm:$0xff]
        %v7708 = vld [vmem:[%s6886 + $0x3f2] sm:$0xff]
        %v7709 = vld [vmem:[%s6886 + $0x402] sm:$0xff]
        %v7710 = vld [vmem:[%s6886 + $0x412] sm:$0xff]
        %v7711 = vld [vmem:[%s6886 + $0x422] sm:$0xff]
        %v7712 = vld [vmem:[%s6886 + $0x432] sm:$0xff]
        %v7713 = vld [vmem:[%s6886 + $0x462] sm:$0xff]
        %v7714 = vld [vmem:[%s6886 + $0x472] sm:$0xff]
        %v7715 = vld [vmem:[%s6886 + $0x482] sm:$0xff]
        %v7716 = vld [vmem:[%s6886 + $0x492] sm:$0xff]
        %v7717 = vld [vmem:[%s6886 + $0x4a2] sm:$0xff]
        %v7718 = vld [vmem:[%s6886 + $0x4b2] sm:$0xff]
        %v7719 = vld [vmem:[%s6886 + $0x4c2] sm:$0xff]
        %v7720 = vld [vmem:[%s6886 + $0x4d2] sm:$0xff]
        %7785 = vrot.lane.b32.xlu0 %v7657, 80
        %v7786 = vpop.permute.xlu0 %7785
        %7787 = vrot.lane.b32.xlu0 %v7658, 80
        %v7788 = vpop.permute.xlu0 %7787
        %7789 = vrot.lane.b32.xlu0 %v7659, 80
        %v7790 = vpop.permute.xlu0 %7789
        %7791 = vrot.lane.b32.xlu0 %v7660, 80
        %v7792 = vpop.permute.xlu0 %7791
        %7793 = vrot.lane.b32.xlu0 %v7661, 80
        %v7794 = vpop.permute.xlu0 %7793
        %7795 = vrot.lane.b32.xlu0 %v7662, 80
        %v7796 = vpop.permute.xlu0 %7795
        %7797 = vrot.lane.b32.xlu0 %v7663, 80
        %v7798 = vpop.permute.xlu0 %7797
        %7799 = vrot.lane.b32.xlu0 %v7664, 80
        %v7800 = vpop.permute.xlu0 %7799
        %7801 = vrot.lane.b32.xlu0 %v7665, 80
        %v7802 = vpop.permute.xlu0 %7801
        %7803 = vrot.lane.b32.xlu0 %v7666, 80
        %v7804 = vpop.permute.xlu0 %7803
        %7805 = vrot.lane.b32.xlu0 %v7667, 80
        %v7806 = vpop.permute.xlu0 %7805
        %7807 = vrot.lane.b32.xlu0 %v7668, 80
        %v7808 = vpop.permute.xlu0 %7807
        %7809 = vrot.lane.b32.xlu0 %v7669, 80
        %v7810 = vpop.permute.xlu0 %7809
        %7811 = vrot.lane.b32.xlu0 %v7670, 80
        %v7812 = vpop.permute.xlu0 %7811
        %7813 = vrot.lane.b32.xlu0 %v7671, 80
        %v7814 = vpop.permute.xlu0 %7813
        %7815 = vrot.lane.b32.xlu0 %v7672, 80
        %v7816 = vpop.permute.xlu0 %7815
        %7817 = vrot.lane.b32.xlu0 %v7673, 80
        %v7818 = vpop.permute.xlu0 %7817
        %7819 = vrot.lane.b32.xlu0 %v7674, 80
        %v7820 = vpop.permute.xlu0 %7819
        %7821 = vrot.lane.b32.xlu0 %v7675, 80
        %v7822 = vpop.permute.xlu0 %7821
        %7823 = vrot.lane.b32.xlu0 %v7676, 80
        %v7824 = vpop.permute.xlu0 %7823
        %7825 = vrot.lane.b32.xlu0 %v7677, 80
        %v7826 = vpop.permute.xlu0 %7825
        %7827 = vrot.lane.b32.xlu0 %v7678, 80
        %v7828 = vpop.permute.xlu0 %7827
        %7829 = vrot.lane.b32.xlu0 %v7679, 80
        %v7830 = vpop.permute.xlu0 %7829
        %7831 = vrot.lane.b32.xlu0 %v7680, 80
        %v7832 = vpop.permute.xlu0 %7831
        %7833 = vrot.lane.b32.xlu0 %v7681, 80
        %v7834 = vpop.permute.xlu0 %7833
        %7835 = vrot.lane.b32.xlu0 %v7682, 80
        %v7836 = vpop.permute.xlu0 %7835
        %7837 = vrot.lane.b32.xlu0 %v7683, 80
        %v7838 = vpop.permute.xlu0 %7837
        %7839 = vrot.lane.b32.xlu0 %v7684, 80
        %v7840 = vpop.permute.xlu0 %7839
        %7841 = vrot.lane.b32.xlu0 %v7685, 80
        %v7842 = vpop.permute.xlu0 %7841
        %7843 = vrot.lane.b32.xlu0 %v7686, 80
        %v7844 = vpop.permute.xlu0 %7843
        %7845 = vrot.lane.b32.xlu0 %v7687, 80
        %v7846 = vpop.permute.xlu0 %7845
        %7847 = vrot.lane.b32.xlu0 %v7688, 80
        %v7848 = vpop.permute.xlu0 %7847
        %7849 = vrot.lane.b32.xlu0 %v7689, 80
        %v7850 = vpop.permute.xlu0 %7849
        %7851 = vrot.lane.b32.xlu0 %v7690, 80
        %v7852 = vpop.permute.xlu0 %7851
        %7853 = vrot.lane.b32.xlu0 %v7691, 80
        %v7854 = vpop.permute.xlu0 %7853
        %7855 = vrot.lane.b32.xlu0 %v7692, 80
        %v7856 = vpop.permute.xlu0 %7855
        %7857 = vrot.lane.b32.xlu0 %v7693, 80
        %v7858 = vpop.permute.xlu0 %7857
        %7859 = vrot.lane.b32.xlu0 %v7694, 80
        %v7860 = vpop.permute.xlu0 %7859
        %7861 = vrot.lane.b32.xlu0 %v7695, 80
        %v7862 = vpop.permute.xlu0 %7861
        %7863 = vrot.lane.b32.xlu0 %v7696, 80
        %v7864 = vpop.permute.xlu0 %7863
        %7865 = vrot.lane.b32.xlu0 %v7697, 80
        %v7866 = vpop.permute.xlu0 %7865
        %7867 = vrot.lane.b32.xlu0 %v7698, 80
        %v7868 = vpop.permute.xlu0 %7867
        %7869 = vrot.lane.b32.xlu0 %v7699, 80
        %v7870 = vpop.permute.xlu0 %7869
        %7871 = vrot.lane.b32.xlu0 %v7700, 80
        %v7872 = vpop.permute.xlu0 %7871
        %7873 = vrot.lane.b32.xlu0 %v7701, 80
        %v7874 = vpop.permute.xlu0 %7873
        %7875 = vrot.lane.b32.xlu0 %v7702, 80
        %v7876 = vpop.permute.xlu0 %7875
        %7877 = vrot.lane.b32.xlu0 %v7703, 80
        %v7878 = vpop.permute.xlu0 %7877
        %7879 = vrot.lane.b32.xlu0 %v7704, 80
        %v7880 = vpop.permute.xlu0 %7879
        %7881 = vrot.lane.b32.xlu0 %v7705, 80
        %v7882 = vpop.permute.xlu0 %7881
        %7883 = vrot.lane.b32.xlu0 %v7706, 80
        %v7884 = vpop.permute.xlu0 %7883
        %7885 = vrot.lane.b32.xlu0 %v7707, 80
        %v7886 = vpop.permute.xlu0 %7885
        %7887 = vrot.lane.b32.xlu0 %v7708, 80
        %v7888 = vpop.permute.xlu0 %7887
        %7889 = vrot.lane.b32.xlu0 %v7709, 80
        %v7890 = vpop.permute.xlu0 %7889
        %7891 = vrot.lane.b32.xlu0 %v7710, 80
        %v7892 = vpop.permute.xlu0 %7891
        %7893 = vrot.lane.b32.xlu0 %v7711, 80
        %v7894 = vpop.permute.xlu0 %7893
        %7895 = vrot.lane.b32.xlu0 %v7712, 80
        %v7896 = vpop.permute.xlu0 %7895
        %7897 = vrot.lane.b32.xlu0 %v7713, 80
        %v7898 = vpop.permute.xlu0 %7897
        %7899 = vrot.lane.b32.xlu0 %v7714, 80
        %v7900 = vpop.permute.xlu0 %7899
        %7901 = vrot.lane.b32.xlu0 %v7715, 80
        %v7902 = vpop.permute.xlu0 %7901
        %7903 = vrot.lane.b32.xlu0 %v7716, 80
        %v7904 = vpop.permute.xlu0 %7903
        %7905 = vrot.lane.b32.xlu0 %v7717, 80
        %v7906 = vpop.permute.xlu0 %7905
        %7907 = vrot.lane.b32.xlu0 %v7718, 80
        %v7908 = vpop.permute.xlu0 %7907
        %7909 = vrot.lane.b32.xlu0 %v7719, 80
        %v7910 = vpop.permute.xlu0 %7909
        %7911 = vrot.lane.b32.xlu0 %v7720, 80
        %v7912 = vpop.permute.xlu0 %7911
        %vm7977 = vcmask 687744
        %7978 = vst.msk [vmem:[#allocation2] sm:$0xff] %vm7977, %v7786
        %7979 = vst.msk [vmem:[#allocation2 + $0x8] sm:$0xff] %vm7977, %v7788
        %7980 = vst.msk [vmem:[#allocation2 + $0x10] sm:$0xff] %vm7977, %v7790
        %7981 = vst.msk [vmem:[#allocation2 + $0x18] sm:$0xff] %vm7977, %v7792
        %7982 = vst.msk [vmem:[#allocation2 + $0x20] sm:$0xff] %vm7977, %v7794
        %7983 = vst.msk [vmem:[#allocation2 + $0x28] sm:$0xff] %vm7977, %v7796
        %7984 = vst.msk [vmem:[#allocation2 + $0x30] sm:$0xff] %vm7977, %v7798
        %7985 = vst.msk [vmem:[#allocation2 + $0x38] sm:$0xff] %vm7977, %v7800
        %7986 = vst.msk [vmem:[#allocation2 + $0x40] sm:$0xff] %vm7977, %v7802
        %7987 = vst.msk [vmem:[#allocation2 + $0x48] sm:$0xff] %vm7977, %v7804
        %7988 = vst.msk [vmem:[#allocation2 + $0x50] sm:$0xff] %vm7977, %v7806
        %7989 = vst.msk [vmem:[#allocation2 + $0x58] sm:$0xff] %vm7977, %v7808
        %7990 = vst.msk [vmem:[#allocation2 + $0x60] sm:$0xff] %vm7977, %v7810
        %7991 = vst.msk [vmem:[#allocation2 + $0x68] sm:$0xff] %vm7977, %v7812
        %7992 = vst.msk [vmem:[#allocation2 + $0x70] sm:$0xff] %vm7977, %v7814
        %7993 = vst.msk [vmem:[#allocation2 + $0x78] sm:$0xff] %vm7977, %v7816
        %7994 = vst.msk [vmem:[#allocation2 + $0x80] sm:$0xff] %vm7977, %v7818
        %7995 = vst.msk [vmem:[#allocation2 + $0x88] sm:$0xff] %vm7977, %v7820
        %7996 = vst.msk [vmem:[#allocation2 + $0x90] sm:$0xff] %vm7977, %v7822
        %7997 = vst.msk [vmem:[#allocation2 + $0x98] sm:$0xff] %vm7977, %v7824
        %7998 = vst.msk [vmem:[#allocation2 + $0xa0] sm:$0xff] %vm7977, %v7826
        %7999 = vst.msk [vmem:[#allocation2 + $0xa8] sm:$0xff] %vm7977, %v7828
        %8000 = vst.msk [vmem:[#allocation2 + $0xb0] sm:$0xff] %vm7977, %v7830
        %8001 = vst.msk [vmem:[#allocation2 + $0xb8] sm:$0xff] %vm7977, %v7832
        %8002 = vst.msk [vmem:[#allocation2 + $0xc0] sm:$0xff] %vm7977, %v7834
        %8003 = vst.msk [vmem:[#allocation2 + $0xc8] sm:$0xff] %vm7977, %v7836
        %8004 = vst.msk [vmem:[#allocation2 + $0xd0] sm:$0xff] %vm7977, %v7838
        %8005 = vst.msk [vmem:[#allocation2 + $0xd8] sm:$0xff] %vm7977, %v7840
        %8006 = vst.msk [vmem:[#allocation2 + $0xe0] sm:$0xff] %vm7977, %v7842
        %8007 = vst.msk [vmem:[#allocation2 + $0xe8] sm:$0xff] %vm7977, %v7844
        %8008 = vst.msk [vmem:[#allocation2 + $0xf0] sm:$0xff] %vm7977, %v7846
        %8009 = vst.msk [vmem:[#allocation2 + $0xf8] sm:$0xff] %vm7977, %v7848
        %8010 = vst.msk [vmem:[#allocation2 + $0x100] sm:$0xff] %vm7977, %v7850
        %8011 = vst.msk [vmem:[#allocation2 + $0x108] sm:$0xff] %vm7977, %v7852
        %8012 = vst.msk [vmem:[#allocation2 + $0x110] sm:$0xff] %vm7977, %v7854
        %8013 = vst.msk [vmem:[#allocation2 + $0x118] sm:$0xff] %vm7977, %v7856
        %8014 = vst.msk [vmem:[#allocation2 + $0x120] sm:$0xff] %vm7977, %v7858
        %8015 = vst.msk [vmem:[#allocation2 + $0x128] sm:$0xff] %vm7977, %v7860
        %8016 = vst.msk [vmem:[#allocation2 + $0x130] sm:$0xff] %vm7977, %v7862
        %8017 = vst.msk [vmem:[#allocation2 + $0x138] sm:$0xff] %vm7977, %v7864
        %8018 = vst.msk [vmem:[#allocation2 + $0x140] sm:$0xff] %vm7977, %v7866
        %8019 = vst.msk [vmem:[#allocation2 + $0x148] sm:$0xff] %vm7977, %v7868
        %8020 = vst.msk [vmem:[#allocation2 + $0x150] sm:$0xff] %vm7977, %v7870
        %8021 = vst.msk [vmem:[#allocation2 + $0x158] sm:$0xff] %vm7977, %v7872
        %8022 = vst.msk [vmem:[#allocation2 + $0x160] sm:$0xff] %vm7977, %v7874
        %8023 = vst.msk [vmem:[#allocation2 + $0x168] sm:$0xff] %vm7977, %v7876
        %8024 = vst.msk [vmem:[#allocation2 + $0x170] sm:$0xff] %vm7977, %v7878
        %8025 = vst.msk [vmem:[#allocation2 + $0x178] sm:$0xff] %vm7977, %v7880
        %8026 = vst.msk [vmem:[#allocation2 + $0x180] sm:$0xff] %vm7977, %v7882
        %8027 = vst.msk [vmem:[#allocation2 + $0x188] sm:$0xff] %vm7977, %v7884
        %8028 = vst.msk [vmem:[#allocation2 + $0x190] sm:$0xff] %vm7977, %v7886
        %8029 = vst.msk [vmem:[#allocation2 + $0x198] sm:$0xff] %vm7977, %v7888
        %8030 = vst.msk [vmem:[#allocation2 + $0x1a0] sm:$0xff] %vm7977, %v7890
        %8031 = vst.msk [vmem:[#allocation2 + $0x1a8] sm:$0xff] %vm7977, %v7892
        %8032 = vst.msk [vmem:[#allocation2 + $0x1b0] sm:$0xff] %vm7977, %v7894
        %8033 = vst.msk [vmem:[#allocation2 + $0x1b8] sm:$0xff] %vm7977, %v7896
        %8034 = vst.msk [vmem:[#allocation2 + $0x1c0] sm:$0xff] %vm7977, %v7898
        %8035 = vst.msk [vmem:[#allocation2 + $0x1c8] sm:$0xff] %vm7977, %v7900
        %8036 = vst.msk [vmem:[#allocation2 + $0x1d0] sm:$0xff] %vm7977, %v7902
        %8037 = vst.msk [vmem:[#allocation2 + $0x1d8] sm:$0xff] %vm7977, %v7904
        %8038 = vst.msk [vmem:[#allocation2 + $0x1e0] sm:$0xff] %vm7977, %v7906
        %8039 = vst.msk [vmem:[#allocation2 + $0x1e8] sm:$0xff] %vm7977, %v7908
        %8040 = vst.msk [vmem:[#allocation2 + $0x1f0] sm:$0xff] %vm7977, %v7910
        %8041 = vst.msk [vmem:[#allocation2 + $0x1f8] sm:$0xff] %vm7977, %v7912
        %s8042 = scalar_lea.vmem %s141, 336
        %v8043 = vld [vmem:[%s8042] sm:$0xff]
        %v8044 = vld [vmem:[%s8042 + $0x10] sm:$0xff]
        %v8045 = vld [vmem:[%s8042 + $0x20] sm:$0xff]
        %v8046 = vld [vmem:[%s8042 + $0x30] sm:$0xff]
        %v8047 = vld [vmem:[%s8042 + $0x40] sm:$0xff]
        %v8048 = vld [vmem:[%s8042 + $0x50] sm:$0xff]
        %v8049 = vld [vmem:[%s8042 + $0x60] sm:$0xff]
        %v8050 = vld [vmem:[%s8042 + $0x70] sm:$0xff]
        %v8051 = vld [vmem:[%s8042 + $0xa0] sm:$0xff]
        %v8052 = vld [vmem:[%s8042 + $0xb0] sm:$0xff]
        %v8053 = vld [vmem:[%s8042 + $0xc0] sm:$0xff]
        %v8054 = vld [vmem:[%s8042 + $0xd0] sm:$0xff]
        %v8055 = vld [vmem:[%s8042 + $0xe0] sm:$0xff]
        %v8056 = vld [vmem:[%s8042 + $0xf0] sm:$0xff]
        %v8057 = vld [vmem:[%s8042 + $0x100] sm:$0xff]
        %v8058 = vld [vmem:[%s8042 + $0x110] sm:$0xff]
        %v8059 = vld [vmem:[%s8042 + $0x140] sm:$0xff]
        %v8060 = vld [vmem:[%s8042 + $0x150] sm:$0xff]
        %v8061 = vld [vmem:[%s8042 + $0x160] sm:$0xff]
        %v8062 = vld [vmem:[%s8042 + $0x170] sm:$0xff]
        %v8063 = vld [vmem:[%s8042 + $0x180] sm:$0xff]
        %v8064 = vld [vmem:[%s8042 + $0x190] sm:$0xff]
        %v8065 = vld [vmem:[%s8042 + $0x1a0] sm:$0xff]
        %v8066 = vld [vmem:[%s8042 + $0x1b0] sm:$0xff]
        %v8067 = vld [vmem:[%s8042 + $0x1e0] sm:$0xff]
        %v8068 = vld [vmem:[%s8042 + $0x1f0] sm:$0xff]
        %v8069 = vld [vmem:[%s8042 + $0x200] sm:$0xff]
        %v8070 = vld [vmem:[%s8042 + $0x210] sm:$0xff]
        %v8071 = vld [vmem:[%s8042 + $0x220] sm:$0xff]
        %v8072 = vld [vmem:[%s8042 + $0x230] sm:$0xff]
        %v8073 = vld [vmem:[%s8042 + $0x240] sm:$0xff]
        %v8074 = vld [vmem:[%s8042 + $0x250] sm:$0xff]
        %v8075 = vld [vmem:[%s8042 + $0x280] sm:$0xff]
        %v8076 = vld [vmem:[%s8042 + $0x290] sm:$0xff]
        %v8077 = vld [vmem:[%s8042 + $0x2a0] sm:$0xff]
        %v8078 = vld [vmem:[%s8042 + $0x2b0] sm:$0xff]
        %v8079 = vld [vmem:[%s8042 + $0x2c0] sm:$0xff]
        %v8080 = vld [vmem:[%s8042 + $0x2d0] sm:$0xff]
        %v8081 = vld [vmem:[%s8042 + $0x2e0] sm:$0xff]
        %v8082 = vld [vmem:[%s8042 + $0x2f0] sm:$0xff]
        %v8083 = vld [vmem:[%s8042 + $0x320] sm:$0xff]
        %v8084 = vld [vmem:[%s8042 + $0x330] sm:$0xff]
        %v8085 = vld [vmem:[%s8042 + $0x340] sm:$0xff]
        %v8086 = vld [vmem:[%s8042 + $0x350] sm:$0xff]
        %v8087 = vld [vmem:[%s8042 + $0x360] sm:$0xff]
        %v8088 = vld [vmem:[%s8042 + $0x370] sm:$0xff]
        %v8089 = vld [vmem:[%s8042 + $0x380] sm:$0xff]
        %v8090 = vld [vmem:[%s8042 + $0x390] sm:$0xff]
        %v8091 = vld [vmem:[%s8042 + $0x3c0] sm:$0xff]
        %v8092 = vld [vmem:[%s8042 + $0x3d0] sm:$0xff]
        %v8093 = vld [vmem:[%s8042 + $0x3e0] sm:$0xff]
        %v8094 = vld [vmem:[%s8042 + $0x3f0] sm:$0xff]
        %v8095 = vld [vmem:[%s8042 + $0x400] sm:$0xff]
        %v8096 = vld [vmem:[%s8042 + $0x410] sm:$0xff]
        %v8097 = vld [vmem:[%s8042 + $0x420] sm:$0xff]
        %v8098 = vld [vmem:[%s8042 + $0x430] sm:$0xff]
        %v8099 = vld [vmem:[%s8042 + $0x460] sm:$0xff]
        %v8100 = vld [vmem:[%s8042 + $0x470] sm:$0xff]
        %v8101 = vld [vmem:[%s8042 + $0x480] sm:$0xff]
        %v8102 = vld [vmem:[%s8042 + $0x490] sm:$0xff]
        %v8103 = vld [vmem:[%s8042 + $0x4a0] sm:$0xff]
        %v8104 = vld [vmem:[%s8042 + $0x4b0] sm:$0xff]
        %v8105 = vld [vmem:[%s8042 + $0x4c0] sm:$0xff]
        %v8106 = vld [vmem:[%s8042 + $0x4d0] sm:$0xff]
        %8171 = vrot.lane.b32.xlu0 %v8043, 84
        %v8172 = vpop.permute.xlu0 %8171
        %8173 = vrot.lane.b32.xlu0 %v8044, 84
        %v8174 = vpop.permute.xlu0 %8173
        %8175 = vrot.lane.b32.xlu0 %v8045, 84
        %v8176 = vpop.permute.xlu0 %8175
        %8177 = vrot.lane.b32.xlu0 %v8046, 84
        %v8178 = vpop.permute.xlu0 %8177
        %8179 = vrot.lane.b32.xlu0 %v8047, 84
        %v8180 = vpop.permute.xlu0 %8179
        %8181 = vrot.lane.b32.xlu0 %v8048, 84
        %v8182 = vpop.permute.xlu0 %8181
        %8183 = vrot.lane.b32.xlu0 %v8049, 84
        %v8184 = vpop.permute.xlu0 %8183
        %8185 = vrot.lane.b32.xlu0 %v8050, 84
        %v8186 = vpop.permute.xlu0 %8185
        %8187 = vrot.lane.b32.xlu0 %v8051, 84
        %v8188 = vpop.permute.xlu0 %8187
        %8189 = vrot.lane.b32.xlu0 %v8052, 84
        %v8190 = vpop.permute.xlu0 %8189
        %8191 = vrot.lane.b32.xlu0 %v8053, 84
        %v8192 = vpop.permute.xlu0 %8191
        %8193 = vrot.lane.b32.xlu0 %v8054, 84
        %v8194 = vpop.permute.xlu0 %8193
        %8195 = vrot.lane.b32.xlu0 %v8055, 84
        %v8196 = vpop.permute.xlu0 %8195
        %8197 = vrot.lane.b32.xlu0 %v8056, 84
        %v8198 = vpop.permute.xlu0 %8197
        %8199 = vrot.lane.b32.xlu0 %v8057, 84
        %v8200 = vpop.permute.xlu0 %8199
        %8201 = vrot.lane.b32.xlu0 %v8058, 84
        %v8202 = vpop.permute.xlu0 %8201
        %8203 = vrot.lane.b32.xlu0 %v8059, 84
        %v8204 = vpop.permute.xlu0 %8203
        %8205 = vrot.lane.b32.xlu0 %v8060, 84
        %v8206 = vpop.permute.xlu0 %8205
        %8207 = vrot.lane.b32.xlu0 %v8061, 84
        %v8208 = vpop.permute.xlu0 %8207
        %8209 = vrot.lane.b32.xlu0 %v8062, 84
        %v8210 = vpop.permute.xlu0 %8209
        %8211 = vrot.lane.b32.xlu0 %v8063, 84
        %v8212 = vpop.permute.xlu0 %8211
        %8213 = vrot.lane.b32.xlu0 %v8064, 84
        %v8214 = vpop.permute.xlu0 %8213
        %8215 = vrot.lane.b32.xlu0 %v8065, 84
        %v8216 = vpop.permute.xlu0 %8215
        %8217 = vrot.lane.b32.xlu0 %v8066, 84
        %v8218 = vpop.permute.xlu0 %8217
        %8219 = vrot.lane.b32.xlu0 %v8067, 84
        %v8220 = vpop.permute.xlu0 %8219
        %8221 = vrot.lane.b32.xlu0 %v8068, 84
        %v8222 = vpop.permute.xlu0 %8221
        %8223 = vrot.lane.b32.xlu0 %v8069, 84
        %v8224 = vpop.permute.xlu0 %8223
        %8225 = vrot.lane.b32.xlu0 %v8070, 84
        %v8226 = vpop.permute.xlu0 %8225
        %8227 = vrot.lane.b32.xlu0 %v8071, 84
        %v8228 = vpop.permute.xlu0 %8227
        %8229 = vrot.lane.b32.xlu0 %v8072, 84
        %v8230 = vpop.permute.xlu0 %8229
        %8231 = vrot.lane.b32.xlu0 %v8073, 84
        %v8232 = vpop.permute.xlu0 %8231
        %8233 = vrot.lane.b32.xlu0 %v8074, 84
        %v8234 = vpop.permute.xlu0 %8233
        %8235 = vrot.lane.b32.xlu0 %v8075, 84
        %v8236 = vpop.permute.xlu0 %8235
        %8237 = vrot.lane.b32.xlu0 %v8076, 84
        %v8238 = vpop.permute.xlu0 %8237
        %8239 = vrot.lane.b32.xlu0 %v8077, 84
        %v8240 = vpop.permute.xlu0 %8239
        %8241 = vrot.lane.b32.xlu0 %v8078, 84
        %v8242 = vpop.permute.xlu0 %8241
        %8243 = vrot.lane.b32.xlu0 %v8079, 84
        %v8244 = vpop.permute.xlu0 %8243
        %8245 = vrot.lane.b32.xlu0 %v8080, 84
        %v8246 = vpop.permute.xlu0 %8245
        %8247 = vrot.lane.b32.xlu0 %v8081, 84
        %v8248 = vpop.permute.xlu0 %8247
        %8249 = vrot.lane.b32.xlu0 %v8082, 84
        %v8250 = vpop.permute.xlu0 %8249
        %8251 = vrot.lane.b32.xlu0 %v8083, 84
        %v8252 = vpop.permute.xlu0 %8251
        %8253 = vrot.lane.b32.xlu0 %v8084, 84
        %v8254 = vpop.permute.xlu0 %8253
        %8255 = vrot.lane.b32.xlu0 %v8085, 84
        %v8256 = vpop.permute.xlu0 %8255
        %8257 = vrot.lane.b32.xlu0 %v8086, 84
        %v8258 = vpop.permute.xlu0 %8257
        %8259 = vrot.lane.b32.xlu0 %v8087, 84
        %v8260 = vpop.permute.xlu0 %8259
        %8261 = vrot.lane.b32.xlu0 %v8088, 84
        %v8262 = vpop.permute.xlu0 %8261
        %8263 = vrot.lane.b32.xlu0 %v8089, 84
        %v8264 = vpop.permute.xlu0 %8263
        %8265 = vrot.lane.b32.xlu0 %v8090, 84
        %v8266 = vpop.permute.xlu0 %8265
        %8267 = vrot.lane.b32.xlu0 %v8091, 84
        %v8268 = vpop.permute.xlu0 %8267
        %8269 = vrot.lane.b32.xlu0 %v8092, 84
        %v8270 = vpop.permute.xlu0 %8269
        %8271 = vrot.lane.b32.xlu0 %v8093, 84
        %v8272 = vpop.permute.xlu0 %8271
        %8273 = vrot.lane.b32.xlu0 %v8094, 84
        %v8274 = vpop.permute.xlu0 %8273
        %8275 = vrot.lane.b32.xlu0 %v8095, 84
        %v8276 = vpop.permute.xlu0 %8275
        %8277 = vrot.lane.b32.xlu0 %v8096, 84
        %v8278 = vpop.permute.xlu0 %8277
        %8279 = vrot.lane.b32.xlu0 %v8097, 84
        %v8280 = vpop.permute.xlu0 %8279
        %8281 = vrot.lane.b32.xlu0 %v8098, 84
        %v8282 = vpop.permute.xlu0 %8281
        %8283 = vrot.lane.b32.xlu0 %v8099, 84
        %v8284 = vpop.permute.xlu0 %8283
        %8285 = vrot.lane.b32.xlu0 %v8100, 84
        %v8286 = vpop.permute.xlu0 %8285
        %8287 = vrot.lane.b32.xlu0 %v8101, 84
        %v8288 = vpop.permute.xlu0 %8287
        %8289 = vrot.lane.b32.xlu0 %v8102, 84
        %v8290 = vpop.permute.xlu0 %8289
        %8291 = vrot.lane.b32.xlu0 %v8103, 84
        %v8292 = vpop.permute.xlu0 %8291
        %8293 = vrot.lane.b32.xlu0 %v8104, 84
        %v8294 = vpop.permute.xlu0 %8293
        %8295 = vrot.lane.b32.xlu0 %v8105, 84
        %v8296 = vpop.permute.xlu0 %8295
        %8297 = vrot.lane.b32.xlu0 %v8106, 84
        %v8298 = vpop.permute.xlu0 %8297
        %vm8363 = vcmask 720544
        %8364 = vst.msk [vmem:[#allocation2] sm:$0xff] %vm8363, %v8172
        %8365 = vst.msk [vmem:[#allocation2 + $0x8] sm:$0xff] %vm8363, %v8174
        %8366 = vst.msk [vmem:[#allocation2 + $0x10] sm:$0xff] %vm8363, %v8176
        %8367 = vst.msk [vmem:[#allocation2 + $0x18] sm:$0xff] %vm8363, %v8178
        %8368 = vst.msk [vmem:[#allocation2 + $0x20] sm:$0xff] %vm8363, %v8180
        %8369 = vst.msk [vmem:[#allocation2 + $0x28] sm:$0xff] %vm8363, %v8182
        %8370 = vst.msk [vmem:[#allocation2 + $0x30] sm:$0xff] %vm8363, %v8184
        %8371 = vst.msk [vmem:[#allocation2 + $0x38] sm:$0xff] %vm8363, %v8186
        %8372 = vst.msk [vmem:[#allocation2 + $0x40] sm:$0xff] %vm8363, %v8188
        %8373 = vst.msk [vmem:[#allocation2 + $0x48] sm:$0xff] %vm8363, %v8190
        %8374 = vst.msk [vmem:[#allocation2 + $0x50] sm:$0xff] %vm8363, %v8192
        %8375 = vst.msk [vmem:[#allocation2 + $0x58] sm:$0xff] %vm8363, %v8194
        %8376 = vst.msk [vmem:[#allocation2 + $0x60] sm:$0xff] %vm8363, %v8196
        %8377 = vst.msk [vmem:[#allocation2 + $0x68] sm:$0xff] %vm8363, %v8198
        %8378 = vst.msk [vmem:[#allocation2 + $0x70] sm:$0xff] %vm8363, %v8200
        %8379 = vst.msk [vmem:[#allocation2 + $0x78] sm:$0xff] %vm8363, %v8202
        %8380 = vst.msk [vmem:[#allocation2 + $0x80] sm:$0xff] %vm8363, %v8204
        %8381 = vst.msk [vmem:[#allocation2 + $0x88] sm:$0xff] %vm8363, %v8206
        %8382 = vst.msk [vmem:[#allocation2 + $0x90] sm:$0xff] %vm8363, %v8208
        %8383 = vst.msk [vmem:[#allocation2 + $0x98] sm:$0xff] %vm8363, %v8210
        %8384 = vst.msk [vmem:[#allocation2 + $0xa0] sm:$0xff] %vm8363, %v8212
        %8385 = vst.msk [vmem:[#allocation2 + $0xa8] sm:$0xff] %vm8363, %v8214
        %8386 = vst.msk [vmem:[#allocation2 + $0xb0] sm:$0xff] %vm8363, %v8216
        %8387 = vst.msk [vmem:[#allocation2 + $0xb8] sm:$0xff] %vm8363, %v8218
        %8388 = vst.msk [vmem:[#allocation2 + $0xc0] sm:$0xff] %vm8363, %v8220
        %8389 = vst.msk [vmem:[#allocation2 + $0xc8] sm:$0xff] %vm8363, %v8222
        %8390 = vst.msk [vmem:[#allocation2 + $0xd0] sm:$0xff] %vm8363, %v8224
        %8391 = vst.msk [vmem:[#allocation2 + $0xd8] sm:$0xff] %vm8363, %v8226
        %8392 = vst.msk [vmem:[#allocation2 + $0xe0] sm:$0xff] %vm8363, %v8228
        %8393 = vst.msk [vmem:[#allocation2 + $0xe8] sm:$0xff] %vm8363, %v8230
        %8394 = vst.msk [vmem:[#allocation2 + $0xf0] sm:$0xff] %vm8363, %v8232
        %8395 = vst.msk [vmem:[#allocation2 + $0xf8] sm:$0xff] %vm8363, %v8234
        %8396 = vst.msk [vmem:[#allocation2 + $0x100] sm:$0xff] %vm8363, %v8236
        %8397 = vst.msk [vmem:[#allocation2 + $0x108] sm:$0xff] %vm8363, %v8238
        %8398 = vst.msk [vmem:[#allocation2 + $0x110] sm:$0xff] %vm8363, %v8240
        %8399 = vst.msk [vmem:[#allocation2 + $0x118] sm:$0xff] %vm8363, %v8242
        %8400 = vst.msk [vmem:[#allocation2 + $0x120] sm:$0xff] %vm8363, %v8244
        %8401 = vst.msk [vmem:[#allocation2 + $0x128] sm:$0xff] %vm8363, %v8246
        %8402 = vst.msk [vmem:[#allocation2 + $0x130] sm:$0xff] %vm8363, %v8248
        %8403 = vst.msk [vmem:[#allocation2 + $0x138] sm:$0xff] %vm8363, %v8250
        %8404 = vst.msk [vmem:[#allocation2 + $0x140] sm:$0xff] %vm8363, %v8252
        %8405 = vst.msk [vmem:[#allocation2 + $0x148] sm:$0xff] %vm8363, %v8254
        %8406 = vst.msk [vmem:[#allocation2 + $0x150] sm:$0xff] %vm8363, %v8256
        %8407 = vst.msk [vmem:[#allocation2 + $0x158] sm:$0xff] %vm8363, %v8258
        %8408 = vst.msk [vmem:[#allocation2 + $0x160] sm:$0xff] %vm8363, %v8260
        %8409 = vst.msk [vmem:[#allocation2 + $0x168] sm:$0xff] %vm8363, %v8262
        %8410 = vst.msk [vmem:[#allocation2 + $0x170] sm:$0xff] %vm8363, %v8264
        %8411 = vst.msk [vmem:[#allocation2 + $0x178] sm:$0xff] %vm8363, %v8266
        %8412 = vst.msk [vmem:[#allocation2 + $0x180] sm:$0xff] %vm8363, %v8268
        %8413 = vst.msk [vmem:[#allocation2 + $0x188] sm:$0xff] %vm8363, %v8270
        %8414 = vst.msk [vmem:[#allocation2 + $0x190] sm:$0xff] %vm8363, %v8272
        %8415 = vst.msk [vmem:[#allocation2 + $0x198] sm:$0xff] %vm8363, %v8274
        %8416 = vst.msk [vmem:[#allocation2 + $0x1a0] sm:$0xff] %vm8363, %v8276
        %8417 = vst.msk [vmem:[#allocation2 + $0x1a8] sm:$0xff] %vm8363, %v8278
        %8418 = vst.msk [vmem:[#allocation2 + $0x1b0] sm:$0xff] %vm8363, %v8280
        %8419 = vst.msk [vmem:[#allocation2 + $0x1b8] sm:$0xff] %vm8363, %v8282
        %8420 = vst.msk [vmem:[#allocation2 + $0x1c0] sm:$0xff] %vm8363, %v8284
        %8421 = vst.msk [vmem:[#allocation2 + $0x1c8] sm:$0xff] %vm8363, %v8286
        %8422 = vst.msk [vmem:[#allocation2 + $0x1d0] sm:$0xff] %vm8363, %v8288
        %8423 = vst.msk [vmem:[#allocation2 + $0x1d8] sm:$0xff] %vm8363, %v8290
        %8424 = vst.msk [vmem:[#allocation2 + $0x1e0] sm:$0xff] %vm8363, %v8292
        %8425 = vst.msk [vmem:[#allocation2 + $0x1e8] sm:$0xff] %vm8363, %v8294
        %8426 = vst.msk [vmem:[#allocation2 + $0x1f0] sm:$0xff] %vm8363, %v8296
        %8427 = vst.msk [vmem:[#allocation2 + $0x1f8] sm:$0xff] %vm8363, %v8298
        %v8428 = vld [vmem:[%s8042 + $0x1] sm:$0xff]
        %v8429 = vld [vmem:[%s8042 + $0x11] sm:$0xff]
        %v8430 = vld [vmem:[%s8042 + $0x21] sm:$0xff]
        %v8431 = vld [vmem:[%s8042 + $0x31] sm:$0xff]
        %v8432 = vld [vmem:[%s8042 + $0x41] sm:$0xff]
        %v8433 = vld [vmem:[%s8042 + $0x51] sm:$0xff]
        %v8434 = vld [vmem:[%s8042 + $0x61] sm:$0xff]
        %v8435 = vld [vmem:[%s8042 + $0x71] sm:$0xff]
        %v8436 = vld [vmem:[%s8042 + $0xa1] sm:$0xff]
        %v8437 = vld [vmem:[%s8042 + $0xb1] sm:$0xff]
        %v8438 = vld [vmem:[%s8042 + $0xc1] sm:$0xff]
        %v8439 = vld [vmem:[%s8042 + $0xd1] sm:$0xff]
        %v8440 = vld [vmem:[%s8042 + $0xe1] sm:$0xff]
        %v8441 = vld [vmem:[%s8042 + $0xf1] sm:$0xff]
        %v8442 = vld [vmem:[%s8042 + $0x101] sm:$0xff]
        %v8443 = vld [vmem:[%s8042 + $0x111] sm:$0xff]
        %v8444 = vld [vmem:[%s8042 + $0x141] sm:$0xff]
        %v8445 = vld [vmem:[%s8042 + $0x151] sm:$0xff]
        %v8446 = vld [vmem:[%s8042 + $0x161] sm:$0xff]
        %v8447 = vld [vmem:[%s8042 + $0x171] sm:$0xff]
        %v8448 = vld [vmem:[%s8042 + $0x181] sm:$0xff]
        %v8449 = vld [vmem:[%s8042 + $0x191] sm:$0xff]
        %v8450 = vld [vmem:[%s8042 + $0x1a1] sm:$0xff]
        %v8451 = vld [vmem:[%s8042 + $0x1b1] sm:$0xff]
        %v8452 = vld [vmem:[%s8042 + $0x1e1] sm:$0xff]
        %v8453 = vld [vmem:[%s8042 + $0x1f1] sm:$0xff]
        %v8454 = vld [vmem:[%s8042 + $0x201] sm:$0xff]
        %v8455 = vld [vmem:[%s8042 + $0x211] sm:$0xff]
        %v8456 = vld [vmem:[%s8042 + $0x221] sm:$0xff]
        %v8457 = vld [vmem:[%s8042 + $0x231] sm:$0xff]
        %v8458 = vld [vmem:[%s8042 + $0x241] sm:$0xff]
        %v8459 = vld [vmem:[%s8042 + $0x251] sm:$0xff]
        %v8460 = vld [vmem:[%s8042 + $0x281] sm:$0xff]
        %v8461 = vld [vmem:[%s8042 + $0x291] sm:$0xff]
        %v8462 = vld [vmem:[%s8042 + $0x2a1] sm:$0xff]
        %v8463 = vld [vmem:[%s8042 + $0x2b1] sm:$0xff]
        %v8464 = vld [vmem:[%s8042 + $0x2c1] sm:$0xff]
        %v8465 = vld [vmem:[%s8042 + $0x2d1] sm:$0xff]
        %v8466 = vld [vmem:[%s8042 + $0x2e1] sm:$0xff]
        %v8467 = vld [vmem:[%s8042 + $0x2f1] sm:$0xff]
        %v8468 = vld [vmem:[%s8042 + $0x321] sm:$0xff]
        %v8469 = vld [vmem:[%s8042 + $0x331] sm:$0xff]
        %v8470 = vld [vmem:[%s8042 + $0x341] sm:$0xff]
        %v8471 = vld [vmem:[%s8042 + $0x351] sm:$0xff]
        %v8472 = vld [vmem:[%s8042 + $0x361] sm:$0xff]
        %v8473 = vld [vmem:[%s8042 + $0x371] sm:$0xff]
        %v8474 = vld [vmem:[%s8042 + $0x381] sm:$0xff]
        %v8475 = vld [vmem:[%s8042 + $0x391] sm:$0xff]
        %v8476 = vld [vmem:[%s8042 + $0x3c1] sm:$0xff]
        %v8477 = vld [vmem:[%s8042 + $0x3d1] sm:$0xff]
        %v8478 = vld [vmem:[%s8042 + $0x3e1] sm:$0xff]
        %v8479 = vld [vmem:[%s8042 + $0x3f1] sm:$0xff]
        %v8480 = vld [vmem:[%s8042 + $0x401] sm:$0xff]
        %v8481 = vld [vmem:[%s8042 + $0x411] sm:$0xff]
        %v8482 = vld [vmem:[%s8042 + $0x421] sm:$0xff]
        %v8483 = vld [vmem:[%s8042 + $0x431] sm:$0xff]
        %v8484 = vld [vmem:[%s8042 + $0x461] sm:$0xff]
        %v8485 = vld [vmem:[%s8042 + $0x471] sm:$0xff]
        %v8486 = vld [vmem:[%s8042 + $0x481] sm:$0xff]
        %v8487 = vld [vmem:[%s8042 + $0x491] sm:$0xff]
        %v8488 = vld [vmem:[%s8042 + $0x4a1] sm:$0xff]
        %v8489 = vld [vmem:[%s8042 + $0x4b1] sm:$0xff]
        %v8490 = vld [vmem:[%s8042 + $0x4c1] sm:$0xff]
        %v8491 = vld [vmem:[%s8042 + $0x4d1] sm:$0xff]
        %8556 = vrot.lane.b32.xlu0 %v8428, 88
        %v8557 = vpop.permute.xlu0 %8556
        %8558 = vrot.lane.b32.xlu0 %v8429, 88
        %v8559 = vpop.permute.xlu0 %8558
        %8560 = vrot.lane.b32.xlu0 %v8430, 88
        %v8561 = vpop.permute.xlu0 %8560
        %8562 = vrot.lane.b32.xlu0 %v8431, 88
        %v8563 = vpop.permute.xlu0 %8562
        %8564 = vrot.lane.b32.xlu0 %v8432, 88
        %v8565 = vpop.permute.xlu0 %8564
        %8566 = vrot.lane.b32.xlu0 %v8433, 88
        %v8567 = vpop.permute.xlu0 %8566
        %8568 = vrot.lane.b32.xlu0 %v8434, 88
        %v8569 = vpop.permute.xlu0 %8568
        %8570 = vrot.lane.b32.xlu0 %v8435, 88
        %v8571 = vpop.permute.xlu0 %8570
        %8572 = vrot.lane.b32.xlu0 %v8436, 88
        %v8573 = vpop.permute.xlu0 %8572
        %8574 = vrot.lane.b32.xlu0 %v8437, 88
        %v8575 = vpop.permute.xlu0 %8574
        %8576 = vrot.lane.b32.xlu0 %v8438, 88
        %v8577 = vpop.permute.xlu0 %8576
        %8578 = vrot.lane.b32.xlu0 %v8439, 88
        %v8579 = vpop.permute.xlu0 %8578
        %8580 = vrot.lane.b32.xlu0 %v8440, 88
        %v8581 = vpop.permute.xlu0 %8580
        %8582 = vrot.lane.b32.xlu0 %v8441, 88
        %v8583 = vpop.permute.xlu0 %8582
        %8584 = vrot.lane.b32.xlu0 %v8442, 88
        %v8585 = vpop.permute.xlu0 %8584
        %8586 = vrot.lane.b32.xlu0 %v8443, 88
        %v8587 = vpop.permute.xlu0 %8586
        %8588 = vrot.lane.b32.xlu0 %v8444, 88
        %v8589 = vpop.permute.xlu0 %8588
        %8590 = vrot.lane.b32.xlu0 %v8445, 88
        %v8591 = vpop.permute.xlu0 %8590
        %8592 = vrot.lane.b32.xlu0 %v8446, 88
        %v8593 = vpop.permute.xlu0 %8592
        %8594 = vrot.lane.b32.xlu0 %v8447, 88
        %v8595 = vpop.permute.xlu0 %8594
        %8596 = vrot.lane.b32.xlu0 %v8448, 88
        %v8597 = vpop.permute.xlu0 %8596
        %8598 = vrot.lane.b32.xlu0 %v8449, 88
        %v8599 = vpop.permute.xlu0 %8598
        %8600 = vrot.lane.b32.xlu0 %v8450, 88
        %v8601 = vpop.permute.xlu0 %8600
        %8602 = vrot.lane.b32.xlu0 %v8451, 88
        %v8603 = vpop.permute.xlu0 %8602
        %8604 = vrot.lane.b32.xlu0 %v8452, 88
        %v8605 = vpop.permute.xlu0 %8604
        %8606 = vrot.lane.b32.xlu0 %v8453, 88
        %v8607 = vpop.permute.xlu0 %8606
        %8608 = vrot.lane.b32.xlu0 %v8454, 88
        %v8609 = vpop.permute.xlu0 %8608
        %8610 = vrot.lane.b32.xlu0 %v8455, 88
        %v8611 = vpop.permute.xlu0 %8610
        %8612 = vrot.lane.b32.xlu0 %v8456, 88
        %v8613 = vpop.permute.xlu0 %8612
        %8614 = vrot.lane.b32.xlu0 %v8457, 88
        %v8615 = vpop.permute.xlu0 %8614
        %8616 = vrot.lane.b32.xlu0 %v8458, 88
        %v8617 = vpop.permute.xlu0 %8616
        %8618 = vrot.lane.b32.xlu0 %v8459, 88
        %v8619 = vpop.permute.xlu0 %8618
        %8620 = vrot.lane.b32.xlu0 %v8460, 88
        %v8621 = vpop.permute.xlu0 %8620
        %8622 = vrot.lane.b32.xlu0 %v8461, 88
        %v8623 = vpop.permute.xlu0 %8622
        %8624 = vrot.lane.b32.xlu0 %v8462, 88
        %v8625 = vpop.permute.xlu0 %8624
        %8626 = vrot.lane.b32.xlu0 %v8463, 88
        %v8627 = vpop.permute.xlu0 %8626
        %8628 = vrot.lane.b32.xlu0 %v8464, 88
        %v8629 = vpop.permute.xlu0 %8628
        %8630 = vrot.lane.b32.xlu0 %v8465, 88
        %v8631 = vpop.permute.xlu0 %8630
        %8632 = vrot.lane.b32.xlu0 %v8466, 88
        %v8633 = vpop.permute.xlu0 %8632
        %8634 = vrot.lane.b32.xlu0 %v8467, 88
        %v8635 = vpop.permute.xlu0 %8634
        %8636 = vrot.lane.b32.xlu0 %v8468, 88
        %v8637 = vpop.permute.xlu0 %8636
        %8638 = vrot.lane.b32.xlu0 %v8469, 88
        %v8639 = vpop.permute.xlu0 %8638
        %8640 = vrot.lane.b32.xlu0 %v8470, 88
        %v8641 = vpop.permute.xlu0 %8640
        %8642 = vrot.lane.b32.xlu0 %v8471, 88
        %v8643 = vpop.permute.xlu0 %8642
        %8644 = vrot.lane.b32.xlu0 %v8472, 88
        %v8645 = vpop.permute.xlu0 %8644
        %8646 = vrot.lane.b32.xlu0 %v8473, 88
        %v8647 = vpop.permute.xlu0 %8646
        %8648 = vrot.lane.b32.xlu0 %v8474, 88
        %v8649 = vpop.permute.xlu0 %8648
        %8650 = vrot.lane.b32.xlu0 %v8475, 88
        %v8651 = vpop.permute.xlu0 %8650
        %8652 = vrot.lane.b32.xlu0 %v8476, 88
        %v8653 = vpop.permute.xlu0 %8652
        %8654 = vrot.lane.b32.xlu0 %v8477, 88
        %v8655 = vpop.permute.xlu0 %8654
        %8656 = vrot.lane.b32.xlu0 %v8478, 88
        %v8657 = vpop.permute.xlu0 %8656
        %8658 = vrot.lane.b32.xlu0 %v8479, 88
        %v8659 = vpop.permute.xlu0 %8658
        %8660 = vrot.lane.b32.xlu0 %v8480, 88
        %v8661 = vpop.permute.xlu0 %8660
        %8662 = vrot.lane.b32.xlu0 %v8481, 88
        %v8663 = vpop.permute.xlu0 %8662
        %8664 = vrot.lane.b32.xlu0 %v8482, 88
        %v8665 = vpop.permute.xlu0 %8664
        %8666 = vrot.lane.b32.xlu0 %v8483, 88
        %v8667 = vpop.permute.xlu0 %8666
        %8668 = vrot.lane.b32.xlu0 %v8484, 88
        %v8669 = vpop.permute.xlu0 %8668
        %8670 = vrot.lane.b32.xlu0 %v8485, 88
        %v8671 = vpop.permute.xlu0 %8670
        %8672 = vrot.lane.b32.xlu0 %v8486, 88
        %v8673 = vpop.permute.xlu0 %8672
        %8674 = vrot.lane.b32.xlu0 %v8487, 88
        %v8675 = vpop.permute.xlu0 %8674
        %8676 = vrot.lane.b32.xlu0 %v8488, 88
        %v8677 = vpop.permute.xlu0 %8676
        %8678 = vrot.lane.b32.xlu0 %v8489, 88
        %v8679 = vpop.permute.xlu0 %8678
        %8680 = vrot.lane.b32.xlu0 %v8490, 88
        %v8681 = vpop.permute.xlu0 %8680
        %8682 = vrot.lane.b32.xlu0 %v8491, 88
        %v8683 = vpop.permute.xlu0 %8682
        %vm8748 = vcmask 753344
        %8749 = vst.msk [vmem:[#allocation2] sm:$0xff] %vm8748, %v8557
        %8750 = vst.msk [vmem:[#allocation2 + $0x8] sm:$0xff] %vm8748, %v8559
        %8751 = vst.msk [vmem:[#allocation2 + $0x10] sm:$0xff] %vm8748, %v8561
        %8752 = vst.msk [vmem:[#allocation2 + $0x18] sm:$0xff] %vm8748, %v8563
        %8753 = vst.msk [vmem:[#allocation2 + $0x20] sm:$0xff] %vm8748, %v8565
        %8754 = vst.msk [vmem:[#allocation2 + $0x28] sm:$0xff] %vm8748, %v8567
        %8755 = vst.msk [vmem:[#allocation2 + $0x30] sm:$0xff] %vm8748, %v8569
        %8756 = vst.msk [vmem:[#allocation2 + $0x38] sm:$0xff] %vm8748, %v8571
        %8757 = vst.msk [vmem:[#allocation2 + $0x40] sm:$0xff] %vm8748, %v8573
        %8758 = vst.msk [vmem:[#allocation2 + $0x48] sm:$0xff] %vm8748, %v8575
        %8759 = vst.msk [vmem:[#allocation2 + $0x50] sm:$0xff] %vm8748, %v8577
        %8760 = vst.msk [vmem:[#allocation2 + $0x58] sm:$0xff] %vm8748, %v8579
        %8761 = vst.msk [vmem:[#allocation2 + $0x60] sm:$0xff] %vm8748, %v8581
        %8762 = vst.msk [vmem:[#allocation2 + $0x68] sm:$0xff] %vm8748, %v8583
        %8763 = vst.msk [vmem:[#allocation2 + $0x70] sm:$0xff] %vm8748, %v8585
        %8764 = vst.msk [vmem:[#allocation2 + $0x78] sm:$0xff] %vm8748, %v8587
        %8765 = vst.msk [vmem:[#allocation2 + $0x80] sm:$0xff] %vm8748, %v8589
        %8766 = vst.msk [vmem:[#allocation2 + $0x88] sm:$0xff] %vm8748, %v8591
        %8767 = vst.msk [vmem:[#allocation2 + $0x90] sm:$0xff] %vm8748, %v8593
        %8768 = vst.msk [vmem:[#allocation2 + $0x98] sm:$0xff] %vm8748, %v8595
        %8769 = vst.msk [vmem:[#allocation2 + $0xa0] sm:$0xff] %vm8748, %v8597
        %8770 = vst.msk [vmem:[#allocation2 + $0xa8] sm:$0xff] %vm8748, %v8599
        %8771 = vst.msk [vmem:[#allocation2 + $0xb0] sm:$0xff] %vm8748, %v8601
        %8772 = vst.msk [vmem:[#allocation2 + $0xb8] sm:$0xff] %vm8748, %v8603
        %8773 = vst.msk [vmem:[#allocation2 + $0xc0] sm:$0xff] %vm8748, %v8605
        %8774 = vst.msk [vmem:[#allocation2 + $0xc8] sm:$0xff] %vm8748, %v8607
        %8775 = vst.msk [vmem:[#allocation2 + $0xd0] sm:$0xff] %vm8748, %v8609
        %8776 = vst.msk [vmem:[#allocation2 + $0xd8] sm:$0xff] %vm8748, %v8611
        %8777 = vst.msk [vmem:[#allocation2 + $0xe0] sm:$0xff] %vm8748, %v8613
        %8778 = vst.msk [vmem:[#allocation2 + $0xe8] sm:$0xff] %vm8748, %v8615
        %8779 = vst.msk [vmem:[#allocation2 + $0xf0] sm:$0xff] %vm8748, %v8617
        %8780 = vst.msk [vmem:[#allocation2 + $0xf8] sm:$0xff] %vm8748, %v8619
        %8781 = vst.msk [vmem:[#allocation2 + $0x100] sm:$0xff] %vm8748, %v8621
        %8782 = vst.msk [vmem:[#allocation2 + $0x108] sm:$0xff] %vm8748, %v8623
        %8783 = vst.msk [vmem:[#allocation2 + $0x110] sm:$0xff] %vm8748, %v8625
        %8784 = vst.msk [vmem:[#allocation2 + $0x118] sm:$0xff] %vm8748, %v8627
        %8785 = vst.msk [vmem:[#allocation2 + $0x120] sm:$0xff] %vm8748, %v8629
        %8786 = vst.msk [vmem:[#allocation2 + $0x128] sm:$0xff] %vm8748, %v8631
        %8787 = vst.msk [vmem:[#allocation2 + $0x130] sm:$0xff] %vm8748, %v8633
        %8788 = vst.msk [vmem:[#allocation2 + $0x138] sm:$0xff] %vm8748, %v8635
        %8789 = vst.msk [vmem:[#allocation2 + $0x140] sm:$0xff] %vm8748, %v8637
        %8790 = vst.msk [vmem:[#allocation2 + $0x148] sm:$0xff] %vm8748, %v8639
        %8791 = vst.msk [vmem:[#allocation2 + $0x150] sm:$0xff] %vm8748, %v8641
        %8792 = vst.msk [vmem:[#allocation2 + $0x158] sm:$0xff] %vm8748, %v8643
        %8793 = vst.msk [vmem:[#allocation2 + $0x160] sm:$0xff] %vm8748, %v8645
        %8794 = vst.msk [vmem:[#allocation2 + $0x168] sm:$0xff] %vm8748, %v8647
        %8795 = vst.msk [vmem:[#allocation2 + $0x170] sm:$0xff] %vm8748, %v8649
        %8796 = vst.msk [vmem:[#allocation2 + $0x178] sm:$0xff] %vm8748, %v8651
        %8797 = vst.msk [vmem:[#allocation2 + $0x180] sm:$0xff] %vm8748, %v8653
        %8798 = vst.msk [vmem:[#allocation2 + $0x188] sm:$0xff] %vm8748, %v8655
        %8799 = vst.msk [vmem:[#allocation2 + $0x190] sm:$0xff] %vm8748, %v8657
        %8800 = vst.msk [vmem:[#allocation2 + $0x198] sm:$0xff] %vm8748, %v8659
        %8801 = vst.msk [vmem:[#allocation2 + $0x1a0] sm:$0xff] %vm8748, %v8661
        %8802 = vst.msk [vmem:[#allocation2 + $0x1a8] sm:$0xff] %vm8748, %v8663
        %8803 = vst.msk [vmem:[#allocation2 + $0x1b0] sm:$0xff] %vm8748, %v8665
        %8804 = vst.msk [vmem:[#allocation2 + $0x1b8] sm:$0xff] %vm8748, %v8667
        %8805 = vst.msk [vmem:[#allocation2 + $0x1c0] sm:$0xff] %vm8748, %v8669
        %8806 = vst.msk [vmem:[#allocation2 + $0x1c8] sm:$0xff] %vm8748, %v8671
        %8807 = vst.msk [vmem:[#allocation2 + $0x1d0] sm:$0xff] %vm8748, %v8673
        %8808 = vst.msk [vmem:[#allocation2 + $0x1d8] sm:$0xff] %vm8748, %v8675
        %8809 = vst.msk [vmem:[#allocation2 + $0x1e0] sm:$0xff] %vm8748, %v8677
        %8810 = vst.msk [vmem:[#allocation2 + $0x1e8] sm:$0xff] %vm8748, %v8679
        %8811 = vst.msk [vmem:[#allocation2 + $0x1f0] sm:$0xff] %vm8748, %v8681
        %8812 = vst.msk [vmem:[#allocation2 + $0x1f8] sm:$0xff] %vm8748, %v8683
        %v8813 = vld [vmem:[%s8042 + $0x2] sm:$0xff]
        %v8814 = vld [vmem:[%s8042 + $0x12] sm:$0xff]
        %v8815 = vld [vmem:[%s8042 + $0x22] sm:$0xff]
        %v8816 = vld [vmem:[%s8042 + $0x32] sm:$0xff]
        %v8817 = vld [vmem:[%s8042 + $0x42] sm:$0xff]
        %v8818 = vld [vmem:[%s8042 + $0x52] sm:$0xff]
        %v8819 = vld [vmem:[%s8042 + $0x62] sm:$0xff]
        %v8820 = vld [vmem:[%s8042 + $0x72] sm:$0xff]
        %v8821 = vld [vmem:[%s8042 + $0xa2] sm:$0xff]
        %v8822 = vld [vmem:[%s8042 + $0xb2] sm:$0xff]
        %v8823 = vld [vmem:[%s8042 + $0xc2] sm:$0xff]
        %v8824 = vld [vmem:[%s8042 + $0xd2] sm:$0xff]
        %v8825 = vld [vmem:[%s8042 + $0xe2] sm:$0xff]
        %v8826 = vld [vmem:[%s8042 + $0xf2] sm:$0xff]
        %v8827 = vld [vmem:[%s8042 + $0x102] sm:$0xff]
        %v8828 = vld [vmem:[%s8042 + $0x112] sm:$0xff]
        %v8829 = vld [vmem:[%s8042 + $0x142] sm:$0xff]
        %v8830 = vld [vmem:[%s8042 + $0x152] sm:$0xff]
        %v8831 = vld [vmem:[%s8042 + $0x162] sm:$0xff]
        %v8832 = vld [vmem:[%s8042 + $0x172] sm:$0xff]
        %v8833 = vld [vmem:[%s8042 + $0x182] sm:$0xff]
        %v8834 = vld [vmem:[%s8042 + $0x192] sm:$0xff]
        %v8835 = vld [vmem:[%s8042 + $0x1a2] sm:$0xff]
        %v8836 = vld [vmem:[%s8042 + $0x1b2] sm:$0xff]
        %v8837 = vld [vmem:[%s8042 + $0x1e2] sm:$0xff]
        %v8838 = vld [vmem:[%s8042 + $0x1f2] sm:$0xff]
        %v8839 = vld [vmem:[%s8042 + $0x202] sm:$0xff]
        %v8840 = vld [vmem:[%s8042 + $0x212] sm:$0xff]
        %v8841 = vld [vmem:[%s8042 + $0x222] sm:$0xff]
        %v8842 = vld [vmem:[%s8042 + $0x232] sm:$0xff]
        %v8843 = vld [vmem:[%s8042 + $0x242] sm:$0xff]
        %v8844 = vld [vmem:[%s8042 + $0x252] sm:$0xff]
        %v8845 = vld [vmem:[%s8042 + $0x282] sm:$0xff]
        %v8846 = vld [vmem:[%s8042 + $0x292] sm:$0xff]
        %v8847 = vld [vmem:[%s8042 + $0x2a2] sm:$0xff]
        %v8848 = vld [vmem:[%s8042 + $0x2b2] sm:$0xff]
        %v8849 = vld [vmem:[%s8042 + $0x2c2] sm:$0xff]
        %v8850 = vld [vmem:[%s8042 + $0x2d2] sm:$0xff]
        %v8851 = vld [vmem:[%s8042 + $0x2e2] sm:$0xff]
        %v8852 = vld [vmem:[%s8042 + $0x2f2] sm:$0xff]
        %v8853 = vld [vmem:[%s8042 + $0x322] sm:$0xff]
        %v8854 = vld [vmem:[%s8042 + $0x332] sm:$0xff]
        %v8855 = vld [vmem:[%s8042 + $0x342] sm:$0xff]
        %v8856 = vld [vmem:[%s8042 + $0x352] sm:$0xff]
        %v8857 = vld [vmem:[%s8042 + $0x362] sm:$0xff]
        %v8858 = vld [vmem:[%s8042 + $0x372] sm:$0xff]
        %v8859 = vld [vmem:[%s8042 + $0x382] sm:$0xff]
        %v8860 = vld [vmem:[%s8042 + $0x392] sm:$0xff]
        %v8861 = vld [vmem:[%s8042 + $0x3c2] sm:$0xff]
        %v8862 = vld [vmem:[%s8042 + $0x3d2] sm:$0xff]
        %v8863 = vld [vmem:[%s8042 + $0x3e2] sm:$0xff]
        %v8864 = vld [vmem:[%s8042 + $0x3f2] sm:$0xff]
        %v8865 = vld [vmem:[%s8042 + $0x402] sm:$0xff]
        %v8866 = vld [vmem:[%s8042 + $0x412] sm:$0xff]
        %v8867 = vld [vmem:[%s8042 + $0x422] sm:$0xff]
        %v8868 = vld [vmem:[%s8042 + $0x432] sm:$0xff]
        %v8869 = vld [vmem:[%s8042 + $0x462] sm:$0xff]
        %v8870 = vld [vmem:[%s8042 + $0x472] sm:$0xff]
        %v8871 = vld [vmem:[%s8042 + $0x482] sm:$0xff]
        %v8872 = vld [vmem:[%s8042 + $0x492] sm:$0xff]
        %v8873 = vld [vmem:[%s8042 + $0x4a2] sm:$0xff]
        %v8874 = vld [vmem:[%s8042 + $0x4b2] sm:$0xff]
        %v8875 = vld [vmem:[%s8042 + $0x4c2] sm:$0xff]
        %v8876 = vld [vmem:[%s8042 + $0x4d2] sm:$0xff]
        %8941 = vrot.lane.b32.xlu0 %v8813, 92
        %v8942 = vpop.permute.xlu0 %8941
        %8943 = vrot.lane.b32.xlu0 %v8814, 92
        %v8944 = vpop.permute.xlu0 %8943
        %8945 = vrot.lane.b32.xlu0 %v8815, 92
        %v8946 = vpop.permute.xlu0 %8945
        %8947 = vrot.lane.b32.xlu0 %v8816, 92
        %v8948 = vpop.permute.xlu0 %8947
        %8949 = vrot.lane.b32.xlu0 %v8817, 92
        %v8950 = vpop.permute.xlu0 %8949
        %8951 = vrot.lane.b32.xlu0 %v8818, 92
        %v8952 = vpop.permute.xlu0 %8951
        %8953 = vrot.lane.b32.xlu0 %v8819, 92
        %v8954 = vpop.permute.xlu0 %8953
        %8955 = vrot.lane.b32.xlu0 %v8820, 92
        %v8956 = vpop.permute.xlu0 %8955
        %8957 = vrot.lane.b32.xlu0 %v8821, 92
        %v8958 = vpop.permute.xlu0 %8957
        %8959 = vrot.lane.b32.xlu0 %v8822, 92
        %v8960 = vpop.permute.xlu0 %8959
        %8961 = vrot.lane.b32.xlu0 %v8823, 92
        %v8962 = vpop.permute.xlu0 %8961
        %8963 = vrot.lane.b32.xlu0 %v8824, 92
        %v8964 = vpop.permute.xlu0 %8963
        %8965 = vrot.lane.b32.xlu0 %v8825, 92
        %v8966 = vpop.permute.xlu0 %8965
        %8967 = vrot.lane.b32.xlu0 %v8826, 92
        %v8968 = vpop.permute.xlu0 %8967
        %8969 = vrot.lane.b32.xlu0 %v8827, 92
        %v8970 = vpop.permute.xlu0 %8969
        %8971 = vrot.lane.b32.xlu0 %v8828, 92
        %v8972 = vpop.permute.xlu0 %8971
        %8973 = vrot.lane.b32.xlu0 %v8829, 92
        %v8974 = vpop.permute.xlu0 %8973
        %8975 = vrot.lane.b32.xlu0 %v8830, 92
        %v8976 = vpop.permute.xlu0 %8975
        %8977 = vrot.lane.b32.xlu0 %v8831, 92
        %v8978 = vpop.permute.xlu0 %8977
        %8979 = vrot.lane.b32.xlu0 %v8832, 92
        %v8980 = vpop.permute.xlu0 %8979
        %8981 = vrot.lane.b32.xlu0 %v8833, 92
        %v8982 = vpop.permute.xlu0 %8981
        %8983 = vrot.lane.b32.xlu0 %v8834, 92
        %v8984 = vpop.permute.xlu0 %8983
        %8985 = vrot.lane.b32.xlu0 %v8835, 92
        %v8986 = vpop.permute.xlu0 %8985
        %8987 = vrot.lane.b32.xlu0 %v8836, 92
        %v8988 = vpop.permute.xlu0 %8987
        %8989 = vrot.lane.b32.xlu0 %v8837, 92
        %v8990 = vpop.permute.xlu0 %8989
        %8991 = vrot.lane.b32.xlu0 %v8838, 92
        %v8992 = vpop.permute.xlu0 %8991
        %8993 = vrot.lane.b32.xlu0 %v8839, 92
        %v8994 = vpop.permute.xlu0 %8993
        %8995 = vrot.lane.b32.xlu0 %v8840, 92
        %v8996 = vpop.permute.xlu0 %8995
        %8997 = vrot.lane.b32.xlu0 %v8841, 92
        %v8998 = vpop.permute.xlu0 %8997
        %8999 = vrot.lane.b32.xlu0 %v8842, 92
        %v9000 = vpop.permute.xlu0 %8999
        %9001 = vrot.lane.b32.xlu0 %v8843, 92
        %v9002 = vpop.permute.xlu0 %9001
        %9003 = vrot.lane.b32.xlu0 %v8844, 92
        %v9004 = vpop.permute.xlu0 %9003
        %9005 = vrot.lane.b32.xlu0 %v8845, 92
        %v9006 = vpop.permute.xlu0 %9005
        %9007 = vrot.lane.b32.xlu0 %v8846, 92
        %v9008 = vpop.permute.xlu0 %9007
        %9009 = vrot.lane.b32.xlu0 %v8847, 92
        %v9010 = vpop.permute.xlu0 %9009
        %9011 = vrot.lane.b32.xlu0 %v8848, 92
        %v9012 = vpop.permute.xlu0 %9011
        %9013 = vrot.lane.b32.xlu0 %v8849, 92
        %v9014 = vpop.permute.xlu0 %9013
        %9015 = vrot.lane.b32.xlu0 %v8850, 92
        %v9016 = vpop.permute.xlu0 %9015
        %9017 = vrot.lane.b32.xlu0 %v8851, 92
        %v9018 = vpop.permute.xlu0 %9017
        %9019 = vrot.lane.b32.xlu0 %v8852, 92
        %v9020 = vpop.permute.xlu0 %9019
        %9021 = vrot.lane.b32.xlu0 %v8853, 92
        %v9022 = vpop.permute.xlu0 %9021
        %9023 = vrot.lane.b32.xlu0 %v8854, 92
        %v9024 = vpop.permute.xlu0 %9023
        %9025 = vrot.lane.b32.xlu0 %v8855, 92
        %v9026 = vpop.permute.xlu0 %9025
        %9027 = vrot.lane.b32.xlu0 %v8856, 92
        %v9028 = vpop.permute.xlu0 %9027
        %9029 = vrot.lane.b32.xlu0 %v8857, 92
        %v9030 = vpop.permute.xlu0 %9029
        %9031 = vrot.lane.b32.xlu0 %v8858, 92
        %v9032 = vpop.permute.xlu0 %9031
        %9033 = vrot.lane.b32.xlu0 %v8859, 92
        %v9034 = vpop.permute.xlu0 %9033
        %9035 = vrot.lane.b32.xlu0 %v8860, 92
        %v9036 = vpop.permute.xlu0 %9035
        %9037 = vrot.lane.b32.xlu0 %v8861, 92
        %v9038 = vpop.permute.xlu0 %9037
        %9039 = vrot.lane.b32.xlu0 %v8862, 92
        %v9040 = vpop.permute.xlu0 %9039
        %9041 = vrot.lane.b32.xlu0 %v8863, 92
        %v9042 = vpop.permute.xlu0 %9041
        %9043 = vrot.lane.b32.xlu0 %v8864, 92
        %v9044 = vpop.permute.xlu0 %9043
        %9045 = vrot.lane.b32.xlu0 %v8865, 92
        %v9046 = vpop.permute.xlu0 %9045
        %9047 = vrot.lane.b32.xlu0 %v8866, 92
        %v9048 = vpop.permute.xlu0 %9047
        %9049 = vrot.lane.b32.xlu0 %v8867, 92
        %v9050 = vpop.permute.xlu0 %9049
        %9051 = vrot.lane.b32.xlu0 %v8868, 92
        %v9052 = vpop.permute.xlu0 %9051
        %9053 = vrot.lane.b32.xlu0 %v8869, 92
        %v9054 = vpop.permute.xlu0 %9053
        %9055 = vrot.lane.b32.xlu0 %v8870, 92
        %v9056 = vpop.permute.xlu0 %9055
        %9057 = vrot.lane.b32.xlu0 %v8871, 92
        %v9058 = vpop.permute.xlu0 %9057
        %9059 = vrot.lane.b32.xlu0 %v8872, 92
        %v9060 = vpop.permute.xlu0 %9059
        %9061 = vrot.lane.b32.xlu0 %v8873, 92
        %v9062 = vpop.permute.xlu0 %9061
        %9063 = vrot.lane.b32.xlu0 %v8874, 92
        %v9064 = vpop.permute.xlu0 %9063
        %9065 = vrot.lane.b32.xlu0 %v8875, 92
        %v9066 = vpop.permute.xlu0 %9065
        %9067 = vrot.lane.b32.xlu0 %v8876, 92
        %v9068 = vpop.permute.xlu0 %9067
        %vm9133 = vcmask 786144
        %9134 = vst.msk [vmem:[#allocation2] sm:$0xff] %vm9133, %v8942
        %9135 = vst.msk [vmem:[#allocation2 + $0x8] sm:$0xff] %vm9133, %v8944
        %9136 = vst.msk [vmem:[#allocation2 + $0x10] sm:$0xff] %vm9133, %v8946
        %9137 = vst.msk [vmem:[#allocation2 + $0x18] sm:$0xff] %vm9133, %v8948
        %9138 = vst.msk [vmem:[#allocation2 + $0x20] sm:$0xff] %vm9133, %v8950
        %9139 = vst.msk [vmem:[#allocation2 + $0x28] sm:$0xff] %vm9133, %v8952
        %9140 = vst.msk [vmem:[#allocation2 + $0x30] sm:$0xff] %vm9133, %v8954
        %9141 = vst.msk [vmem:[#allocation2 + $0x38] sm:$0xff] %vm9133, %v8956
        %9142 = vst.msk [vmem:[#allocation2 + $0x40] sm:$0xff] %vm9133, %v8958
        %9143 = vst.msk [vmem:[#allocation2 + $0x48] sm:$0xff] %vm9133, %v8960
        %9144 = vst.msk [vmem:[#allocation2 + $0x50] sm:$0xff] %vm9133, %v8962
        %9145 = vst.msk [vmem:[#allocation2 + $0x58] sm:$0xff] %vm9133, %v8964
        %9146 = vst.msk [vmem:[#allocation2 + $0x60] sm:$0xff] %vm9133, %v8966
        %9147 = vst.msk [vmem:[#allocation2 + $0x68] sm:$0xff] %vm9133, %v8968
        %9148 = vst.msk [vmem:[#allocation2 + $0x70] sm:$0xff] %vm9133, %v8970
        %9149 = vst.msk [vmem:[#allocation2 + $0x78] sm:$0xff] %vm9133, %v8972
        %9150 = vst.msk [vmem:[#allocation2 + $0x80] sm:$0xff] %vm9133, %v8974
        %9151 = vst.msk [vmem:[#allocation2 + $0x88] sm:$0xff] %vm9133, %v8976
        %9152 = vst.msk [vmem:[#allocation2 + $0x90] sm:$0xff] %vm9133, %v8978
        %9153 = vst.msk [vmem:[#allocation2 + $0x98] sm:$0xff] %vm9133, %v8980
        %9154 = vst.msk [vmem:[#allocation2 + $0xa0] sm:$0xff] %vm9133, %v8982
        %9155 = vst.msk [vmem:[#allocation2 + $0xa8] sm:$0xff] %vm9133, %v8984
        %9156 = vst.msk [vmem:[#allocation2 + $0xb0] sm:$0xff] %vm9133, %v8986
        %9157 = vst.msk [vmem:[#allocation2 + $0xb8] sm:$0xff] %vm9133, %v8988
        %9158 = vst.msk [vmem:[#allocation2 + $0xc0] sm:$0xff] %vm9133, %v8990
        %9159 = vst.msk [vmem:[#allocation2 + $0xc8] sm:$0xff] %vm9133, %v8992
        %9160 = vst.msk [vmem:[#allocation2 + $0xd0] sm:$0xff] %vm9133, %v8994
        %9161 = vst.msk [vmem:[#allocation2 + $0xd8] sm:$0xff] %vm9133, %v8996
        %9162 = vst.msk [vmem:[#allocation2 + $0xe0] sm:$0xff] %vm9133, %v8998
        %9163 = vst.msk [vmem:[#allocation2 + $0xe8] sm:$0xff] %vm9133, %v9000
        %9164 = vst.msk [vmem:[#allocation2 + $0xf0] sm:$0xff] %vm9133, %v9002
        %9165 = vst.msk [vmem:[#allocation2 + $0xf8] sm:$0xff] %vm9133, %v9004
        %9166 = vst.msk [vmem:[#allocation2 + $0x100] sm:$0xff] %vm9133, %v9006
        %9167 = vst.msk [vmem:[#allocation2 + $0x108] sm:$0xff] %vm9133, %v9008
        %9168 = vst.msk [vmem:[#allocation2 + $0x110] sm:$0xff] %vm9133, %v9010
        %9169 = vst.msk [vmem:[#allocation2 + $0x118] sm:$0xff] %vm9133, %v9012
        %9170 = vst.msk [vmem:[#allocation2 + $0x120] sm:$0xff] %vm9133, %v9014
        %9171 = vst.msk [vmem:[#allocation2 + $0x128] sm:$0xff] %vm9133, %v9016
        %9172 = vst.msk [vmem:[#allocation2 + $0x130] sm:$0xff] %vm9133, %v9018
        %9173 = vst.msk [vmem:[#allocation2 + $0x138] sm:$0xff] %vm9133, %v9020
        %9174 = vst.msk [vmem:[#allocation2 + $0x140] sm:$0xff] %vm9133, %v9022
        %9175 = vst.msk [vmem:[#allocation2 + $0x148] sm:$0xff] %vm9133, %v9024
        %9176 = vst.msk [vmem:[#allocation2 + $0x150] sm:$0xff] %vm9133, %v9026
        %9177 = vst.msk [vmem:[#allocation2 + $0x158] sm:$0xff] %vm9133, %v9028
        %9178 = vst.msk [vmem:[#allocation2 + $0x160] sm:$0xff] %vm9133, %v9030
        %9179 = vst.msk [vmem:[#allocation2 + $0x168] sm:$0xff] %vm9133, %v9032
        %9180 = vst.msk [vmem:[#allocation2 + $0x170] sm:$0xff] %vm9133, %v9034
        %9181 = vst.msk [vmem:[#allocation2 + $0x178] sm:$0xff] %vm9133, %v9036
        %9182 = vst.msk [vmem:[#allocation2 + $0x180] sm:$0xff] %vm9133, %v9038
        %9183 = vst.msk [vmem:[#allocation2 + $0x188] sm:$0xff] %vm9133, %v9040
        %9184 = vst.msk [vmem:[#allocation2 + $0x190] sm:$0xff] %vm9133, %v9042
        %9185 = vst.msk [vmem:[#allocation2 + $0x198] sm:$0xff] %vm9133, %v9044
        %9186 = vst.msk [vmem:[#allocation2 + $0x1a0] sm:$0xff] %vm9133, %v9046
        %9187 = vst.msk [vmem:[#allocation2 + $0x1a8] sm:$0xff] %vm9133, %v9048
        %9188 = vst.msk [vmem:[#allocation2 + $0x1b0] sm:$0xff] %vm9133, %v9050
        %9189 = vst.msk [vmem:[#allocation2 + $0x1b8] sm:$0xff] %vm9133, %v9052
        %9190 = vst.msk [vmem:[#allocation2 + $0x1c0] sm:$0xff] %vm9133, %v9054
        %9191 = vst.msk [vmem:[#allocation2 + $0x1c8] sm:$0xff] %vm9133, %v9056
        %9192 = vst.msk [vmem:[#allocation2 + $0x1d0] sm:$0xff] %vm9133, %v9058
        %9193 = vst.msk [vmem:[#allocation2 + $0x1d8] sm:$0xff] %vm9133, %v9060
        %9194 = vst.msk [vmem:[#allocation2 + $0x1e0] sm:$0xff] %vm9133, %v9062
        %9195 = vst.msk [vmem:[#allocation2 + $0x1e8] sm:$0xff] %vm9133, %v9064
        %9196 = vst.msk [vmem:[#allocation2 + $0x1f0] sm:$0xff] %vm9133, %v9066
        %9197 = vst.msk [vmem:[#allocation2 + $0x1f8] sm:$0xff] %vm9133, %v9068
        %s9198 = scalar_lea.vmem %s141, 352
        %v9199 = vld [vmem:[%s9198] sm:$0xff]
        %v9200 = vld [vmem:[%s9198 + $0x10] sm:$0xff]
        %v9201 = vld [vmem:[%s9198 + $0x20] sm:$0xff]
        %v9202 = vld [vmem:[%s9198 + $0x30] sm:$0xff]
        %v9203 = vld [vmem:[%s9198 + $0x40] sm:$0xff]
        %v9204 = vld [vmem:[%s9198 + $0x50] sm:$0xff]
        %v9205 = vld [vmem:[%s9198 + $0x60] sm:$0xff]
        %v9206 = vld [vmem:[%s9198 + $0x70] sm:$0xff]
        %v9207 = vld [vmem:[%s9198 + $0xa0] sm:$0xff]
        %v9208 = vld [vmem:[%s9198 + $0xb0] sm:$0xff]
        %v9209 = vld [vmem:[%s9198 + $0xc0] sm:$0xff]
        %v9210 = vld [vmem:[%s9198 + $0xd0] sm:$0xff]
        %v9211 = vld [vmem:[%s9198 + $0xe0] sm:$0xff]
        %v9212 = vld [vmem:[%s9198 + $0xf0] sm:$0xff]
        %v9213 = vld [vmem:[%s9198 + $0x100] sm:$0xff]
        %v9214 = vld [vmem:[%s9198 + $0x110] sm:$0xff]
        %v9215 = vld [vmem:[%s9198 + $0x140] sm:$0xff]
        %v9216 = vld [vmem:[%s9198 + $0x150] sm:$0xff]
        %v9217 = vld [vmem:[%s9198 + $0x160] sm:$0xff]
        %v9218 = vld [vmem:[%s9198 + $0x170] sm:$0xff]
        %v9219 = vld [vmem:[%s9198 + $0x180] sm:$0xff]
        %v9220 = vld [vmem:[%s9198 + $0x190] sm:$0xff]
        %v9221 = vld [vmem:[%s9198 + $0x1a0] sm:$0xff]
        %v9222 = vld [vmem:[%s9198 + $0x1b0] sm:$0xff]
        %v9223 = vld [vmem:[%s9198 + $0x1e0] sm:$0xff]
        %v9224 = vld [vmem:[%s9198 + $0x1f0] sm:$0xff]
        %v9225 = vld [vmem:[%s9198 + $0x200] sm:$0xff]
        %v9226 = vld [vmem:[%s9198 + $0x210] sm:$0xff]
        %v9227 = vld [vmem:[%s9198 + $0x220] sm:$0xff]
        %v9228 = vld [vmem:[%s9198 + $0x230] sm:$0xff]
        %v9229 = vld [vmem:[%s9198 + $0x240] sm:$0xff]
        %v9230 = vld [vmem:[%s9198 + $0x250] sm:$0xff]
        %v9231 = vld [vmem:[%s9198 + $0x280] sm:$0xff]
        %v9232 = vld [vmem:[%s9198 + $0x290] sm:$0xff]
        %v9233 = vld [vmem:[%s9198 + $0x2a0] sm:$0xff]
        %v9234 = vld [vmem:[%s9198 + $0x2b0] sm:$0xff]
        %v9235 = vld [vmem:[%s9198 + $0x2c0] sm:$0xff]
        %v9236 = vld [vmem:[%s9198 + $0x2d0] sm:$0xff]
        %v9237 = vld [vmem:[%s9198 + $0x2e0] sm:$0xff]
        %v9238 = vld [vmem:[%s9198 + $0x2f0] sm:$0xff]
        %v9239 = vld [vmem:[%s9198 + $0x320] sm:$0xff]
        %v9240 = vld [vmem:[%s9198 + $0x330] sm:$0xff]
        %v9241 = vld [vmem:[%s9198 + $0x340] sm:$0xff]
        %v9242 = vld [vmem:[%s9198 + $0x350] sm:$0xff]
        %v9243 = vld [vmem:[%s9198 + $0x360] sm:$0xff]
        %v9244 = vld [vmem:[%s9198 + $0x370] sm:$0xff]
        %v9245 = vld [vmem:[%s9198 + $0x380] sm:$0xff]
        %v9246 = vld [vmem:[%s9198 + $0x390] sm:$0xff]
        %v9247 = vld [vmem:[%s9198 + $0x3c0] sm:$0xff]
        %v9248 = vld [vmem:[%s9198 + $0x3d0] sm:$0xff]
        %v9249 = vld [vmem:[%s9198 + $0x3e0] sm:$0xff]
        %v9250 = vld [vmem:[%s9198 + $0x3f0] sm:$0xff]
        %v9251 = vld [vmem:[%s9198 + $0x400] sm:$0xff]
        %v9252 = vld [vmem:[%s9198 + $0x410] sm:$0xff]
        %v9253 = vld [vmem:[%s9198 + $0x420] sm:$0xff]
        %v9254 = vld [vmem:[%s9198 + $0x430] sm:$0xff]
        %v9255 = vld [vmem:[%s9198 + $0x460] sm:$0xff]
        %v9256 = vld [vmem:[%s9198 + $0x470] sm:$0xff]
        %v9257 = vld [vmem:[%s9198 + $0x480] sm:$0xff]
        %v9258 = vld [vmem:[%s9198 + $0x490] sm:$0xff]
        %v9259 = vld [vmem:[%s9198 + $0x4a0] sm:$0xff]
        %v9260 = vld [vmem:[%s9198 + $0x4b0] sm:$0xff]
        %v9261 = vld [vmem:[%s9198 + $0x4c0] sm:$0xff]
        %v9262 = vld [vmem:[%s9198 + $0x4d0] sm:$0xff]
        %9327 = vrot.lane.b32.xlu0 %v9199, 96
        %v9328 = vpop.permute.xlu0 %9327
        %9329 = vrot.lane.b32.xlu0 %v9200, 96
        %v9330 = vpop.permute.xlu0 %9329
        %9331 = vrot.lane.b32.xlu0 %v9201, 96
        %v9332 = vpop.permute.xlu0 %9331
        %9333 = vrot.lane.b32.xlu0 %v9202, 96
        %v9334 = vpop.permute.xlu0 %9333
        %9335 = vrot.lane.b32.xlu0 %v9203, 96
        %v9336 = vpop.permute.xlu0 %9335
        %9337 = vrot.lane.b32.xlu0 %v9204, 96
        %v9338 = vpop.permute.xlu0 %9337
        %9339 = vrot.lane.b32.xlu0 %v9205, 96
        %v9340 = vpop.permute.xlu0 %9339
        %9341 = vrot.lane.b32.xlu0 %v9206, 96
        %v9342 = vpop.permute.xlu0 %9341
        %9343 = vrot.lane.b32.xlu0 %v9207, 96
        %v9344 = vpop.permute.xlu0 %9343
        %9345 = vrot.lane.b32.xlu0 %v9208, 96
        %v9346 = vpop.permute.xlu0 %9345
        %9347 = vrot.lane.b32.xlu0 %v9209, 96
        %v9348 = vpop.permute.xlu0 %9347
        %9349 = vrot.lane.b32.xlu0 %v9210, 96
        %v9350 = vpop.permute.xlu0 %9349
        %9351 = vrot.lane.b32.xlu0 %v9211, 96
        %v9352 = vpop.permute.xlu0 %9351
        %9353 = vrot.lane.b32.xlu0 %v9212, 96
        %v9354 = vpop.permute.xlu0 %9353
        %9355 = vrot.lane.b32.xlu0 %v9213, 96
        %v9356 = vpop.permute.xlu0 %9355
        %9357 = vrot.lane.b32.xlu0 %v9214, 96
        %v9358 = vpop.permute.xlu0 %9357
        %9359 = vrot.lane.b32.xlu0 %v9215, 96
        %v9360 = vpop.permute.xlu0 %9359
        %9361 = vrot.lane.b32.xlu0 %v9216, 96
        %v9362 = vpop.permute.xlu0 %9361
        %9363 = vrot.lane.b32.xlu0 %v9217, 96
        %v9364 = vpop.permute.xlu0 %9363
        %9365 = vrot.lane.b32.xlu0 %v9218, 96
        %v9366 = vpop.permute.xlu0 %9365
        %9367 = vrot.lane.b32.xlu0 %v9219, 96
        %v9368 = vpop.permute.xlu0 %9367
        %9369 = vrot.lane.b32.xlu0 %v9220, 96
        %v9370 = vpop.permute.xlu0 %9369
        %9371 = vrot.lane.b32.xlu0 %v9221, 96
        %v9372 = vpop.permute.xlu0 %9371
        %9373 = vrot.lane.b32.xlu0 %v9222, 96
        %v9374 = vpop.permute.xlu0 %9373
        %9375 = vrot.lane.b32.xlu0 %v9223, 96
        %v9376 = vpop.permute.xlu0 %9375
        %9377 = vrot.lane.b32.xlu0 %v9224, 96
        %v9378 = vpop.permute.xlu0 %9377
        %9379 = vrot.lane.b32.xlu0 %v9225, 96
        %v9380 = vpop.permute.xlu0 %9379
        %9381 = vrot.lane.b32.xlu0 %v9226, 96
        %v9382 = vpop.permute.xlu0 %9381
        %9383 = vrot.lane.b32.xlu0 %v9227, 96
        %v9384 = vpop.permute.xlu0 %9383
        %9385 = vrot.lane.b32.xlu0 %v9228, 96
        %v9386 = vpop.permute.xlu0 %9385
        %9387 = vrot.lane.b32.xlu0 %v9229, 96
        %v9388 = vpop.permute.xlu0 %9387
        %9389 = vrot.lane.b32.xlu0 %v9230, 96
        %v9390 = vpop.permute.xlu0 %9389
        %9391 = vrot.lane.b32.xlu0 %v9231, 96
        %v9392 = vpop.permute.xlu0 %9391
        %9393 = vrot.lane.b32.xlu0 %v9232, 96
        %v9394 = vpop.permute.xlu0 %9393
        %9395 = vrot.lane.b32.xlu0 %v9233, 96
        %v9396 = vpop.permute.xlu0 %9395
        %9397 = vrot.lane.b32.xlu0 %v9234, 96
        %v9398 = vpop.permute.xlu0 %9397
        %9399 = vrot.lane.b32.xlu0 %v9235, 96
        %v9400 = vpop.permute.xlu0 %9399
        %9401 = vrot.lane.b32.xlu0 %v9236, 96
        %v9402 = vpop.permute.xlu0 %9401
        %9403 = vrot.lane.b32.xlu0 %v9237, 96
        %v9404 = vpop.permute.xlu0 %9403
        %9405 = vrot.lane.b32.xlu0 %v9238, 96
        %v9406 = vpop.permute.xlu0 %9405
        %9407 = vrot.lane.b32.xlu0 %v9239, 96
        %v9408 = vpop.permute.xlu0 %9407
        %9409 = vrot.lane.b32.xlu0 %v9240, 96
        %v9410 = vpop.permute.xlu0 %9409
        %9411 = vrot.lane.b32.xlu0 %v9241, 96
        %v9412 = vpop.permute.xlu0 %9411
        %9413 = vrot.lane.b32.xlu0 %v9242, 96
        %v9414 = vpop.permute.xlu0 %9413
        %9415 = vrot.lane.b32.xlu0 %v9243, 96
        %v9416 = vpop.permute.xlu0 %9415
        %9417 = vrot.lane.b32.xlu0 %v9244, 96
        %v9418 = vpop.permute.xlu0 %9417
        %9419 = vrot.lane.b32.xlu0 %v9245, 96
        %v9420 = vpop.permute.xlu0 %9419
        %9421 = vrot.lane.b32.xlu0 %v9246, 96
        %v9422 = vpop.permute.xlu0 %9421
        %9423 = vrot.lane.b32.xlu0 %v9247, 96
        %v9424 = vpop.permute.xlu0 %9423
        %9425 = vrot.lane.b32.xlu0 %v9248, 96
        %v9426 = vpop.permute.xlu0 %9425
        %9427 = vrot.lane.b32.xlu0 %v9249, 96
        %v9428 = vpop.permute.xlu0 %9427
        %9429 = vrot.lane.b32.xlu0 %v9250, 96
        %v9430 = vpop.permute.xlu0 %9429
        %9431 = vrot.lane.b32.xlu0 %v9251, 96
        %v9432 = vpop.permute.xlu0 %9431
        %9433 = vrot.lane.b32.xlu0 %v9252, 96
        %v9434 = vpop.permute.xlu0 %9433
        %9435 = vrot.lane.b32.xlu0 %v9253, 96
        %v9436 = vpop.permute.xlu0 %9435
        %9437 = vrot.lane.b32.xlu0 %v9254, 96
        %v9438 = vpop.permute.xlu0 %9437
        %9439 = vrot.lane.b32.xlu0 %v9255, 96
        %v9440 = vpop.permute.xlu0 %9439
        %9441 = vrot.lane.b32.xlu0 %v9256, 96
        %v9442 = vpop.permute.xlu0 %9441
        %9443 = vrot.lane.b32.xlu0 %v9257, 96
        %v9444 = vpop.permute.xlu0 %9443
        %9445 = vrot.lane.b32.xlu0 %v9258, 96
        %v9446 = vpop.permute.xlu0 %9445
        %9447 = vrot.lane.b32.xlu0 %v9259, 96
        %v9448 = vpop.permute.xlu0 %9447
        %9449 = vrot.lane.b32.xlu0 %v9260, 96
        %v9450 = vpop.permute.xlu0 %9449
        %9451 = vrot.lane.b32.xlu0 %v9261, 96
        %v9452 = vpop.permute.xlu0 %9451
        %9453 = vrot.lane.b32.xlu0 %v9262, 96
        %v9454 = vpop.permute.xlu0 %9453
        %vm9519 = vcmask 818944
        %9520 = vst.msk [vmem:[#allocation2] sm:$0xff] %vm9519, %v9328
        %9521 = vst.msk [vmem:[#allocation2 + $0x8] sm:$0xff] %vm9519, %v9330
        %9522 = vst.msk [vmem:[#allocation2 + $0x10] sm:$0xff] %vm9519, %v9332
        %9523 = vst.msk [vmem:[#allocation2 + $0x18] sm:$0xff] %vm9519, %v9334
        %9524 = vst.msk [vmem:[#allocation2 + $0x20] sm:$0xff] %vm9519, %v9336
        %9525 = vst.msk [vmem:[#allocation2 + $0x28] sm:$0xff] %vm9519, %v9338
        %9526 = vst.msk [vmem:[#allocation2 + $0x30] sm:$0xff] %vm9519, %v9340
        %9527 = vst.msk [vmem:[#allocation2 + $0x38] sm:$0xff] %vm9519, %v9342
        %9528 = vst.msk [vmem:[#allocation2 + $0x40] sm:$0xff] %vm9519, %v9344
        %9529 = vst.msk [vmem:[#allocation2 + $0x48] sm:$0xff] %vm9519, %v9346
        %9530 = vst.msk [vmem:[#allocation2 + $0x50] sm:$0xff] %vm9519, %v9348
        %9531 = vst.msk [vmem:[#allocation2 + $0x58] sm:$0xff] %vm9519, %v9350
        %9532 = vst.msk [vmem:[#allocation2 + $0x60] sm:$0xff] %vm9519, %v9352
        %9533 = vst.msk [vmem:[#allocation2 + $0x68] sm:$0xff] %vm9519, %v9354
        %9534 = vst.msk [vmem:[#allocation2 + $0x70] sm:$0xff] %vm9519, %v9356
        %9535 = vst.msk [vmem:[#allocation2 + $0x78] sm:$0xff] %vm9519, %v9358
        %9536 = vst.msk [vmem:[#allocation2 + $0x80] sm:$0xff] %vm9519, %v9360
        %9537 = vst.msk [vmem:[#allocation2 + $0x88] sm:$0xff] %vm9519, %v9362
        %9538 = vst.msk [vmem:[#allocation2 + $0x90] sm:$0xff] %vm9519, %v9364
        %9539 = vst.msk [vmem:[#allocation2 + $0x98] sm:$0xff] %vm9519, %v9366
        %9540 = vst.msk [vmem:[#allocation2 + $0xa0] sm:$0xff] %vm9519, %v9368
        %9541 = vst.msk [vmem:[#allocation2 + $0xa8] sm:$0xff] %vm9519, %v9370
        %9542 = vst.msk [vmem:[#allocation2 + $0xb0] sm:$0xff] %vm9519, %v9372
        %9543 = vst.msk [vmem:[#allocation2 + $0xb8] sm:$0xff] %vm9519, %v9374
        %9544 = vst.msk [vmem:[#allocation2 + $0xc0] sm:$0xff] %vm9519, %v9376
        %9545 = vst.msk [vmem:[#allocation2 + $0xc8] sm:$0xff] %vm9519, %v9378
        %9546 = vst.msk [vmem:[#allocation2 + $0xd0] sm:$0xff] %vm9519, %v9380
        %9547 = vst.msk [vmem:[#allocation2 + $0xd8] sm:$0xff] %vm9519, %v9382
        %9548 = vst.msk [vmem:[#allocation2 + $0xe0] sm:$0xff] %vm9519, %v9384
        %9549 = vst.msk [vmem:[#allocation2 + $0xe8] sm:$0xff] %vm9519, %v9386
        %9550 = vst.msk [vmem:[#allocation2 + $0xf0] sm:$0xff] %vm9519, %v9388
        %9551 = vst.msk [vmem:[#allocation2 + $0xf8] sm:$0xff] %vm9519, %v9390
        %9552 = vst.msk [vmem:[#allocation2 + $0x100] sm:$0xff] %vm9519, %v9392
        %9553 = vst.msk [vmem:[#allocation2 + $0x108] sm:$0xff] %vm9519, %v9394
        %9554 = vst.msk [vmem:[#allocation2 + $0x110] sm:$0xff] %vm9519, %v9396
        %9555 = vst.msk [vmem:[#allocation2 + $0x118] sm:$0xff] %vm9519, %v9398
        %9556 = vst.msk [vmem:[#allocation2 + $0x120] sm:$0xff] %vm9519, %v9400
        %9557 = vst.msk [vmem:[#allocation2 + $0x128] sm:$0xff] %vm9519, %v9402
        %9558 = vst.msk [vmem:[#allocation2 + $0x130] sm:$0xff] %vm9519, %v9404
        %9559 = vst.msk [vmem:[#allocation2 + $0x138] sm:$0xff] %vm9519, %v9406
        %9560 = vst.msk [vmem:[#allocation2 + $0x140] sm:$0xff] %vm9519, %v9408
        %9561 = vst.msk [vmem:[#allocation2 + $0x148] sm:$0xff] %vm9519, %v9410
        %9562 = vst.msk [vmem:[#allocation2 + $0x150] sm:$0xff] %vm9519, %v9412
        %9563 = vst.msk [vmem:[#allocation2 + $0x158] sm:$0xff] %vm9519, %v9414
        %9564 = vst.msk [vmem:[#allocation2 + $0x160] sm:$0xff] %vm9519, %v9416
        %9565 = vst.msk [vmem:[#allocation2 + $0x168] sm:$0xff] %vm9519, %v9418
        %9566 = vst.msk [vmem:[#allocation2 + $0x170] sm:$0xff] %vm9519, %v9420
        %9567 = vst.msk [vmem:[#allocation2 + $0x178] sm:$0xff] %vm9519, %v9422
        %9568 = vst.msk [vmem:[#allocation2 + $0x180] sm:$0xff] %vm9519, %v9424
        %9569 = vst.msk [vmem:[#allocation2 + $0x188] sm:$0xff] %vm9519, %v9426
        %9570 = vst.msk [vmem:[#allocation2 + $0x190] sm:$0xff] %vm9519, %v9428
        %9571 = vst.msk [vmem:[#allocation2 + $0x198] sm:$0xff] %vm9519, %v9430
        %9572 = vst.msk [vmem:[#allocation2 + $0x1a0] sm:$0xff] %vm9519, %v9432
        %9573 = vst.msk [vmem:[#allocation2 + $0x1a8] sm:$0xff] %vm9519, %v9434
        %9574 = vst.msk [vmem:[#allocation2 + $0x1b0] sm:$0xff] %vm9519, %v9436
        %9575 = vst.msk [vmem:[#allocation2 + $0x1b8] sm:$0xff] %vm9519, %v9438
        %9576 = vst.msk [vmem:[#allocation2 + $0x1c0] sm:$0xff] %vm9519, %v9440
        %9577 = vst.msk [vmem:[#allocation2 + $0x1c8] sm:$0xff] %vm9519, %v9442
        %9578 = vst.msk [vmem:[#allocation2 + $0x1d0] sm:$0xff] %vm9519, %v9444
        %9579 = vst.msk [vmem:[#allocation2 + $0x1d8] sm:$0xff] %vm9519, %v9446
        %9580 = vst.msk [vmem:[#allocation2 + $0x1e0] sm:$0xff] %vm9519, %v9448
        %9581 = vst.msk [vmem:[#allocation2 + $0x1e8] sm:$0xff] %vm9519, %v9450
        %9582 = vst.msk [vmem:[#allocation2 + $0x1f0] sm:$0xff] %vm9519, %v9452
        %9583 = vst.msk [vmem:[#allocation2 + $0x1f8] sm:$0xff] %vm9519, %v9454
        %v9584 = vld [vmem:[%s9198 + $0x1] sm:$0xff]
        %v9585 = vld [vmem:[%s9198 + $0x11] sm:$0xff]
        %v9586 = vld [vmem:[%s9198 + $0x21] sm:$0xff]
        %v9587 = vld [vmem:[%s9198 + $0x31] sm:$0xff]
        %v9588 = vld [vmem:[%s9198 + $0x41] sm:$0xff]
        %v9589 = vld [vmem:[%s9198 + $0x51] sm:$0xff]
        %v9590 = vld [vmem:[%s9198 + $0x61] sm:$0xff]
        %v9591 = vld [vmem:[%s9198 + $0x71] sm:$0xff]
        %v9592 = vld [vmem:[%s9198 + $0xa1] sm:$0xff]
        %v9593 = vld [vmem:[%s9198 + $0xb1] sm:$0xff]
        %v9594 = vld [vmem:[%s9198 + $0xc1] sm:$0xff]
        %v9595 = vld [vmem:[%s9198 + $0xd1] sm:$0xff]
        %v9596 = vld [vmem:[%s9198 + $0xe1] sm:$0xff]
        %v9597 = vld [vmem:[%s9198 + $0xf1] sm:$0xff]
        %v9598 = vld [vmem:[%s9198 + $0x101] sm:$0xff]
        %v9599 = vld [vmem:[%s9198 + $0x111] sm:$0xff]
        %v9600 = vld [vmem:[%s9198 + $0x141] sm:$0xff]
        %v9601 = vld [vmem:[%s9198 + $0x151] sm:$0xff]
        %v9602 = vld [vmem:[%s9198 + $0x161] sm:$0xff]
        %v9603 = vld [vmem:[%s9198 + $0x171] sm:$0xff]
        %v9604 = vld [vmem:[%s9198 + $0x181] sm:$0xff]
        %v9605 = vld [vmem:[%s9198 + $0x191] sm:$0xff]
        %v9606 = vld [vmem:[%s9198 + $0x1a1] sm:$0xff]
        %v9607 = vld [vmem:[%s9198 + $0x1b1] sm:$0xff]
        %v9608 = vld [vmem:[%s9198 + $0x1e1] sm:$0xff]
        %v9609 = vld [vmem:[%s9198 + $0x1f1] sm:$0xff]
        %v9610 = vld [vmem:[%s9198 + $0x201] sm:$0xff]
        %v9611 = vld [vmem:[%s9198 + $0x211] sm:$0xff]
        %v9612 = vld [vmem:[%s9198 + $0x221] sm:$0xff]
        %v9613 = vld [vmem:[%s9198 + $0x231] sm:$0xff]
        %v9614 = vld [vmem:[%s9198 + $0x241] sm:$0xff]
        %v9615 = vld [vmem:[%s9198 + $0x251] sm:$0xff]
        %v9616 = vld [vmem:[%s9198 + $0x281] sm:$0xff]
        %v9617 = vld [vmem:[%s9198 + $0x291] sm:$0xff]
        %v9618 = vld [vmem:[%s9198 + $0x2a1] sm:$0xff]
        %v9619 = vld [vmem:[%s9198 + $0x2b1] sm:$0xff]
        %v9620 = vld [vmem:[%s9198 + $0x2c1] sm:$0xff]
        %v9621 = vld [vmem:[%s9198 + $0x2d1] sm:$0xff]
        %v9622 = vld [vmem:[%s9198 + $0x2e1] sm:$0xff]
        %v9623 = vld [vmem:[%s9198 + $0x2f1] sm:$0xff]
        %v9624 = vld [vmem:[%s9198 + $0x321] sm:$0xff]
        %v9625 = vld [vmem:[%s9198 + $0x331] sm:$0xff]
        %v9626 = vld [vmem:[%s9198 + $0x341] sm:$0xff]
        %v9627 = vld [vmem:[%s9198 + $0x351] sm:$0xff]
        %v9628 = vld [vmem:[%s9198 + $0x361] sm:$0xff]
        %v9629 = vld [vmem:[%s9198 + $0x371] sm:$0xff]
        %v9630 = vld [vmem:[%s9198 + $0x381] sm:$0xff]
        %v9631 = vld [vmem:[%s9198 + $0x391] sm:$0xff]
        %v9632 = vld [vmem:[%s9198 + $0x3c1] sm:$0xff]
        %v9633 = vld [vmem:[%s9198 + $0x3d1] sm:$0xff]
        %v9634 = vld [vmem:[%s9198 + $0x3e1] sm:$0xff]
        %v9635 = vld [vmem:[%s9198 + $0x3f1] sm:$0xff]
        %v9636 = vld [vmem:[%s9198 + $0x401] sm:$0xff]
        %v9637 = vld [vmem:[%s9198 + $0x411] sm:$0xff]
        %v9638 = vld [vmem:[%s9198 + $0x421] sm:$0xff]
        %v9639 = vld [vmem:[%s9198 + $0x431] sm:$0xff]
        %v9640 = vld [vmem:[%s9198 + $0x461] sm:$0xff]
        %v9641 = vld [vmem:[%s9198 + $0x471] sm:$0xff]
        %v9642 = vld [vmem:[%s9198 + $0x481] sm:$0xff]
        %v9643 = vld [vmem:[%s9198 + $0x491] sm:$0xff]
        %v9644 = vld [vmem:[%s9198 + $0x4a1] sm:$0xff]
        %v9645 = vld [vmem:[%s9198 + $0x4b1] sm:$0xff]
        %v9646 = vld [vmem:[%s9198 + $0x4c1] sm:$0xff]
        %v9647 = vld [vmem:[%s9198 + $0x4d1] sm:$0xff]
        %9712 = vrot.lane.b32.xlu0 %v9584, 100
        %v9713 = vpop.permute.xlu0 %9712
        %9714 = vrot.lane.b32.xlu0 %v9585, 100
        %v9715 = vpop.permute.xlu0 %9714
        %9716 = vrot.lane.b32.xlu0 %v9586, 100
        %v9717 = vpop.permute.xlu0 %9716
        %9718 = vrot.lane.b32.xlu0 %v9587, 100
        %v9719 = vpop.permute.xlu0 %9718
        %9720 = vrot.lane.b32.xlu0 %v9588, 100
        %v9721 = vpop.permute.xlu0 %9720
        %9722 = vrot.lane.b32.xlu0 %v9589, 100
        %v9723 = vpop.permute.xlu0 %9722
        %9724 = vrot.lane.b32.xlu0 %v9590, 100
        %v9725 = vpop.permute.xlu0 %9724
        %9726 = vrot.lane.b32.xlu0 %v9591, 100
        %v9727 = vpop.permute.xlu0 %9726
        %9728 = vrot.lane.b32.xlu0 %v9592, 100
        %v9729 = vpop.permute.xlu0 %9728
        %9730 = vrot.lane.b32.xlu0 %v9593, 100
        %v9731 = vpop.permute.xlu0 %9730
        %9732 = vrot.lane.b32.xlu0 %v9594, 100
        %v9733 = vpop.permute.xlu0 %9732
        %9734 = vrot.lane.b32.xlu0 %v9595, 100
        %v9735 = vpop.permute.xlu0 %9734
        %9736 = vrot.lane.b32.xlu0 %v9596, 100
        %v9737 = vpop.permute.xlu0 %9736
        %9738 = vrot.lane.b32.xlu0 %v9597, 100
        %v9739 = vpop.permute.xlu0 %9738
        %9740 = vrot.lane.b32.xlu0 %v9598, 100
        %v9741 = vpop.permute.xlu0 %9740
        %9742 = vrot.lane.b32.xlu0 %v9599, 100
        %v9743 = vpop.permute.xlu0 %9742
        %9744 = vrot.lane.b32.xlu0 %v9600, 100
        %v9745 = vpop.permute.xlu0 %9744
        %9746 = vrot.lane.b32.xlu0 %v9601, 100
        %v9747 = vpop.permute.xlu0 %9746
        %9748 = vrot.lane.b32.xlu0 %v9602, 100
        %v9749 = vpop.permute.xlu0 %9748
        %9750 = vrot.lane.b32.xlu0 %v9603, 100
        %v9751 = vpop.permute.xlu0 %9750
        %9752 = vrot.lane.b32.xlu0 %v9604, 100
        %v9753 = vpop.permute.xlu0 %9752
        %9754 = vrot.lane.b32.xlu0 %v9605, 100
        %v9755 = vpop.permute.xlu0 %9754
        %9756 = vrot.lane.b32.xlu0 %v9606, 100
        %v9757 = vpop.permute.xlu0 %9756
        %9758 = vrot.lane.b32.xlu0 %v9607, 100
        %v9759 = vpop.permute.xlu0 %9758
        %9760 = vrot.lane.b32.xlu0 %v9608, 100
        %v9761 = vpop.permute.xlu0 %9760
        %9762 = vrot.lane.b32.xlu0 %v9609, 100
        %v9763 = vpop.permute.xlu0 %9762
        %9764 = vrot.lane.b32.xlu0 %v9610, 100
        %v9765 = vpop.permute.xlu0 %9764
        %9766 = vrot.lane.b32.xlu0 %v9611, 100
        %v9767 = vpop.permute.xlu0 %9766
        %9768 = vrot.lane.b32.xlu0 %v9612, 100
        %v9769 = vpop.permute.xlu0 %9768
        %9770 = vrot.lane.b32.xlu0 %v9613, 100
        %v9771 = vpop.permute.xlu0 %9770
        %9772 = vrot.lane.b32.xlu0 %v9614, 100
        %v9773 = vpop.permute.xlu0 %9772
        %9774 = vrot.lane.b32.xlu0 %v9615, 100
        %v9775 = vpop.permute.xlu0 %9774
        %9776 = vrot.lane.b32.xlu0 %v9616, 100
        %v9777 = vpop.permute.xlu0 %9776
        %9778 = vrot.lane.b32.xlu0 %v9617, 100
        %v9779 = vpop.permute.xlu0 %9778
        %9780 = vrot.lane.b32.xlu0 %v9618, 100
        %v9781 = vpop.permute.xlu0 %9780
        %9782 = vrot.lane.b32.xlu0 %v9619, 100
        %v9783 = vpop.permute.xlu0 %9782
        %9784 = vrot.lane.b32.xlu0 %v9620, 100
        %v9785 = vpop.permute.xlu0 %9784
        %9786 = vrot.lane.b32.xlu0 %v9621, 100
        %v9787 = vpop.permute.xlu0 %9786
        %9788 = vrot.lane.b32.xlu0 %v9622, 100
        %v9789 = vpop.permute.xlu0 %9788
        %9790 = vrot.lane.b32.xlu0 %v9623, 100
        %v9791 = vpop.permute.xlu0 %9790
        %9792 = vrot.lane.b32.xlu0 %v9624, 100
        %v9793 = vpop.permute.xlu0 %9792
        %9794 = vrot.lane.b32.xlu0 %v9625, 100
        %v9795 = vpop.permute.xlu0 %9794
        %9796 = vrot.lane.b32.xlu0 %v9626, 100
        %v9797 = vpop.permute.xlu0 %9796
        %9798 = vrot.lane.b32.xlu0 %v9627, 100
        %v9799 = vpop.permute.xlu0 %9798
        %9800 = vrot.lane.b32.xlu0 %v9628, 100
        %v9801 = vpop.permute.xlu0 %9800
        %9802 = vrot.lane.b32.xlu0 %v9629, 100
        %v9803 = vpop.permute.xlu0 %9802
        %9804 = vrot.lane.b32.xlu0 %v9630, 100
        %v9805 = vpop.permute.xlu0 %9804
        %9806 = vrot.lane.b32.xlu0 %v9631, 100
        %v9807 = vpop.permute.xlu0 %9806
        %9808 = vrot.lane.b32.xlu0 %v9632, 100
        %v9809 = vpop.permute.xlu0 %9808
        %9810 = vrot.lane.b32.xlu0 %v9633, 100
        %v9811 = vpop.permute.xlu0 %9810
        %9812 = vrot.lane.b32.xlu0 %v9634, 100
        %v9813 = vpop.permute.xlu0 %9812
        %9814 = vrot.lane.b32.xlu0 %v9635, 100
        %v9815 = vpop.permute.xlu0 %9814
        %9816 = vrot.lane.b32.xlu0 %v9636, 100
        %v9817 = vpop.permute.xlu0 %9816
        %9818 = vrot.lane.b32.xlu0 %v9637, 100
        %v9819 = vpop.permute.xlu0 %9818
        %9820 = vrot.lane.b32.xlu0 %v9638, 100
        %v9821 = vpop.permute.xlu0 %9820
        %9822 = vrot.lane.b32.xlu0 %v9639, 100
        %v9823 = vpop.permute.xlu0 %9822
        %9824 = vrot.lane.b32.xlu0 %v9640, 100
        %v9825 = vpop.permute.xlu0 %9824
        %9826 = vrot.lane.b32.xlu0 %v9641, 100
        %v9827 = vpop.permute.xlu0 %9826
        %9828 = vrot.lane.b32.xlu0 %v9642, 100
        %v9829 = vpop.permute.xlu0 %9828
        %9830 = vrot.lane.b32.xlu0 %v9643, 100
        %v9831 = vpop.permute.xlu0 %9830
        %9832 = vrot.lane.b32.xlu0 %v9644, 100
        %v9833 = vpop.permute.xlu0 %9832
        %9834 = vrot.lane.b32.xlu0 %v9645, 100
        %v9835 = vpop.permute.xlu0 %9834
        %9836 = vrot.lane.b32.xlu0 %v9646, 100
        %v9837 = vpop.permute.xlu0 %9836
        %9838 = vrot.lane.b32.xlu0 %v9647, 100
        %v9839 = vpop.permute.xlu0 %9838
        %vm9904 = vcmask 851744
        %9905 = vst.msk [vmem:[#allocation2] sm:$0xff] %vm9904, %v9713
        %9906 = vst.msk [vmem:[#allocation2 + $0x8] sm:$0xff] %vm9904, %v9715
        %9907 = vst.msk [vmem:[#allocation2 + $0x10] sm:$0xff] %vm9904, %v9717
        %9908 = vst.msk [vmem:[#allocation2 + $0x18] sm:$0xff] %vm9904, %v9719
        %9909 = vst.msk [vmem:[#allocation2 + $0x20] sm:$0xff] %vm9904, %v9721
        %9910 = vst.msk [vmem:[#allocation2 + $0x28] sm:$0xff] %vm9904, %v9723
        %9911 = vst.msk [vmem:[#allocation2 + $0x30] sm:$0xff] %vm9904, %v9725
        %9912 = vst.msk [vmem:[#allocation2 + $0x38] sm:$0xff] %vm9904, %v9727
        %9913 = vst.msk [vmem:[#allocation2 + $0x40] sm:$0xff] %vm9904, %v9729
        %9914 = vst.msk [vmem:[#allocation2 + $0x48] sm:$0xff] %vm9904, %v9731
        %9915 = vst.msk [vmem:[#allocation2 + $0x50] sm:$0xff] %vm9904, %v9733
        %9916 = vst.msk [vmem:[#allocation2 + $0x58] sm:$0xff] %vm9904, %v9735
        %9917 = vst.msk [vmem:[#allocation2 + $0x60] sm:$0xff] %vm9904, %v9737
        %9918 = vst.msk [vmem:[#allocation2 + $0x68] sm:$0xff] %vm9904, %v9739
        %9919 = vst.msk [vmem:[#allocation2 + $0x70] sm:$0xff] %vm9904, %v9741
        %9920 = vst.msk [vmem:[#allocation2 + $0x78] sm:$0xff] %vm9904, %v9743
        %9921 = vst.msk [vmem:[#allocation2 + $0x80] sm:$0xff] %vm9904, %v9745
        %9922 = vst.msk [vmem:[#allocation2 + $0x88] sm:$0xff] %vm9904, %v9747
        %9923 = vst.msk [vmem:[#allocation2 + $0x90] sm:$0xff] %vm9904, %v9749
        %9924 = vst.msk [vmem:[#allocation2 + $0x98] sm:$0xff] %vm9904, %v9751
        %9925 = vst.msk [vmem:[#allocation2 + $0xa0] sm:$0xff] %vm9904, %v9753
        %9926 = vst.msk [vmem:[#allocation2 + $0xa8] sm:$0xff] %vm9904, %v9755
        %9927 = vst.msk [vmem:[#allocation2 + $0xb0] sm:$0xff] %vm9904, %v9757
        %9928 = vst.msk [vmem:[#allocation2 + $0xb8] sm:$0xff] %vm9904, %v9759
        %9929 = vst.msk [vmem:[#allocation2 + $0xc0] sm:$0xff] %vm9904, %v9761
        %9930 = vst.msk [vmem:[#allocation2 + $0xc8] sm:$0xff] %vm9904, %v9763
        %9931 = vst.msk [vmem:[#allocation2 + $0xd0] sm:$0xff] %vm9904, %v9765
        %9932 = vst.msk [vmem:[#allocation2 + $0xd8] sm:$0xff] %vm9904, %v9767
        %9933 = vst.msk [vmem:[#allocation2 + $0xe0] sm:$0xff] %vm9904, %v9769
        %9934 = vst.msk [vmem:[#allocation2 + $0xe8] sm:$0xff] %vm9904, %v9771
        %9935 = vst.msk [vmem:[#allocation2 + $0xf0] sm:$0xff] %vm9904, %v9773
        %9936 = vst.msk [vmem:[#allocation2 + $0xf8] sm:$0xff] %vm9904, %v9775
        %9937 = vst.msk [vmem:[#allocation2 + $0x100] sm:$0xff] %vm9904, %v9777
        %9938 = vst.msk [vmem:[#allocation2 + $0x108] sm:$0xff] %vm9904, %v9779
        %9939 = vst.msk [vmem:[#allocation2 + $0x110] sm:$0xff] %vm9904, %v9781
        %9940 = vst.msk [vmem:[#allocation2 + $0x118] sm:$0xff] %vm9904, %v9783
        %9941 = vst.msk [vmem:[#allocation2 + $0x120] sm:$0xff] %vm9904, %v9785
        %9942 = vst.msk [vmem:[#allocation2 + $0x128] sm:$0xff] %vm9904, %v9787
        %9943 = vst.msk [vmem:[#allocation2 + $0x130] sm:$0xff] %vm9904, %v9789
        %9944 = vst.msk [vmem:[#allocation2 + $0x138] sm:$0xff] %vm9904, %v9791
        %9945 = vst.msk [vmem:[#allocation2 + $0x140] sm:$0xff] %vm9904, %v9793
        %9946 = vst.msk [vmem:[#allocation2 + $0x148] sm:$0xff] %vm9904, %v9795
        %9947 = vst.msk [vmem:[#allocation2 + $0x150] sm:$0xff] %vm9904, %v9797
        %9948 = vst.msk [vmem:[#allocation2 + $0x158] sm:$0xff] %vm9904, %v9799
        %9949 = vst.msk [vmem:[#allocation2 + $0x160] sm:$0xff] %vm9904, %v9801
        %9950 = vst.msk [vmem:[#allocation2 + $0x168] sm:$0xff] %vm9904, %v9803
        %9951 = vst.msk [vmem:[#allocation2 + $0x170] sm:$0xff] %vm9904, %v9805
        %9952 = vst.msk [vmem:[#allocation2 + $0x178] sm:$0xff] %vm9904, %v9807
        %9953 = vst.msk [vmem:[#allocation2 + $0x180] sm:$0xff] %vm9904, %v9809
        %9954 = vst.msk [vmem:[#allocation2 + $0x188] sm:$0xff] %vm9904, %v9811
        %9955 = vst.msk [vmem:[#allocation2 + $0x190] sm:$0xff] %vm9904, %v9813
        %9956 = vst.msk [vmem:[#allocation2 + $0x198] sm:$0xff] %vm9904, %v9815
        %9957 = vst.msk [vmem:[#allocation2 + $0x1a0] sm:$0xff] %vm9904, %v9817
        %9958 = vst.msk [vmem:[#allocation2 + $0x1a8] sm:$0xff] %vm9904, %v9819
        %9959 = vst.msk [vmem:[#allocation2 + $0x1b0] sm:$0xff] %vm9904, %v9821
        %9960 = vst.msk [vmem:[#allocation2 + $0x1b8] sm:$0xff] %vm9904, %v9823
        %9961 = vst.msk [vmem:[#allocation2 + $0x1c0] sm:$0xff] %vm9904, %v9825
        %9962 = vst.msk [vmem:[#allocation2 + $0x1c8] sm:$0xff] %vm9904, %v9827
        %9963 = vst.msk [vmem:[#allocation2 + $0x1d0] sm:$0xff] %vm9904, %v9829
        %9964 = vst.msk [vmem:[#allocation2 + $0x1d8] sm:$0xff] %vm9904, %v9831
        %9965 = vst.msk [vmem:[#allocation2 + $0x1e0] sm:$0xff] %vm9904, %v9833
        %9966 = vst.msk [vmem:[#allocation2 + $0x1e8] sm:$0xff] %vm9904, %v9835
        %9967 = vst.msk [vmem:[#allocation2 + $0x1f0] sm:$0xff] %vm9904, %v9837
        %9968 = vst.msk [vmem:[#allocation2 + $0x1f8] sm:$0xff] %vm9904, %v9839
        %v9969 = vld [vmem:[%s9198 + $0x2] sm:$0xff]
        %v9970 = vld [vmem:[%s9198 + $0x12] sm:$0xff]
        %v9971 = vld [vmem:[%s9198 + $0x22] sm:$0xff]
        %v9972 = vld [vmem:[%s9198 + $0x32] sm:$0xff]
        %v9973 = vld [vmem:[%s9198 + $0x42] sm:$0xff]
        %v9974 = vld [vmem:[%s9198 + $0x52] sm:$0xff]
        %v9975 = vld [vmem:[%s9198 + $0x62] sm:$0xff]
        %v9976 = vld [vmem:[%s9198 + $0x72] sm:$0xff]
        %v9977 = vld [vmem:[%s9198 + $0xa2] sm:$0xff]
        %v9978 = vld [vmem:[%s9198 + $0xb2] sm:$0xff]
        %v9979 = vld [vmem:[%s9198 + $0xc2] sm:$0xff]
        %v9980 = vld [vmem:[%s9198 + $0xd2] sm:$0xff]
        %v9981 = vld [vmem:[%s9198 + $0xe2] sm:$0xff]
        %v9982 = vld [vmem:[%s9198 + $0xf2] sm:$0xff]
        %v9983 = vld [vmem:[%s9198 + $0x102] sm:$0xff]
        %v9984 = vld [vmem:[%s9198 + $0x112] sm:$0xff]
        %v9985 = vld [vmem:[%s9198 + $0x142] sm:$0xff]
        %v9986 = vld [vmem:[%s9198 + $0x152] sm:$0xff]
        %v9987 = vld [vmem:[%s9198 + $0x162] sm:$0xff]
        %v9988 = vld [vmem:[%s9198 + $0x172] sm:$0xff]
        %v9989 = vld [vmem:[%s9198 + $0x182] sm:$0xff]
        %v9990 = vld [vmem:[%s9198 + $0x192] sm:$0xff]
        %v9991 = vld [vmem:[%s9198 + $0x1a2] sm:$0xff]
        %v9992 = vld [vmem:[%s9198 + $0x1b2] sm:$0xff]
        %v9993 = vld [vmem:[%s9198 + $0x1e2] sm:$0xff]
        %v9994 = vld [vmem:[%s9198 + $0x1f2] sm:$0xff]
        %v9995 = vld [vmem:[%s9198 + $0x202] sm:$0xff]
        %v9996 = vld [vmem:[%s9198 + $0x212] sm:$0xff]
        %v9997 = vld [vmem:[%s9198 + $0x222] sm:$0xff]
        %v9998 = vld [vmem:[%s9198 + $0x232] sm:$0xff]
        %v9999 = vld [vmem:[%s9198 + $0x242] sm:$0xff]
        %v10000 = vld [vmem:[%s9198 + $0x252] sm:$0xff]
        %v10001 = vld [vmem:[%s9198 + $0x282] sm:$0xff]
        %v10002 = vld [vmem:[%s9198 + $0x292] sm:$0xff]
        %v10003 = vld [vmem:[%s9198 + $0x2a2] sm:$0xff]
        %v10004 = vld [vmem:[%s9198 + $0x2b2] sm:$0xff]
        %v10005 = vld [vmem:[%s9198 + $0x2c2] sm:$0xff]
        %v10006 = vld [vmem:[%s9198 + $0x2d2] sm:$0xff]
        %v10007 = vld [vmem:[%s9198 + $0x2e2] sm:$0xff]
        %v10008 = vld [vmem:[%s9198 + $0x2f2] sm:$0xff]
        %v10009 = vld [vmem:[%s9198 + $0x322] sm:$0xff]
        %v10010 = vld [vmem:[%s9198 + $0x332] sm:$0xff]
        %v10011 = vld [vmem:[%s9198 + $0x342] sm:$0xff]
        %v10012 = vld [vmem:[%s9198 + $0x352] sm:$0xff]
        %v10013 = vld [vmem:[%s9198 + $0x362] sm:$0xff]
        %v10014 = vld [vmem:[%s9198 + $0x372] sm:$0xff]
        %v10015 = vld [vmem:[%s9198 + $0x382] sm:$0xff]
        %v10016 = vld [vmem:[%s9198 + $0x392] sm:$0xff]
        %v10017 = vld [vmem:[%s9198 + $0x3c2] sm:$0xff]
        %v10018 = vld [vmem:[%s9198 + $0x3d2] sm:$0xff]
        %v10019 = vld [vmem:[%s9198 + $0x3e2] sm:$0xff]
        %v10020 = vld [vmem:[%s9198 + $0x3f2] sm:$0xff]
        %v10021 = vld [vmem:[%s9198 + $0x402] sm:$0xff]
        %v10022 = vld [vmem:[%s9198 + $0x412] sm:$0xff]
        %v10023 = vld [vmem:[%s9198 + $0x422] sm:$0xff]
        %v10024 = vld [vmem:[%s9198 + $0x432] sm:$0xff]
        %v10025 = vld [vmem:[%s9198 + $0x462] sm:$0xff]
        %v10026 = vld [vmem:[%s9198 + $0x472] sm:$0xff]
        %v10027 = vld [vmem:[%s9198 + $0x482] sm:$0xff]
        %v10028 = vld [vmem:[%s9198 + $0x492] sm:$0xff]
        %v10029 = vld [vmem:[%s9198 + $0x4a2] sm:$0xff]
        %v10030 = vld [vmem:[%s9198 + $0x4b2] sm:$0xff]
        %v10031 = vld [vmem:[%s9198 + $0x4c2] sm:$0xff]
        %v10032 = vld [vmem:[%s9198 + $0x4d2] sm:$0xff]
        %10097 = vrot.lane.b32.xlu0 %v9969, 104
        %v10098 = vpop.permute.xlu0 %10097
        %10099 = vrot.lane.b32.xlu0 %v9970, 104
        %v10100 = vpop.permute.xlu0 %10099
        %10101 = vrot.lane.b32.xlu0 %v9971, 104
        %v10102 = vpop.permute.xlu0 %10101
        %10103 = vrot.lane.b32.xlu0 %v9972, 104
        %v10104 = vpop.permute.xlu0 %10103
        %10105 = vrot.lane.b32.xlu0 %v9973, 104
        %v10106 = vpop.permute.xlu0 %10105
        %10107 = vrot.lane.b32.xlu0 %v9974, 104
        %v10108 = vpop.permute.xlu0 %10107
        %10109 = vrot.lane.b32.xlu0 %v9975, 104
        %v10110 = vpop.permute.xlu0 %10109
        %10111 = vrot.lane.b32.xlu0 %v9976, 104
        %v10112 = vpop.permute.xlu0 %10111
        %10113 = vrot.lane.b32.xlu0 %v9977, 104
        %v10114 = vpop.permute.xlu0 %10113
        %10115 = vrot.lane.b32.xlu0 %v9978, 104
        %v10116 = vpop.permute.xlu0 %10115
        %10117 = vrot.lane.b32.xlu0 %v9979, 104
        %v10118 = vpop.permute.xlu0 %10117
        %10119 = vrot.lane.b32.xlu0 %v9980, 104
        %v10120 = vpop.permute.xlu0 %10119
        %10121 = vrot.lane.b32.xlu0 %v9981, 104
        %v10122 = vpop.permute.xlu0 %10121
        %10123 = vrot.lane.b32.xlu0 %v9982, 104
        %v10124 = vpop.permute.xlu0 %10123
        %10125 = vrot.lane.b32.xlu0 %v9983, 104
        %v10126 = vpop.permute.xlu0 %10125
        %10127 = vrot.lane.b32.xlu0 %v9984, 104
        %v10128 = vpop.permute.xlu0 %10127
        %10129 = vrot.lane.b32.xlu0 %v9985, 104
        %v10130 = vpop.permute.xlu0 %10129
        %10131 = vrot.lane.b32.xlu0 %v9986, 104
        %v10132 = vpop.permute.xlu0 %10131
        %10133 = vrot.lane.b32.xlu0 %v9987, 104
        %v10134 = vpop.permute.xlu0 %10133
        %10135 = vrot.lane.b32.xlu0 %v9988, 104
        %v10136 = vpop.permute.xlu0 %10135
        %10137 = vrot.lane.b32.xlu0 %v9989, 104
        %v10138 = vpop.permute.xlu0 %10137
        %10139 = vrot.lane.b32.xlu0 %v9990, 104
        %v10140 = vpop.permute.xlu0 %10139
        %10141 = vrot.lane.b32.xlu0 %v9991, 104
        %v10142 = vpop.permute.xlu0 %10141
        %10143 = vrot.lane.b32.xlu0 %v9992, 104
        %v10144 = vpop.permute.xlu0 %10143
        %10145 = vrot.lane.b32.xlu0 %v9993, 104
        %v10146 = vpop.permute.xlu0 %10145
        %10147 = vrot.lane.b32.xlu0 %v9994, 104
        %v10148 = vpop.permute.xlu0 %10147
        %10149 = vrot.lane.b32.xlu0 %v9995, 104
        %v10150 = vpop.permute.xlu0 %10149
        %10151 = vrot.lane.b32.xlu0 %v9996, 104
        %v10152 = vpop.permute.xlu0 %10151
        %10153 = vrot.lane.b32.xlu0 %v9997, 104
        %v10154 = vpop.permute.xlu0 %10153
        %10155 = vrot.lane.b32.xlu0 %v9998, 104
        %v10156 = vpop.permute.xlu0 %10155
        %10157 = vrot.lane.b32.xlu0 %v9999, 104
        %v10158 = vpop.permute.xlu0 %10157
        %10159 = vrot.lane.b32.xlu0 %v10000, 104
        %v10160 = vpop.permute.xlu0 %10159
        %10161 = vrot.lane.b32.xlu0 %v10001, 104
        %v10162 = vpop.permute.xlu0 %10161
        %10163 = vrot.lane.b32.xlu0 %v10002, 104
        %v10164 = vpop.permute.xlu0 %10163
        %10165 = vrot.lane.b32.xlu0 %v10003, 104
        %v10166 = vpop.permute.xlu0 %10165
        %10167 = vrot.lane.b32.xlu0 %v10004, 104
        %v10168 = vpop.permute.xlu0 %10167
        %10169 = vrot.lane.b32.xlu0 %v10005, 104
        %v10170 = vpop.permute.xlu0 %10169
        %10171 = vrot.lane.b32.xlu0 %v10006, 104
        %v10172 = vpop.permute.xlu0 %10171
        %10173 = vrot.lane.b32.xlu0 %v10007, 104
        %v10174 = vpop.permute.xlu0 %10173
        %10175 = vrot.lane.b32.xlu0 %v10008, 104
        %v10176 = vpop.permute.xlu0 %10175
        %10177 = vrot.lane.b32.xlu0 %v10009, 104
        %v10178 = vpop.permute.xlu0 %10177
        %10179 = vrot.lane.b32.xlu0 %v10010, 104
        %v10180 = vpop.permute.xlu0 %10179
        %10181 = vrot.lane.b32.xlu0 %v10011, 104
        %v10182 = vpop.permute.xlu0 %10181
        %10183 = vrot.lane.b32.xlu0 %v10012, 104
        %v10184 = vpop.permute.xlu0 %10183
        %10185 = vrot.lane.b32.xlu0 %v10013, 104
        %v10186 = vpop.permute.xlu0 %10185
        %10187 = vrot.lane.b32.xlu0 %v10014, 104
        %v10188 = vpop.permute.xlu0 %10187
        %10189 = vrot.lane.b32.xlu0 %v10015, 104
        %v10190 = vpop.permute.xlu0 %10189
        %10191 = vrot.lane.b32.xlu0 %v10016, 104
        %v10192 = vpop.permute.xlu0 %10191
        %10193 = vrot.lane.b32.xlu0 %v10017, 104
        %v10194 = vpop.permute.xlu0 %10193
        %10195 = vrot.lane.b32.xlu0 %v10018, 104
        %v10196 = vpop.permute.xlu0 %10195
        %10197 = vrot.lane.b32.xlu0 %v10019, 104
        %v10198 = vpop.permute.xlu0 %10197
        %10199 = vrot.lane.b32.xlu0 %v10020, 104
        %v10200 = vpop.permute.xlu0 %10199
        %10201 = vrot.lane.b32.xlu0 %v10021, 104
        %v10202 = vpop.permute.xlu0 %10201
        %10203 = vrot.lane.b32.xlu0 %v10022, 104
        %v10204 = vpop.permute.xlu0 %10203
        %10205 = vrot.lane.b32.xlu0 %v10023, 104
        %v10206 = vpop.permute.xlu0 %10205
        %10207 = vrot.lane.b32.xlu0 %v10024, 104
        %v10208 = vpop.permute.xlu0 %10207
        %10209 = vrot.lane.b32.xlu0 %v10025, 104
        %v10210 = vpop.permute.xlu0 %10209
        %10211 = vrot.lane.b32.xlu0 %v10026, 104
        %v10212 = vpop.permute.xlu0 %10211
        %10213 = vrot.lane.b32.xlu0 %v10027, 104
        %v10214 = vpop.permute.xlu0 %10213
        %10215 = vrot.lane.b32.xlu0 %v10028, 104
        %v10216 = vpop.permute.xlu0 %10215
        %10217 = vrot.lane.b32.xlu0 %v10029, 104
        %v10218 = vpop.permute.xlu0 %10217
        %10219 = vrot.lane.b32.xlu0 %v10030, 104
        %v10220 = vpop.permute.xlu0 %10219
        %10221 = vrot.lane.b32.xlu0 %v10031, 104
        %v10222 = vpop.permute.xlu0 %10221
        %10223 = vrot.lane.b32.xlu0 %v10032, 104
        %v10224 = vpop.permute.xlu0 %10223
        %vm10289 = vcmask 884544
        %10290 = vst.msk [vmem:[#allocation2] sm:$0xff] %vm10289, %v10098
        %10291 = vst.msk [vmem:[#allocation2 + $0x8] sm:$0xff] %vm10289, %v10100
        %10292 = vst.msk [vmem:[#allocation2 + $0x10] sm:$0xff] %vm10289, %v10102
        %10293 = vst.msk [vmem:[#allocation2 + $0x18] sm:$0xff] %vm10289, %v10104
        %10294 = vst.msk [vmem:[#allocation2 + $0x20] sm:$0xff] %vm10289, %v10106
        %10295 = vst.msk [vmem:[#allocation2 + $0x28] sm:$0xff] %vm10289, %v10108
        %10296 = vst.msk [vmem:[#allocation2 + $0x30] sm:$0xff] %vm10289, %v10110
        %10297 = vst.msk [vmem:[#allocation2 + $0x38] sm:$0xff] %vm10289, %v10112
        %10298 = vst.msk [vmem:[#allocation2 + $0x40] sm:$0xff] %vm10289, %v10114
        %10299 = vst.msk [vmem:[#allocation2 + $0x48] sm:$0xff] %vm10289, %v10116
        %10300 = vst.msk [vmem:[#allocation2 + $0x50] sm:$0xff] %vm10289, %v10118
        %10301 = vst.msk [vmem:[#allocation2 + $0x58] sm:$0xff] %vm10289, %v10120
        %10302 = vst.msk [vmem:[#allocation2 + $0x60] sm:$0xff] %vm10289, %v10122
        %10303 = vst.msk [vmem:[#allocation2 + $0x68] sm:$0xff] %vm10289, %v10124
        %10304 = vst.msk [vmem:[#allocation2 + $0x70] sm:$0xff] %vm10289, %v10126
        %10305 = vst.msk [vmem:[#allocation2 + $0x78] sm:$0xff] %vm10289, %v10128
        %10306 = vst.msk [vmem:[#allocation2 + $0x80] sm:$0xff] %vm10289, %v10130
        %10307 = vst.msk [vmem:[#allocation2 + $0x88] sm:$0xff] %vm10289, %v10132
        %10308 = vst.msk [vmem:[#allocation2 + $0x90] sm:$0xff] %vm10289, %v10134
        %10309 = vst.msk [vmem:[#allocation2 + $0x98] sm:$0xff] %vm10289, %v10136
        %10310 = vst.msk [vmem:[#allocation2 + $0xa0] sm:$0xff] %vm10289, %v10138
        %10311 = vst.msk [vmem:[#allocation2 + $0xa8] sm:$0xff] %vm10289, %v10140
        %10312 = vst.msk [vmem:[#allocation2 + $0xb0] sm:$0xff] %vm10289, %v10142
        %10313 = vst.msk [vmem:[#allocation2 + $0xb8] sm:$0xff] %vm10289, %v10144
        %10314 = vst.msk [vmem:[#allocation2 + $0xc0] sm:$0xff] %vm10289, %v10146
        %10315 = vst.msk [vmem:[#allocation2 + $0xc8] sm:$0xff] %vm10289, %v10148
        %10316 = vst.msk [vmem:[#allocation2 + $0xd0] sm:$0xff] %vm10289, %v10150
        %10317 = vst.msk [vmem:[#allocation2 + $0xd8] sm:$0xff] %vm10289, %v10152
        %10318 = vst.msk [vmem:[#allocation2 + $0xe0] sm:$0xff] %vm10289, %v10154
        %10319 = vst.msk [vmem:[#allocation2 + $0xe8] sm:$0xff] %vm10289, %v10156
        %10320 = vst.msk [vmem:[#allocation2 + $0xf0] sm:$0xff] %vm10289, %v10158
        %10321 = vst.msk [vmem:[#allocation2 + $0xf8] sm:$0xff] %vm10289, %v10160
        %10322 = vst.msk [vmem:[#allocation2 + $0x100] sm:$0xff] %vm10289, %v10162
        %10323 = vst.msk [vmem:[#allocation2 + $0x108] sm:$0xff] %vm10289, %v10164
        %10324 = vst.msk [vmem:[#allocation2 + $0x110] sm:$0xff] %vm10289, %v10166
        %10325 = vst.msk [vmem:[#allocation2 + $0x118] sm:$0xff] %vm10289, %v10168
        %10326 = vst.msk [vmem:[#allocation2 + $0x120] sm:$0xff] %vm10289, %v10170
        %10327 = vst.msk [vmem:[#allocation2 + $0x128] sm:$0xff] %vm10289, %v10172
        %10328 = vst.msk [vmem:[#allocation2 + $0x130] sm:$0xff] %vm10289, %v10174
        %10329 = vst.msk [vmem:[#allocation2 + $0x138] sm:$0xff] %vm10289, %v10176
        %10330 = vst.msk [vmem:[#allocation2 + $0x140] sm:$0xff] %vm10289, %v10178
        %10331 = vst.msk [vmem:[#allocation2 + $0x148] sm:$0xff] %vm10289, %v10180
        %10332 = vst.msk [vmem:[#allocation2 + $0x150] sm:$0xff] %vm10289, %v10182
        %10333 = vst.msk [vmem:[#allocation2 + $0x158] sm:$0xff] %vm10289, %v10184
        %10334 = vst.msk [vmem:[#allocation2 + $0x160] sm:$0xff] %vm10289, %v10186
        %10335 = vst.msk [vmem:[#allocation2 + $0x168] sm:$0xff] %vm10289, %v10188
        %10336 = vst.msk [vmem:[#allocation2 + $0x170] sm:$0xff] %vm10289, %v10190
        %10337 = vst.msk [vmem:[#allocation2 + $0x178] sm:$0xff] %vm10289, %v10192
        %10338 = vst.msk [vmem:[#allocation2 + $0x180] sm:$0xff] %vm10289, %v10194
        %10339 = vst.msk [vmem:[#allocation2 + $0x188] sm:$0xff] %vm10289, %v10196
        %10340 = vst.msk [vmem:[#allocation2 + $0x190] sm:$0xff] %vm10289, %v10198
        %10341 = vst.msk [vmem:[#allocation2 + $0x198] sm:$0xff] %vm10289, %v10200
        %10342 = vst.msk [vmem:[#allocation2 + $0x1a0] sm:$0xff] %vm10289, %v10202
        %10343 = vst.msk [vmem:[#allocation2 + $0x1a8] sm:$0xff] %vm10289, %v10204
        %10344 = vst.msk [vmem:[#allocation2 + $0x1b0] sm:$0xff] %vm10289, %v10206
        %10345 = vst.msk [vmem:[#allocation2 + $0x1b8] sm:$0xff] %vm10289, %v10208
        %10346 = vst.msk [vmem:[#allocation2 + $0x1c0] sm:$0xff] %vm10289, %v10210
        %10347 = vst.msk [vmem:[#allocation2 + $0x1c8] sm:$0xff] %vm10289, %v10212
        %10348 = vst.msk [vmem:[#allocation2 + $0x1d0] sm:$0xff] %vm10289, %v10214
        %10349 = vst.msk [vmem:[#allocation2 + $0x1d8] sm:$0xff] %vm10289, %v10216
        %10350 = vst.msk [vmem:[#allocation2 + $0x1e0] sm:$0xff] %vm10289, %v10218
        %10351 = vst.msk [vmem:[#allocation2 + $0x1e8] sm:$0xff] %vm10289, %v10220
        %10352 = vst.msk [vmem:[#allocation2 + $0x1f0] sm:$0xff] %vm10289, %v10222
        %10353 = vst.msk [vmem:[#allocation2 + $0x1f8] sm:$0xff] %vm10289, %v10224
        %v10354 = vld [vmem:[#allocation2] sm:$0xff]
        %v10355 = vld [vmem:[#allocation2 + $0x8] sm:$0xff]
        %v10356 = vld [vmem:[#allocation2 + $0x10] sm:$0xff]
        %v10357 = vld [vmem:[#allocation2 + $0x18] sm:$0xff]
        %v10358 = vld [vmem:[#allocation2 + $0x20] sm:$0xff]
        %v10359 = vld [vmem:[#allocation2 + $0x28] sm:$0xff]
        %v10360 = vld [vmem:[#allocation2 + $0x30] sm:$0xff]
        %v10361 = vld [vmem:[#allocation2 + $0x38] sm:$0xff]
        %v10362 = vld [vmem:[#allocation2 + $0x40] sm:$0xff]
        %v10363 = vld [vmem:[#allocation2 + $0x48] sm:$0xff]
        %v10364 = vld [vmem:[#allocation2 + $0x50] sm:$0xff]
        %v10365 = vld [vmem:[#allocation2 + $0x58] sm:$0xff]
        %v10366 = vld [vmem:[#allocation2 + $0x60] sm:$0xff]
        %v10367 = vld [vmem:[#allocation2 + $0x68] sm:$0xff]
        %v10368 = vld [vmem:[#allocation2 + $0x70] sm:$0xff]
        %v10369 = vld [vmem:[#allocation2 + $0x78] sm:$0xff]
        %v10370 = vld [vmem:[#allocation2 + $0x80] sm:$0xff]
        %v10371 = vld [vmem:[#allocation2 + $0x88] sm:$0xff]
        %v10372 = vld [vmem:[#allocation2 + $0x90] sm:$0xff]
        %v10373 = vld [vmem:[#allocation2 + $0x98] sm:$0xff]
        %v10374 = vld [vmem:[#allocation2 + $0xa0] sm:$0xff]
        %v10375 = vld [vmem:[#allocation2 + $0xa8] sm:$0xff]
        %v10376 = vld [vmem:[#allocation2 + $0xb0] sm:$0xff]
        %v10377 = vld [vmem:[#allocation2 + $0xb8] sm:$0xff]
        %v10378 = vld [vmem:[#allocation2 + $0xc0] sm:$0xff]
        %v10379 = vld [vmem:[#allocation2 + $0xc8] sm:$0xff]
        %v10380 = vld [vmem:[#allocation2 + $0xd0] sm:$0xff]
        %v10381 = vld [vmem:[#allocation2 + $0xd8] sm:$0xff]
        %v10382 = vld [vmem:[#allocation2 + $0xe0] sm:$0xff]
        %v10383 = vld [vmem:[#allocation2 + $0xe8] sm:$0xff]
        %v10384 = vld [vmem:[#allocation2 + $0xf0] sm:$0xff]
        %v10385 = vld [vmem:[#allocation2 + $0xf8] sm:$0xff]
        %v10386 = vld [vmem:[#allocation2 + $0x100] sm:$0xff]
        %v10387 = vld [vmem:[#allocation2 + $0x108] sm:$0xff]
        %v10388 = vld [vmem:[#allocation2 + $0x110] sm:$0xff]
        %v10389 = vld [vmem:[#allocation2 + $0x118] sm:$0xff]
        %v10390 = vld [vmem:[#allocation2 + $0x120] sm:$0xff]
        %v10391 = vld [vmem:[#allocation2 + $0x128] sm:$0xff]
        %v10392 = vld [vmem:[#allocation2 + $0x130] sm:$0xff]
        %v10393 = vld [vmem:[#allocation2 + $0x138] sm:$0xff]
        %v10394 = vld [vmem:[#allocation2 + $0x140] sm:$0xff]
        %v10395 = vld [vmem:[#allocation2 + $0x148] sm:$0xff]
        %v10396 = vld [vmem:[#allocation2 + $0x150] sm:$0xff]
        %v10397 = vld [vmem:[#allocation2 + $0x158] sm:$0xff]
        %v10398 = vld [vmem:[#allocation2 + $0x160] sm:$0xff]
        %v10399 = vld [vmem:[#allocation2 + $0x168] sm:$0xff]
        %v10400 = vld [vmem:[#allocation2 + $0x170] sm:$0xff]
        %v10401 = vld [vmem:[#allocation2 + $0x178] sm:$0xff]
        %v10402 = vld [vmem:[#allocation2 + $0x180] sm:$0xff]
        %v10403 = vld [vmem:[#allocation2 + $0x188] sm:$0xff]
        %v10404 = vld [vmem:[#allocation2 + $0x190] sm:$0xff]
        %v10405 = vld [vmem:[#allocation2 + $0x198] sm:$0xff]
        %v10406 = vld [vmem:[#allocation2 + $0x1a0] sm:$0xff]
        %v10407 = vld [vmem:[#allocation2 + $0x1a8] sm:$0xff]
        %v10408 = vld [vmem:[#allocation2 + $0x1b0] sm:$0xff]
        %v10409 = vld [vmem:[#allocation2 + $0x1b8] sm:$0xff]
        %v10410 = vld [vmem:[#allocation2 + $0x1c0] sm:$0xff]
        %v10411 = vld [vmem:[#allocation2 + $0x1c8] sm:$0xff]
        %v10412 = vld [vmem:[#allocation2 + $0x1d0] sm:$0xff]
        %v10413 = vld [vmem:[#allocation2 + $0x1d8] sm:$0xff]
        %v10414 = vld [vmem:[#allocation2 + $0x1e0] sm:$0xff]
        %v10415 = vld [vmem:[#allocation2 + $0x1e8] sm:$0xff]
        %v10416 = vld [vmem:[#allocation2 + $0x1f0] sm:$0xff]
        %v10417 = vld [vmem:[#allocation2 + $0x1f8] sm:$0xff]
        %v10418 = vld [vmem:[%s1] sm:$0xff]
        %v10419 = vld [vmem:[%s1 + $0x8] sm:$0xff]
        %v10420 = vld [vmem:[%s1 + $0x10] sm:$0xff]
        %v10421 = vld [vmem:[%s1 + $0x18] sm:$0xff]
        %v10422 = vld [vmem:[%s1 + $0x20] sm:$0xff]
        %v10423 = vld [vmem:[%s1 + $0x28] sm:$0xff]
        %v10424 = vld [vmem:[%s1 + $0x30] sm:$0xff]
        %v10425 = vld [vmem:[%s1 + $0x38] sm:$0xff]
        %v10426 = vld [vmem:[%s1 + $0x40] sm:$0xff]
        %v10427 = vld [vmem:[%s1 + $0x48] sm:$0xff]
        %v10428 = vld [vmem:[%s1 + $0x50] sm:$0xff]
        %v10429 = vld [vmem:[%s1 + $0x58] sm:$0xff]
        %v10430 = vld [vmem:[%s1 + $0x60] sm:$0xff]
        %v10431 = vld [vmem:[%s1 + $0x68] sm:$0xff]
        %v10432 = vld [vmem:[%s1 + $0x70] sm:$0xff]
        %v10433 = vld [vmem:[%s1 + $0x78] sm:$0xff]
        %10434 = vmatprep.subr.mxu0 0.0
        %10435 = vmatpush1.msra.mxu0 %v10433
        %10436 = vmatprep.subr.mxu0 0.0
        %10437 = vmatpush1.msra.mxu0 %v10432
        %10438 = vmatprep.subr.mxu0 0.0
        %10439 = vmatpush1.msra.mxu0 %v10431
        %10440 = vmatprep.subr.mxu0 0.0
        %10441 = vmatpush1.msra.mxu0 %v10430
        %10442 = vmatprep.subr.mxu0 0.0
        %10443 = vmatpush1.msra.mxu0 %v10429
        %10444 = vmatprep.subr.mxu0 0.0
        %10445 = vmatpush1.msra.mxu0 %v10428
        %10446 = vmatprep.subr.mxu0 0.0
        %10447 = vmatpush1.msra.mxu0 %v10427
        %10448 = vmatprep.subr.mxu0 0.0
        %10449 = vmatpush1.msra.mxu0 %v10426
        %10450 = vmatprep.subr.mxu0 0.0
        %10451 = vmatpush1.msra.mxu0 %v10425
        %10452 = vmatprep.subr.mxu0 0.0
        %10453 = vmatpush1.msra.mxu0 %v10424
        %10454 = vmatprep.subr.mxu0 0.0
        %10455 = vmatpush1.msra.mxu0 %v10423
        %10456 = vmatprep.subr.mxu0 0.0
        %10457 = vmatpush1.msra.mxu0 %v10422
        %10458 = vmatprep.subr.mxu0 0.0
        %10459 = vmatpush1.msra.mxu0 %v10421
        %10460 = vmatprep.subr.mxu0 0.0
        %10461 = vmatpush1.msra.mxu0 %v10420
        %10462 = vmatprep.subr.mxu0 0.0
        %10463 = vmatpush1.msra.mxu0 %v10419
        %10464 = vmatprep.subr.mxu0 0.0
        %10465 = vmatpush1.msra.mxu0 %v10418
        %10466 = vmatprep.subr.mxu0 0.0
        %10467 = vmatpush2.msra.mxu0 0.0
        %10468 = vmatprep.subr.mxu0 0.0
        %10469 = vmatpush2.msra.mxu0 0.0
        %10470 = vmatprep.subr.mxu0 0.0
        %10471 = vmatpush2.msra.mxu0 0.0
        %10472 = vmatprep.subr.mxu0 0.0
        %10473 = vmatpush2.msra.mxu0 0.0
        %10474 = vmatprep.subr.mxu0 0.0
        %10475 = vmatpush2.msra.mxu0 0.0
        %10476 = vmatprep.subr.mxu0 0.0
        %10477 = vmatpush2.msra.mxu0 0.0
        %10478 = vmatprep.subr.mxu0 0.0
        %10479 = vmatpush2.msra.mxu0 0.0
        %10480 = vmatprep.subr.mxu0 0.0
        %10481 = vmatpush2.msra.mxu0 0.0
        %10482 = vmatprep.subr.mxu0 0.0
        %10483 = vmatpush2.msra.mxu0 0.0
        %10484 = vmatprep.subr.mxu0 0.0
        %10485 = vmatpush2.msra.mxu0 0.0
        %10486 = vmatprep.subr.mxu0 0.0
        %10487 = vmatpush2.msra.mxu0 0.0
        %10488 = vmatprep.subr.mxu0 0.0
        %10489 = vmatpush2.msra.mxu0 0.0
        %10490 = vmatprep.subr.mxu0 0.0
        %10491 = vmatpush2.msra.mxu0 0.0
        %10492 = vmatprep.subr.mxu0 0.0
        %10493 = vmatpush2.msra.mxu0 0.0
        %10494 = vmatprep.subr.mxu0 0.0
        %10495 = vmatpush2.msra.mxu0 0.0
        %10496 = vmatprep.subr.mxu0 0.0
        %10497 = vmatpush2.msra.mxu0 0.0
        %10498 = vmatprep.mubr.f32.mxu0 0.0
        %10499 = vmatmul.mubr.f32.gmra.mxu0 %v10354
        %v10500 = vpop.f32.mrf.mxu0
        %v10501 = vadd.f32 0.0, %v10500
        %v10502 = vpop.f32.mrf.mxu0
        %10503 = vmatprep.mubr.f32.mxu0 0.0
        %10504 = vmatmul.mubr.f32.gmra.mxu0 %v10355
        %v10505 = vpop.f32.mrf.mxu0
        %v10506 = vadd.f32 0.0, %v10505
        %v10507 = vpop.f32.mrf.mxu0
        %10508 = vmatprep.mubr.f32.mxu0 0.0
        %10509 = vmatmul.mubr.f32.gmra.mxu0 %v10356
        %v10510 = vpop.f32.mrf.mxu0
        %v10511 = vadd.f32 0.0, %v10510
        %v10512 = vpop.f32.mrf.mxu0
        %10513 = vmatprep.mubr.f32.mxu0 0.0
        %10514 = vmatmul.mubr.f32.gmra.mxu0 %v10357
        %v10515 = vpop.f32.mrf.mxu0
        %v10516 = vadd.f32 0.0, %v10515
        %v10517 = vpop.f32.mrf.mxu0
        %10518 = vmatprep.mubr.f32.mxu0 0.0
        %10519 = vmatmul.mubr.f32.gmra.mxu0 %v10358
        %v10520 = vpop.f32.mrf.mxu0
        %v10521 = vadd.f32 0.0, %v10520
        %v10522 = vpop.f32.mrf.mxu0
        %10523 = vmatprep.mubr.f32.mxu0 0.0
        %10524 = vmatmul.mubr.f32.gmra.mxu0 %v10359
        %v10525 = vpop.f32.mrf.mxu0
        %v10526 = vadd.f32 0.0, %v10525
        %v10527 = vpop.f32.mrf.mxu0
        %10528 = vmatprep.mubr.f32.mxu0 0.0
        %10529 = vmatmul.mubr.f32.gmra.mxu0 %v10360
        %v10530 = vpop.f32.mrf.mxu0
        %v10531 = vadd.f32 0.0, %v10530
        %v10532 = vpop.f32.mrf.mxu0
        %10533 = vmatprep.mubr.f32.mxu0 0.0
        %10534 = vmatmul.mubr.f32.gmra.mxu0 %v10361
        %v10535 = vpop.f32.mrf.mxu0
        %v10536 = vadd.f32 0.0, %v10535
        %v10537 = vpop.f32.mrf.mxu0
        %10538 = vmatprep.mubr.f32.mxu0 0.0
        %10539 = vmatmul.mubr.f32.gmra.mxu0 %v10362
        %v10540 = vpop.f32.mrf.mxu0
        %v10541 = vadd.f32 0.0, %v10540
        %v10542 = vpop.f32.mrf.mxu0
        %10543 = vmatprep.mubr.f32.mxu0 0.0
        %10544 = vmatmul.mubr.f32.gmra.mxu0 %v10363
        %v10545 = vpop.f32.mrf.mxu0
        %v10546 = vadd.f32 0.0, %v10545
        %v10547 = vpop.f32.mrf.mxu0
        %10548 = vmatprep.mubr.f32.mxu0 0.0
        %10549 = vmatmul.mubr.f32.gmra.mxu0 %v10364
        %v10550 = vpop.f32.mrf.mxu0
        %v10551 = vadd.f32 0.0, %v10550
        %v10552 = vpop.f32.mrf.mxu0
        %10553 = vmatprep.mubr.f32.mxu0 0.0
        %10554 = vmatmul.mubr.f32.gmra.mxu0 %v10365
        %v10555 = vpop.f32.mrf.mxu0
        %v10556 = vadd.f32 0.0, %v10555
        %v10557 = vpop.f32.mrf.mxu0
        %10558 = vmatprep.mubr.f32.mxu0 0.0
        %10559 = vmatmul.mubr.f32.gmra.mxu0 %v10366
        %v10560 = vpop.f32.mrf.mxu0
        %v10561 = vadd.f32 0.0, %v10560
        %v10562 = vpop.f32.mrf.mxu0
        %10563 = vmatprep.mubr.f32.mxu0 0.0
        %10564 = vmatmul.mubr.f32.gmra.mxu0 %v10367
        %v10565 = vpop.f32.mrf.mxu0
        %v10566 = vadd.f32 0.0, %v10565
        %v10567 = vpop.f32.mrf.mxu0
        %10568 = vmatprep.mubr.f32.mxu0 0.0
        %10569 = vmatmul.mubr.f32.gmra.mxu0 %v10368
        %v10570 = vpop.f32.mrf.mxu0
        %v10571 = vadd.f32 0.0, %v10570
        %v10572 = vpop.f32.mrf.mxu0
        %10573 = vmatprep.mubr.f32.mxu0 0.0
        %10574 = vmatmul.mubr.f32.gmra.mxu0 %v10369
        %v10575 = vpop.f32.mrf.mxu0
        %v10576 = vadd.f32 0.0, %v10575
        %v10577 = vpop.f32.mrf.mxu0
        %10578 = vmatprep.mubr.f32.mxu0 0.0
        %10579 = vmatmul.mubr.f32.gmra.mxu0 %v10370
        %v10580 = vpop.f32.mrf.mxu0
        %v10581 = vadd.f32 0.0, %v10580
        %v10582 = vpop.f32.mrf.mxu0
        %10583 = vmatprep.mubr.f32.mxu0 0.0
        %10584 = vmatmul.mubr.f32.gmra.mxu0 %v10371
        %v10585 = vpop.f32.mrf.mxu0
        %v10586 = vadd.f32 0.0, %v10585
        %v10587 = vpop.f32.mrf.mxu0
        %10588 = vmatprep.mubr.f32.mxu0 0.0
        %10589 = vmatmul.mubr.f32.gmra.mxu0 %v10372
        %v10590 = vpop.f32.mrf.mxu0
        %v10591 = vadd.f32 0.0, %v10590
        %v10592 = vpop.f32.mrf.mxu0
        %10593 = vmatprep.mubr.f32.mxu0 0.0
        %10594 = vmatmul.mubr.f32.gmra.mxu0 %v10373
        %v10595 = vpop.f32.mrf.mxu0
        %v10596 = vadd.f32 0.0, %v10595
        %v10597 = vpop.f32.mrf.mxu0
        %10598 = vmatprep.mubr.f32.mxu0 0.0
        %10599 = vmatmul.mubr.f32.gmra.mxu0 %v10374
        %v10600 = vpop.f32.mrf.mxu0
        %v10601 = vadd.f32 0.0, %v10600
        %v10602 = vpop.f32.mrf.mxu0
        %10603 = vmatprep.mubr.f32.mxu0 0.0
        %10604 = vmatmul.mubr.f32.gmra.mxu0 %v10375
        %v10605 = vpop.f32.mrf.mxu0
        %v10606 = vadd.f32 0.0, %v10605
        %v10607 = vpop.f32.mrf.mxu0
        %10608 = vmatprep.mubr.f32.mxu0 0.0
        %10609 = vmatmul.mubr.f32.gmra.mxu0 %v10376
        %v10610 = vpop.f32.mrf.mxu0
        %v10611 = vadd.f32 0.0, %v10610
        %v10612 = vpop.f32.mrf.mxu0
        %10613 = vmatprep.mubr.f32.mxu0 0.0
        %10614 = vmatmul.mubr.f32.gmra.mxu0 %v10377
        %v10615 = vpop.f32.mrf.mxu0
        %v10616 = vadd.f32 0.0, %v10615
        %v10617 = vpop.f32.mrf.mxu0
        %10618 = vmatprep.mubr.f32.mxu0 0.0
        %10619 = vmatmul.mubr.f32.gmra.mxu0 %v10378
        %v10620 = vpop.f32.mrf.mxu0
        %v10621 = vadd.f32 0.0, %v10620
        %v10622 = vpop.f32.mrf.mxu0
        %10623 = vmatprep.mubr.f32.mxu0 0.0
        %10624 = vmatmul.mubr.f32.gmra.mxu0 %v10379
        %v10625 = vpop.f32.mrf.mxu0
        %v10626 = vadd.f32 0.0, %v10625
        %v10627 = vpop.f32.mrf.mxu0
        %10628 = vmatprep.mubr.f32.mxu0 0.0
        %10629 = vmatmul.mubr.f32.gmra.mxu0 %v10380
        %v10630 = vpop.f32.mrf.mxu0
        %v10631 = vadd.f32 0.0, %v10630
        %v10632 = vpop.f32.mrf.mxu0
        %10633 = vmatprep.mubr.f32.mxu0 0.0
        %10634 = vmatmul.mubr.f32.gmra.mxu0 %v10381
        %v10635 = vpop.f32.mrf.mxu0
        %v10636 = vadd.f32 0.0, %v10635
        %v10637 = vpop.f32.mrf.mxu0
        %10638 = vmatprep.mubr.f32.mxu0 0.0
        %10639 = vmatmul.mubr.f32.gmra.mxu0 %v10382
        %v10640 = vpop.f32.mrf.mxu0
        %v10641 = vadd.f32 0.0, %v10640
        %v10642 = vpop.f32.mrf.mxu0
        %10643 = vmatprep.mubr.f32.mxu0 0.0
        %10644 = vmatmul.mubr.f32.gmra.mxu0 %v10383
        %v10645 = vpop.f32.mrf.mxu0
        %v10646 = vadd.f32 0.0, %v10645
        %v10647 = vpop.f32.mrf.mxu0
        %10648 = vmatprep.mubr.f32.mxu0 0.0
        %10649 = vmatmul.mubr.f32.gmra.mxu0 %v10384
        %v10650 = vpop.f32.mrf.mxu0
        %v10651 = vadd.f32 0.0, %v10650
        %v10652 = vpop.f32.mrf.mxu0
        %10653 = vmatprep.mubr.f32.mxu0 0.0
        %10654 = vmatmul.mubr.f32.gmra.mxu0 %v10385
        %v10655 = vpop.f32.mrf.mxu0
        %v10656 = vadd.f32 0.0, %v10655
        %v10657 = vpop.f32.mrf.mxu0
        %10658 = vmatprep.mubr.f32.mxu0 0.0
        %10659 = vmatmul.mubr.f32.gmra.mxu0 %v10386
        %v10660 = vpop.f32.mrf.mxu0
        %v10661 = vadd.f32 0.0, %v10660
        %v10662 = vpop.f32.mrf.mxu0
        %10663 = vmatprep.mubr.f32.mxu0 0.0
        %10664 = vmatmul.mubr.f32.gmra.mxu0 %v10387
        %v10665 = vpop.f32.mrf.mxu0
        %v10666 = vadd.f32 0.0, %v10665
        %v10667 = vpop.f32.mrf.mxu0
        %10668 = vmatprep.mubr.f32.mxu0 0.0
        %10669 = vmatmul.mubr.f32.gmra.mxu0 %v10388
        %v10670 = vpop.f32.mrf.mxu0
        %v10671 = vadd.f32 0.0, %v10670
        %v10672 = vpop.f32.mrf.mxu0
        %10673 = vmatprep.mubr.f32.mxu0 0.0
        %10674 = vmatmul.mubr.f32.gmra.mxu0 %v10389
        %v10675 = vpop.f32.mrf.mxu0
        %v10676 = vadd.f32 0.0, %v10675
        %v10677 = vpop.f32.mrf.mxu0
        %10678 = vmatprep.mubr.f32.mxu0 0.0
        %10679 = vmatmul.mubr.f32.gmra.mxu0 %v10390
        %v10680 = vpop.f32.mrf.mxu0
        %v10681 = vadd.f32 0.0, %v10680
        %v10682 = vpop.f32.mrf.mxu0
        %10683 = vmatprep.mubr.f32.mxu0 0.0
        %10684 = vmatmul.mubr.f32.gmra.mxu0 %v10391
        %v10685 = vpop.f32.mrf.mxu0
        %v10686 = vadd.f32 0.0, %v10685
        %v10687 = vpop.f32.mrf.mxu0
        %10688 = vmatprep.mubr.f32.mxu0 0.0
        %10689 = vmatmul.mubr.f32.gmra.mxu0 %v10392
        %v10690 = vpop.f32.mrf.mxu0
        %v10691 = vadd.f32 0.0, %v10690
        %v10692 = vpop.f32.mrf.mxu0
        %10693 = vmatprep.mubr.f32.mxu0 0.0
        %10694 = vmatmul.mubr.f32.gmra.mxu0 %v10393
        %v10695 = vpop.f32.mrf.mxu0
        %v10696 = vadd.f32 0.0, %v10695
        %v10697 = vpop.f32.mrf.mxu0
        %10698 = vmatprep.mubr.f32.mxu0 0.0
        %10699 = vmatmul.mubr.f32.gmra.mxu0 %v10394
        %v10700 = vpop.f32.mrf.mxu0
        %v10701 = vadd.f32 0.0, %v10700
        %v10702 = vpop.f32.mrf.mxu0
        %10703 = vmatprep.mubr.f32.mxu0 0.0
        %10704 = vmatmul.mubr.f32.gmra.mxu0 %v10395
        %v10705 = vpop.f32.mrf.mxu0
        %v10706 = vadd.f32 0.0, %v10705
        %v10707 = vpop.f32.mrf.mxu0
        %10708 = vmatprep.mubr.f32.mxu0 0.0
        %10709 = vmatmul.mubr.f32.gmra.mxu0 %v10396
        %v10710 = vpop.f32.mrf.mxu0
        %v10711 = vadd.f32 0.0, %v10710
        %v10712 = vpop.f32.mrf.mxu0
        %10713 = vmatprep.mubr.f32.mxu0 0.0
        %10714 = vmatmul.mubr.f32.gmra.mxu0 %v10397
        %v10715 = vpop.f32.mrf.mxu0
        %v10716 = vadd.f32 0.0, %v10715
        %v10717 = vpop.f32.mrf.mxu0
        %10718 = vmatprep.mubr.f32.mxu0 0.0
        %10719 = vmatmul.mubr.f32.gmra.mxu0 %v10398
        %v10720 = vpop.f32.mrf.mxu0
        %v10721 = vadd.f32 0.0, %v10720
        %v10722 = vpop.f32.mrf.mxu0
        %10723 = vmatprep.mubr.f32.mxu0 0.0
        %10724 = vmatmul.mubr.f32.gmra.mxu0 %v10399
        %v10725 = vpop.f32.mrf.mxu0
        %v10726 = vadd.f32 0.0, %v10725
        %v10727 = vpop.f32.mrf.mxu0
        %10728 = vmatprep.mubr.f32.mxu0 0.0
        %10729 = vmatmul.mubr.f32.gmra.mxu0 %v10400
        %v10730 = vpop.f32.mrf.mxu0
        %v10731 = vadd.f32 0.0, %v10730
        %v10732 = vpop.f32.mrf.mxu0
        %10733 = vmatprep.mubr.f32.mxu0 0.0
        %10734 = vmatmul.mubr.f32.gmra.mxu0 %v10401
        %v10735 = vpop.f32.mrf.mxu0
        %v10736 = vadd.f32 0.0, %v10735
        %v10737 = vpop.f32.mrf.mxu0
        %10738 = vmatprep.mubr.f32.mxu0 0.0
        %10739 = vmatmul.mubr.f32.gmra.mxu0 %v10402
        %v10740 = vpop.f32.mrf.mxu0
        %v10741 = vadd.f32 0.0, %v10740
        %v10742 = vpop.f32.mrf.mxu0
        %10743 = vmatprep.mubr.f32.mxu0 0.0
        %10744 = vmatmul.mubr.f32.gmra.mxu0 %v10403
        %v10745 = vpop.f32.mrf.mxu0
        %v10746 = vadd.f32 0.0, %v10745
        %v10747 = vpop.f32.mrf.mxu0
        %10748 = vmatprep.mubr.f32.mxu0 0.0
        %10749 = vmatmul.mubr.f32.gmra.mxu0 %v10404
        %v10750 = vpop.f32.mrf.mxu0
        %v10751 = vadd.f32 0.0, %v10750
        %v10752 = vpop.f32.mrf.mxu0
        %10753 = vmatprep.mubr.f32.mxu0 0.0
        %10754 = vmatmul.mubr.f32.gmra.mxu0 %v10405
        %v10755 = vpop.f32.mrf.mxu0
        %v10756 = vadd.f32 0.0, %v10755
        %v10757 = vpop.f32.mrf.mxu0
        %10758 = vmatprep.mubr.f32.mxu0 0.0
        %10759 = vmatmul.mubr.f32.gmra.mxu0 %v10406
        %v10760 = vpop.f32.mrf.mxu0
        %v10761 = vadd.f32 0.0, %v10760
        %v10762 = vpop.f32.mrf.mxu0
        %10763 = vmatprep.mubr.f32.mxu0 0.0
        %10764 = vmatmul.mubr.f32.gmra.mxu0 %v10407
        %v10765 = vpop.f32.mrf.mxu0
        %v10766 = vadd.f32 0.0, %v10765
        %v10767 = vpop.f32.mrf.mxu0
        %10768 = vmatprep.mubr.f32.mxu0 0.0
        %10769 = vmatmul.mubr.f32.gmra.mxu0 %v10408
        %v10770 = vpop.f32.mrf.mxu0
        %v10771 = vadd.f32 0.0, %v10770
        %v10772 = vpop.f32.mrf.mxu0
        %10773 = vmatprep.mubr.f32.mxu0 0.0
        %10774 = vmatmul.mubr.f32.gmra.mxu0 %v10409
        %v10775 = vpop.f32.mrf.mxu0
        %v10776 = vadd.f32 0.0, %v10775
        %v10777 = vpop.f32.mrf.mxu0
        %10778 = vmatprep.mubr.f32.mxu0 0.0
        %10779 = vmatmul.mubr.f32.gmra.mxu0 %v10410
        %v10780 = vpop.f32.mrf.mxu0
        %v10781 = vadd.f32 0.0, %v10780
        %v10782 = vpop.f32.mrf.mxu0
        %10783 = vmatprep.mubr.f32.mxu0 0.0
        %10784 = vmatmul.mubr.f32.gmra.mxu0 %v10411
        %v10785 = vpop.f32.mrf.mxu0
        %v10786 = vadd.f32 0.0, %v10785
        %v10787 = vpop.f32.mrf.mxu0
        %10788 = vmatprep.mubr.f32.mxu0 0.0
        %10789 = vmatmul.mubr.f32.gmra.mxu0 %v10412
        %v10790 = vpop.f32.mrf.mxu0
        %v10791 = vadd.f32 0.0, %v10790
        %v10792 = vpop.f32.mrf.mxu0
        %10793 = vmatprep.mubr.f32.mxu0 0.0
        %10794 = vmatmul.mubr.f32.gmra.mxu0 %v10413
        %v10795 = vpop.f32.mrf.mxu0
        %v10796 = vadd.f32 0.0, %v10795
        %v10797 = vpop.f32.mrf.mxu0
        %10798 = vmatprep.mubr.f32.mxu0 0.0
        %10799 = vmatmul.mubr.f32.gmra.mxu0 %v10414
        %v10800 = vpop.f32.mrf.mxu0
        %v10801 = vadd.f32 0.0, %v10800
        %v10802 = vpop.f32.mrf.mxu0
        %10803 = vmatprep.mubr.f32.mxu0 0.0
        %10804 = vmatmul.mubr.f32.gmra.mxu0 %v10415
        %v10805 = vpop.f32.mrf.mxu0
        %v10806 = vadd.f32 0.0, %v10805
        %v10807 = vpop.f32.mrf.mxu0
        %10808 = vmatprep.mubr.f32.mxu0 0.0
        %10809 = vmatmul.mubr.f32.gmra.mxu0 %v10416
        %v10810 = vpop.f32.mrf.mxu0
        %v10811 = vadd.f32 0.0, %v10810
        %v10812 = vpop.f32.mrf.mxu0
        %10813 = vmatprep.mubr.f32.mxu0 0.0
        %10814 = vmatmul.mubr.f32.gmra.mxu0 %v10417
        %v10815 = vpop.f32.mrf.mxu0
        %v10816 = vadd.f32 0.0, %v10815
        %v10817 = vpop.f32.mrf.mxu0
        %10818 = vdwg.mxu0
        %v10819 = vmax.f32 %v10501, 0.0
        %v10820 = vmax.f32 %v10506, 0.0
        %v10821 = vmax.f32 %v10511, 0.0
        %v10822 = vmax.f32 %v10516, 0.0
        %v10823 = vmax.f32 %v10521, 0.0
        %v10824 = vmax.f32 %v10526, 0.0
        %v10825 = vmax.f32 %v10531, 0.0
        %v10826 = vmax.f32 %v10536, 0.0
        %v10827 = vmax.f32 %v10541, 0.0
        %v10828 = vmax.f32 %v10546, 0.0
        %v10829 = vmax.f32 %v10551, 0.0
        %v10830 = vmax.f32 %v10556, 0.0
        %v10831 = vmax.f32 %v10561, 0.0
        %v10832 = vmax.f32 %v10566, 0.0
        %v10833 = vmax.f32 %v10571, 0.0
        %v10834 = vmax.f32 %v10576, 0.0
        %v10835 = vmax.f32 %v10581, 0.0
        %v10836 = vmax.f32 %v10586, 0.0
        %v10837 = vmax.f32 %v10591, 0.0
        %v10838 = vmax.f32 %v10596, 0.0
        %v10839 = vmax.f32 %v10601, 0.0
        %v10840 = vmax.f32 %v10606, 0.0
        %v10841 = vmax.f32 %v10611, 0.0
        %v10842 = vmax.f32 %v10616, 0.0
        %v10843 = vmax.f32 %v10621, 0.0
        %v10844 = vmax.f32 %v10626, 0.0
        %v10845 = vmax.f32 %v10631, 0.0
        %v10846 = vmax.f32 %v10636, 0.0
        %v10847 = vmax.f32 %v10641, 0.0
        %v10848 = vmax.f32 %v10646, 0.0
        %v10849 = vmax.f32 %v10651, 0.0
        %v10850 = vmax.f32 %v10656, 0.0
        %v10851 = vmax.f32 %v10661, 0.0
        %v10852 = vmax.f32 %v10666, 0.0
        %v10853 = vmax.f32 %v10671, 0.0
        %v10854 = vmax.f32 %v10676, 0.0
        %v10855 = vmax.f32 %v10681, 0.0
        %v10856 = vmax.f32 %v10686, 0.0
        %v10857 = vmax.f32 %v10691, 0.0
        %v10858 = vmax.f32 %v10696, 0.0
        %v10859 = vmax.f32 %v10701, 0.0
        %v10860 = vmax.f32 %v10706, 0.0
        %v10861 = vmax.f32 %v10711, 0.0
        %v10862 = vmax.f32 %v10716, 0.0
        %v10863 = vmax.f32 %v10721, 0.0
        %v10864 = vmax.f32 %v10726, 0.0
        %v10865 = vmax.f32 %v10731, 0.0
        %v10866 = vmax.f32 %v10736, 0.0
        %v10867 = vmax.f32 %v10741, 0.0
        %v10868 = vmax.f32 %v10746, 0.0
        %v10869 = vmax.f32 %v10751, 0.0
        %v10870 = vmax.f32 %v10756, 0.0
        %v10871 = vmax.f32 %v10761, 0.0
        %v10872 = vmax.f32 %v10766, 0.0
        %v10873 = vmax.f32 %v10771, 0.0
        %v10874 = vmax.f32 %v10776, 0.0
        %v10875 = vmax.f32 %v10781, 0.0
        %v10876 = vmax.f32 %v10786, 0.0
        %v10877 = vmax.f32 %v10791, 0.0
        %v10878 = vmax.f32 %v10796, 0.0
        %v10879 = vmax.f32 %v10801, 0.0
        %v10880 = vmax.f32 %v10806, 0.0
        %v10881 = vmax.f32 %v10811, 0.0
        %v10882 = vmax.f32 %v10816, 0.0
        %10883 = vst [vmem:[%s136] sm:$0xff] %v10819
        %10884 = vst [vmem:[%s136 + $0x8] sm:$0xff] %v10820
        %10885 = vst [vmem:[%s136 + $0x10] sm:$0xff] %v10821
        %10886 = vst [vmem:[%s136 + $0x18] sm:$0xff] %v10822
        %10887 = vst [vmem:[%s136 + $0x20] sm:$0xff] %v10823
        %10888 = vst [vmem:[%s136 + $0x28] sm:$0xff] %v10824
        %10889 = vst [vmem:[%s136 + $0x30] sm:$0xff] %v10825
        %10890 = vst [vmem:[%s136 + $0x38] sm:$0xff] %v10826
        %10891 = vst [vmem:[%s136 + $0x40] sm:$0xff] %v10827
        %10892 = vst [vmem:[%s136 + $0x48] sm:$0xff] %v10828
        %10893 = vst [vmem:[%s136 + $0x50] sm:$0xff] %v10829
        %10894 = vst [vmem:[%s136 + $0x58] sm:$0xff] %v10830
        %10895 = vst [vmem:[%s136 + $0x60] sm:$0xff] %v10831
        %10896 = vst [vmem:[%s136 + $0x68] sm:$0xff] %v10832
        %10897 = vst [vmem:[%s136 + $0x70] sm:$0xff] %v10833
        %10898 = vst [vmem:[%s136 + $0x78] sm:$0xff] %v10834
        %10899 = vst [vmem:[%s136 + $0x80] sm:$0xff] %v10835
        %10900 = vst [vmem:[%s136 + $0x88] sm:$0xff] %v10836
        %10901 = vst [vmem:[%s136 + $0x90] sm:$0xff] %v10837
        %10902 = vst [vmem:[%s136 + $0x98] sm:$0xff] %v10838
        %10903 = vst [vmem:[%s136 + $0xa0] sm:$0xff] %v10839
        %10904 = vst [vmem:[%s136 + $0xa8] sm:$0xff] %v10840
        %10905 = vst [vmem:[%s136 + $0xb0] sm:$0xff] %v10841
        %10906 = vst [vmem:[%s136 + $0xb8] sm:$0xff] %v10842
        %10907 = vst [vmem:[%s136 + $0xc0] sm:$0xff] %v10843
        %10908 = vst [vmem:[%s136 + $0xc8] sm:$0xff] %v10844
        %10909 = vst [vmem:[%s136 + $0xd0] sm:$0xff] %v10845
        %10910 = vst [vmem:[%s136 + $0xd8] sm:$0xff] %v10846
        %10911 = vst [vmem:[%s136 + $0xe0] sm:$0xff] %v10847
        %10912 = vst [vmem:[%s136 + $0xe8] sm:$0xff] %v10848
        %10913 = vst [vmem:[%s136 + $0xf0] sm:$0xff] %v10849
        %10914 = vst [vmem:[%s136 + $0xf8] sm:$0xff] %v10850
        %10915 = vst [vmem:[%s136 + $0x100] sm:$0xff] %v10851
        %10916 = vst [vmem:[%s136 + $0x108] sm:$0xff] %v10852
        %10917 = vst [vmem:[%s136 + $0x110] sm:$0xff] %v10853
        %10918 = vst [vmem:[%s136 + $0x118] sm:$0xff] %v10854
        %10919 = vst [vmem:[%s136 + $0x120] sm:$0xff] %v10855
        %10920 = vst [vmem:[%s136 + $0x128] sm:$0xff] %v10856
        %10921 = vst [vmem:[%s136 + $0x130] sm:$0xff] %v10857
        %10922 = vst [vmem:[%s136 + $0x138] sm:$0xff] %v10858
        %10923 = vst [vmem:[%s136 + $0x140] sm:$0xff] %v10859
        %10924 = vst [vmem:[%s136 + $0x148] sm:$0xff] %v10860
        %10925 = vst [vmem:[%s136 + $0x150] sm:$0xff] %v10861
        %10926 = vst [vmem:[%s136 + $0x158] sm:$0xff] %v10862
        %10927 = vst [vmem:[%s136 + $0x160] sm:$0xff] %v10863
        %10928 = vst [vmem:[%s136 + $0x168] sm:$0xff] %v10864
        %10929 = vst [vmem:[%s136 + $0x170] sm:$0xff] %v10865
        %10930 = vst [vmem:[%s136 + $0x178] sm:$0xff] %v10866
        %10931 = vst [vmem:[%s136 + $0x180] sm:$0xff] %v10867
        %10932 = vst [vmem:[%s136 + $0x188] sm:$0xff] %v10868
        %10933 = vst [vmem:[%s136 + $0x190] sm:$0xff] %v10869
        %10934 = vst [vmem:[%s136 + $0x198] sm:$0xff] %v10870
        %10935 = vst [vmem:[%s136 + $0x1a0] sm:$0xff] %v10871
        %10936 = vst [vmem:[%s136 + $0x1a8] sm:$0xff] %v10872
        %10937 = vst [vmem:[%s136 + $0x1b0] sm:$0xff] %v10873
        %10938 = vst [vmem:[%s136 + $0x1b8] sm:$0xff] %v10874
        %10939 = vst [vmem:[%s136 + $0x1c0] sm:$0xff] %v10875
        %10940 = vst [vmem:[%s136 + $0x1c8] sm:$0xff] %v10876
        %10941 = vst [vmem:[%s136 + $0x1d0] sm:$0xff] %v10877
        %10942 = vst [vmem:[%s136 + $0x1d8] sm:$0xff] %v10878
        %10943 = vst [vmem:[%s136 + $0x1e0] sm:$0xff] %v10879
        %10944 = vst [vmem:[%s136 + $0x1e8] sm:$0xff] %v10880
        %10945 = vst [vmem:[%s136 + $0x1f0] sm:$0xff] %v10881
        %10946 = vst [vmem:[%s136 + $0x1f8] sm:$0xff] %v10882
        %s10947 = sand.u32 %s71, 1
        %s10948 = scalar_lea.sflag [#allocation4], %s10947
        %s10949 = sand.u32 %s71, 1
        %s10950 = smul.addr %s10949, 512
        %s10951 = scalar_lea.vmem [#allocation3], %s10950
        // Predicated region
        $region29: #{tpu_custom_call.1} parent=27 // pred_check
          %p10952 = pneg %p81
        $region30: #{tpu_custom_call.1} parent=27 // pred_check_branch
          %10954 = sbr.rel (%p10952) target = $region32
        $region31: #{tpu_custom_call.1} parent=27 // pred_region
          %s10956 = ssub.s32 8192, 8192
          %10957 = vsyncadd %s10948, %s10956
          %s10958 = smul.addr %s16, 64
          %s10959 = smul.addr %s10958, 128
          %s10960 = scalar_lea.hbm %s2, %s10959
          %s10961 = sshll.u32 %s10951, 4
          %s10962 = int_to_ptr.vmem [resolvable:$true] %s10961
          %10967 = dma.vmem_to_hbm [thread:$0]  %s10962, 8192, %s10960, %s10948, 128, 128, 8
        $region32: #{tpu_custom_call.1} parent=27 // pred_fallthru
          _
      $region28: #{tpu_custom_call.1} parent=5 // pred_fallthru
        _
      %p10968 = scmp.le.s32.totalorder 2, %s11
      // Predicated region
      $region33: #{tpu_custom_call.1} parent=5 // pred_check
        %p10969 = pneg %p10968
      $region34: #{tpu_custom_call.1} parent=5 // pred_check_branch
        %10971 = sbr.rel (%p10969) target = $region36
      $region35: #{tpu_custom_call.1} parent=5 // pred_region
        %s10972 = ssub.s32 %s11, 2
        // Predicated region
        $region37: #{tpu_custom_call.1} parent=35 // pred_check
          %p10973 = pneg %p87
        $region38: #{tpu_custom_call.1} parent=35 // pred_check_branch
          %10975 = sbr.rel (%p10973) target = $region40
        $region39: #{tpu_custom_call.1} parent=35 // pred_region
          %s10976 = sand.u32 %s72, 1
          %s10977 = scalar_lea.sflag [#allocation4], %s10976
          %s10978 = sand.u32 %s72, 1
          %s10979 = smul.addr %s10978, 512
          %s10980 = scalar_lea.vmem [#allocation3], %s10979
          %10981 = dma.done %s10977, 8192
        $region40: #{tpu_custom_call.1} parent=35 // pred_fallthru
          _
      $region36: #{tpu_custom_call.1} parent=5 // pred_fallthru
        _
    $region6: #{tpu_custom_call.1} parent=1 // loop_footer
      %s15 = sadd.s32 1, %s11
    $region7: #{tpu_custom_call.1} parent=1 // loop_footer_branch
      %10 = sbr.rel target = $region3
    $region8: #{tpu_custom_call.1} parent=1 // loop_exit
      _
    %10982 = vsyncpa [#allocation4], 1
    %s10983 = scalar_lea.sflag [#allocation4], 1
    %10984 = vsyncpa %s10983, 1

</llo_original>
